<compile_context>
chip_gen: v7x
topology: tpu7x:2x2x1
jax: 0.10.0
libtpu: 0.0.40
codegen_flags: <defaults>
</compile_context>

<pallas_src>
import jax
import jax.numpy as jnp
from jax import lax
from jax.experimental import pallas as pl
from jax.experimental.pallas import tpu as pltpu

BN_EPS = 1e-5


# ----------------------------------------------------------------------------
# Fused kernel
# ----------------------------------------------------------------------------
def _make_csfe_kernel(Cin, H, W, KH, KW, C1, C2):
    Ho1, Wo1 = H - KH + 1, W - KW + 1
    Hp1, Wp1 = Ho1 // 2, Wo1 // 2
    Ho2, Wo2 = Hp1 - KH + 1, Wp1 - KW + 1
    Hp2, Wp2 = Ho2 // 2, Wo2 // 2
    half1, half2 = Wp1 * C1, Wp2 * C2          # 384, 256 (multiples of 128)

    def kernel(x_ref, w1_ref, s1_ref, b1_ref, w2_ref, s2_ref, b2_ref,
               fcw_ref, fcb_ref, o_ref, p1_ref, p2_ref):
        Bb = x_ref.shape[0]

        # ---- stage 1: conv 5x5 (KH row-Toeplitz matmuls) + BN + ReLU ----
        acc = jnp.zeros((Bb * Ho1, Wo1 * C1), jnp.float32)
        for dy in range(KH):
            rows = x_ref[:, dy:dy + Ho1, :].reshape(Bb * Ho1, W * Cin)
            acc = acc + jnp.dot(rows, w1_ref[dy],
                                preferred_element_type=jnp.float32)
        y = jnp.maximum(acc * s1_ref[...] + b1_ref[...], 0.0)
        # W-pool: weight columns are parity-major, so the two columns of each
        # 2x2 window live in the two aligned lane halves -> single max.
        y = jnp.maximum(y[:, :half1], y[:, half1:])          # (Bb*Ho1, Wp1*C1)
        y = y.reshape(Bb, Ho1, half1)
        for h in range(Hp1):                                  # H-pool
            p1_ref[:, h, :] = jnp.maximum(y[:, 2 * h, :], y[:, 2 * h + 1, :])

        # ---- stage 2: conv 5x5 + BN + ReLU ----
        acc = jnp.zeros((Bb * Ho2, Wo2 * C2), jnp.float32)
        for dy in range(KH):
            rows = p1_ref[:, dy:dy + Ho2, :].reshape(Bb * Ho2, Wp1 * C1)
            acc = acc + jnp.dot(rows, w2_ref[dy],
                                preferred_element_type=jnp.float32)
        y = jnp.maximum(acc * s2_ref[...] + b2_ref[...], 0.0)
        y = jnp.maximum(y[:, :half2], y[:, half2:])          # (Bb*Ho2, Wp2*C2)
        y = y.reshape(Bb, Ho2, half2)
        for h in range(Hp2):
            p2_ref[:, h, :] = jnp.maximum(y[:, 2 * h, :], y[:, 2 * h + 1, :])

        # ---- flatten (h, w, c) + FC (weight rows pre-permuted to this order)
        zf = jnp.concatenate([p2_ref[:, h, :] for h in range(Hp2)], axis=-1)
        o_ref[...] = (jnp.dot(zf, fcw_ref[...],
                              preferred_element_type=jnp.float32)
                      + fcb_ref[...]).astype(o_ref.dtype)

    return kernel


# ----------------------------------------------------------------------------
# Parameter preparation (pure JAX; cheap, hoistable to init)
# ----------------------------------------------------------------------------
def _toeplitz_conv_weight(w_oihw, w_in):
    """Row-matmul form of a valid KxK conv, with parity-major output columns.

    Result Wt[dy, i*Cin+ci, col(j, c)] = w[c, ci, dy, i-j] for 0 <= i-j < KW,
    where col(j, c) = (j % 2) * (Wo//2 * Cout) + (j // 2) * Cout + c.
    """
    Cout, Cin, KH, KW = w_oihw.shape
    Wo = w_in - KW + 1
    w_hwio = jnp.transpose(w_oihw, (2, 3, 1, 0))               # (KH, KW, Cin, Cout)
    d = jnp.arange(w_in)[:, None] - jnp.arange(Wo)[None, :]     # i - j
    valid = (d >= 0) & (d < KW)
    taps = w_hwio[:, jnp.clip(d, 0, KW - 1)]                    # (KH, Win, Wo, Cin, Cout)
    taps = jnp.where(valid[None, :, :, None, None], taps, 0.0)
    taps = jnp.transpose(taps, (0, 1, 3, 2, 4))                 # (KH, Win, Cin, Wo, Cout)
    # Parity-major reorder of the output-column (j) axis: evens then odds, so
    # the in-kernel 2x2 W-pool is a single aligned lane-half max.
    taps = jnp.concatenate([taps[:, :, :, 0::2, :], taps[:, :, :, 1::2, :]],
                           axis=3)
    return taps.reshape(KH, w_in * Cin, Wo * Cout)


def _fold_bn(conv_b, gamma, beta, mean, var):
    scale = gamma / jnp.sqrt(var + BN_EPS)
    bias = (conv_b - mean) * scale + beta
    return scale, bias


# ----------------------------------------------------------------------------
# Forward
# ----------------------------------------------------------------------------
def csfe_forward(params, x_nchw, block_batch=8):
    N, Cin, H, W = x_nchw.shape
    C1, Cin1, KH, KW = params["conv1_w"].shape
    C2 = params["conv2_w"].shape[0]
    assert Cin1 == Cin

    Ho1, Wo1 = H - KH + 1, W - KW + 1
    Hp1, Wp1 = Ho1 // 2, Wo1 // 2
    Ho2, Wo2 = Hp1 - KH + 1, Wp1 - KW + 1
    Hp2, Wp2 = Ho2 // 2, Wo2 // 2
    assert Wo1 % 2 == 0 and Ho1 % 2 == 0 and Wo2 % 2 == 0 and Ho2 % 2 == 0
    hidden = Hp2 * Wp2 * C2
    out_dim = params["fc_w"].shape[0]
    assert params["fc_w"].shape[1] == hidden

    # ---- weight prep (BN fold, Toeplitz form, FC row permutation) ----
    w1t = _toeplitz_conv_weight(params["conv1_w"], W)          # (KH, W*Cin,  Wo1*C1)
    w2t = _toeplitz_conv_weight(params["conv2_w"], Wp1)        # (KH, Wp1*C1, Wo2*C2)
    s1, b1 = _fold_bn(params["conv1_b"], params["bn1_gamma"], params["bn1_beta"],
                      params["bn1_mean"], params["bn1_var"])
    s2, b2 = _fold_bn(params["conv2_b"], params["bn2_gamma"], params["bn2_beta"],
                      params["bn2_mean"], params["bn2_var"])
    s1t, b1t = jnp.tile(s1, Wo1)[None, :], jnp.tile(b1, Wo1)[None, :]
    s2t, b2t = jnp.tile(s2, Wo2)[None, :], jnp.tile(b2, Wo2)[None, :]
    # FC weight permuted so it consumes the kernel's (h, w, c)-ordered flatten
    # while matching PyTorch's NCHW z.view(N, -1) semantics.
    k = jnp.arange(hidden)
    h_i = k // (Wp2 * C2)
    w_i = (k % (Wp2 * C2)) // C2
    c_i = k % C2
    perm = c_i * (Hp2 * Wp2) + h_i * Wp2 + w_i
    fcw = params["fc_w"][:, perm].T                            # (hidden, out_dim)
    fcb = params["fc_b"][None, :]

    # ---- input to row-major (N, H, W*Cin) ----
    x_rm = jnp.transpose(x_nchw, (0, 2, 3, 1)).reshape(N, H, W * Cin)

    # ---- batch blocking ----
    Bb = min(block_batch, N)
    Npad = ((N + Bb - 1) // Bb) * Bb
    if Npad != N:
        x_rm = jnp.pad(x_rm, ((0, Npad - N), (0, 0), (0, 0)))

    kernel = _make_csfe_kernel(Cin, H, W, KH, KW, C1, C2)
    out = pl.pallas_call(
        kernel,
        out_shape=jax.ShapeDtypeStruct((Npad, out_dim), jnp.float32),
        grid=(Npad // Bb,),
        in_specs=[
            pl.BlockSpec((Bb, H, W * Cin), lambda n: (n, 0, 0)),
            pl.BlockSpec(w1t.shape, lambda n: (0, 0, 0)),
            pl.BlockSpec(s1t.shape, lambda n: (0, 0)),
            pl.BlockSpec(b1t.shape, lambda n: (0, 0)),
            pl.BlockSpec(w2t.shape, lambda n: (0, 0, 0)),
            pl.BlockSpec(s2t.shape, lambda n: (0, 0)),
            pl.BlockSpec(b2t.shape, lambda n: (0, 0)),
            pl.BlockSpec(fcw.shape, lambda n: (0, 0)),
            pl.BlockSpec(fcb.shape, lambda n: (0, 0)),
        ],
        out_specs=pl.BlockSpec((Bb, out_dim), lambda n: (n, 0)),
        scratch_shapes=[
            pltpu.VMEM((Bb, Hp1, Wp1 * C1), jnp.float32),
            pltpu.VMEM((Bb, Hp2, Wp2 * C2), jnp.float32),
        ],
        compiler_params=pltpu.CompilerParams(
            dimension_semantics=("parallel",)),
    )(x_rm, w1t, s1t, b1t, w2t, s2t, b2t, fcw, fcb)
    return out[:N]


# ----------------------------------------------------------------------------
# Parameters
# ----------------------------------------------------------------------------
def init_params(key, in_channels=1, hidden_size=1024, embed_dim=512):
    ks = jax.random.split(key, 10)
    return {
        "conv1_w": 0.05 * jax.random.normal(ks[0], (32, in_channels, 5, 5), jnp.float32),
        "conv1_b": 0.05 * jax.random.normal(ks[1], (32,), jnp.float32),
        "bn1_gamma": 1.0 + 0.05 * jax.random.normal(ks[2], (32,), jnp.float32),
        "bn1_beta": 0.05 * jax.random.normal(ks[3], (32,), jnp.float32),
        "bn1_mean": jnp.zeros((32,), jnp.float32),
        "bn1_var": jnp.ones((32,), jnp.float32),
        "conv2_w": 0.05 * jax.random.normal(ks[4], (64, 32, 5, 5), jnp.float32),
        "conv2_b": 0.05 * jax.random.normal(ks[5], (64,), jnp.float32),
        "bn2_gamma": 1.0 + 0.05 * jax.random.normal(ks[6], (64,), jnp.float32),
        "bn2_beta": 0.05 * jax.random.normal(ks[7], (64,), jnp.float32),
        "bn2_mean": jnp.zeros((64,), jnp.float32),
        "bn2_var": jnp.ones((64,), jnp.float32),
        # PyTorch Linear convention: (out_features, in_features)
        "fc_w": 0.03 * jax.random.normal(ks[8], (2 * embed_dim, hidden_size), jnp.float32),
        "fc_b": 0.03 * jax.random.normal(ks[9], (2 * embed_dim,), jnp.float32),
    }


# ----------------------------------------------------------------------------
# Pure-JAX reference (correctness check)
# ----------------------------------------------------------------------------
def csfe_reference(params, x_nchw):
    def conv(xn, w_oihw, b):
        w = jnp.transpose(w_oihw, (2, 3, 1, 0))
        y = lax.conv_general_dilated(
            xn, w, (1, 1), "VALID",
            dimension_numbers=("NHWC", "HWIO", "NHWC"))
        return y + b[None, None, None, :]

    def bn(xv, g, be, m, v):
        return (xv - m) * (g / jnp.sqrt(v + BN_EPS)) + be

    def pool(xv):
        return lax.reduce_window(xv, -jnp.inf, lax.max,
                                 (1, 2, 2, 1), (1, 2, 2, 1), "VALID")

    x = jnp.transpose(x_nchw, (0, 2, 3, 1))
    z = conv(x, params["conv1_w"], params["conv1_b"])
    z = jnp.maximum(bn(z, params["bn1_gamma"], params["bn1_beta"],
                       params["bn1_mean"], params["bn1_var"]), 0.0)
    z = pool(z)
    z = conv(z, params["conv2_w"], params["conv2_b"])
    z = jnp.maximum(bn(z, params["bn2_gamma"], params["bn2_beta"],
                       params["bn2_mean"], params["bn2_var"]), 0.0)
    z = pool(z)
    zf = jnp.transpose(z, (0, 3, 1, 2)).reshape(x.shape[0], -1)
    return zf @ params["fc_w"].T + params["fc_b"]


if __name__ == "__main__":
    key = jax.random.PRNGKey(0)
    pkey, xkey = jax.random.split(key)
    params = init_params(pkey)

    # hidden_size=1024 => 64*4*4 after the conv stack => 28x28 single-channel input.
    x = jax.random.normal(xkey, (2, 1, 28, 28), jnp.float32)

    out = jax.jit(csfe_forward)(params, x)
    out = jax.block_until_ready(out)
    assert out.shape == (2, 1024), out.shape

    ref = csfe_reference(params, x)
    max_err = float(jnp.max(jnp.abs(out - ref)))
    assert max_err < 5e-3, f"mismatch vs reference: {max_err}"

    print("KERNEL_OK")
</pallas_src>

<mosaic_0001>
module attributes {stable_mosaic.version = 11 : i64} {
  func.func @kernel(%arg0: i32, %arg1: memref<2x28x28xf32, #tpu.memory_space<vmem>>, %arg2: memref<5x28x768xf32, #tpu.memory_space<vmem>>, %arg3: memref<1x768xf32, #tpu.memory_space<vmem>>, %arg4: memref<1x768xf32, #tpu.memory_space<vmem>>, %arg5: memref<5x384x512xf32, #tpu.memory_space<vmem>>, %arg6: memref<1x512xf32, #tpu.memory_space<vmem>>, %arg7: memref<1x512xf32, #tpu.memory_space<vmem>>, %arg8: memref<1024x1024xf32, #tpu.memory_space<vmem>>, %arg9: memref<1x1024xf32, #tpu.memory_space<vmem>>, %arg10: memref<2x1024xf32, #tpu.memory_space<vmem>>, %arg11: memref<2x12x384xf32, #tpu.memory_space<vmem>>, %arg12: memref<2x4x256xf32, #tpu.memory_space<vmem>>) attributes {dimension_semantics = [#tpu.dimension_semantics<parallel>], iteration_bounds = array<i64: 1>, scalar_prefetch = 0 : i64, scratch_operands = 2 : i64, tpu.core_type = #tpu.core_type<tc>, window_params = [{transform_indices = @transform_0, window_bounds = array<i64: 2, 28, 28>}, {pipeline_mode = #tpu.pipeline_mode<synchronous>, transform_indices = @transform_1, window_bounds = array<i64: 5, 28, 768>}, {pipeline_mode = #tpu.pipeline_mode<synchronous>, transform_indices = @transform_2, window_bounds = array<i64: 1, 768>}, {pipeline_mode = #tpu.pipeline_mode<synchronous>, transform_indices = @transform_3, window_bounds = array<i64: 1, 768>}, {pipeline_mode = #tpu.pipeline_mode<synchronous>, transform_indices = @transform_4, window_bounds = array<i64: 5, 384, 512>}, {pipeline_mode = #tpu.pipeline_mode<synchronous>, transform_indices = @transform_5, window_bounds = array<i64: 1, 512>}, {pipeline_mode = #tpu.pipeline_mode<synchronous>, transform_indices = @transform_6, window_bounds = array<i64: 1, 512>}, {pipeline_mode = #tpu.pipeline_mode<synchronous>, transform_indices = @transform_7, window_bounds = array<i64: 1024, 1024>}, {pipeline_mode = #tpu.pipeline_mode<synchronous>, transform_indices = @transform_8, window_bounds = array<i64: 1, 1024>}, {transform_indices = @transform_9, window_bounds = array<i64: 2, 1024>}]} {
    %cst = arith.constant 0.000000e+00 : f32
    %0 = vector.broadcast %cst : f32 to vector<48x768xf32>
    %c0 = arith.constant 0 : index
    %c0_0 = arith.constant 0 : index
    %c0_1 = arith.constant 0 : index
    %1 = vector.load %arg1[%c0, %c0_0, %c0_1] : memref<2x28x28xf32, #tpu.memory_space<vmem>>, vector<2x24x28xf32>
    %2 = vector.shape_cast %1 : vector<2x24x28xf32> to vector<48x28xf32>
    %c0_2 = arith.constant 0 : index
    %c0_3 = arith.constant 0 : index
    %c0_4 = arith.constant 0 : index
    %3 = vector.load %arg2[%c0_2, %c0_3, %c0_4] : memref<5x28x768xf32, #tpu.memory_space<vmem>>, vector<1x28x768xf32>
    %4 = vector.shape_cast %3 : vector<1x28x768xf32> to vector<28x768xf32>
    %cst_5 = arith.constant dense<0.000000e+00> : vector<48x768xf32>
    %5 = tpu.matmul %2, %4, %cst_5 {dimension_numbers = #tpu.dot_dimension_numbers<[1], [0], [0], [1], [0, 0, 1, 1], [], []>} : vector<48x28xf32>, vector<28x768xf32>, vector<48x768xf32> -> vector<48x768xf32>
    %6 = arith.addf %0, %5 : vector<48x768xf32>
    %c0_6 = arith.constant 0 : index
    %c1 = arith.constant 1 : index
    %c0_7 = arith.constant 0 : index
    %7 = vector.load %arg1[%c0_6, %c1, %c0_7] : memref<2x28x28xf32, #tpu.memory_space<vmem>>, vector<2x24x28xf32>
    %8 = vector.shape_cast %7 : vector<2x24x28xf32> to vector<48x28xf32>
    %c1_8 = arith.constant 1 : index
    %c0_9 = arith.constant 0 : index
    %c0_10 = arith.constant 0 : index
    %9 = vector.load %arg2[%c1_8, %c0_9, %c0_10] : memref<5x28x768xf32, #tpu.memory_space<vmem>>, vector<1x28x768xf32>
    %10 = vector.shape_cast %9 : vector<1x28x768xf32> to vector<28x768xf32>
    %cst_11 = arith.constant dense<0.000000e+00> : vector<48x768xf32>
    %11 = tpu.matmul %8, %10, %cst_11 {dimension_numbers = #tpu.dot_dimension_numbers<[1], [0], [0], [1], [0, 0, 1, 1], [], []>} : vector<48x28xf32>, vector<28x768xf32>, vector<48x768xf32> -> vector<48x768xf32>
    %12 = arith.addf %6, %11 : vector<48x768xf32>
    %c0_12 = arith.constant 0 : index
    %c2 = arith.constant 2 : index
    %c0_13 = arith.constant 0 : index
    %13 = vector.load %arg1[%c0_12, %c2, %c0_13] : memref<2x28x28xf32, #tpu.memory_space<vmem>>, vector<2x24x28xf32>
    %14 = vector.shape_cast %13 : vector<2x24x28xf32> to vector<48x28xf32>
    %c2_14 = arith.constant 2 : index
    %c0_15 = arith.constant 0 : index
    %c0_16 = arith.constant 0 : index
    %15 = vector.load %arg2[%c2_14, %c0_15, %c0_16] : memref<5x28x768xf32, #tpu.memory_space<vmem>>, vector<1x28x768xf32>
    %16 = vector.shape_cast %15 : vector<1x28x768xf32> to vector<28x768xf32>
    %cst_17 = arith.constant dense<0.000000e+00> : vector<48x768xf32>
    %17 = tpu.matmul %14, %16, %cst_17 {dimension_numbers = #tpu.dot_dimension_numbers<[1], [0], [0], [1], [0, 0, 1, 1], [], []>} : vector<48x28xf32>, vector<28x768xf32>, vector<48x768xf32> -> vector<48x768xf32>
    %18 = arith.addf %12, %17 : vector<48x768xf32>
    %c0_18 = arith.constant 0 : index
    %c3 = arith.constant 3 : index
    %c0_19 = arith.constant 0 : index
    %19 = vector.load %arg1[%c0_18, %c3, %c0_19] : memref<2x28x28xf32, #tpu.memory_space<vmem>>, vector<2x24x28xf32>
    %20 = vector.shape_cast %19 : vector<2x24x28xf32> to vector<48x28xf32>
    %c3_20 = arith.constant 3 : index
    %c0_21 = arith.constant 0 : index
    %c0_22 = arith.constant 0 : index
    %21 = vector.load %arg2[%c3_20, %c0_21, %c0_22] : memref<5x28x768xf32, #tpu.memory_space<vmem>>, vector<1x28x768xf32>
    %22 = vector.shape_cast %21 : vector<1x28x768xf32> to vector<28x768xf32>
    %cst_23 = arith.constant dense<0.000000e+00> : vector<48x768xf32>
    %23 = tpu.matmul %20, %22, %cst_23 {dimension_numbers = #tpu.dot_dimension_numbers<[1], [0], [0], [1], [0, 0, 1, 1], [], []>} : vector<48x28xf32>, vector<28x768xf32>, vector<48x768xf32> -> vector<48x768xf32>
    %24 = arith.addf %18, %23 : vector<48x768xf32>
    %c0_24 = arith.constant 0 : index
    %c4 = arith.constant 4 : index
    %c0_25 = arith.constant 0 : index
    %25 = vector.load %arg1[%c0_24, %c4, %c0_25] : memref<2x28x28xf32, #tpu.memory_space<vmem>>, vector<2x24x28xf32>
    %26 = vector.shape_cast %25 : vector<2x24x28xf32> to vector<48x28xf32>
    %c4_26 = arith.constant 4 : index
    %c0_27 = arith.constant 0 : index
    %c0_28 = arith.constant 0 : index
    %27 = vector.load %arg2[%c4_26, %c0_27, %c0_28] : memref<5x28x768xf32, #tpu.memory_space<vmem>>, vector<1x28x768xf32>
    %28 = vector.shape_cast %27 : vector<1x28x768xf32> to vector<28x768xf32>
    %cst_29 = arith.constant dense<0.000000e+00> : vector<48x768xf32>
    %29 = tpu.matmul %26, %28, %cst_29 {dimension_numbers = #tpu.dot_dimension_numbers<[1], [0], [0], [1], [0, 0, 1, 1], [], []>} : vector<48x28xf32>, vector<28x768xf32>, vector<48x768xf32> -> vector<48x768xf32>
    %30 = arith.addf %24, %29 : vector<48x768xf32>
    %c0_30 = arith.constant 0 : index
    %c0_31 = arith.constant 0 : index
    %31 = vector.load %arg3[%c0_30, %c0_31] : memref<1x768xf32, #tpu.memory_space<vmem>>, vector<1x768xf32>
    %32 = vector.broadcast %31 : vector<1x768xf32> to vector<48x768xf32>
    %33 = arith.mulf %30, %32 : vector<48x768xf32>
    %c0_32 = arith.constant 0 : index
    %c0_33 = arith.constant 0 : index
    %34 = vector.load %arg4[%c0_32, %c0_33] : memref<1x768xf32, #tpu.memory_space<vmem>>, vector<1x768xf32>
    %35 = vector.broadcast %34 : vector<1x768xf32> to vector<48x768xf32>
    %36 = arith.addf %33, %35 : vector<48x768xf32>
    %cst_34 = arith.constant 0.000000e+00 : f32
    %37 = vector.broadcast %cst_34 : f32 to vector<48x768xf32>
    %38 = arith.maximumf %36, %37 : vector<48x768xf32>
    %39 = vector.extract_strided_slice %38 {offsets = [0, 0], sizes = [48, 384], strides = [1, 1]} : vector<48x768xf32> to vector<48x384xf32>
    %40 = vector.extract_strided_slice %38 {offsets = [0, 384], sizes = [48, 384], strides = [1, 1]} : vector<48x768xf32> to vector<48x384xf32>
    %41 = arith.maximumf %39, %40 : vector<48x384xf32>
    %42 = vector.shape_cast %41 : vector<48x384xf32> to vector<2x24x384xf32>
    %43 = vector.extract_strided_slice %42 {offsets = [0, 0, 0], sizes = [2, 1, 384], strides = [1, 1, 1]} : vector<2x24x384xf32> to vector<2x1x384xf32>
    %44 = vector.shape_cast %43 : vector<2x1x384xf32> to vector<2x384xf32>
    %45 = vector.extract_strided_slice %42 {offsets = [0, 1, 0], sizes = [2, 1, 384], strides = [1, 1, 1]} : vector<2x24x384xf32> to vector<2x1x384xf32>
    %46 = vector.shape_cast %45 : vector<2x1x384xf32> to vector<2x384xf32>
    %47 = arith.maximumf %44, %46 : vector<2x384xf32>
    %c0_35 = arith.constant 0 : index
    %c0_36 = arith.constant 0 : index
    %c0_37 = arith.constant 0 : index
    %48 = vector.load %arg11[%c0_35, %c0_36, %c0_37] : memref<2x12x384xf32, #tpu.memory_space<vmem>>, vector<2x1x384xf32>
    %49 = vector.shape_cast %48 : vector<2x1x384xf32> to vector<2x384xf32>
    %50 = vector.shape_cast %47 : vector<2x384xf32> to vector<2x1x384xf32>
    tpu.vector_store %arg11[%c0_35, %c0_36, %c0_37], %50 {strides = array<i32>} : memref<2x12x384xf32, #tpu.memory_space<vmem>>, vector<2x1x384xf32>,
    %51 = vector.extract_strided_slice %42 {offsets = [0, 2, 0], sizes = [2, 1, 384], strides = [1, 1, 1]} : vector<2x24x384xf32> to vector<2x1x384xf32>
    %52 = vector.shape_cast %51 : vector<2x1x384xf32> to vector<2x384xf32>
    %53 = vector.extract_strided_slice %42 {offsets = [0, 3, 0], sizes = [2, 1, 384], strides = [1, 1, 1]} : vector<2x24x384xf32> to vector<2x1x384xf32>
    %54 = vector.shape_cast %53 : vector<2x1x384xf32> to vector<2x384xf32>
    %55 = arith.maximumf %52, %54 : vector<2x384xf32>
    %c0_38 = arith.constant 0 : index
    %c1_39 = arith.constant 1 : index
    %c0_40 = arith.constant 0 : index
    %56 = vector.load %arg11[%c0_38, %c1_39, %c0_40] : memref<2x12x384xf32, #tpu.memory_space<vmem>>, vector<2x1x384xf32>
    %57 = vector.shape_cast %56 : vector<2x1x384xf32> to vector<2x384xf32>
    %58 = vector.shape_cast %55 : vector<2x384xf32> to vector<2x1x384xf32>
    tpu.vector_store %arg11[%c0_38, %c1_39, %c0_40], %58 {strides = array<i32>} : memref<2x12x384xf32, #tpu.memory_space<vmem>>, vector<2x1x384xf32>,
    %59 = vector.extract_strided_slice %42 {offsets = [0, 4, 0], sizes = [2, 1, 384], strides = [1, 1, 1]} : vector<2x24x384xf32> to vector<2x1x384xf32>
    %60 = vector.shape_cast %59 : vector<2x1x384xf32> to vector<2x384xf32>
    %61 = vector.extract_strided_slice %42 {offsets = [0, 5, 0], sizes = [2, 1, 384], strides = [1, 1, 1]} : vector<2x24x384xf32> to vector<2x1x384xf32>
    %62 = vector.shape_cast %61 : vector<2x1x384xf32> to vector<2x384xf32>
    %63 = arith.maximumf %60, %62 : vector<2x384xf32>
    %c0_41 = arith.constant 0 : index
    %c2_42 = arith.constant 2 : index
    %c0_43 = arith.constant 0 : index
    %64 = vector.load %arg11[%c0_41, %c2_42, %c0_43] : memref<2x12x384xf32, #tpu.memory_space<vmem>>, vector<2x1x384xf32>
    %65 = vector.shape_cast %64 : vector<2x1x384xf32> to vector<2x384xf32>
    %66 = vector.shape_cast %63 : vector<2x384xf32> to vector<2x1x384xf32>
    tpu.vector_store %arg11[%c0_41, %c2_42, %c0_43], %66 {strides = array<i32>} : memref<2x12x384xf32, #tpu.memory_space<vmem>>, vector<2x1x384xf32>,
    %67 = vector.extract_strided_slice %42 {offsets = [0, 6, 0], sizes = [2, 1, 384], strides = [1, 1, 1]} : vector<2x24x384xf32> to vector<2x1x384xf32>
    %68 = vector.shape_cast %67 : vector<2x1x384xf32> to vector<2x384xf32>
    %69 = vector.extract_strided_slice %42 {offsets = [0, 7, 0], sizes = [2, 1, 384], strides = [1, 1, 1]} : vector<2x24x384xf32> to vector<2x1x384xf32>
    %70 = vector.shape_cast %69 : vector<2x1x384xf32> to vector<2x384xf32>
    %71 = arith.maximumf %68, %70 : vector<2x384xf32>
    %c0_44 = arith.constant 0 : index
    %c3_45 = arith.constant 3 : index
    %c0_46 = arith.constant 0 : index
    %72 = vector.load %arg11[%c0_44, %c3_45, %c0_46] : memref<2x12x384xf32, #tpu.memory_space<vmem>>, vector<2x1x384xf32>
    %73 = vector.shape_cast %72 : vector<2x1x384xf32> to vector<2x384xf32>
    %74 = vector.shape_cast %71 : vector<2x384xf32> to vector<2x1x384xf32>
    tpu.vector_store %arg11[%c0_44, %c3_45, %c0_46], %74 {strides = array<i32>} : memref<2x12x384xf32, #tpu.memory_space<vmem>>, vector<2x1x384xf32>,
    %75 = vector.extract_strided_slice %42 {offsets = [0, 8, 0], sizes = [2, 1, 384], strides = [1, 1, 1]} : vector<2x24x384xf32> to vector<2x1x384xf32>
    %76 = vector.shape_cast %75 : vector<2x1x384xf32> to vector<2x384xf32>
    %77 = vector.extract_strided_slice %42 {offsets = [0, 9, 0], sizes = [2, 1, 384], strides = [1, 1, 1]} : vector<2x24x384xf32> to vector<2x1x384xf32>
    %78 = vector.shape_cast %77 : vector<2x1x384xf32> to vector<2x384xf32>
    %79 = arith.maximumf %76, %78 : vector<2x384xf32>
    %c0_47 = arith.constant 0 : index
    %c4_48 = arith.constant 4 : index
    %c0_49 = arith.constant 0 : index
    %80 = vector.load %arg11[%c0_47, %c4_48, %c0_49] : memref<2x12x384xf32, #tpu.memory_space<vmem>>, vector<2x1x384xf32>
    %81 = vector.shape_cast %80 : vector<2x1x384xf32> to vector<2x384xf32>
    %82 = vector.shape_cast %79 : vector<2x384xf32> to vector<2x1x384xf32>
    tpu.vector_store %arg11[%c0_47, %c4_48, %c0_49], %82 {strides = array<i32>} : memref<2x12x384xf32, #tpu.memory_space<vmem>>, vector<2x1x384xf32>,
    %83 = vector.extract_strided_slice %42 {offsets = [0, 10, 0], sizes = [2, 1, 384], strides = [1, 1, 1]} : vector<2x24x384xf32> to vector<2x1x384xf32>
    %84 = vector.shape_cast %83 : vector<2x1x384xf32> to vector<2x384xf32>
    %85 = vector.extract_strided_slice %42 {offsets = [0, 11, 0], sizes = [2, 1, 384], strides = [1, 1, 1]} : vector<2x24x384xf32> to vector<2x1x384xf32>
    %86 = vector.shape_cast %85 : vector<2x1x384xf32> to vector<2x384xf32>
    %87 = arith.maximumf %84, %86 : vector<2x384xf32>
    %c0_50 = arith.constant 0 : index
    %c5 = arith.constant 5 : index
    %c0_51 = arith.constant 0 : index
    %88 = vector.load %arg11[%c0_50, %c5, %c0_51] : memref<2x12x384xf32, #tpu.memory_space<vmem>>, vector<2x1x384xf32>
    %89 = vector.shape_cast %88 : vector<2x1x384xf32> to vector<2x384xf32>
    %90 = vector.shape_cast %87 : vector<2x384xf32> to vector<2x1x384xf32>
    tpu.vector_store %arg11[%c0_50, %c5, %c0_51], %90 {strides = array<i32>} : memref<2x12x384xf32, #tpu.memory_space<vmem>>, vector<2x1x384xf32>,
    %91 = vector.extract_strided_slice %42 {offsets = [0, 12, 0], sizes = [2, 1, 384], strides = [1, 1, 1]} : vector<2x24x384xf32> to vector<2x1x384xf32>
    %92 = vector.shape_cast %91 : vector<2x1x384xf32> to vector<2x384xf32>
    %93 = vector.extract_strided_slice %42 {offsets = [0, 13, 0], sizes = [2, 1, 384], strides = [1, 1, 1]} : vector<2x24x384xf32> to vector<2x1x384xf32>
    %94 = vector.shape_cast %93 : vector<2x1x384xf32> to vector<2x384xf32>
    %95 = arith.maximumf %92, %94 : vector<2x384xf32>
    %c0_52 = arith.constant 0 : index
    %c6 = arith.constant 6 : index
    %c0_53 = arith.constant 0 : index
    %96 = vector.load %arg11[%c0_52, %c6, %c0_53] : memref<2x12x384xf32, #tpu.memory_space<vmem>>, vector<2x1x384xf32>
    %97 = vector.shape_cast %96 : vector<2x1x384xf32> to vector<2x384xf32>
    %98 = vector.shape_cast %95 : vector<2x384xf32> to vector<2x1x384xf32>
    tpu.vector_store %arg11[%c0_52, %c6, %c0_53], %98 {strides = array<i32>} : memref<2x12x384xf32, #tpu.memory_space<vmem>>, vector<2x1x384xf32>,
    %99 = vector.extract_strided_slice %42 {offsets = [0, 14, 0], sizes = [2, 1, 384], strides = [1, 1, 1]} : vector<2x24x384xf32> to vector<2x1x384xf32>
    %100 = vector.shape_cast %99 : vector<2x1x384xf32> to vector<2x384xf32>
    %101 = vector.extract_strided_slice %42 {offsets = [0, 15, 0], sizes = [2, 1, 384], strides = [1, 1, 1]} : vector<2x24x384xf32> to vector<2x1x384xf32>
    %102 = vector.shape_cast %101 : vector<2x1x384xf32> to vector<2x384xf32>
    %103 = arith.maximumf %100, %102 : vector<2x384xf32>
    %c0_54 = arith.constant 0 : index
    %c7 = arith.constant 7 : index
    %c0_55 = arith.constant 0 : index
    %104 = vector.load %arg11[%c0_54, %c7, %c0_55] : memref<2x12x384xf32, #tpu.memory_space<vmem>>, vector<2x1x384xf32>
    %105 = vector.shape_cast %104 : vector<2x1x384xf32> to vector<2x384xf32>
    %106 = vector.shape_cast %103 : vector<2x384xf32> to vector<2x1x384xf32>
    tpu.vector_store %arg11[%c0_54, %c7, %c0_55], %106 {strides = array<i32>} : memref<2x12x384xf32, #tpu.memory_space<vmem>>, vector<2x1x384xf32>,
    %107 = vector.extract_strided_slice %42 {offsets = [0, 16, 0], sizes = [2, 1, 384], strides = [1, 1, 1]} : vector<2x24x384xf32> to vector<2x1x384xf32>
    %108 = vector.shape_cast %107 : vector<2x1x384xf32> to vector<2x384xf32>
    %109 = vector.extract_strided_slice %42 {offsets = [0, 17, 0], sizes = [2, 1, 384], strides = [1, 1, 1]} : vector<2x24x384xf32> to vector<2x1x384xf32>
    %110 = vector.shape_cast %109 : vector<2x1x384xf32> to vector<2x384xf32>
    %111 = arith.maximumf %108, %110 : vector<2x384xf32>
    %c0_56 = arith.constant 0 : index
    %c8 = arith.constant 8 : index
    %c0_57 = arith.constant 0 : index
    %112 = vector.load %arg11[%c0_56, %c8, %c0_57] : memref<2x12x384xf32, #tpu.memory_space<vmem>>, vector<2x1x384xf32>
    %113 = vector.shape_cast %112 : vector<2x1x384xf32> to vector<2x384xf32>
    %114 = vector.shape_cast %111 : vector<2x384xf32> to vector<2x1x384xf32>
    tpu.vector_store %arg11[%c0_56, %c8, %c0_57], %114 {strides = array<i32>} : memref<2x12x384xf32, #tpu.memory_space<vmem>>, vector<2x1x384xf32>,
    %115 = vector.extract_strided_slice %42 {offsets = [0, 18, 0], sizes = [2, 1, 384], strides = [1, 1, 1]} : vector<2x24x384xf32> to vector<2x1x384xf32>
    %116 = vector.shape_cast %115 : vector<2x1x384xf32> to vector<2x384xf32>
    %117 = vector.extract_strided_slice %42 {offsets = [0, 19, 0], sizes = [2, 1, 384], strides = [1, 1, 1]} : vector<2x24x384xf32> to vector<2x1x384xf32>
    %118 = vector.shape_cast %117 : vector<2x1x384xf32> to vector<2x384xf32>
    %119 = arith.maximumf %116, %118 : vector<2x384xf32>
    %c0_58 = arith.constant 0 : index
    %c9 = arith.constant 9 : index
    %c0_59 = arith.constant 0 : index
    %120 = vector.load %arg11[%c0_58, %c9, %c0_59] : memref<2x12x384xf32, #tpu.memory_space<vmem>>, vector<2x1x384xf32>
    %121 = vector.shape_cast %120 : vector<2x1x384xf32> to vector<2x384xf32>
    %122 = vector.shape_cast %119 : vector<2x384xf32> to vector<2x1x384xf32>
    tpu.vector_store %arg11[%c0_58, %c9, %c0_59], %122 {strides = array<i32>} : memref<2x12x384xf32, #tpu.memory_space<vmem>>, vector<2x1x384xf32>,
    %123 = vector.extract_strided_slice %42 {offsets = [0, 20, 0], sizes = [2, 1, 384], strides = [1, 1, 1]} : vector<2x24x384xf32> to vector<2x1x384xf32>
    %124 = vector.shape_cast %123 : vector<2x1x384xf32> to vector<2x384xf32>
    %125 = vector.extract_strided_slice %42 {offsets = [0, 21, 0], sizes = [2, 1, 384], strides = [1, 1, 1]} : vector<2x24x384xf32> to vector<2x1x384xf32>
    %126 = vector.shape_cast %125 : vector<2x1x384xf32> to vector<2x384xf32>
    %127 = arith.maximumf %124, %126 : vector<2x384xf32>
    %c0_60 = arith.constant 0 : index
    %c10 = arith.constant 10 : index
    %c0_61 = arith.constant 0 : index
    %128 = vector.load %arg11[%c0_60, %c10, %c0_61] : memref<2x12x384xf32, #tpu.memory_space<vmem>>, vector<2x1x384xf32>
    %129 = vector.shape_cast %128 : vector<2x1x384xf32> to vector<2x384xf32>
    %130 = vector.shape_cast %127 : vector<2x384xf32> to vector<2x1x384xf32>
    tpu.vector_store %arg11[%c0_60, %c10, %c0_61], %130 {strides = array<i32>} : memref<2x12x384xf32, #tpu.memory_space<vmem>>, vector<2x1x384xf32>,
    %131 = vector.extract_strided_slice %42 {offsets = [0, 22, 0], sizes = [2, 1, 384], strides = [1, 1, 1]} : vector<2x24x384xf32> to vector<2x1x384xf32>
    %132 = vector.shape_cast %131 : vector<2x1x384xf32> to vector<2x384xf32>
    %133 = vector.extract_strided_slice %42 {offsets = [0, 23, 0], sizes = [2, 1, 384], strides = [1, 1, 1]} : vector<2x24x384xf32> to vector<2x1x384xf32>
    %134 = vector.shape_cast %133 : vector<2x1x384xf32> to vector<2x384xf32>
    %135 = arith.maximumf %132, %134 : vector<2x384xf32>
    %c0_62 = arith.constant 0 : index
    %c11 = arith.constant 11 : index
    %c0_63 = arith.constant 0 : index
    %136 = vector.load %arg11[%c0_62, %c11, %c0_63] : memref<2x12x384xf32, #tpu.memory_space<vmem>>, vector<2x1x384xf32>
    %137 = vector.shape_cast %136 : vector<2x1x384xf32> to vector<2x384xf32>
    %138 = vector.shape_cast %135 : vector<2x384xf32> to vector<2x1x384xf32>
    tpu.vector_store %arg11[%c0_62, %c11, %c0_63], %138 {strides = array<i32>} : memref<2x12x384xf32, #tpu.memory_space<vmem>>, vector<2x1x384xf32>,
    %cst_64 = arith.constant 0.000000e+00 : f32
    %139 = vector.broadcast %cst_64 : f32 to vector<16x512xf32>
    %c0_65 = arith.constant 0 : index
    %c0_66 = arith.constant 0 : index
    %c0_67 = arith.constant 0 : index
    %140 = vector.load %arg11[%c0_65, %c0_66, %c0_67] : memref<2x12x384xf32, #tpu.memory_space<vmem>>, vector<2x8x384xf32>
    %141 = vector.shape_cast %140 : vector<2x8x384xf32> to vector<16x384xf32>
    %c0_68 = arith.constant 0 : index
    %c0_69 = arith.constant 0 : index
    %c0_70 = arith.constant 0 : index
    %142 = vector.load %arg5[%c0_68, %c0_69, %c0_70] : memref<5x384x512xf32, #tpu.memory_space<vmem>>, vector<1x384x512xf32>
    %143 = vector.shape_cast %142 : vector<1x384x512xf32> to vector<384x512xf32>
    %cst_71 = arith.constant dense<0.000000e+00> : vector<16x512xf32>
    %144 = tpu.matmul %141, %143, %cst_71 {dimension_numbers = #tpu.dot_dimension_numbers<[1], [0], [0], [1], [0, 0, 1, 1], [], []>} : vector<16x384xf32>, vector<384x512xf32>, vector<16x512xf32> -> vector<16x512xf32>
    %145 = arith.addf %139, %144 : vector<16x512xf32>
    %c0_72 = arith.constant 0 : index
    %c1_73 = arith.constant 1 : index
    %c0_74 = arith.constant 0 : index
    %146 = vector.load %arg11[%c0_72, %c1_73, %c0_74] : memref<2x12x384xf32, #tpu.memory_space<vmem>>, vector<2x8x384xf32>
    %147 = vector.shape_cast %146 : vector<2x8x384xf32> to vector<16x384xf32>
    %c1_75 = arith.constant 1 : index
    %c0_76 = arith.constant 0 : index
    %c0_77 = arith.constant 0 : index
    %148 = vector.load %arg5[%c1_75, %c0_76, %c0_77] : memref<5x384x512xf32, #tpu.memory_space<vmem>>, vector<1x384x512xf32>
    %149 = vector.shape_cast %148 : vector<1x384x512xf32> to vector<384x512xf32>
    %cst_78 = arith.constant dense<0.000000e+00> : vector<16x512xf32>
    %150 = tpu.matmul %147, %149, %cst_78 {dimension_numbers = #tpu.dot_dimension_numbers<[1], [0], [0], [1], [0, 0, 1, 1], [], []>} : vector<16x384xf32>, vector<384x512xf32>, vector<16x512xf32> -> vector<16x512xf32>
    %151 = arith.addf %145, %150 : vector<16x512xf32>
    %c0_79 = arith.constant 0 : index
    %c2_80 = arith.constant 2 : index
    %c0_81 = arith.constant 0 : index
    %152 = vector.load %arg11[%c0_79, %c2_80, %c0_81] : memref<2x12x384xf32, #tpu.memory_space<vmem>>, vector<2x8x384xf32>
    %153 = vector.shape_cast %152 : vector<2x8x384xf32> to vector<16x384xf32>
    %c2_82 = arith.constant 2 : index
    %c0_83 = arith.constant 0 : index
    %c0_84 = arith.constant 0 : index
    %154 = vector.load %arg5[%c2_82, %c0_83, %c0_84] : memref<5x384x512xf32, #tpu.memory_space<vmem>>, vector<1x384x512xf32>
    %155 = vector.shape_cast %154 : vector<1x384x512xf32> to vector<384x512xf32>
    %cst_85 = arith.constant dense<0.000000e+00> : vector<16x512xf32>
    %156 = tpu.matmul %153, %155, %cst_85 {dimension_numbers = #tpu.dot_dimension_numbers<[1], [0], [0], [1], [0, 0, 1, 1], [], []>} : vector<16x384xf32>, vector<384x512xf32>, vector<16x512xf32> -> vector<16x512xf32>
    %157 = arith.addf %151, %156 : vector<16x512xf32>
    %c0_86 = arith.constant 0 : index
    %c3_87 = arith.constant 3 : index
    %c0_88 = arith.constant 0 : index
    %158 = vector.load %arg11[%c0_86, %c3_87, %c0_88] : memref<2x12x384xf32, #tpu.memory_space<vmem>>, vector<2x8x384xf32>
    %159 = vector.shape_cast %158 : vector<2x8x384xf32> to vector<16x384xf32>
    %c3_89 = arith.constant 3 : index
    %c0_90 = arith.constant 0 : index
    %c0_91 = arith.constant 0 : index
    %160 = vector.load %arg5[%c3_89, %c0_90, %c0_91] : memref<5x384x512xf32, #tpu.memory_space<vmem>>, vector<1x384x512xf32>
    %161 = vector.shape_cast %160 : vector<1x384x512xf32> to vector<384x512xf32>
    %cst_92 = arith.constant dense<0.000000e+00> : vector<16x512xf32>
    %162 = tpu.matmul %159, %161, %cst_92 {dimension_numbers = #tpu.dot_dimension_numbers<[1], [0], [0], [1], [0, 0, 1, 1], [], []>} : vector<16x384xf32>, vector<384x512xf32>, vector<16x512xf32> -> vector<16x512xf32>
    %163 = arith.addf %157, %162 : vector<16x512xf32>
    %c0_93 = arith.constant 0 : index
    %c4_94 = arith.constant 4 : index
    %c0_95 = arith.constant 0 : index
    %164 = vector.load %arg11[%c0_93, %c4_94, %c0_95] : memref<2x12x384xf32, #tpu.memory_space<vmem>>, vector<2x8x384xf32>
    %165 = vector.shape_cast %164 : vector<2x8x384xf32> to vector<16x384xf32>
    %c4_96 = arith.constant 4 : index
    %c0_97 = arith.constant 0 : index
    %c0_98 = arith.constant 0 : index
    %166 = vector.load %arg5[%c4_96, %c0_97, %c0_98] : memref<5x384x512xf32, #tpu.memory_space<vmem>>, vector<1x384x512xf32>
    %167 = vector.shape_cast %166 : vector<1x384x512xf32> to vector<384x512xf32>
    %cst_99 = arith.constant dense<0.000000e+00> : vector<16x512xf32>
    %168 = tpu.matmul %165, %167, %cst_99 {dimension_numbers = #tpu.dot_dimension_numbers<[1], [0], [0], [1], [0, 0, 1, 1], [], []>} : vector<16x384xf32>, vector<384x512xf32>, vector<16x512xf32> -> vector<16x512xf32>
    %169 = arith.addf %163, %168 : vector<16x512xf32>
    %c0_100 = arith.constant 0 : index
    %c0_101 = arith.constant 0 : index
    %170 = vector.load %arg6[%c0_100, %c0_101] : memref<1x512xf32, #tpu.memory_space<vmem>>, vector<1x512xf32>
    %171 = vector.broadcast %170 : vector<1x512xf32> to vector<16x512xf32>
    %172 = arith.mulf %169, %171 : vector<16x512xf32>
    %c0_102 = arith.constant 0 : index
    %c0_103 = arith.constant 0 : index
    %173 = vector.load %arg7[%c0_102, %c0_103] : memref<1x512xf32, #tpu.memory_space<vmem>>, vector<1x512xf32>
    %174 = vector.broadcast %173 : vector<1x512xf32> to vector<16x512xf32>
    %175 = arith.addf %172, %174 : vector<16x512xf32>
    %cst_104 = arith.constant 0.000000e+00 : f32
    %176 = vector.broadcast %cst_104 : f32 to vector<16x512xf32>
    %177 = arith.maximumf %175, %176 : vector<16x512xf32>
    %178 = vector.extract_strided_slice %177 {offsets = [0, 0], sizes = [16, 256], strides = [1, 1]} : vector<16x512xf32> to vector<16x256xf32>
    %179 = vector.extract_strided_slice %177 {offsets = [0, 256], sizes = [16, 256], strides = [1, 1]} : vector<16x512xf32> to vector<16x256xf32>
    %180 = arith.maximumf %178, %179 : vector<16x256xf32>
    %181 = vector.shape_cast %180 : vector<16x256xf32> to vector<2x8x256xf32>
    %182 = vector.extract_strided_slice %181 {offsets = [0, 0, 0], sizes = [2, 1, 256], strides = [1, 1, 1]} : vector<2x8x256xf32> to vector<2x1x256xf32>
    %183 = vector.shape_cast %182 : vector<2x1x256xf32> to vector<2x256xf32>
    %184 = vector.extract_strided_slice %181 {offsets = [0, 1, 0], sizes = [2, 1, 256], strides = [1, 1, 1]} : vector<2x8x256xf32> to vector<2x1x256xf32>
    %185 = vector.shape_cast %184 : vector<2x1x256xf32> to vector<2x256xf32>
    %186 = arith.maximumf %183, %185 : vector<2x256xf32>
    %c0_105 = arith.constant 0 : index
    %c0_106 = arith.constant 0 : index
    %c0_107 = arith.constant 0 : index
    %187 = vector.load %arg12[%c0_105, %c0_106, %c0_107] : memref<2x4x256xf32, #tpu.memory_space<vmem>>, vector<2x1x256xf32>
    %188 = vector.shape_cast %187 : vector<2x1x256xf32> to vector<2x256xf32>
    %189 = vector.shape_cast %186 : vector<2x256xf32> to vector<2x1x256xf32>
    tpu.vector_store %arg12[%c0_105, %c0_106, %c0_107], %189 {strides = array<i32>} : memref<2x4x256xf32, #tpu.memory_space<vmem>>, vector<2x1x256xf32>,
    %190 = vector.extract_strided_slice %181 {offsets = [0, 2, 0], sizes = [2, 1, 256], strides = [1, 1, 1]} : vector<2x8x256xf32> to vector<2x1x256xf32>
    %191 = vector.shape_cast %190 : vector<2x1x256xf32> to vector<2x256xf32>
    %192 = vector.extract_strided_slice %181 {offsets = [0, 3, 0], sizes = [2, 1, 256], strides = [1, 1, 1]} : vector<2x8x256xf32> to vector<2x1x256xf32>
    %193 = vector.shape_cast %192 : vector<2x1x256xf32> to vector<2x256xf32>
    %194 = arith.maximumf %191, %193 : vector<2x256xf32>
    %c0_108 = arith.constant 0 : index
    %c1_109 = arith.constant 1 : index
    %c0_110 = arith.constant 0 : index
    %195 = vector.load %arg12[%c0_108, %c1_109, %c0_110] : memref<2x4x256xf32, #tpu.memory_space<vmem>>, vector<2x1x256xf32>
    %196 = vector.shape_cast %195 : vector<2x1x256xf32> to vector<2x256xf32>
    %197 = vector.shape_cast %194 : vector<2x256xf32> to vector<2x1x256xf32>
    tpu.vector_store %arg12[%c0_108, %c1_109, %c0_110], %197 {strides = array<i32>} : memref<2x4x256xf32, #tpu.memory_space<vmem>>, vector<2x1x256xf32>,
    %198 = vector.extract_strided_slice %181 {offsets = [0, 4, 0], sizes = [2, 1, 256], strides = [1, 1, 1]} : vector<2x8x256xf32> to vector<2x1x256xf32>
    %199 = vector.shape_cast %198 : vector<2x1x256xf32> to vector<2x256xf32>
    %200 = vector.extract_strided_slice %181 {offsets = [0, 5, 0], sizes = [2, 1, 256], strides = [1, 1, 1]} : vector<2x8x256xf32> to vector<2x1x256xf32>
    %201 = vector.shape_cast %200 : vector<2x1x256xf32> to vector<2x256xf32>
    %202 = arith.maximumf %199, %201 : vector<2x256xf32>
    %c0_111 = arith.constant 0 : index
    %c2_112 = arith.constant 2 : index
    %c0_113 = arith.constant 0 : index
    %203 = vector.load %arg12[%c0_111, %c2_112, %c0_113] : memref<2x4x256xf32, #tpu.memory_space<vmem>>, vector<2x1x256xf32>
    %204 = vector.shape_cast %203 : vector<2x1x256xf32> to vector<2x256xf32>
    %205 = vector.shape_cast %202 : vector<2x256xf32> to vector<2x1x256xf32>
    tpu.vector_store %arg12[%c0_111, %c2_112, %c0_113], %205 {strides = array<i32>} : memref<2x4x256xf32, #tpu.memory_space<vmem>>, vector<2x1x256xf32>,
    %206 = vector.extract_strided_slice %181 {offsets = [0, 6, 0], sizes = [2, 1, 256], strides = [1, 1, 1]} : vector<2x8x256xf32> to vector<2x1x256xf32>
    %207 = vector.shape_cast %206 : vector<2x1x256xf32> to vector<2x256xf32>
    %208 = vector.extract_strided_slice %181 {offsets = [0, 7, 0], sizes = [2, 1, 256], strides = [1, 1, 1]} : vector<2x8x256xf32> to vector<2x1x256xf32>
    %209 = vector.shape_cast %208 : vector<2x1x256xf32> to vector<2x256xf32>
    %210 = arith.maximumf %207, %209 : vector<2x256xf32>
    %c0_114 = arith.constant 0 : index
    %c3_115 = arith.constant 3 : index
    %c0_116 = arith.constant 0 : index
    %211 = vector.load %arg12[%c0_114, %c3_115, %c0_116] : memref<2x4x256xf32, #tpu.memory_space<vmem>>, vector<2x1x256xf32>
    %212 = vector.shape_cast %211 : vector<2x1x256xf32> to vector<2x256xf32>
    %213 = vector.shape_cast %210 : vector<2x256xf32> to vector<2x1x256xf32>
    tpu.vector_store %arg12[%c0_114, %c3_115, %c0_116], %213 {strides = array<i32>} : memref<2x4x256xf32, #tpu.memory_space<vmem>>, vector<2x1x256xf32>,
    %c0_117 = arith.constant 0 : index
    %c0_118 = arith.constant 0 : index
    %c0_119 = arith.constant 0 : index
    %214 = vector.load %arg12[%c0_117, %c0_118, %c0_119] : memref<2x4x256xf32, #tpu.memory_space<vmem>>, vector<2x1x256xf32>
    %215 = vector.shape_cast %214 : vector<2x1x256xf32> to vector<2x256xf32>
    %c0_120 = arith.constant 0 : index
    %c1_121 = arith.constant 1 : index
    %c0_122 = arith.constant 0 : index
    %216 = vector.load %arg12[%c0_120, %c1_121, %c0_122] : memref<2x4x256xf32, #tpu.memory_space<vmem>>, vector<2x1x256xf32>
    %217 = vector.shape_cast %216 : vector<2x1x256xf32> to vector<2x256xf32>
    %c0_123 = arith.constant 0 : index
    %c2_124 = arith.constant 2 : index
    %c0_125 = arith.constant 0 : index
    %218 = vector.load %arg12[%c0_123, %c2_124, %c0_125] : memref<2x4x256xf32, #tpu.memory_space<vmem>>, vector<2x1x256xf32>
    %219 = vector.shape_cast %218 : vector<2x1x256xf32> to vector<2x256xf32>
    %c0_126 = arith.constant 0 : index
    %c3_127 = arith.constant 3 : index
    %c0_128 = arith.constant 0 : index
    %220 = vector.load %arg12[%c0_126, %c3_127, %c0_128] : memref<2x4x256xf32, #tpu.memory_space<vmem>>, vector<2x1x256xf32>
    %221 = vector.shape_cast %220 : vector<2x1x256xf32> to vector<2x256xf32>
    %222 = tpu.concatenate %215, %217, %219, %221 in 1 : vector<2x256xf32>, vector<2x256xf32>, vector<2x256xf32>, vector<2x256xf32> -> vector<2x1024xf32>
    %c0_129 = arith.constant 0 : index
    %c0_130 = arith.constant 0 : index
    %223 = vector.load %arg8[%c0_129, %c0_130] : memref<1024x1024xf32, #tpu.memory_space<vmem>>, vector<1024x1024xf32>
    %cst_131 = arith.constant dense<0.000000e+00> : vector<2x1024xf32>
    %224 = tpu.matmul %222, %223, %cst_131 {dimension_numbers = #tpu.dot_dimension_numbers<[1], [0], [0], [1], [0, 0, 1, 1], [], []>} : vector<2x1024xf32>, vector<1024x1024xf32>, vector<2x1024xf32> -> vector<2x1024xf32>
    %c0_132 = arith.constant 0 : index
    %c0_133 = arith.constant 0 : index
    %225 = vector.load %arg9[%c0_132, %c0_133] : memref<1x1024xf32, #tpu.memory_space<vmem>>, vector<1x1024xf32>
    %226 = vector.broadcast %225 : vector<1x1024xf32> to vector<2x1024xf32>
    %227 = arith.addf %224, %226 : vector<2x1024xf32>
    %c0_134 = arith.constant 0 : index
    %c0_135 = arith.constant 0 : index
    %228 = vector.load %arg10[%c0_134, %c0_135] : memref<2x1024xf32, #tpu.memory_space<vmem>>, vector<2x1024xf32>
    tpu.vector_store %arg10[%c0_134, %c0_135], %227 {strides = array<i32>} : memref<2x1024xf32, #tpu.memory_space<vmem>>, vector<2x1024xf32>,
    return
  }
  func.func @transform_0(%arg0: i32) -> (i32, i32, i32) {
    %c0_i32 = arith.constant 0 : i32
    %c0_i32_0 = arith.constant 0 : i32
    %c0_i32_1 = arith.constant 0 : i32
    return %arg0, %c0_i32, %c0_i32_0 : i32, i32, i32
  }
  func.func @transform_1(%arg0: i32) -> (i32, i32, i32) {
    %c0_i32 = arith.constant 0 : i32
    %c0_i32_0 = arith.constant 0 : i32
    %c0_i32_1 = arith.constant 0 : i32
    %c0_i32_2 = arith.constant 0 : i32
    return %c0_i32, %c0_i32_0, %c0_i32_1 : i32, i32, i32
  }
  func.func @transform_2(%arg0: i32) -> (i32, i32) {
    %c0_i32 = arith.constant 0 : i32
    %c0_i32_0 = arith.constant 0 : i32
    %c0_i32_1 = arith.constant 0 : i32
    return %c0_i32, %c0_i32_0 : i32, i32
  }
  func.func @transform_3(%arg0: i32) -> (i32, i32) {
    %c0_i32 = arith.constant 0 : i32
    %c0_i32_0 = arith.constant 0 : i32
    %c0_i32_1 = arith.constant 0 : i32
    return %c0_i32, %c0_i32_0 : i32, i32
  }
  func.func @transform_4(%arg0: i32) -> (i32, i32, i32) {
    %c0_i32 = arith.constant 0 : i32
    %c0_i32_0 = arith.constant 0 : i32
    %c0_i32_1 = arith.constant 0 : i32
    %c0_i32_2 = arith.constant 0 : i32
    return %c0_i32, %c0_i32_0, %c0_i32_1 : i32, i32, i32
  }
  func.func @transform_5(%arg0: i32) -> (i32, i32) {
    %c0_i32 = arith.constant 0 : i32
    %c0_i32_0 = arith.constant 0 : i32
    %c0_i32_1 = arith.constant 0 : i32
    return %c0_i32, %c0_i32_0 : i32, i32
  }
  func.func @transform_6(%arg0: i32) -> (i32, i32) {
    %c0_i32 = arith.constant 0 : i32
    %c0_i32_0 = arith.constant 0 : i32
    %c0_i32_1 = arith.constant 0 : i32
    return %c0_i32, %c0_i32_0 : i32, i32
  }
  func.func @transform_7(%arg0: i32) -> (i32, i32) {
    %c0_i32 = arith.constant 0 : i32
    %c0_i32_0 = arith.constant 0 : i32
    %c0_i32_1 = arith.constant 0 : i32
    return %c0_i32, %c0_i32_0 : i32, i32
  }
  func.func @transform_8(%arg0: i32) -> (i32, i32) {
    %c0_i32 = arith.constant 0 : i32
    %c0_i32_0 = arith.constant 0 : i32
    %c0_i32_1 = arith.constant 0 : i32
    return %c0_i32, %c0_i32_0 : i32, i32
  }
  func.func @transform_9(%arg0: i32) -> (i32, i32) {
    %c0_i32 = arith.constant 0 : i32
    %c0_i32_0 = arith.constant 0 : i32
    return %arg0, %c0_i32 : i32, i32
  }
}

</mosaic_0001>

<llo_original>
// kernel: tile.23
$region0: #{tile.23}
  #allocation0 [shape = 's32[1]{0}', space=sflag, size = 0x4, scoped, tag = 'scoped memory for tile.23']
  %s0 = inlined_call_operand.vmem [shape: f32[32], index: 0, kind: input, shape index: {}]
  %s1 = inlined_call_operand.vmem [shape: f32[24,32], index: 1, kind: output, shape index: {}]
  // Predicated region
  $region2: #{tile.23} parent=0 // pred_check
    _
  $region3: #{tile.23} parent=0 // pred_check_branch
    %3 = sbr.rel (0) target = $region5
  $region4: #{tile.23} parent=0 // pred_region
    _
  $region5: #{tile.23} parent=0 // pred_fallthru
    _
  %v4 = vld [vmem:[%s0] ss:$0 sm:$0xff]
  %5 = vst [vmem:[%s1] sm:$0xff] %v4
  %s6 = scalar_lea.vmem %s1, 8
  %7 = vst [vmem:[%s6] sm:$0xff] %v4
  %s8 = scalar_lea.vmem %s1, 16
  %9 = vst [vmem:[%s8] sm:$0xff] %v4

// kernel: tile.24
$region0: #{tile.24}
  %s0 = inlined_call_operand.vmem [shape: f32[24,32], index: 0, kind: input, shape index: {}]
  %s1 = inlined_call_operand.vmem [shape: f32[1,768], index: 1, kind: output, shape index: {}]
  $region1: #{tile.24} parent=0
    #allocation0 [shape = 'u8[24576]{0}', space=vmem, size = 0x6000, scoped, tag = 'scoped mem for output reshape']
    %v2 = vld [vmem:[%s0] ss:$4 sm:$0x3f]
    %vm3 = vcmask 261120
    %4 = vst.msk [vmem:[#allocation0] ss:$8 sm:$0xf] %vm3, %v2
    %5 = vst.msk [vmem:[#allocation0] ss:$8 sm:$0x30] %vm3, %v2
    %s6 = scalar_lea.vmem %s0, 3
    %v7 = vld [vmem:[%s6] ss:$4 sm:$0x3f]
    %8 = vrot.lane.b32.xlu0 %v7, 96
    %v9 = vpop.permute.xlu0 %8
    %vm10 = vcmask 1048320
    %11 = vst.msk [vmem:[#allocation0] ss:$8 sm:$0xf] %vm10, %v9
    %12 = vst.msk [vmem:[#allocation0] ss:$8 sm:$0x30] %vm10, %v9
    %s13 = scalar_lea.vmem %s0, 2
    %v14 = vld [vmem:[%s13] ss:$4 sm:$0x3f]
    %15 = vrot.lane.b32.xlu0 %v14, 64
    %v16 = vpop.permute.xlu0 %15
    %vm17 = vcmask 785920
    %18 = vst.msk [vmem:[#allocation0] ss:$8 sm:$0xf] %vm17, %v16
    %19 = vst.msk [vmem:[#allocation0] ss:$8 sm:$0x30] %vm17, %v16
    %s20 = scalar_lea.vmem %s0, 1
    %v21 = vld [vmem:[%s20] ss:$4 sm:$0x3f]
    %22 = vrot.lane.b32.xlu0 %v21, 32
    %v23 = vpop.permute.xlu0 %22
    %vm24 = vcmask 523520
    %25 = vst.msk [vmem:[#allocation0] ss:$8 sm:$0xf] %vm24, %v23
    %26 = vst.msk [vmem:[#allocation0] ss:$8 sm:$0x30] %vm24, %v23
    %s28 = sshllo.u32 0, 1
    %v30 = vld [vmem:[#allocation0] sm:%s28]
    %s31 = sshllo.u32 0, 1
    %32 = vst [vmem:[%s1] sm:%s31] %v30
    %s33 = scalar_lea.vmem [#allocation0], 8
    %v34 = vld [vmem:[%s33] sm:%s28]
    %s35 = sshllo.u32 0, 1
    %s36 = scalar_lea.vmem %s1, 1
    %37 = vst [vmem:[%s36] sm:%s35] %v34
    %s38 = scalar_lea.vmem [#allocation0], 16
    %v39 = vld [vmem:[%s38] sm:%s28]
    %s40 = sshllo.u32 0, 1
    %s41 = smul.addr 1, 2
    %s42 = scalar_lea.vmem %s1, %s41
    %43 = vst [vmem:[%s42] sm:%s40] %v39
    %s44 = scalar_lea.vmem [#allocation0], 24
    %v45 = vld [vmem:[%s44] sm:%s28]
    %s46 = sshllo.u32 0, 1
    %s47 = smul.addr 1, 3
    %s48 = scalar_lea.vmem %s1, %s47
    %49 = vst [vmem:[%s48] sm:%s46] %v45
    %s50 = scalar_lea.vmem [#allocation0], 32
    %v51 = vld [vmem:[%s50] sm:%s28]
    %s52 = sshllo.u32 0, 1
    %s53 = smul.addr 1, 4
    %s54 = scalar_lea.vmem %s1, %s53
    %55 = vst [vmem:[%s54] sm:%s52] %v51
    %s56 = scalar_lea.vmem [#allocation0], 40
    %v57 = vld [vmem:[%s56] sm:%s28]
    %s58 = sshllo.u32 0, 1
    %s59 = smul.addr 1, 5
    %s60 = scalar_lea.vmem %s1, %s59
    %61 = vst [vmem:[%s60] sm:%s58] %v57

// kernel: tile.33
$region0: #{tile.33}
  #allocation0 [shape = 's32[1]{0}', space=sflag, size = 0x4, scoped, tag = 'scoped memory for tile.33']
  %s0 = inlined_call_operand.vmem [shape: f32[64], index: 0, kind: input, shape index: {}]
  %s1 = inlined_call_operand.vmem [shape: f32[8,64], index: 1, kind: output, shape index: {}]
  // Predicated region
  $region2: #{tile.33} parent=0 // pred_check
    _
  $region3: #{tile.33} parent=0 // pred_check_branch
    %3 = sbr.rel (0) target = $region5
  $region4: #{tile.33} parent=0 // pred_region
    _
  $region5: #{tile.33} parent=0 // pred_fallthru
    _
  %v4 = vld [vmem:[%s0] ss:$0 sm:$0xff]
  %5 = vst [vmem:[%s1] sm:$0xff] %v4

// kernel: tile.34
$region0: #{tile.34}
  %s0 = inlined_call_operand.vmem [shape: f32[8,64], index: 0, kind: input, shape index: {}]
  %s1 = inlined_call_operand.vmem [shape: f32[1,512], index: 1, kind: output, shape index: {}]
  $region1: #{tile.34} parent=0
    #allocation0 [shape = 'u8[16384]{0}', space=vmem, size = 0x4000, scoped, tag = 'scoped mem for output reshape']
    %v2 = vld [vmem:[%s0] ss:$2 sm:$0xf]
    %vm3 = vcmask 523264
    %4 = vst.msk [vmem:[#allocation0] ss:$8 sm:$0xf] %vm3, %v2
    %s5 = scalar_lea.vmem %s0, 1
    %v6 = vld [vmem:[%s5] ss:$2 sm:$0xf]
    %7 = vrot.lane.b32.xlu0 %v6, 64
    %v8 = vpop.permute.xlu0 %7
    %vm9 = vcmask 1048064
    %10 = vst.msk [vmem:[#allocation0] ss:$8 sm:$0xf] %vm9, %v8
    %s12 = sshllo.u32 0, 1
    %v14 = vld [vmem:[#allocation0] sm:%s12]
    %s15 = sshllo.u32 0, 1
    %16 = vst [vmem:[%s1] sm:%s15] %v14
    %s17 = scalar_lea.vmem [#allocation0], 8
    %v18 = vld [vmem:[%s17] sm:%s12]
    %s19 = sshllo.u32 0, 1
    %s20 = scalar_lea.vmem %s1, 1
    %21 = vst [vmem:[%s20] sm:%s19] %v18
    %s22 = scalar_lea.vmem [#allocation0], 16
    %v23 = vld [vmem:[%s22] sm:%s12]
    %s24 = sshllo.u32 0, 1
    %s25 = smul.addr 1, 2
    %s26 = scalar_lea.vmem %s1, %s25
    %27 = vst [vmem:[%s26] sm:%s24] %v23
    %s28 = scalar_lea.vmem [#allocation0], 24
    %v29 = vld [vmem:[%s28] sm:%s12]
    %s30 = sshllo.u32 0, 1
    %s31 = smul.addr 1, 3
    %s32 = scalar_lea.vmem %s1, %s31
    %33 = vst [vmem:[%s32] sm:%s30] %v29

// kernel: csfe_forward.1
$region0: #{csfe_forward.1}
  #allocation0 [shape = 'u32[]', space=smem, size = 0x4, offset = 0x4, fixed_abs, tag = 'smem constant byte address 0x4 - core index']
  #allocation1 [shape = 'u32[144,128]{1,0:T(1,128)}', space=vmem, size = 0x12000, scoped, tag = 'internal scratch']
  #allocation2 [shape = 'f32[2,12,384]{2,1,0:T(8,128)}', space=vmem, size = 0xc000, scoped, tag = 'scratch operand']
  #allocation3 [shape = 'f32[2,4,256]{2,1,0:T(4,128)}', space=vmem, size = 0x2000, scoped, tag = 'scratch operand']
  %s0 = inlined_call_operand.vmem [shape: f32[2,28,28], index: 0, kind: input, shape index: {}]
  %s1 = inlined_call_operand.vmem [shape: f32[5,28,768], index: 1, kind: input, shape index: {}]
  %s2 = inlined_call_operand.vmem [shape: f32[1,768], index: 2, kind: input, shape index: {}]
  %s3 = inlined_call_operand.vmem [shape: f32[1,768], index: 3, kind: input, shape index: {}]
  %s4 = inlined_call_operand.vmem [shape: f32[5,384,512], index: 4, kind: input, shape index: {}]
  %s5 = inlined_call_operand.vmem [shape: f32[1,512], index: 5, kind: input, shape index: {}]
  %s6 = inlined_call_operand.vmem [shape: f32[1,512], index: 6, kind: input, shape index: {}]
  %s7 = inlined_call_operand.vmem [shape: f32[1024,1024], index: 7, kind: input, shape index: {}]
  %s8 = inlined_call_operand.vmem [shape: f32[1,1024], index: 8, kind: input, shape index: {}]
  %s9 = inlined_call_operand.hbm [shape: f32[2,1024], index: 9, kind: output, shape index: {}]
  %s10 = sld [smem:[#allocation0]]
  $region46: #{csfe_forward.1} parent=0
    _
  %s12 = ssub.s32 1, %s10
  %s13 = scalar_select 0, %s12, %s10
  $region1: #{csfe_forward.1} parent=0
    #allocation4 [shape = 'u8[8192]{0}', space=vmem, size = 0x2000, scoped, tag = 'output window, operand 0, single buffered']
    #allocation5 [shape = 's32[1]{0}', space=sflag, size = 0x4, scoped, tag = 'scoped memory for csfe_forward.1']
    %14 = vsyncpa [#allocation5], 0
    // Predicated region
    $region2: #{csfe_forward.1} parent=1 // pred_check
      _
    $region3: #{csfe_forward.1} parent=1 // pred_check_branch
      %16 = sbr.rel (0) target = $region5
    $region4: #{csfe_forward.1} parent=1 // pred_region
      _
    $region5: #{csfe_forward.1} parent=1 // pred_fallthru
      _
    // Predicated region
    $region6: #{csfe_forward.1} parent=1 // pred_check
      _
    $region7: #{csfe_forward.1} parent=1 // pred_check_branch
      %18 = sbr.rel (0) target = $region9
    $region8: #{csfe_forward.1} parent=1 // pred_region
      _
    $region9: #{csfe_forward.1} parent=1 // pred_fallthru
      _
    // Predicated region
    $region10: #{csfe_forward.1} parent=1 // pred_check
      _
    $region11: #{csfe_forward.1} parent=1 // pred_check_branch
      %20 = sbr.rel (0) target = $region13
    $region12: #{csfe_forward.1} parent=1 // pred_region
      _
    $region13: #{csfe_forward.1} parent=1 // pred_fallthru
      _
    // Predicated region
    $region14: #{csfe_forward.1} parent=1 // pred_check
      _
    $region15: #{csfe_forward.1} parent=1 // pred_check_branch
      %22 = sbr.rel (0) target = $region17
    $region16: #{csfe_forward.1} parent=1 // pred_region
      _
    $region17: #{csfe_forward.1} parent=1 // pred_fallthru
      _
    // Predicated region
    $region18: #{csfe_forward.1} parent=1 // pred_check
      _
    $region19: #{csfe_forward.1} parent=1 // pred_check_branch
      %24 = sbr.rel (0) target = $region21
    $region20: #{csfe_forward.1} parent=1 // pred_region
      _
    $region21: #{csfe_forward.1} parent=1 // pred_fallthru
      _
    // Predicated region
    $region22: #{csfe_forward.1} parent=1 // pred_check
      _
    $region23: #{csfe_forward.1} parent=1 // pred_check_branch
      %26 = sbr.rel (0) target = $region25
    $region24: #{csfe_forward.1} parent=1 // pred_region
      _
    $region25: #{csfe_forward.1} parent=1 // pred_fallthru
      _
    // Predicated region
    $region26: #{csfe_forward.1} parent=1 // pred_check
      _
    $region27: #{csfe_forward.1} parent=1 // pred_check_branch
      %28 = sbr.rel (0) target = $region29
    $region28: #{csfe_forward.1} parent=1 // pred_region
      _
    $region29: #{csfe_forward.1} parent=1 // pred_fallthru
      _
    // Predicated region
    $region30: #{csfe_forward.1} parent=1 // pred_check
      _
    $region31: #{csfe_forward.1} parent=1 // pred_check_branch
      %30 = sbr.rel (0) target = $region33
    $region32: #{csfe_forward.1} parent=1 // pred_region
      _
    $region33: #{csfe_forward.1} parent=1 // pred_fallthru
      _
    // Predicated region
    $region34: #{csfe_forward.1} parent=1 // pred_check
      _
    $region35: #{csfe_forward.1} parent=1 // pred_check_branch
      %32 = sbr.rel (0) target = $region37
    $region36: #{csfe_forward.1} parent=1 // pred_region
      _
    $region37: #{csfe_forward.1} parent=1 // pred_fallthru
      _
    %v33 = vld [vmem:[%s0] sm:$0xff]
    %v34 = vld [vmem:[%s0 + $0x8] sm:$0xff]
    %v35 = vld [vmem:[%s0 + $0x10] sm:$0xff]
    %v36 = vld [vmem:[%s0 + $0x20] sm:$0xff]
    %v37 = vld [vmem:[%s0 + $0x28] sm:$0xff]
    %v38 = vld [vmem:[%s0 + $0x30] sm:$0xff]
    %v39 = vld [vmem:[%s1] sm:$0xff]
    %v40 = vld [vmem:[%s1 + $0x8] sm:$0xff]
    %v41 = vld [vmem:[%s1 + $0x10] sm:$0xff]
    %v42 = vld [vmem:[%s1 + $0x18] sm:$0xff]
    %v43 = vld [vmem:[%s1 + $0x20] sm:$0xff]
    %v44 = vld [vmem:[%s1 + $0x28] sm:$0xff]
    %v45 = vld [vmem:[%s1 + $0x30] sm:$0xff]
    %v46 = vld [vmem:[%s1 + $0x38] sm:$0xff]
    %v47 = vld [vmem:[%s1 + $0x40] sm:$0xff]
    %v48 = vld [vmem:[%s1 + $0x48] sm:$0xff]
    %v49 = vld [vmem:[%s1 + $0x50] sm:$0xff]
    %v50 = vld [vmem:[%s1 + $0x58] sm:$0xff]
    %v51 = vld [vmem:[%s1 + $0x60] sm:$0xff]
    %v52 = vld [vmem:[%s1 + $0x68] sm:$0xff]
    %v53 = vld [vmem:[%s1 + $0x70] sm:$0xff]
    %v54 = vld [vmem:[%s1 + $0x78] sm:$0xff]
    %v55 = vld [vmem:[%s1 + $0x80] sm:$0xff]
    %v56 = vld [vmem:[%s1 + $0x88] sm:$0xff]
    %v57 = vld [vmem:[%s1 + $0x90] sm:$0xf]
    %v58 = vld [vmem:[%s1 + $0x98] sm:$0xf]
    %v59 = vld [vmem:[%s1 + $0xa0] sm:$0xf]
    %v60 = vld [vmem:[%s1 + $0xa8] sm:$0xf]
    %v61 = vld [vmem:[%s1 + $0xb0] sm:$0xf]
    %v62 = vld [vmem:[%s1 + $0xb8] sm:$0xf]
    %v63 = vld [vmem:[%s0 + $0x1] sm:$0xff]
    %v64 = vld [vmem:[%s0 + $0x9] sm:$0xff]
    %v65 = vld [vmem:[%s0 + $0x11] sm:$0xff]
    %v66 = vld [vmem:[%s0 + $0x21] sm:$0xff]
    %v67 = vld [vmem:[%s0 + $0x29] sm:$0xff]
    %v68 = vld [vmem:[%s0 + $0x31] sm:$0xff]
    %s69 = scalar_lea.vmem %s1, 192
    %v70 = vld [vmem:[%s69] sm:$0xff]
    %v71 = vld [vmem:[%s69 + $0x8] sm:$0xff]
    %v72 = vld [vmem:[%s69 + $0x10] sm:$0xff]
    %v73 = vld [vmem:[%s69 + $0x18] sm:$0xff]
    %v74 = vld [vmem:[%s69 + $0x20] sm:$0xff]
    %v75 = vld [vmem:[%s69 + $0x28] sm:$0xff]
    %v76 = vld [vmem:[%s69 + $0x30] sm:$0xff]
    %v77 = vld [vmem:[%s69 + $0x38] sm:$0xff]
    %v78 = vld [vmem:[%s69 + $0x40] sm:$0xff]
    %v79 = vld [vmem:[%s69 + $0x48] sm:$0xff]
    %v80 = vld [vmem:[%s69 + $0x50] sm:$0xff]
    %v81 = vld [vmem:[%s69 + $0x58] sm:$0xff]
    %v82 = vld [vmem:[%s69 + $0x60] sm:$0xff]
    %v83 = vld [vmem:[%s69 + $0x68] sm:$0xff]
    %v84 = vld [vmem:[%s69 + $0x70] sm:$0xff]
    %v85 = vld [vmem:[%s69 + $0x78] sm:$0xff]
    %v86 = vld [vmem:[%s69 + $0x80] sm:$0xff]
    %v87 = vld [vmem:[%s69 + $0x88] sm:$0xff]
    %v88 = vld [vmem:[%s69 + $0x90] sm:$0xf]
    %v89 = vld [vmem:[%s69 + $0x98] sm:$0xf]
    %v90 = vld [vmem:[%s69 + $0xa0] sm:$0xf]
    %v91 = vld [vmem:[%s69 + $0xa8] sm:$0xf]
    %v92 = vld [vmem:[%s69 + $0xb0] sm:$0xf]
    %v93 = vld [vmem:[%s69 + $0xb8] sm:$0xf]
    %vm94 = vcmask 228352
    %v96 = vsel %vm94, %v63, 0
    %v99 = vsel %vm94, %v64, 0
    %v102 = vsel %vm94, %v65, 0
    %v105 = vsel %vm94, %v66, 0
    %v108 = vsel %vm94, %v67, 0
    %v111 = vsel %vm94, %v68, 0
    %vm113 = vcmask 1043456
    %v115 = vsel %vm113, %v88, 0
    %v118 = vsel %vm113, %v89, 0
    %v121 = vsel %vm113, %v90, 0
    %v124 = vsel %vm113, %v91, 0
    %v127 = vsel %vm113, %v92, 0
    %v130 = vsel %vm113, %v93, 0
    %132 = vmatprep.subr.mxu0 %v71
    %133 = vmatpush1.msra.mxu0 %v70
    %134 = vmatprep.subr.mxu0 %v77
    %135 = vmatpush1.msra.mxu0 %v76
    %136 = vmatprep.subr.mxu0 %v83
    %137 = vmatpush1.msra.mxu0 %v82
    %138 = vmatprep.subr.mxu0 %v118
    %139 = vmatpush1.msra.mxu0 %v115
    %140 = vmatprep.subr.mxu0 0.0
    %141 = vmatpush1.msra.mxu0 0.0
    %142 = vmatprep.subr.mxu0 0.0
    %143 = vmatpush1.msra.mxu0 0.0
    %144 = vmatprep.subr.mxu0 0.0
    %145 = vmatpush1.msra.mxu0 0.0
    %146 = vmatprep.subr.mxu0 0.0
    %147 = vmatpush1.msra.mxu0 0.0
    %148 = vmatprep.subr.mxu0 0.0
    %149 = vmatpush1.msra.mxu0 0.0
    %150 = vmatprep.subr.mxu0 0.0
    %151 = vmatpush1.msra.mxu0 0.0
    %152 = vmatprep.subr.mxu0 0.0
    %153 = vmatpush1.msra.mxu0 0.0
    %154 = vmatprep.subr.mxu0 0.0
    %155 = vmatpush1.msra.mxu0 0.0
    %156 = vmatprep.subr.mxu0 0.0
    %157 = vmatpush1.msra.mxu0 0.0
    %158 = vmatprep.subr.mxu0 0.0
    %159 = vmatpush1.msra.mxu0 0.0
    %160 = vmatprep.subr.mxu0 0.0
    %161 = vmatpush1.msra.mxu0 0.0
    %162 = vmatprep.subr.mxu0 0.0
    %163 = vmatpush1.msra.mxu0 0.0
    %164 = vmatprep.subr.mxu0 0.0
    %165 = vmatpush1.msra.mxu0 0.0
    %166 = vmatprep.subr.mxu0 0.0
    %167 = vmatpush1.msra.mxu0 0.0
    %168 = vmatprep.subr.mxu0 0.0
    %169 = vmatpush1.msra.mxu0 0.0
    %170 = vmatprep.subr.mxu0 0.0
    %171 = vmatpush1.msra.mxu0 0.0
    %172 = vmatprep.subr.mxu0 0.0
    %173 = vmatpush1.msra.mxu0 0.0
    %174 = vmatprep.subr.mxu0 0.0
    %175 = vmatpush1.msra.mxu0 0.0
    %176 = vmatprep.subr.mxu0 0.0
    %177 = vmatpush1.msra.mxu0 0.0
    %178 = vmatprep.subr.mxu0 0.0
    %179 = vmatpush1.msra.mxu0 0.0
    %180 = vmatprep.subr.mxu0 0.0
    %181 = vmatpush1.msra.mxu0 0.0
    %182 = vmatprep.subr.mxu0 0.0
    %183 = vmatpush1.msra.mxu0 0.0
    %184 = vmatprep.subr.mxu0 0.0
    %185 = vmatpush1.msra.mxu0 0.0
    %186 = vmatprep.subr.mxu0 0.0
    %187 = vmatpush1.msra.mxu0 0.0
    %188 = vmatprep.subr.mxu0 0.0
    %189 = vmatpush1.msra.mxu0 0.0
    %190 = vmatprep.subr.mxu0 0.0
    %191 = vmatpush1.msra.mxu0 0.0
    %192 = vmatprep.subr.mxu0 0.0
    %193 = vmatpush1.msra.mxu0 0.0
    %194 = vmatprep.subr.mxu0 0.0
    %195 = vmatpush1.msra.mxu0 0.0
    %196 = vmatprep.mubr.f32.mxu0 0.0
    %197 = vmatmul.mubr.f32.gmra.mrb[0].mxu0 %v96
    %v198 = vpop.f32.mrb[0].mxu0
    %v199 = vadd.f32 0.0, %v198
    %v200 = vpop.f32.mrb[0].mxu0
    %v201 = vadd.f32 0.0, %v200
    %202 = vmatprep.mubr.f32.mxu0 0.0
    %203 = vmatmul.mubr.f32.gmra.mrb[0].mxu0 %v99
    %v204 = vpop.f32.mrb[0].mxu0
    %v205 = vadd.f32 0.0, %v204
    %v206 = vpop.f32.mrb[0].mxu0
    %v207 = vadd.f32 0.0, %v206
    %208 = vmatprep.mubr.f32.mxu0 0.0
    %209 = vmatmul.mubr.f32.gmra.mrb[0].mxu0 %v102
    %v210 = vpop.f32.mrb[0].mxu0
    %v211 = vadd.f32 0.0, %v210
    %v212 = vpop.f32.mrb[0].mxu0
    %v213 = vadd.f32 0.0, %v212
    %214 = vmatprep.mubr.f32.mxu0 0.0
    %215 = vmatmul.mubr.f32.gmra.mrb[0].mxu0 %v105
    %v216 = vpop.f32.mrb[0].mxu0
    %v217 = vadd.f32 0.0, %v216
    %v218 = vpop.f32.mrb[0].mxu0
    %v219 = vadd.f32 0.0, %v218
    %220 = vmatprep.mubr.f32.mxu0 0.0
    %221 = vmatmul.mubr.f32.gmra.mrb[0].mxu0 %v108
    %v222 = vpop.f32.mrb[0].mxu0
    %v223 = vadd.f32 0.0, %v222
    %v224 = vpop.f32.mrb[0].mxu0
    %v225 = vadd.f32 0.0, %v224
    %226 = vmatprep.mubr.f32.mxu0 0.0
    %227 = vmatmul.mubr.f32.gmra.mrb[0].mxu0 %v111
    %v228 = vpop.f32.mrb[0].mxu0
    %v229 = vadd.f32 0.0, %v228
    %v230 = vpop.f32.mrb[0].mxu0
    %v231 = vadd.f32 0.0, %v230
    %232 = vdwg.mxu0
    %233 = vmatprep.subr.mxu0 %v73
    %234 = vmatpush1.msra.mxu0 %v72
    %235 = vmatprep.subr.mxu0 %v79
    %236 = vmatpush1.msra.mxu0 %v78
    %237 = vmatprep.subr.mxu0 %v85
    %238 = vmatpush1.msra.mxu0 %v84
    %239 = vmatprep.subr.mxu0 %v124
    %240 = vmatpush1.msra.mxu0 %v121
    %241 = vmatprep.subr.mxu0 0.0
    %242 = vmatpush1.msra.mxu0 0.0
    %243 = vmatprep.subr.mxu0 0.0
    %244 = vmatpush1.msra.mxu0 0.0
    %245 = vmatprep.subr.mxu0 0.0
    %246 = vmatpush1.msra.mxu0 0.0
    %247 = vmatprep.subr.mxu0 0.0
    %248 = vmatpush1.msra.mxu0 0.0
    %249 = vmatprep.subr.mxu0 0.0
    %250 = vmatpush1.msra.mxu0 0.0
    %251 = vmatprep.subr.mxu0 0.0
    %252 = vmatpush1.msra.mxu0 0.0
    %253 = vmatprep.subr.mxu0 0.0
    %254 = vmatpush1.msra.mxu0 0.0
    %255 = vmatprep.subr.mxu0 0.0
    %256 = vmatpush1.msra.mxu0 0.0
    %257 = vmatprep.subr.mxu0 0.0
    %258 = vmatpush1.msra.mxu0 0.0
    %259 = vmatprep.subr.mxu0 0.0
    %260 = vmatpush1.msra.mxu0 0.0
    %261 = vmatprep.subr.mxu0 0.0
    %262 = vmatpush1.msra.mxu0 0.0
    %263 = vmatprep.subr.mxu0 0.0
    %264 = vmatpush1.msra.mxu0 0.0
    %265 = vmatprep.subr.mxu0 0.0
    %266 = vmatpush1.msra.mxu0 0.0
    %267 = vmatprep.subr.mxu0 0.0
    %268 = vmatpush1.msra.mxu0 0.0
    %269 = vmatprep.subr.mxu0 0.0
    %270 = vmatpush1.msra.mxu0 0.0
    %271 = vmatprep.subr.mxu0 0.0
    %272 = vmatpush1.msra.mxu0 0.0
    %273 = vmatprep.subr.mxu0 0.0
    %274 = vmatpush1.msra.mxu0 0.0
    %275 = vmatprep.subr.mxu0 0.0
    %276 = vmatpush1.msra.mxu0 0.0
    %277 = vmatprep.subr.mxu0 0.0
    %278 = vmatpush1.msra.mxu0 0.0
    %279 = vmatprep.subr.mxu0 0.0
    %280 = vmatpush1.msra.mxu0 0.0
    %281 = vmatprep.subr.mxu0 0.0
    %282 = vmatpush1.msra.mxu0 0.0
    %283 = vmatprep.subr.mxu0 0.0
    %284 = vmatpush1.msra.mxu0 0.0
    %285 = vmatprep.subr.mxu0 0.0
    %286 = vmatpush1.msra.mxu0 0.0
    %287 = vmatprep.subr.mxu0 0.0
    %288 = vmatpush1.msra.mxu0 0.0
    %289 = vmatprep.subr.mxu0 0.0
    %290 = vmatpush1.msra.mxu0 0.0
    %291 = vmatprep.subr.mxu0 0.0
    %292 = vmatpush1.msra.mxu0 0.0
    %293 = vmatprep.subr.mxu0 0.0
    %294 = vmatpush1.msra.mxu0 0.0
    %295 = vmatprep.subr.mxu0 0.0
    %296 = vmatpush1.msra.mxu0 0.0
    %297 = vmatprep.mubr.f32.mxu0 0.0
    %298 = vmatmul.mubr.f32.gmra.mrb[0].mxu0 %v96
    %v299 = vpop.f32.mrb[0].mxu0
    %v300 = vadd.f32 0.0, %v299
    %v301 = vpop.f32.mrb[0].mxu0
    %v302 = vadd.f32 0.0, %v301
    %303 = vmatprep.mubr.f32.mxu0 0.0
    %304 = vmatmul.mubr.f32.gmra.mrb[0].mxu0 %v99
    %v305 = vpop.f32.mrb[0].mxu0
    %v306 = vadd.f32 0.0, %v305
    %v307 = vpop.f32.mrb[0].mxu0
    %v308 = vadd.f32 0.0, %v307
    %309 = vmatprep.mubr.f32.mxu0 0.0
    %310 = vmatmul.mubr.f32.gmra.mrb[0].mxu0 %v102
    %v311 = vpop.f32.mrb[0].mxu0
    %v312 = vadd.f32 0.0, %v311
    %v313 = vpop.f32.mrb[0].mxu0
    %v314 = vadd.f32 0.0, %v313
    %315 = vmatprep.mubr.f32.mxu0 0.0
    %316 = vmatmul.mubr.f32.gmra.mrb[0].mxu0 %v105
    %v317 = vpop.f32.mrb[0].mxu0
    %v318 = vadd.f32 0.0, %v317
    %v319 = vpop.f32.mrb[0].mxu0
    %v320 = vadd.f32 0.0, %v319
    %321 = vmatprep.mubr.f32.mxu0 0.0
    %322 = vmatmul.mubr.f32.gmra.mrb[0].mxu0 %v108
    %v323 = vpop.f32.mrb[0].mxu0
    %v324 = vadd.f32 0.0, %v323
    %v325 = vpop.f32.mrb[0].mxu0
    %v326 = vadd.f32 0.0, %v325
    %327 = vmatprep.mubr.f32.mxu0 0.0
    %328 = vmatmul.mubr.f32.gmra.mrb[0].mxu0 %v111
    %v329 = vpop.f32.mrb[0].mxu0
    %v330 = vadd.f32 0.0, %v329
    %v331 = vpop.f32.mrb[0].mxu0
    %v332 = vadd.f32 0.0, %v331
    %333 = vdwg.mxu0
    %334 = vmatprep.subr.mxu0 %v75
    %335 = vmatpush1.msra.mxu0 %v74
    %336 = vmatprep.subr.mxu0 %v81
    %337 = vmatpush1.msra.mxu0 %v80
    %338 = vmatprep.subr.mxu0 %v87
    %339 = vmatpush1.msra.mxu0 %v86
    %340 = vmatprep.subr.mxu0 %v130
    %341 = vmatpush1.msra.mxu0 %v127
    %342 = vmatprep.subr.mxu0 0.0
    %343 = vmatpush1.msra.mxu0 0.0
    %344 = vmatprep.subr.mxu0 0.0
    %345 = vmatpush1.msra.mxu0 0.0
    %346 = vmatprep.subr.mxu0 0.0
    %347 = vmatpush1.msra.mxu0 0.0
    %348 = vmatprep.subr.mxu0 0.0
    %349 = vmatpush1.msra.mxu0 0.0
    %350 = vmatprep.subr.mxu0 0.0
    %351 = vmatpush1.msra.mxu0 0.0
    %352 = vmatprep.subr.mxu0 0.0
    %353 = vmatpush1.msra.mxu0 0.0
    %354 = vmatprep.subr.mxu0 0.0
    %355 = vmatpush1.msra.mxu0 0.0
    %356 = vmatprep.subr.mxu0 0.0
    %357 = vmatpush1.msra.mxu0 0.0
    %358 = vmatprep.subr.mxu0 0.0
    %359 = vmatpush1.msra.mxu0 0.0
    %360 = vmatprep.subr.mxu0 0.0
    %361 = vmatpush1.msra.mxu0 0.0
    %362 = vmatprep.subr.mxu0 0.0
    %363 = vmatpush1.msra.mxu0 0.0
    %364 = vmatprep.subr.mxu0 0.0
    %365 = vmatpush1.msra.mxu0 0.0
    %366 = vmatprep.subr.mxu0 0.0
    %367 = vmatpush1.msra.mxu0 0.0
    %368 = vmatprep.subr.mxu0 0.0
    %369 = vmatpush1.msra.mxu0 0.0
    %370 = vmatprep.subr.mxu0 0.0
    %371 = vmatpush1.msra.mxu0 0.0
    %372 = vmatprep.subr.mxu0 0.0
    %373 = vmatpush1.msra.mxu0 0.0
    %374 = vmatprep.subr.mxu0 0.0
    %375 = vmatpush1.msra.mxu0 0.0
    %376 = vmatprep.subr.mxu0 0.0
    %377 = vmatpush1.msra.mxu0 0.0
    %378 = vmatprep.subr.mxu0 0.0
    %379 = vmatpush1.msra.mxu0 0.0
    %380 = vmatprep.subr.mxu0 0.0
    %381 = vmatpush1.msra.mxu0 0.0
    %382 = vmatprep.subr.mxu0 0.0
    %383 = vmatpush1.msra.mxu0 0.0
    %384 = vmatprep.subr.mxu0 0.0
    %385 = vmatpush1.msra.mxu0 0.0
    %386 = vmatprep.subr.mxu0 0.0
    %387 = vmatpush1.msra.mxu0 0.0
    %388 = vmatprep.subr.mxu0 0.0
    %389 = vmatpush1.msra.mxu0 0.0
    %390 = vmatprep.subr.mxu0 0.0
    %391 = vmatpush1.msra.mxu0 0.0
    %392 = vmatprep.subr.mxu0 0.0
    %393 = vmatpush1.msra.mxu0 0.0
    %394 = vmatprep.subr.mxu0 0.0
    %395 = vmatpush1.msra.mxu0 0.0
    %396 = vmatprep.subr.mxu0 0.0
    %397 = vmatpush1.msra.mxu0 0.0
    %398 = vmatprep.mubr.f32.mxu0 0.0
    %399 = vmatmul.mubr.f32.gmra.mrb[0].mxu0 %v96
    %v400 = vpop.f32.mrb[0].mxu0
    %v401 = vadd.f32 0.0, %v400
    %v402 = vpop.f32.mrb[0].mxu0
    %v403 = vadd.f32 0.0, %v402
    %404 = vmatprep.mubr.f32.mxu0 0.0
    %405 = vmatmul.mubr.f32.gmra.mrb[0].mxu0 %v99
    %v406 = vpop.f32.mrb[0].mxu0
    %v407 = vadd.f32 0.0, %v406
    %v408 = vpop.f32.mrb[0].mxu0
    %v409 = vadd.f32 0.0, %v408
    %410 = vmatprep.mubr.f32.mxu0 0.0
    %411 = vmatmul.mubr.f32.gmra.mrb[0].mxu0 %v102
    %v412 = vpop.f32.mrb[0].mxu0
    %v413 = vadd.f32 0.0, %v412
    %v414 = vpop.f32.mrb[0].mxu0
    %v415 = vadd.f32 0.0, %v414
    %416 = vmatprep.mubr.f32.mxu0 0.0
    %417 = vmatmul.mubr.f32.gmra.mrb[0].mxu0 %v105
    %v418 = vpop.f32.mrb[0].mxu0
    %v419 = vadd.f32 0.0, %v418
    %v420 = vpop.f32.mrb[0].mxu0
    %v421 = vadd.f32 0.0, %v420
    %422 = vmatprep.mubr.f32.mxu0 0.0
    %423 = vmatmul.mubr.f32.gmra.mrb[0].mxu0 %v108
    %v424 = vpop.f32.mrb[0].mxu0
    %v425 = vadd.f32 0.0, %v424
    %v426 = vpop.f32.mrb[0].mxu0
    %v427 = vadd.f32 0.0, %v426
    %428 = vmatprep.mubr.f32.mxu0 0.0
    %429 = vmatmul.mubr.f32.gmra.mrb[0].mxu0 %v111
    %v430 = vpop.f32.mrb[0].mxu0
    %v431 = vadd.f32 0.0, %v430
    %v432 = vpop.f32.mrb[0].mxu0
    %v433 = vadd.f32 0.0, %v432
    %434 = vdwg.mxu0
    %v436 = vsel %vm94, %v33, 0
    %v439 = vsel %vm94, %v34, 0
    %v442 = vsel %vm94, %v35, 0
    %v445 = vsel %vm94, %v36, 0
    %v448 = vsel %vm94, %v37, 0
    %v451 = vsel %vm94, %v38, 0
    %v454 = vsel %vm113, %v57, 0
    %v457 = vsel %vm113, %v58, 0
    %v460 = vsel %vm113, %v59, 0
    %v463 = vsel %vm113, %v60, 0
    %v466 = vsel %vm113, %v61, 0
    %v469 = vsel %vm113, %v62, 0
    %471 = vmatprep.subr.mxu0 %v40
    %472 = vmatpush1.msra.mxu0 %v39
    %473 = vmatprep.subr.mxu0 %v46
    %474 = vmatpush1.msra.mxu0 %v45
    %475 = vmatprep.subr.mxu0 %v52
    %476 = vmatpush1.msra.mxu0 %v51
    %477 = vmatprep.subr.mxu0 %v457
    %478 = vmatpush1.msra.mxu0 %v454
    %479 = vmatprep.subr.mxu0 0.0
    %480 = vmatpush1.msra.mxu0 0.0
    %481 = vmatprep.subr.mxu0 0.0
    %482 = vmatpush1.msra.mxu0 0.0
    %483 = vmatprep.subr.mxu0 0.0
    %484 = vmatpush1.msra.mxu0 0.0
    %485 = vmatprep.subr.mxu0 0.0
    %486 = vmatpush1.msra.mxu0 0.0
    %487 = vmatprep.subr.mxu0 0.0
    %488 = vmatpush1.msra.mxu0 0.0
    %489 = vmatprep.subr.mxu0 0.0
    %490 = vmatpush1.msra.mxu0 0.0
    %491 = vmatprep.subr.mxu0 0.0
    %492 = vmatpush1.msra.mxu0 0.0
    %493 = vmatprep.subr.mxu0 0.0
    %494 = vmatpush1.msra.mxu0 0.0
    %495 = vmatprep.subr.mxu0 0.0
    %496 = vmatpush1.msra.mxu0 0.0
    %497 = vmatprep.subr.mxu0 0.0
    %498 = vmatpush1.msra.mxu0 0.0
    %499 = vmatprep.subr.mxu0 0.0
    %500 = vmatpush1.msra.mxu0 0.0
    %501 = vmatprep.subr.mxu0 0.0
    %502 = vmatpush1.msra.mxu0 0.0
    %503 = vmatprep.subr.mxu0 0.0
    %504 = vmatpush1.msra.mxu0 0.0
    %505 = vmatprep.subr.mxu0 0.0
    %506 = vmatpush1.msra.mxu0 0.0
    %507 = vmatprep.subr.mxu0 0.0
    %508 = vmatpush1.msra.mxu0 0.0
    %509 = vmatprep.subr.mxu0 0.0
    %510 = vmatpush1.msra.mxu0 0.0
    %511 = vmatprep.subr.mxu0 0.0
    %512 = vmatpush1.msra.mxu0 0.0
    %513 = vmatprep.subr.mxu0 0.0
    %514 = vmatpush1.msra.mxu0 0.0
    %515 = vmatprep.subr.mxu0 0.0
    %516 = vmatpush1.msra.mxu0 0.0
    %517 = vmatprep.subr.mxu0 0.0
    %518 = vmatpush1.msra.mxu0 0.0
    %519 = vmatprep.subr.mxu0 0.0
    %520 = vmatpush1.msra.mxu0 0.0
    %521 = vmatprep.subr.mxu0 0.0
    %522 = vmatpush1.msra.mxu0 0.0
    %523 = vmatprep.subr.mxu0 0.0
    %524 = vmatpush1.msra.mxu0 0.0
    %525 = vmatprep.subr.mxu0 0.0
    %526 = vmatpush1.msra.mxu0 0.0
    %527 = vmatprep.subr.mxu0 0.0
    %528 = vmatpush1.msra.mxu0 0.0
    %529 = vmatprep.subr.mxu0 0.0
    %530 = vmatpush1.msra.mxu0 0.0
    %531 = vmatprep.subr.mxu0 0.0
    %532 = vmatpush1.msra.mxu0 0.0
    %533 = vmatprep.subr.mxu0 0.0
    %534 = vmatpush1.msra.mxu0 0.0
    %535 = vmatprep.mubr.f32.mxu0 0.0
    %536 = vmatmul.mubr.f32.gmra.mrb[0].mxu0 %v436
    %v537 = vpop.f32.mrb[0].mxu0
    %v538 = vadd.f32 %v199, %v537
    %v539 = vpop.f32.mrb[0].mxu0
    %v540 = vadd.f32 %v201, %v539
    %541 = vmatprep.mubr.f32.mxu0 0.0
    %542 = vmatmul.mubr.f32.gmra.mrb[0].mxu0 %v439
    %v543 = vpop.f32.mrb[0].mxu0
    %v544 = vadd.f32 %v205, %v543
    %v545 = vpop.f32.mrb[0].mxu0
    %v546 = vadd.f32 %v207, %v545
    %547 = vmatprep.mubr.f32.mxu0 0.0
    %548 = vmatmul.mubr.f32.gmra.mrb[0].mxu0 %v442
    %v549 = vpop.f32.mrb[0].mxu0
    %v550 = vadd.f32 %v211, %v549
    %v551 = vpop.f32.mrb[0].mxu0
    %v552 = vadd.f32 %v213, %v551
    %553 = vmatprep.mubr.f32.mxu0 0.0
    %554 = vmatmul.mubr.f32.gmra.mrb[0].mxu0 %v445
    %v555 = vpop.f32.mrb[0].mxu0
    %v556 = vadd.f32 %v217, %v555
    %v557 = vpop.f32.mrb[0].mxu0
    %v558 = vadd.f32 %v219, %v557
    %559 = vmatprep.mubr.f32.mxu0 0.0
    %560 = vmatmul.mubr.f32.gmra.mrb[0].mxu0 %v448
    %v561 = vpop.f32.mrb[0].mxu0
    %v562 = vadd.f32 %v223, %v561
    %v563 = vpop.f32.mrb[0].mxu0
    %v564 = vadd.f32 %v225, %v563
    %565 = vmatprep.mubr.f32.mxu0 0.0
    %566 = vmatmul.mubr.f32.gmra.mrb[0].mxu0 %v451
    %v567 = vpop.f32.mrb[0].mxu0
    %v568 = vadd.f32 %v229, %v567
    %v569 = vpop.f32.mrb[0].mxu0
    %v570 = vadd.f32 %v231, %v569
    %571 = vdwg.mxu0
    %572 = vmatprep.subr.mxu0 %v42
    %573 = vmatpush1.msra.mxu0 %v41
    %574 = vmatprep.subr.mxu0 %v48
    %575 = vmatpush1.msra.mxu0 %v47
    %576 = vmatprep.subr.mxu0 %v54
    %577 = vmatpush1.msra.mxu0 %v53
    %578 = vmatprep.subr.mxu0 %v463
    %579 = vmatpush1.msra.mxu0 %v460
    %580 = vmatprep.subr.mxu0 0.0
    %581 = vmatpush1.msra.mxu0 0.0
    %582 = vmatprep.subr.mxu0 0.0
    %583 = vmatpush1.msra.mxu0 0.0
    %584 = vmatprep.subr.mxu0 0.0
    %585 = vmatpush1.msra.mxu0 0.0
    %586 = vmatprep.subr.mxu0 0.0
    %587 = vmatpush1.msra.mxu0 0.0
    %588 = vmatprep.subr.mxu0 0.0
    %589 = vmatpush1.msra.mxu0 0.0
    %590 = vmatprep.subr.mxu0 0.0
    %591 = vmatpush1.msra.mxu0 0.0
    %592 = vmatprep.subr.mxu0 0.0
    %593 = vmatpush1.msra.mxu0 0.0
    %594 = vmatprep.subr.mxu0 0.0
    %595 = vmatpush1.msra.mxu0 0.0
    %596 = vmatprep.subr.mxu0 0.0
    %597 = vmatpush1.msra.mxu0 0.0
    %598 = vmatprep.subr.mxu0 0.0
    %599 = vmatpush1.msra.mxu0 0.0
    %600 = vmatprep.subr.mxu0 0.0
    %601 = vmatpush1.msra.mxu0 0.0
    %602 = vmatprep.subr.mxu0 0.0
    %603 = vmatpush1.msra.mxu0 0.0
    %604 = vmatprep.subr.mxu0 0.0
    %605 = vmatpush1.msra.mxu0 0.0
    %606 = vmatprep.subr.mxu0 0.0
    %607 = vmatpush1.msra.mxu0 0.0
    %608 = vmatprep.subr.mxu0 0.0
    %609 = vmatpush1.msra.mxu0 0.0
    %610 = vmatprep.subr.mxu0 0.0
    %611 = vmatpush1.msra.mxu0 0.0
    %612 = vmatprep.subr.mxu0 0.0
    %613 = vmatpush1.msra.mxu0 0.0
    %614 = vmatprep.subr.mxu0 0.0
    %615 = vmatpush1.msra.mxu0 0.0
    %616 = vmatprep.subr.mxu0 0.0
    %617 = vmatpush1.msra.mxu0 0.0
    %618 = vmatprep.subr.mxu0 0.0
    %619 = vmatpush1.msra.mxu0 0.0
    %620 = vmatprep.subr.mxu0 0.0
    %621 = vmatpush1.msra.mxu0 0.0
    %622 = vmatprep.subr.mxu0 0.0
    %623 = vmatpush1.msra.mxu0 0.0
    %624 = vmatprep.subr.mxu0 0.0
    %625 = vmatpush1.msra.mxu0 0.0
    %626 = vmatprep.subr.mxu0 0.0
    %627 = vmatpush1.msra.mxu0 0.0
    %628 = vmatprep.subr.mxu0 0.0
    %629 = vmatpush1.msra.mxu0 0.0
    %630 = vmatprep.subr.mxu0 0.0
    %631 = vmatpush1.msra.mxu0 0.0
    %632 = vmatprep.subr.mxu0 0.0
    %633 = vmatpush1.msra.mxu0 0.0
    %634 = vmatprep.subr.mxu0 0.0
    %635 = vmatpush1.msra.mxu0 0.0
    %636 = vmatprep.mubr.f32.mxu0 0.0
    %637 = vmatmul.mubr.f32.gmra.mrb[0].mxu0 %v436
    %v638 = vpop.f32.mrb[0].mxu0
    %v639 = vadd.f32 %v300, %v638
    %v640 = vpop.f32.mrb[0].mxu0
    %v641 = vadd.f32 %v302, %v640
    %642 = vmatprep.mubr.f32.mxu0 0.0
    %643 = vmatmul.mubr.f32.gmra.mrb[0].mxu0 %v439
    %v644 = vpop.f32.mrb[0].mxu0
    %v645 = vadd.f32 %v306, %v644
    %v646 = vpop.f32.mrb[0].mxu0
    %v647 = vadd.f32 %v308, %v646
    %648 = vmatprep.mubr.f32.mxu0 0.0
    %649 = vmatmul.mubr.f32.gmra.mrb[0].mxu0 %v442
    %v650 = vpop.f32.mrb[0].mxu0
    %v651 = vadd.f32 %v312, %v650
    %v652 = vpop.f32.mrb[0].mxu0
    %v653 = vadd.f32 %v314, %v652
    %654 = vmatprep.mubr.f32.mxu0 0.0
    %655 = vmatmul.mubr.f32.gmra.mrb[0].mxu0 %v445
    %v656 = vpop.f32.mrb[0].mxu0
    %v657 = vadd.f32 %v318, %v656
    %v658 = vpop.f32.mrb[0].mxu0
    %v659 = vadd.f32 %v320, %v658
    %660 = vmatprep.mubr.f32.mxu0 0.0
    %661 = vmatmul.mubr.f32.gmra.mrb[0].mxu0 %v448
    %v662 = vpop.f32.mrb[0].mxu0
    %v663 = vadd.f32 %v324, %v662
    %v664 = vpop.f32.mrb[0].mxu0
    %v665 = vadd.f32 %v326, %v664
    %666 = vmatprep.mubr.f32.mxu0 0.0
    %667 = vmatmul.mubr.f32.gmra.mrb[0].mxu0 %v451
    %v668 = vpop.f32.mrb[0].mxu0
    %v669 = vadd.f32 %v330, %v668
    %v670 = vpop.f32.mrb[0].mxu0
    %v671 = vadd.f32 %v332, %v670
    %672 = vdwg.mxu0
    %673 = vmatprep.subr.mxu0 %v44
    %674 = vmatpush1.msra.mxu0 %v43
    %675 = vmatprep.subr.mxu0 %v50
    %676 = vmatpush1.msra.mxu0 %v49
    %677 = vmatprep.subr.mxu0 %v56
    %678 = vmatpush1.msra.mxu0 %v55
    %679 = vmatprep.subr.mxu0 %v469
    %680 = vmatpush1.msra.mxu0 %v466
    %681 = vmatprep.subr.mxu0 0.0
    %682 = vmatpush1.msra.mxu0 0.0
    %683 = vmatprep.subr.mxu0 0.0
    %684 = vmatpush1.msra.mxu0 0.0
    %685 = vmatprep.subr.mxu0 0.0
    %686 = vmatpush1.msra.mxu0 0.0
    %687 = vmatprep.subr.mxu0 0.0
    %688 = vmatpush1.msra.mxu0 0.0
    %689 = vmatprep.subr.mxu0 0.0
    %690 = vmatpush1.msra.mxu0 0.0
    %691 = vmatprep.subr.mxu0 0.0
    %692 = vmatpush1.msra.mxu0 0.0
    %693 = vmatprep.subr.mxu0 0.0
    %694 = vmatpush1.msra.mxu0 0.0
    %695 = vmatprep.subr.mxu0 0.0
    %696 = vmatpush1.msra.mxu0 0.0
    %697 = vmatprep.subr.mxu0 0.0
    %698 = vmatpush1.msra.mxu0 0.0
    %699 = vmatprep.subr.mxu0 0.0
    %700 = vmatpush1.msra.mxu0 0.0
    %701 = vmatprep.subr.mxu0 0.0
    %702 = vmatpush1.msra.mxu0 0.0
    %703 = vmatprep.subr.mxu0 0.0
    %704 = vmatpush1.msra.mxu0 0.0
    %705 = vmatprep.subr.mxu0 0.0
    %706 = vmatpush1.msra.mxu0 0.0
    %707 = vmatprep.subr.mxu0 0.0
    %708 = vmatpush1.msra.mxu0 0.0
    %709 = vmatprep.subr.mxu0 0.0
    %710 = vmatpush1.msra.mxu0 0.0
    %711 = vmatprep.subr.mxu0 0.0
    %712 = vmatpush1.msra.mxu0 0.0
    %713 = vmatprep.subr.mxu0 0.0
    %714 = vmatpush1.msra.mxu0 0.0
    %715 = vmatprep.subr.mxu0 0.0
    %716 = vmatpush1.msra.mxu0 0.0
    %717 = vmatprep.subr.mxu0 0.0
    %718 = vmatpush1.msra.mxu0 0.0
    %719 = vmatprep.subr.mxu0 0.0
    %720 = vmatpush1.msra.mxu0 0.0
    %721 = vmatprep.subr.mxu0 0.0
    %722 = vmatpush1.msra.mxu0 0.0
    %723 = vmatprep.subr.mxu0 0.0
    %724 = vmatpush1.msra.mxu0 0.0
    %725 = vmatprep.subr.mxu0 0.0
    %726 = vmatpush1.msra.mxu0 0.0
    %727 = vmatprep.subr.mxu0 0.0
    %728 = vmatpush1.msra.mxu0 0.0
    %729 = vmatprep.subr.mxu0 0.0
    %730 = vmatpush1.msra.mxu0 0.0
    %731 = vmatprep.subr.mxu0 0.0
    %732 = vmatpush1.msra.mxu0 0.0
    %733 = vmatprep.subr.mxu0 0.0
    %734 = vmatpush1.msra.mxu0 0.0
    %735 = vmatprep.subr.mxu0 0.0
    %736 = vmatpush1.msra.mxu0 0.0
    %737 = vmatprep.mubr.f32.mxu0 0.0
    %738 = vmatmul.mubr.f32.gmra.mrb[0].mxu0 %v436
    %v739 = vpop.f32.mrb[0].mxu0
    %v740 = vadd.f32 %v401, %v739
    %v741 = vpop.f32.mrb[0].mxu0
    %v742 = vadd.f32 %v403, %v741
    %743 = vmatprep.mubr.f32.mxu0 0.0
    %744 = vmatmul.mubr.f32.gmra.mrb[0].mxu0 %v439
    %v745 = vpop.f32.mrb[0].mxu0
    %v746 = vadd.f32 %v407, %v745
    %v747 = vpop.f32.mrb[0].mxu0
    %v748 = vadd.f32 %v409, %v747
    %749 = vmatprep.mubr.f32.mxu0 0.0
    %750 = vmatmul.mubr.f32.gmra.mrb[0].mxu0 %v442
    %v751 = vpop.f32.mrb[0].mxu0
    %v752 = vadd.f32 %v413, %v751
    %v753 = vpop.f32.mrb[0].mxu0
    %v754 = vadd.f32 %v415, %v753
    %755 = vmatprep.mubr.f32.mxu0 0.0
    %756 = vmatmul.mubr.f32.gmra.mrb[0].mxu0 %v445
    %v757 = vpop.f32.mrb[0].mxu0
    %v758 = vadd.f32 %v419, %v757
    %v759 = vpop.f32.mrb[0].mxu0
    %v760 = vadd.f32 %v421, %v759
    %761 = vmatprep.mubr.f32.mxu0 0.0
    %762 = vmatmul.mubr.f32.gmra.mrb[0].mxu0 %v448
    %v763 = vpop.f32.mrb[0].mxu0
    %v764 = vadd.f32 %v425, %v763
    %v765 = vpop.f32.mrb[0].mxu0
    %v766 = vadd.f32 %v427, %v765
    %767 = vmatprep.mubr.f32.mxu0 0.0
    %768 = vmatmul.mubr.f32.gmra.mrb[0].mxu0 %v451
    %v769 = vpop.f32.mrb[0].mxu0
    %v770 = vadd.f32 %v431, %v769
    %v771 = vpop.f32.mrb[0].mxu0
    %v772 = vadd.f32 %v433, %v771
    %773 = vdwg.mxu0
    %v774 = vld [vmem:[%s0 + $0x2] sm:$0xff]
    %v775 = vld [vmem:[%s0 + $0xa] sm:$0xff]
    %v776 = vld [vmem:[%s0 + $0x12] sm:$0xff]
    %v777 = vld [vmem:[%s0 + $0x22] sm:$0xff]
    %v778 = vld [vmem:[%s0 + $0x2a] sm:$0xff]
    %v779 = vld [vmem:[%s0 + $0x32] sm:$0xff]
    %s780 = scalar_lea.vmem %s1, 384
    %v781 = vld [vmem:[%s780] sm:$0xff]
    %v782 = vld [vmem:[%s780 + $0x8] sm:$0xff]
    %v783 = vld [vmem:[%s780 + $0x10] sm:$0xff]
    %v784 = vld [vmem:[%s780 + $0x18] sm:$0xff]
    %v785 = vld [vmem:[%s780 + $0x20] sm:$0xff]
    %v786 = vld [vmem:[%s780 + $0x28] sm:$0xff]
    %v787 = vld [vmem:[%s780 + $0x30] sm:$0xff]
    %v788 = vld [vmem:[%s780 + $0x38] sm:$0xff]
    %v789 = vld [vmem:[%s780 + $0x40] sm:$0xff]
    %v790 = vld [vmem:[%s780 + $0x48] sm:$0xff]
    %v791 = vld [vmem:[%s780 + $0x50] sm:$0xff]
    %v792 = vld [vmem:[%s780 + $0x58] sm:$0xff]
    %v793 = vld [vmem:[%s780 + $0x60] sm:$0xff]
    %v794 = vld [vmem:[%s780 + $0x68] sm:$0xff]
    %v795 = vld [vmem:[%s780 + $0x70] sm:$0xff]
    %v796 = vld [vmem:[%s780 + $0x78] sm:$0xff]
    %v797 = vld [vmem:[%s780 + $0x80] sm:$0xff]
    %v798 = vld [vmem:[%s780 + $0x88] sm:$0xff]
    %v799 = vld [vmem:[%s780 + $0x90] sm:$0xf]
    %v800 = vld [vmem:[%s780 + $0x98] sm:$0xf]
    %v801 = vld [vmem:[%s780 + $0xa0] sm:$0xf]
    %v802 = vld [vmem:[%s780 + $0xa8] sm:$0xf]
    %v803 = vld [vmem:[%s780 + $0xb0] sm:$0xf]
    %v804 = vld [vmem:[%s780 + $0xb8] sm:$0xf]
    %v806 = vsel %vm94, %v774, 0
    %v809 = vsel %vm94, %v775, 0
    %v812 = vsel %vm94, %v776, 0
    %v815 = vsel %vm94, %v777, 0
    %v818 = vsel %vm94, %v778, 0
    %v821 = vsel %vm94, %v779, 0
    %v824 = vsel %vm113, %v799, 0
    %v827 = vsel %vm113, %v800, 0
    %v830 = vsel %vm113, %v801, 0
    %v833 = vsel %vm113, %v802, 0
    %v836 = vsel %vm113, %v803, 0
    %v839 = vsel %vm113, %v804, 0
    %841 = vmatprep.subr.mxu0 %v782
    %842 = vmatpush1.msra.mxu0 %v781
    %843 = vmatprep.subr.mxu0 %v788
    %844 = vmatpush1.msra.mxu0 %v787
    %845 = vmatprep.subr.mxu0 %v794
    %846 = vmatpush1.msra.mxu0 %v793
    %847 = vmatprep.subr.mxu0 %v827
    %848 = vmatpush1.msra.mxu0 %v824
    %849 = vmatprep.subr.mxu0 0.0
    %850 = vmatpush1.msra.mxu0 0.0
    %851 = vmatprep.subr.mxu0 0.0
    %852 = vmatpush1.msra.mxu0 0.0
    %853 = vmatprep.subr.mxu0 0.0
    %854 = vmatpush1.msra.mxu0 0.0
    %855 = vmatprep.subr.mxu0 0.0
    %856 = vmatpush1.msra.mxu0 0.0
    %857 = vmatprep.subr.mxu0 0.0
    %858 = vmatpush1.msra.mxu0 0.0
    %859 = vmatprep.subr.mxu0 0.0
    %860 = vmatpush1.msra.mxu0 0.0
    %861 = vmatprep.subr.mxu0 0.0
    %862 = vmatpush1.msra.mxu0 0.0
    %863 = vmatprep.subr.mxu0 0.0
    %864 = vmatpush1.msra.mxu0 0.0
    %865 = vmatprep.subr.mxu0 0.0
    %866 = vmatpush1.msra.mxu0 0.0
    %867 = vmatprep.subr.mxu0 0.0
    %868 = vmatpush1.msra.mxu0 0.0
    %869 = vmatprep.subr.mxu0 0.0
    %870 = vmatpush1.msra.mxu0 0.0
    %871 = vmatprep.subr.mxu0 0.0
    %872 = vmatpush1.msra.mxu0 0.0
    %873 = vmatprep.subr.mxu0 0.0
    %874 = vmatpush1.msra.mxu0 0.0
    %875 = vmatprep.subr.mxu0 0.0
    %876 = vmatpush1.msra.mxu0 0.0
    %877 = vmatprep.subr.mxu0 0.0
    %878 = vmatpush1.msra.mxu0 0.0
    %879 = vmatprep.subr.mxu0 0.0
    %880 = vmatpush1.msra.mxu0 0.0
    %881 = vmatprep.subr.mxu0 0.0
    %882 = vmatpush1.msra.mxu0 0.0
    %883 = vmatprep.subr.mxu0 0.0
    %884 = vmatpush1.msra.mxu0 0.0
    %885 = vmatprep.subr.mxu0 0.0
    %886 = vmatpush1.msra.mxu0 0.0
    %887 = vmatprep.subr.mxu0 0.0
    %888 = vmatpush1.msra.mxu0 0.0
    %889 = vmatprep.subr.mxu0 0.0
    %890 = vmatpush1.msra.mxu0 0.0
    %891 = vmatprep.subr.mxu0 0.0
    %892 = vmatpush1.msra.mxu0 0.0
    %893 = vmatprep.subr.mxu0 0.0
    %894 = vmatpush1.msra.mxu0 0.0
    %895 = vmatprep.subr.mxu0 0.0
    %896 = vmatpush1.msra.mxu0 0.0
    %897 = vmatprep.subr.mxu0 0.0
    %898 = vmatpush1.msra.mxu0 0.0
    %899 = vmatprep.subr.mxu0 0.0
    %900 = vmatpush1.msra.mxu0 0.0
    %901 = vmatprep.subr.mxu0 0.0
    %902 = vmatpush1.msra.mxu0 0.0
    %903 = vmatprep.subr.mxu0 0.0
    %904 = vmatpush1.msra.mxu0 0.0
    %905 = vmatprep.mubr.f32.mxu0 0.0
    %906 = vmatmul.mubr.f32.gmra.mrb[0].mxu0 %v806
    %v907 = vpop.f32.mrb[0].mxu0
    %v908 = vadd.f32 0.0, %v907
    %v909 = vpop.f32.mrb[0].mxu0
    %v910 = vadd.f32 0.0, %v909
    %911 = vmatprep.mubr.f32.mxu0 0.0
    %912 = vmatmul.mubr.f32.gmra.mrb[0].mxu0 %v809
    %v913 = vpop.f32.mrb[0].mxu0
    %v914 = vadd.f32 0.0, %v913
    %v915 = vpop.f32.mrb[0].mxu0
    %v916 = vadd.f32 0.0, %v915
    %917 = vmatprep.mubr.f32.mxu0 0.0
    %918 = vmatmul.mubr.f32.gmra.mrb[0].mxu0 %v812
    %v919 = vpop.f32.mrb[0].mxu0
    %v920 = vadd.f32 0.0, %v919
    %v921 = vpop.f32.mrb[0].mxu0
    %v922 = vadd.f32 0.0, %v921
    %923 = vmatprep.mubr.f32.mxu0 0.0
    %924 = vmatmul.mubr.f32.gmra.mrb[0].mxu0 %v815
    %v925 = vpop.f32.mrb[0].mxu0
    %v926 = vadd.f32 0.0, %v925
    %v927 = vpop.f32.mrb[0].mxu0
    %v928 = vadd.f32 0.0, %v927
    %929 = vmatprep.mubr.f32.mxu0 0.0
    %930 = vmatmul.mubr.f32.gmra.mrb[0].mxu0 %v818
    %v931 = vpop.f32.mrb[0].mxu0
    %v932 = vadd.f32 0.0, %v931
    %v933 = vpop.f32.mrb[0].mxu0
    %v934 = vadd.f32 0.0, %v933
    %935 = vmatprep.mubr.f32.mxu0 0.0
    %936 = vmatmul.mubr.f32.gmra.mrb[0].mxu0 %v821
    %v937 = vpop.f32.mrb[0].mxu0
    %v938 = vadd.f32 0.0, %v937
    %v939 = vpop.f32.mrb[0].mxu0
    %v940 = vadd.f32 0.0, %v939
    %941 = vdwg.mxu0
    %942 = vmatprep.subr.mxu0 %v784
    %943 = vmatpush1.msra.mxu0 %v783
    %944 = vmatprep.subr.mxu0 %v790
    %945 = vmatpush1.msra.mxu0 %v789
    %946 = vmatprep.subr.mxu0 %v796
    %947 = vmatpush1.msra.mxu0 %v795
    %948 = vmatprep.subr.mxu0 %v833
    %949 = vmatpush1.msra.mxu0 %v830
    %950 = vmatprep.subr.mxu0 0.0
    %951 = vmatpush1.msra.mxu0 0.0
    %952 = vmatprep.subr.mxu0 0.0
    %953 = vmatpush1.msra.mxu0 0.0
    %954 = vmatprep.subr.mxu0 0.0
    %955 = vmatpush1.msra.mxu0 0.0
    %956 = vmatprep.subr.mxu0 0.0
    %957 = vmatpush1.msra.mxu0 0.0
    %958 = vmatprep.subr.mxu0 0.0
    %959 = vmatpush1.msra.mxu0 0.0
    %960 = vmatprep.subr.mxu0 0.0
    %961 = vmatpush1.msra.mxu0 0.0
    %962 = vmatprep.subr.mxu0 0.0
    %963 = vmatpush1.msra.mxu0 0.0
    %964 = vmatprep.subr.mxu0 0.0
    %965 = vmatpush1.msra.mxu0 0.0
    %966 = vmatprep.subr.mxu0 0.0
    %967 = vmatpush1.msra.mxu0 0.0
    %968 = vmatprep.subr.mxu0 0.0
    %969 = vmatpush1.msra.mxu0 0.0
    %970 = vmatprep.subr.mxu0 0.0
    %971 = vmatpush1.msra.mxu0 0.0
    %972 = vmatprep.subr.mxu0 0.0
    %973 = vmatpush1.msra.mxu0 0.0
    %974 = vmatprep.subr.mxu0 0.0
    %975 = vmatpush1.msra.mxu0 0.0
    %976 = vmatprep.subr.mxu0 0.0
    %977 = vmatpush1.msra.mxu0 0.0
    %978 = vmatprep.subr.mxu0 0.0
    %979 = vmatpush1.msra.mxu0 0.0
    %980 = vmatprep.subr.mxu0 0.0
    %981 = vmatpush1.msra.mxu0 0.0
    %982 = vmatprep.subr.mxu0 0.0
    %983 = vmatpush1.msra.mxu0 0.0
    %984 = vmatprep.subr.mxu0 0.0
    %985 = vmatpush1.msra.mxu0 0.0
    %986 = vmatprep.subr.mxu0 0.0
    %987 = vmatpush1.msra.mxu0 0.0
    %988 = vmatprep.subr.mxu0 0.0
    %989 = vmatpush1.msra.mxu0 0.0
    %990 = vmatprep.subr.mxu0 0.0
    %991 = vmatpush1.msra.mxu0 0.0
    %992 = vmatprep.subr.mxu0 0.0
    %993 = vmatpush1.msra.mxu0 0.0
    %994 = vmatprep.subr.mxu0 0.0
    %995 = vmatpush1.msra.mxu0 0.0
    %996 = vmatprep.subr.mxu0 0.0
    %997 = vmatpush1.msra.mxu0 0.0
    %998 = vmatprep.subr.mxu0 0.0
    %999 = vmatpush1.msra.mxu0 0.0
    %1000 = vmatprep.subr.mxu0 0.0
    %1001 = vmatpush1.msra.mxu0 0.0
    %1002 = vmatprep.subr.mxu0 0.0
    %1003 = vmatpush1.msra.mxu0 0.0
    %1004 = vmatprep.subr.mxu0 0.0
    %1005 = vmatpush1.msra.mxu0 0.0
    %1006 = vmatprep.mubr.f32.mxu0 0.0
    %1007 = vmatmul.mubr.f32.gmra.mrb[0].mxu0 %v806
    %v1008 = vpop.f32.mrb[0].mxu0
    %v1009 = vadd.f32 0.0, %v1008
    %v1010 = vpop.f32.mrb[0].mxu0
    %v1011 = vadd.f32 0.0, %v1010
    %1012 = vmatprep.mubr.f32.mxu0 0.0
    %1013 = vmatmul.mubr.f32.gmra.mrb[0].mxu0 %v809
    %v1014 = vpop.f32.mrb[0].mxu0
    %v1015 = vadd.f32 0.0, %v1014
    %v1016 = vpop.f32.mrb[0].mxu0
    %v1017 = vadd.f32 0.0, %v1016
    %1018 = vmatprep.mubr.f32.mxu0 0.0
    %1019 = vmatmul.mubr.f32.gmra.mrb[0].mxu0 %v812
    %v1020 = vpop.f32.mrb[0].mxu0
    %v1021 = vadd.f32 0.0, %v1020
    %v1022 = vpop.f32.mrb[0].mxu0
    %v1023 = vadd.f32 0.0, %v1022
    %1024 = vmatprep.mubr.f32.mxu0 0.0
    %1025 = vmatmul.mubr.f32.gmra.mrb[0].mxu0 %v815
    %v1026 = vpop.f32.mrb[0].mxu0
    %v1027 = vadd.f32 0.0, %v1026
    %v1028 = vpop.f32.mrb[0].mxu0
    %v1029 = vadd.f32 0.0, %v1028
    %1030 = vmatprep.mubr.f32.mxu0 0.0
    %1031 = vmatmul.mubr.f32.gmra.mrb[0].mxu0 %v818
    %v1032 = vpop.f32.mrb[0].mxu0
    %v1033 = vadd.f32 0.0, %v1032
    %v1034 = vpop.f32.mrb[0].mxu0
    %v1035 = vadd.f32 0.0, %v1034
    %1036 = vmatprep.mubr.f32.mxu0 0.0
    %1037 = vmatmul.mubr.f32.gmra.mrb[0].mxu0 %v821
    %v1038 = vpop.f32.mrb[0].mxu0
    %v1039 = vadd.f32 0.0, %v1038
    %v1040 = vpop.f32.mrb[0].mxu0
    %v1041 = vadd.f32 0.0, %v1040
    %1042 = vdwg.mxu0
    %1043 = vmatprep.subr.mxu0 %v786
    %1044 = vmatpush1.msra.mxu0 %v785
    %1045 = vmatprep.subr.mxu0 %v792
    %1046 = vmatpush1.msra.mxu0 %v791
    %1047 = vmatprep.subr.mxu0 %v798
    %1048 = vmatpush1.msra.mxu0 %v797
    %1049 = vmatprep.subr.mxu0 %v839
    %1050 = vmatpush1.msra.mxu0 %v836
    %1051 = vmatprep.subr.mxu0 0.0
    %1052 = vmatpush1.msra.mxu0 0.0
    %1053 = vmatprep.subr.mxu0 0.0
    %1054 = vmatpush1.msra.mxu0 0.0
    %1055 = vmatprep.subr.mxu0 0.0
    %1056 = vmatpush1.msra.mxu0 0.0
    %1057 = vmatprep.subr.mxu0 0.0
    %1058 = vmatpush1.msra.mxu0 0.0
    %1059 = vmatprep.subr.mxu0 0.0
    %1060 = vmatpush1.msra.mxu0 0.0
    %1061 = vmatprep.subr.mxu0 0.0
    %1062 = vmatpush1.msra.mxu0 0.0
    %1063 = vmatprep.subr.mxu0 0.0
    %1064 = vmatpush1.msra.mxu0 0.0
    %1065 = vmatprep.subr.mxu0 0.0
    %1066 = vmatpush1.msra.mxu0 0.0
    %1067 = vmatprep.subr.mxu0 0.0
    %1068 = vmatpush1.msra.mxu0 0.0
    %1069 = vmatprep.subr.mxu0 0.0
    %1070 = vmatpush1.msra.mxu0 0.0
    %1071 = vmatprep.subr.mxu0 0.0
    %1072 = vmatpush1.msra.mxu0 0.0
    %1073 = vmatprep.subr.mxu0 0.0
    %1074 = vmatpush1.msra.mxu0 0.0
    %1075 = vmatprep.subr.mxu0 0.0
    %1076 = vmatpush1.msra.mxu0 0.0
    %1077 = vmatprep.subr.mxu0 0.0
    %1078 = vmatpush1.msra.mxu0 0.0
    %1079 = vmatprep.subr.mxu0 0.0
    %1080 = vmatpush1.msra.mxu0 0.0
    %1081 = vmatprep.subr.mxu0 0.0
    %1082 = vmatpush1.msra.mxu0 0.0
    %1083 = vmatprep.subr.mxu0 0.0
    %1084 = vmatpush1.msra.mxu0 0.0
    %1085 = vmatprep.subr.mxu0 0.0
    %1086 = vmatpush1.msra.mxu0 0.0
    %1087 = vmatprep.subr.mxu0 0.0
    %1088 = vmatpush1.msra.mxu0 0.0
    %1089 = vmatprep.subr.mxu0 0.0
    %1090 = vmatpush1.msra.mxu0 0.0
    %1091 = vmatprep.subr.mxu0 0.0
    %1092 = vmatpush1.msra.mxu0 0.0
    %1093 = vmatprep.subr.mxu0 0.0
    %1094 = vmatpush1.msra.mxu0 0.0
    %1095 = vmatprep.subr.mxu0 0.0
    %1096 = vmatpush1.msra.mxu0 0.0
    %1097 = vmatprep.subr.mxu0 0.0
    %1098 = vmatpush1.msra.mxu0 0.0
    %1099 = vmatprep.subr.mxu0 0.0
    %1100 = vmatpush1.msra.mxu0 0.0
    %1101 = vmatprep.subr.mxu0 0.0
    %1102 = vmatpush1.msra.mxu0 0.0
    %1103 = vmatprep.subr.mxu0 0.0
    %1104 = vmatpush1.msra.mxu0 0.0
    %1105 = vmatprep.subr.mxu0 0.0
    %1106 = vmatpush1.msra.mxu0 0.0
    %1107 = vmatprep.mubr.f32.mxu0 0.0
    %1108 = vmatmul.mubr.f32.gmra.mrb[0].mxu0 %v806
    %v1109 = vpop.f32.mrb[0].mxu0
    %v1110 = vadd.f32 0.0, %v1109
    %v1111 = vpop.f32.mrb[0].mxu0
    %v1112 = vadd.f32 0.0, %v1111
    %1113 = vmatprep.mubr.f32.mxu0 0.0
    %1114 = vmatmul.mubr.f32.gmra.mrb[0].mxu0 %v809
    %v1115 = vpop.f32.mrb[0].mxu0
    %v1116 = vadd.f32 0.0, %v1115
    %v1117 = vpop.f32.mrb[0].mxu0
    %v1118 = vadd.f32 0.0, %v1117
    %1119 = vmatprep.mubr.f32.mxu0 0.0
    %1120 = vmatmul.mubr.f32.gmra.mrb[0].mxu0 %v812
    %v1121 = vpop.f32.mrb[0].mxu0
    %v1122 = vadd.f32 0.0, %v1121
    %v1123 = vpop.f32.mrb[0].mxu0
    %v1124 = vadd.f32 0.0, %v1123
    %1125 = vmatprep.mubr.f32.mxu0 0.0
    %1126 = vmatmul.mubr.f32.gmra.mrb[0].mxu0 %v815
    %v1127 = vpop.f32.mrb[0].mxu0
    %v1128 = vadd.f32 0.0, %v1127
    %v1129 = vpop.f32.mrb[0].mxu0
    %v1130 = vadd.f32 0.0, %v1129
    %1131 = vmatprep.mubr.f32.mxu0 0.0
    %1132 = vmatmul.mubr.f32.gmra.mrb[0].mxu0 %v818
    %v1133 = vpop.f32.mrb[0].mxu0
    %v1134 = vadd.f32 0.0, %v1133
    %v1135 = vpop.f32.mrb[0].mxu0
    %v1136 = vadd.f32 0.0, %v1135
    %1137 = vmatprep.mubr.f32.mxu0 0.0
    %1138 = vmatmul.mubr.f32.gmra.mrb[0].mxu0 %v821
    %v1139 = vpop.f32.mrb[0].mxu0
    %v1140 = vadd.f32 0.0, %v1139
    %v1141 = vpop.f32.mrb[0].mxu0
    %v1142 = vadd.f32 0.0, %v1141
    %1143 = vdwg.mxu0
    %v1144 = vadd.f32 %v538, %v908
    %v1145 = vadd.f32 %v540, %v910
    %v1146 = vadd.f32 %v639, %v1009
    %v1147 = vadd.f32 %v641, %v1011
    %v1148 = vadd.f32 %v740, %v1110
    %v1149 = vadd.f32 %v742, %v1112
    %v1150 = vadd.f32 %v544, %v914
    %v1151 = vadd.f32 %v546, %v916
    %v1152 = vadd.f32 %v645, %v1015
    %v1153 = vadd.f32 %v647, %v1017
    %v1154 = vadd.f32 %v746, %v1116
    %v1155 = vadd.f32 %v748, %v1118
    %v1156 = vadd.f32 %v550, %v920
    %v1157 = vadd.f32 %v552, %v922
    %v1158 = vadd.f32 %v651, %v1021
    %v1159 = vadd.f32 %v653, %v1023
    %v1160 = vadd.f32 %v752, %v1122
    %v1161 = vadd.f32 %v754, %v1124
    %v1162 = vadd.f32 %v556, %v926
    %v1163 = vadd.f32 %v558, %v928
    %v1164 = vadd.f32 %v657, %v1027
    %v1165 = vadd.f32 %v659, %v1029
    %v1166 = vadd.f32 %v758, %v1128
    %v1167 = vadd.f32 %v760, %v1130
    %v1168 = vadd.f32 %v562, %v932
    %v1169 = vadd.f32 %v564, %v934
    %v1170 = vadd.f32 %v663, %v1033
    %v1171 = vadd.f32 %v665, %v1035
    %v1172 = vadd.f32 %v764, %v1134
    %v1173 = vadd.f32 %v766, %v1136
    %v1174 = vadd.f32 %v568, %v938
    %v1175 = vadd.f32 %v570, %v940
    %v1176 = vadd.f32 %v669, %v1039
    %v1177 = vadd.f32 %v671, %v1041
    %v1178 = vadd.f32 %v770, %v1140
    %v1179 = vadd.f32 %v772, %v1142
    %v1180 = vld [vmem:[%s0 + $0x3] sm:$0xff]
    %v1181 = vld [vmem:[%s0 + $0xb] sm:$0xff]
    %v1182 = vld [vmem:[%s0 + $0x13] sm:$0xff]
    %v1183 = vld [vmem:[%s0 + $0x23] sm:$0xff]
    %v1184 = vld [vmem:[%s0 + $0x2b] sm:$0xff]
    %v1185 = vld [vmem:[%s0 + $0x33] sm:$0xff]
    %s1186 = scalar_lea.vmem %s1, 576
    %v1187 = vld [vmem:[%s1186] sm:$0xff]
    %v1188 = vld [vmem:[%s1186 + $0x8] sm:$0xff]
    %v1189 = vld [vmem:[%s1186 + $0x10] sm:$0xff]
    %v1190 = vld [vmem:[%s1186 + $0x18] sm:$0xff]
    %v1191 = vld [vmem:[%s1186 + $0x20] sm:$0xff]
    %v1192 = vld [vmem:[%s1186 + $0x28] sm:$0xff]
    %v1193 = vld [vmem:[%s1186 + $0x30] sm:$0xff]
    %v1194 = vld [vmem:[%s1186 + $0x38] sm:$0xff]
    %v1195 = vld [vmem:[%s1186 + $0x40] sm:$0xff]
    %v1196 = vld [vmem:[%s1186 + $0x48] sm:$0xff]
    %v1197 = vld [vmem:[%s1186 + $0x50] sm:$0xff]
    %v1198 = vld [vmem:[%s1186 + $0x58] sm:$0xff]
    %v1199 = vld [vmem:[%s1186 + $0x60] sm:$0xff]
    %v1200 = vld [vmem:[%s1186 + $0x68] sm:$0xff]
    %v1201 = vld [vmem:[%s1186 + $0x70] sm:$0xff]
    %v1202 = vld [vmem:[%s1186 + $0x78] sm:$0xff]
    %v1203 = vld [vmem:[%s1186 + $0x80] sm:$0xff]
    %v1204 = vld [vmem:[%s1186 + $0x88] sm:$0xff]
    %v1205 = vld [vmem:[%s1186 + $0x90] sm:$0xf]
    %v1206 = vld [vmem:[%s1186 + $0x98] sm:$0xf]
    %v1207 = vld [vmem:[%s1186 + $0xa0] sm:$0xf]
    %v1208 = vld [vmem:[%s1186 + $0xa8] sm:$0xf]
    %v1209 = vld [vmem:[%s1186 + $0xb0] sm:$0xf]
    %v1210 = vld [vmem:[%s1186 + $0xb8] sm:$0xf]
    %v1212 = vsel %vm94, %v1180, 0
    %v1215 = vsel %vm94, %v1181, 0
    %v1218 = vsel %vm94, %v1182, 0
    %v1221 = vsel %vm94, %v1183, 0
    %v1224 = vsel %vm94, %v1184, 0
    %v1227 = vsel %vm94, %v1185, 0
    %v1230 = vsel %vm113, %v1205, 0
    %v1233 = vsel %vm113, %v1206, 0
    %v1236 = vsel %vm113, %v1207, 0
    %v1239 = vsel %vm113, %v1208, 0
    %v1242 = vsel %vm113, %v1209, 0
    %v1245 = vsel %vm113, %v1210, 0
    %1247 = vmatprep.subr.mxu0 %v1188
    %1248 = vmatpush1.msra.mxu0 %v1187
    %1249 = vmatprep.subr.mxu0 %v1194
    %1250 = vmatpush1.msra.mxu0 %v1193
    %1251 = vmatprep.subr.mxu0 %v1200
    %1252 = vmatpush1.msra.mxu0 %v1199
    %1253 = vmatprep.subr.mxu0 %v1233
    %1254 = vmatpush1.msra.mxu0 %v1230
    %1255 = vmatprep.subr.mxu0 0.0
    %1256 = vmatpush1.msra.mxu0 0.0
    %1257 = vmatprep.subr.mxu0 0.0
    %1258 = vmatpush1.msra.mxu0 0.0
    %1259 = vmatprep.subr.mxu0 0.0
    %1260 = vmatpush1.msra.mxu0 0.0
    %1261 = vmatprep.subr.mxu0 0.0
    %1262 = vmatpush1.msra.mxu0 0.0
    %1263 = vmatprep.subr.mxu0 0.0
    %1264 = vmatpush1.msra.mxu0 0.0
    %1265 = vmatprep.subr.mxu0 0.0
    %1266 = vmatpush1.msra.mxu0 0.0
    %1267 = vmatprep.subr.mxu0 0.0
    %1268 = vmatpush1.msra.mxu0 0.0
    %1269 = vmatprep.subr.mxu0 0.0
    %1270 = vmatpush1.msra.mxu0 0.0
    %1271 = vmatprep.subr.mxu0 0.0
    %1272 = vmatpush1.msra.mxu0 0.0
    %1273 = vmatprep.subr.mxu0 0.0
    %1274 = vmatpush1.msra.mxu0 0.0
    %1275 = vmatprep.subr.mxu0 0.0
    %1276 = vmatpush1.msra.mxu0 0.0
    %1277 = vmatprep.subr.mxu0 0.0
    %1278 = vmatpush1.msra.mxu0 0.0
    %1279 = vmatprep.subr.mxu0 0.0
    %1280 = vmatpush1.msra.mxu0 0.0
    %1281 = vmatprep.subr.mxu0 0.0
    %1282 = vmatpush1.msra.mxu0 0.0
    %1283 = vmatprep.subr.mxu0 0.0
    %1284 = vmatpush1.msra.mxu0 0.0
    %1285 = vmatprep.subr.mxu0 0.0
    %1286 = vmatpush1.msra.mxu0 0.0
    %1287 = vmatprep.subr.mxu0 0.0
    %1288 = vmatpush1.msra.mxu0 0.0
    %1289 = vmatprep.subr.mxu0 0.0
    %1290 = vmatpush1.msra.mxu0 0.0
    %1291 = vmatprep.subr.mxu0 0.0
    %1292 = vmatpush1.msra.mxu0 0.0
    %1293 = vmatprep.subr.mxu0 0.0
    %1294 = vmatpush1.msra.mxu0 0.0
    %1295 = vmatprep.subr.mxu0 0.0
    %1296 = vmatpush1.msra.mxu0 0.0
    %1297 = vmatprep.subr.mxu0 0.0
    %1298 = vmatpush1.msra.mxu0 0.0
    %1299 = vmatprep.subr.mxu0 0.0
    %1300 = vmatpush1.msra.mxu0 0.0
    %1301 = vmatprep.subr.mxu0 0.0
    %1302 = vmatpush1.msra.mxu0 0.0
    %1303 = vmatprep.subr.mxu0 0.0
    %1304 = vmatpush1.msra.mxu0 0.0
    %1305 = vmatprep.subr.mxu0 0.0
    %1306 = vmatpush1.msra.mxu0 0.0
    %1307 = vmatprep.subr.mxu0 0.0
    %1308 = vmatpush1.msra.mxu0 0.0
    %1309 = vmatprep.subr.mxu0 0.0
    %1310 = vmatpush1.msra.mxu0 0.0
    %1311 = vmatprep.mubr.f32.mxu0 0.0
    %1312 = vmatmul.mubr.f32.gmra.mrb[0].mxu0 %v1212
    %v1313 = vpop.f32.mrb[0].mxu0
    %v1314 = vadd.f32 0.0, %v1313
    %v1315 = vpop.f32.mrb[0].mxu0
    %v1316 = vadd.f32 0.0, %v1315
    %1317 = vmatprep.mubr.f32.mxu0 0.0
    %1318 = vmatmul.mubr.f32.gmra.mrb[0].mxu0 %v1215
    %v1319 = vpop.f32.mrb[0].mxu0
    %v1320 = vadd.f32 0.0, %v1319
    %v1321 = vpop.f32.mrb[0].mxu0
    %v1322 = vadd.f32 0.0, %v1321
    %1323 = vmatprep.mubr.f32.mxu0 0.0
    %1324 = vmatmul.mubr.f32.gmra.mrb[0].mxu0 %v1218
    %v1325 = vpop.f32.mrb[0].mxu0
    %v1326 = vadd.f32 0.0, %v1325
    %v1327 = vpop.f32.mrb[0].mxu0
    %v1328 = vadd.f32 0.0, %v1327
    %1329 = vmatprep.mubr.f32.mxu0 0.0
    %1330 = vmatmul.mubr.f32.gmra.mrb[0].mxu0 %v1221
    %v1331 = vpop.f32.mrb[0].mxu0
    %v1332 = vadd.f32 0.0, %v1331
    %v1333 = vpop.f32.mrb[0].mxu0
    %v1334 = vadd.f32 0.0, %v1333
    %1335 = vmatprep.mubr.f32.mxu0 0.0
    %1336 = vmatmul.mubr.f32.gmra.mrb[0].mxu0 %v1224
    %v1337 = vpop.f32.mrb[0].mxu0
    %v1338 = vadd.f32 0.0, %v1337
    %v1339 = vpop.f32.mrb[0].mxu0
    %v1340 = vadd.f32 0.0, %v1339
    %1341 = vmatprep.mubr.f32.mxu0 0.0
    %1342 = vmatmul.mubr.f32.gmra.mrb[0].mxu0 %v1227
    %v1343 = vpop.f32.mrb[0].mxu0
    %v1344 = vadd.f32 0.0, %v1343
    %v1345 = vpop.f32.mrb[0].mxu0
    %v1346 = vadd.f32 0.0, %v1345
    %1347 = vdwg.mxu0
    %1348 = vmatprep.subr.mxu0 %v1190
    %1349 = vmatpush1.msra.mxu0 %v1189
    %1350 = vmatprep.subr.mxu0 %v1196
    %1351 = vmatpush1.msra.mxu0 %v1195
    %1352 = vmatprep.subr.mxu0 %v1202
    %1353 = vmatpush1.msra.mxu0 %v1201
    %1354 = vmatprep.subr.mxu0 %v1239
    %1355 = vmatpush1.msra.mxu0 %v1236
    %1356 = vmatprep.subr.mxu0 0.0
    %1357 = vmatpush1.msra.mxu0 0.0
    %1358 = vmatprep.subr.mxu0 0.0
    %1359 = vmatpush1.msra.mxu0 0.0
    %1360 = vmatprep.subr.mxu0 0.0
    %1361 = vmatpush1.msra.mxu0 0.0
    %1362 = vmatprep.subr.mxu0 0.0
    %1363 = vmatpush1.msra.mxu0 0.0
    %1364 = vmatprep.subr.mxu0 0.0
    %1365 = vmatpush1.msra.mxu0 0.0
    %1366 = vmatprep.subr.mxu0 0.0
    %1367 = vmatpush1.msra.mxu0 0.0
    %1368 = vmatprep.subr.mxu0 0.0
    %1369 = vmatpush1.msra.mxu0 0.0
    %1370 = vmatprep.subr.mxu0 0.0
    %1371 = vmatpush1.msra.mxu0 0.0
    %1372 = vmatprep.subr.mxu0 0.0
    %1373 = vmatpush1.msra.mxu0 0.0
    %1374 = vmatprep.subr.mxu0 0.0
    %1375 = vmatpush1.msra.mxu0 0.0
    %1376 = vmatprep.subr.mxu0 0.0
    %1377 = vmatpush1.msra.mxu0 0.0
    %1378 = vmatprep.subr.mxu0 0.0
    %1379 = vmatpush1.msra.mxu0 0.0
    %1380 = vmatprep.subr.mxu0 0.0
    %1381 = vmatpush1.msra.mxu0 0.0
    %1382 = vmatprep.subr.mxu0 0.0
    %1383 = vmatpush1.msra.mxu0 0.0
    %1384 = vmatprep.subr.mxu0 0.0
    %1385 = vmatpush1.msra.mxu0 0.0
    %1386 = vmatprep.subr.mxu0 0.0
    %1387 = vmatpush1.msra.mxu0 0.0
    %1388 = vmatprep.subr.mxu0 0.0
    %1389 = vmatpush1.msra.mxu0 0.0
    %1390 = vmatprep.subr.mxu0 0.0
    %1391 = vmatpush1.msra.mxu0 0.0
    %1392 = vmatprep.subr.mxu0 0.0
    %1393 = vmatpush1.msra.mxu0 0.0
    %1394 = vmatprep.subr.mxu0 0.0
    %1395 = vmatpush1.msra.mxu0 0.0
    %1396 = vmatprep.subr.mxu0 0.0
    %1397 = vmatpush1.msra.mxu0 0.0
    %1398 = vmatprep.subr.mxu0 0.0
    %1399 = vmatpush1.msra.mxu0 0.0
    %1400 = vmatprep.subr.mxu0 0.0
    %1401 = vmatpush1.msra.mxu0 0.0
    %1402 = vmatprep.subr.mxu0 0.0
    %1403 = vmatpush1.msra.mxu0 0.0
    %1404 = vmatprep.subr.mxu0 0.0
    %1405 = vmatpush1.msra.mxu0 0.0
    %1406 = vmatprep.subr.mxu0 0.0
    %1407 = vmatpush1.msra.mxu0 0.0
    %1408 = vmatprep.subr.mxu0 0.0
    %1409 = vmatpush1.msra.mxu0 0.0
    %1410 = vmatprep.subr.mxu0 0.0
    %1411 = vmatpush1.msra.mxu0 0.0
    %1412 = vmatprep.mubr.f32.mxu0 0.0
    %1413 = vmatmul.mubr.f32.gmra.mrb[0].mxu0 %v1212
    %v1414 = vpop.f32.mrb[0].mxu0
    %v1415 = vadd.f32 0.0, %v1414
    %v1416 = vpop.f32.mrb[0].mxu0
    %v1417 = vadd.f32 0.0, %v1416
    %1418 = vmatprep.mubr.f32.mxu0 0.0
    %1419 = vmatmul.mubr.f32.gmra.mrb[0].mxu0 %v1215
    %v1420 = vpop.f32.mrb[0].mxu0
    %v1421 = vadd.f32 0.0, %v1420
    %v1422 = vpop.f32.mrb[0].mxu0
    %v1423 = vadd.f32 0.0, %v1422
    %1424 = vmatprep.mubr.f32.mxu0 0.0
    %1425 = vmatmul.mubr.f32.gmra.mrb[0].mxu0 %v1218
    %v1426 = vpop.f32.mrb[0].mxu0
    %v1427 = vadd.f32 0.0, %v1426
    %v1428 = vpop.f32.mrb[0].mxu0
    %v1429 = vadd.f32 0.0, %v1428
    %1430 = vmatprep.mubr.f32.mxu0 0.0
    %1431 = vmatmul.mubr.f32.gmra.mrb[0].mxu0 %v1221
    %v1432 = vpop.f32.mrb[0].mxu0
    %v1433 = vadd.f32 0.0, %v1432
    %v1434 = vpop.f32.mrb[0].mxu0
    %v1435 = vadd.f32 0.0, %v1434
    %1436 = vmatprep.mubr.f32.mxu0 0.0
    %1437 = vmatmul.mubr.f32.gmra.mrb[0].mxu0 %v1224
    %v1438 = vpop.f32.mrb[0].mxu0
    %v1439 = vadd.f32 0.0, %v1438
    %v1440 = vpop.f32.mrb[0].mxu0
    %v1441 = vadd.f32 0.0, %v1440
    %1442 = vmatprep.mubr.f32.mxu0 0.0
    %1443 = vmatmul.mubr.f32.gmra.mrb[0].mxu0 %v1227
    %v1444 = vpop.f32.mrb[0].mxu0
    %v1445 = vadd.f32 0.0, %v1444
    %v1446 = vpop.f32.mrb[0].mxu0
    %v1447 = vadd.f32 0.0, %v1446
    %1448 = vdwg.mxu0
    %1449 = vmatprep.subr.mxu0 %v1192
    %1450 = vmatpush1.msra.mxu0 %v1191
    %1451 = vmatprep.subr.mxu0 %v1198
    %1452 = vmatpush1.msra.mxu0 %v1197
    %1453 = vmatprep.subr.mxu0 %v1204
    %1454 = vmatpush1.msra.mxu0 %v1203
    %1455 = vmatprep.subr.mxu0 %v1245
    %1456 = vmatpush1.msra.mxu0 %v1242
    %1457 = vmatprep.subr.mxu0 0.0
    %1458 = vmatpush1.msra.mxu0 0.0
    %1459 = vmatprep.subr.mxu0 0.0
    %1460 = vmatpush1.msra.mxu0 0.0
    %1461 = vmatprep.subr.mxu0 0.0
    %1462 = vmatpush1.msra.mxu0 0.0
    %1463 = vmatprep.subr.mxu0 0.0
    %1464 = vmatpush1.msra.mxu0 0.0
    %1465 = vmatprep.subr.mxu0 0.0
    %1466 = vmatpush1.msra.mxu0 0.0
    %1467 = vmatprep.subr.mxu0 0.0
    %1468 = vmatpush1.msra.mxu0 0.0
    %1469 = vmatprep.subr.mxu0 0.0
    %1470 = vmatpush1.msra.mxu0 0.0
    %1471 = vmatprep.subr.mxu0 0.0
    %1472 = vmatpush1.msra.mxu0 0.0
    %1473 = vmatprep.subr.mxu0 0.0
    %1474 = vmatpush1.msra.mxu0 0.0
    %1475 = vmatprep.subr.mxu0 0.0
    %1476 = vmatpush1.msra.mxu0 0.0
    %1477 = vmatprep.subr.mxu0 0.0
    %1478 = vmatpush1.msra.mxu0 0.0
    %1479 = vmatprep.subr.mxu0 0.0
    %1480 = vmatpush1.msra.mxu0 0.0
    %1481 = vmatprep.subr.mxu0 0.0
    %1482 = vmatpush1.msra.mxu0 0.0
    %1483 = vmatprep.subr.mxu0 0.0
    %1484 = vmatpush1.msra.mxu0 0.0
    %1485 = vmatprep.subr.mxu0 0.0
    %1486 = vmatpush1.msra.mxu0 0.0
    %1487 = vmatprep.subr.mxu0 0.0
    %1488 = vmatpush1.msra.mxu0 0.0
    %1489 = vmatprep.subr.mxu0 0.0
    %1490 = vmatpush1.msra.mxu0 0.0
    %1491 = vmatprep.subr.mxu0 0.0
    %1492 = vmatpush1.msra.mxu0 0.0
    %1493 = vmatprep.subr.mxu0 0.0
    %1494 = vmatpush1.msra.mxu0 0.0
    %1495 = vmatprep.subr.mxu0 0.0
    %1496 = vmatpush1.msra.mxu0 0.0
    %1497 = vmatprep.subr.mxu0 0.0
    %1498 = vmatpush1.msra.mxu0 0.0
    %1499 = vmatprep.subr.mxu0 0.0
    %1500 = vmatpush1.msra.mxu0 0.0
    %1501 = vmatprep.subr.mxu0 0.0
    %1502 = vmatpush1.msra.mxu0 0.0
    %1503 = vmatprep.subr.mxu0 0.0
    %1504 = vmatpush1.msra.mxu0 0.0
    %1505 = vmatprep.subr.mxu0 0.0
    %1506 = vmatpush1.msra.mxu0 0.0
    %1507 = vmatprep.subr.mxu0 0.0
    %1508 = vmatpush1.msra.mxu0 0.0
    %1509 = vmatprep.subr.mxu0 0.0
    %1510 = vmatpush1.msra.mxu0 0.0
    %1511 = vmatprep.subr.mxu0 0.0
    %1512 = vmatpush1.msra.mxu0 0.0
    %1513 = vmatprep.mubr.f32.mxu0 0.0
    %1514 = vmatmul.mubr.f32.gmra.mrb[0].mxu0 %v1212
    %v1515 = vpop.f32.mrb[0].mxu0
    %v1516 = vadd.f32 0.0, %v1515
    %v1517 = vpop.f32.mrb[0].mxu0
    %v1518 = vadd.f32 0.0, %v1517
    %1519 = vmatprep.mubr.f32.mxu0 0.0
    %1520 = vmatmul.mubr.f32.gmra.mrb[0].mxu0 %v1215
    %v1521 = vpop.f32.mrb[0].mxu0
    %v1522 = vadd.f32 0.0, %v1521
    %v1523 = vpop.f32.mrb[0].mxu0
    %v1524 = vadd.f32 0.0, %v1523
    %1525 = vmatprep.mubr.f32.mxu0 0.0
    %1526 = vmatmul.mubr.f32.gmra.mrb[0].mxu0 %v1218
    %v1527 = vpop.f32.mrb[0].mxu0
    %v1528 = vadd.f32 0.0, %v1527
    %v1529 = vpop.f32.mrb[0].mxu0
    %v1530 = vadd.f32 0.0, %v1529
    %1531 = vmatprep.mubr.f32.mxu0 0.0
    %1532 = vmatmul.mubr.f32.gmra.mrb[0].mxu0 %v1221
    %v1533 = vpop.f32.mrb[0].mxu0
    %v1534 = vadd.f32 0.0, %v1533
    %v1535 = vpop.f32.mrb[0].mxu0
    %v1536 = vadd.f32 0.0, %v1535
    %1537 = vmatprep.mubr.f32.mxu0 0.0
    %1538 = vmatmul.mubr.f32.gmra.mrb[0].mxu0 %v1224
    %v1539 = vpop.f32.mrb[0].mxu0
    %v1540 = vadd.f32 0.0, %v1539
    %v1541 = vpop.f32.mrb[0].mxu0
    %v1542 = vadd.f32 0.0, %v1541
    %1543 = vmatprep.mubr.f32.mxu0 0.0
    %1544 = vmatmul.mubr.f32.gmra.mrb[0].mxu0 %v1227
    %v1545 = vpop.f32.mrb[0].mxu0
    %v1546 = vadd.f32 0.0, %v1545
    %v1547 = vpop.f32.mrb[0].mxu0
    %v1548 = vadd.f32 0.0, %v1547
    %1549 = vdwg.mxu0
    %v1550 = vadd.f32 %v1144, %v1314
    %v1551 = vadd.f32 %v1145, %v1316
    %v1552 = vadd.f32 %v1146, %v1415
    %v1553 = vadd.f32 %v1147, %v1417
    %v1554 = vadd.f32 %v1148, %v1516
    %v1555 = vadd.f32 %v1149, %v1518
    %v1556 = vadd.f32 %v1150, %v1320
    %v1557 = vadd.f32 %v1151, %v1322
    %v1558 = vadd.f32 %v1152, %v1421
    %v1559 = vadd.f32 %v1153, %v1423
    %v1560 = vadd.f32 %v1154, %v1522
    %v1561 = vadd.f32 %v1155, %v1524
    %v1562 = vadd.f32 %v1156, %v1326
    %v1563 = vadd.f32 %v1157, %v1328
    %v1564 = vadd.f32 %v1158, %v1427
    %v1565 = vadd.f32 %v1159, %v1429
    %v1566 = vadd.f32 %v1160, %v1528
    %v1567 = vadd.f32 %v1161, %v1530
    %v1568 = vadd.f32 %v1162, %v1332
    %v1569 = vadd.f32 %v1163, %v1334
    %v1570 = vadd.f32 %v1164, %v1433
    %v1571 = vadd.f32 %v1165, %v1435
    %v1572 = vadd.f32 %v1166, %v1534
    %v1573 = vadd.f32 %v1167, %v1536
    %v1574 = vadd.f32 %v1168, %v1338
    %v1575 = vadd.f32 %v1169, %v1340
    %v1576 = vadd.f32 %v1170, %v1439
    %v1577 = vadd.f32 %v1171, %v1441
    %v1578 = vadd.f32 %v1172, %v1540
    %v1579 = vadd.f32 %v1173, %v1542
    %v1580 = vadd.f32 %v1174, %v1344
    %v1581 = vadd.f32 %v1175, %v1346
    %v1582 = vadd.f32 %v1176, %v1445
    %v1583 = vadd.f32 %v1177, %v1447
    %v1584 = vadd.f32 %v1178, %v1546
    %v1585 = vadd.f32 %v1179, %v1548
    %v1586 = vld [vmem:[%s0 + $0x4] sm:$0xff]
    %v1587 = vld [vmem:[%s0 + $0xc] sm:$0xff]
    %v1588 = vld [vmem:[%s0 + $0x14] sm:$0xff]
    %v1589 = vld [vmem:[%s0 + $0x24] sm:$0xff]
    %v1590 = vld [vmem:[%s0 + $0x2c] sm:$0xff]
    %v1591 = vld [vmem:[%s0 + $0x34] sm:$0xff]
    %s1592 = scalar_lea.vmem %s1, 768
    %v1593 = vld [vmem:[%s1592] sm:$0xff]
    %v1594 = vld [vmem:[%s1592 + $0x8] sm:$0xff]
    %v1595 = vld [vmem:[%s1592 + $0x10] sm:$0xff]
    %v1596 = vld [vmem:[%s1592 + $0x18] sm:$0xff]
    %v1597 = vld [vmem:[%s1592 + $0x20] sm:$0xff]
    %v1598 = vld [vmem:[%s1592 + $0x28] sm:$0xff]
    %v1599 = vld [vmem:[%s1592 + $0x30] sm:$0xff]
    %v1600 = vld [vmem:[%s1592 + $0x38] sm:$0xff]
    %v1601 = vld [vmem:[%s1592 + $0x40] sm:$0xff]
    %v1602 = vld [vmem:[%s1592 + $0x48] sm:$0xff]
    %v1603 = vld [vmem:[%s1592 + $0x50] sm:$0xff]
    %v1604 = vld [vmem:[%s1592 + $0x58] sm:$0xff]
    %v1605 = vld [vmem:[%s1592 + $0x60] sm:$0xff]
    %v1606 = vld [vmem:[%s1592 + $0x68] sm:$0xff]
    %v1607 = vld [vmem:[%s1592 + $0x70] sm:$0xff]
    %v1608 = vld [vmem:[%s1592 + $0x78] sm:$0xff]
    %v1609 = vld [vmem:[%s1592 + $0x80] sm:$0xff]
    %v1610 = vld [vmem:[%s1592 + $0x88] sm:$0xff]
    %v1611 = vld [vmem:[%s1592 + $0x90] sm:$0xf]
    %v1612 = vld [vmem:[%s1592 + $0x98] sm:$0xf]
    %v1613 = vld [vmem:[%s1592 + $0xa0] sm:$0xf]
    %v1614 = vld [vmem:[%s1592 + $0xa8] sm:$0xf]
    %v1615 = vld [vmem:[%s1592 + $0xb0] sm:$0xf]
    %v1616 = vld [vmem:[%s1592 + $0xb8] sm:$0xf]
    %v1618 = vsel %vm94, %v1586, 0
    %v1621 = vsel %vm94, %v1587, 0
    %v1624 = vsel %vm94, %v1588, 0
    %v1627 = vsel %vm94, %v1589, 0
    %v1630 = vsel %vm94, %v1590, 0
    %v1633 = vsel %vm94, %v1591, 0
    %v1636 = vsel %vm113, %v1611, 0
    %v1639 = vsel %vm113, %v1612, 0
    %v1642 = vsel %vm113, %v1613, 0
    %v1645 = vsel %vm113, %v1614, 0
    %v1648 = vsel %vm113, %v1615, 0
    %v1651 = vsel %vm113, %v1616, 0
    %1653 = vmatprep.subr.mxu0 %v1594
    %1654 = vmatpush1.msra.mxu0 %v1593
    %1655 = vmatprep.subr.mxu0 %v1600
    %1656 = vmatpush1.msra.mxu0 %v1599
    %1657 = vmatprep.subr.mxu0 %v1606
    %1658 = vmatpush1.msra.mxu0 %v1605
    %1659 = vmatprep.subr.mxu0 %v1639
    %1660 = vmatpush1.msra.mxu0 %v1636
    %1661 = vmatprep.subr.mxu0 0.0
    %1662 = vmatpush1.msra.mxu0 0.0
    %1663 = vmatprep.subr.mxu0 0.0
    %1664 = vmatpush1.msra.mxu0 0.0
    %1665 = vmatprep.subr.mxu0 0.0
    %1666 = vmatpush1.msra.mxu0 0.0
    %1667 = vmatprep.subr.mxu0 0.0
    %1668 = vmatpush1.msra.mxu0 0.0
    %1669 = vmatprep.subr.mxu0 0.0
    %1670 = vmatpush1.msra.mxu0 0.0
    %1671 = vmatprep.subr.mxu0 0.0
    %1672 = vmatpush1.msra.mxu0 0.0
    %1673 = vmatprep.subr.mxu0 0.0
    %1674 = vmatpush1.msra.mxu0 0.0
    %1675 = vmatprep.subr.mxu0 0.0
    %1676 = vmatpush1.msra.mxu0 0.0
    %1677 = vmatprep.subr.mxu0 0.0
    %1678 = vmatpush1.msra.mxu0 0.0
    %1679 = vmatprep.subr.mxu0 0.0
    %1680 = vmatpush1.msra.mxu0 0.0
    %1681 = vmatprep.subr.mxu0 0.0
    %1682 = vmatpush1.msra.mxu0 0.0
    %1683 = vmatprep.subr.mxu0 0.0
    %1684 = vmatpush1.msra.mxu0 0.0
    %1685 = vmatprep.subr.mxu0 0.0
    %1686 = vmatpush1.msra.mxu0 0.0
    %1687 = vmatprep.subr.mxu0 0.0
    %1688 = vmatpush1.msra.mxu0 0.0
    %1689 = vmatprep.subr.mxu0 0.0
    %1690 = vmatpush1.msra.mxu0 0.0
    %1691 = vmatprep.subr.mxu0 0.0
    %1692 = vmatpush1.msra.mxu0 0.0
    %1693 = vmatprep.subr.mxu0 0.0
    %1694 = vmatpush1.msra.mxu0 0.0
    %1695 = vmatprep.subr.mxu0 0.0
    %1696 = vmatpush1.msra.mxu0 0.0
    %1697 = vmatprep.subr.mxu0 0.0
    %1698 = vmatpush1.msra.mxu0 0.0
    %1699 = vmatprep.subr.mxu0 0.0
    %1700 = vmatpush1.msra.mxu0 0.0
    %1701 = vmatprep.subr.mxu0 0.0
    %1702 = vmatpush1.msra.mxu0 0.0
    %1703 = vmatprep.subr.mxu0 0.0
    %1704 = vmatpush1.msra.mxu0 0.0
    %1705 = vmatprep.subr.mxu0 0.0
    %1706 = vmatpush1.msra.mxu0 0.0
    %1707 = vmatprep.subr.mxu0 0.0
    %1708 = vmatpush1.msra.mxu0 0.0
    %1709 = vmatprep.subr.mxu0 0.0
    %1710 = vmatpush1.msra.mxu0 0.0
    %1711 = vmatprep.subr.mxu0 0.0
    %1712 = vmatpush1.msra.mxu0 0.0
    %1713 = vmatprep.subr.mxu0 0.0
    %1714 = vmatpush1.msra.mxu0 0.0
    %1715 = vmatprep.subr.mxu0 0.0
    %1716 = vmatpush1.msra.mxu0 0.0
    %1717 = vmatprep.mubr.f32.mxu0 0.0
    %1718 = vmatmul.mubr.f32.gmra.mrb[0].mxu0 %v1618
    %v1719 = vpop.f32.mrb[0].mxu0
    %v1720 = vadd.f32 0.0, %v1719
    %v1721 = vpop.f32.mrb[0].mxu0
    %v1722 = vadd.f32 0.0, %v1721
    %1723 = vmatprep.mubr.f32.mxu0 0.0
    %1724 = vmatmul.mubr.f32.gmra.mrb[0].mxu0 %v1621
    %v1725 = vpop.f32.mrb[0].mxu0
    %v1726 = vadd.f32 0.0, %v1725
    %v1727 = vpop.f32.mrb[0].mxu0
    %v1728 = vadd.f32 0.0, %v1727
    %1729 = vmatprep.mubr.f32.mxu0 0.0
    %1730 = vmatmul.mubr.f32.gmra.mrb[0].mxu0 %v1624
    %v1731 = vpop.f32.mrb[0].mxu0
    %v1732 = vadd.f32 0.0, %v1731
    %v1733 = vpop.f32.mrb[0].mxu0
    %v1734 = vadd.f32 0.0, %v1733
    %1735 = vmatprep.mubr.f32.mxu0 0.0
    %1736 = vmatmul.mubr.f32.gmra.mrb[0].mxu0 %v1627
    %v1737 = vpop.f32.mrb[0].mxu0
    %v1738 = vadd.f32 0.0, %v1737
    %v1739 = vpop.f32.mrb[0].mxu0
    %v1740 = vadd.f32 0.0, %v1739
    %1741 = vmatprep.mubr.f32.mxu0 0.0
    %1742 = vmatmul.mubr.f32.gmra.mrb[0].mxu0 %v1630
    %v1743 = vpop.f32.mrb[0].mxu0
    %v1744 = vadd.f32 0.0, %v1743
    %v1745 = vpop.f32.mrb[0].mxu0
    %v1746 = vadd.f32 0.0, %v1745
    %1747 = vmatprep.mubr.f32.mxu0 0.0
    %1748 = vmatmul.mubr.f32.gmra.mrb[0].mxu0 %v1633
    %v1749 = vpop.f32.mrb[0].mxu0
    %v1750 = vadd.f32 0.0, %v1749
    %v1751 = vpop.f32.mrb[0].mxu0
    %v1752 = vadd.f32 0.0, %v1751
    %1753 = vdwg.mxu0
    %1754 = vmatprep.subr.mxu0 %v1596
    %1755 = vmatpush1.msra.mxu0 %v1595
    %1756 = vmatprep.subr.mxu0 %v1602
    %1757 = vmatpush1.msra.mxu0 %v1601
    %1758 = vmatprep.subr.mxu0 %v1608
    %1759 = vmatpush1.msra.mxu0 %v1607
    %1760 = vmatprep.subr.mxu0 %v1645
    %1761 = vmatpush1.msra.mxu0 %v1642
    %1762 = vmatprep.subr.mxu0 0.0
    %1763 = vmatpush1.msra.mxu0 0.0
    %1764 = vmatprep.subr.mxu0 0.0
    %1765 = vmatpush1.msra.mxu0 0.0
    %1766 = vmatprep.subr.mxu0 0.0
    %1767 = vmatpush1.msra.mxu0 0.0
    %1768 = vmatprep.subr.mxu0 0.0
    %1769 = vmatpush1.msra.mxu0 0.0
    %1770 = vmatprep.subr.mxu0 0.0
    %1771 = vmatpush1.msra.mxu0 0.0
    %1772 = vmatprep.subr.mxu0 0.0
    %1773 = vmatpush1.msra.mxu0 0.0
    %1774 = vmatprep.subr.mxu0 0.0
    %1775 = vmatpush1.msra.mxu0 0.0
    %1776 = vmatprep.subr.mxu0 0.0
    %1777 = vmatpush1.msra.mxu0 0.0
    %1778 = vmatprep.subr.mxu0 0.0
    %1779 = vmatpush1.msra.mxu0 0.0
    %1780 = vmatprep.subr.mxu0 0.0
    %1781 = vmatpush1.msra.mxu0 0.0
    %1782 = vmatprep.subr.mxu0 0.0
    %1783 = vmatpush1.msra.mxu0 0.0
    %1784 = vmatprep.subr.mxu0 0.0
    %1785 = vmatpush1.msra.mxu0 0.0
    %1786 = vmatprep.subr.mxu0 0.0
    %1787 = vmatpush1.msra.mxu0 0.0
    %1788 = vmatprep.subr.mxu0 0.0
    %1789 = vmatpush1.msra.mxu0 0.0
    %1790 = vmatprep.subr.mxu0 0.0
    %1791 = vmatpush1.msra.mxu0 0.0
    %1792 = vmatprep.subr.mxu0 0.0
    %1793 = vmatpush1.msra.mxu0 0.0
    %1794 = vmatprep.subr.mxu0 0.0
    %1795 = vmatpush1.msra.mxu0 0.0
    %1796 = vmatprep.subr.mxu0 0.0
    %1797 = vmatpush1.msra.mxu0 0.0
    %1798 = vmatprep.subr.mxu0 0.0
    %1799 = vmatpush1.msra.mxu0 0.0
    %1800 = vmatprep.subr.mxu0 0.0
    %1801 = vmatpush1.msra.mxu0 0.0
    %1802 = vmatprep.subr.mxu0 0.0
    %1803 = vmatpush1.msra.mxu0 0.0
    %1804 = vmatprep.subr.mxu0 0.0
    %1805 = vmatpush1.msra.mxu0 0.0
    %1806 = vmatprep.subr.mxu0 0.0
    %1807 = vmatpush1.msra.mxu0 0.0
    %1808 = vmatprep.subr.mxu0 0.0
    %1809 = vmatpush1.msra.mxu0 0.0
    %1810 = vmatprep.subr.mxu0 0.0
    %1811 = vmatpush1.msra.mxu0 0.0
    %1812 = vmatprep.subr.mxu0 0.0
    %1813 = vmatpush1.msra.mxu0 0.0
    %1814 = vmatprep.subr.mxu0 0.0
    %1815 = vmatpush1.msra.mxu0 0.0
    %1816 = vmatprep.subr.mxu0 0.0
    %1817 = vmatpush1.msra.mxu0 0.0
    %1818 = vmatprep.mubr.f32.mxu0 0.0
    %1819 = vmatmul.mubr.f32.gmra.mrb[0].mxu0 %v1618
    %v1820 = vpop.f32.mrb[0].mxu0
    %v1821 = vadd.f32 0.0, %v1820
    %v1822 = vpop.f32.mrb[0].mxu0
    %v1823 = vadd.f32 0.0, %v1822
    %1824 = vmatprep.mubr.f32.mxu0 0.0
    %1825 = vmatmul.mubr.f32.gmra.mrb[0].mxu0 %v1621
    %v1826 = vpop.f32.mrb[0].mxu0
    %v1827 = vadd.f32 0.0, %v1826
    %v1828 = vpop.f32.mrb[0].mxu0
    %v1829 = vadd.f32 0.0, %v1828
    %1830 = vmatprep.mubr.f32.mxu0 0.0
    %1831 = vmatmul.mubr.f32.gmra.mrb[0].mxu0 %v1624
    %v1832 = vpop.f32.mrb[0].mxu0
    %v1833 = vadd.f32 0.0, %v1832
    %v1834 = vpop.f32.mrb[0].mxu0
    %v1835 = vadd.f32 0.0, %v1834
    %1836 = vmatprep.mubr.f32.mxu0 0.0
    %1837 = vmatmul.mubr.f32.gmra.mrb[0].mxu0 %v1627
    %v1838 = vpop.f32.mrb[0].mxu0
    %v1839 = vadd.f32 0.0, %v1838
    %v1840 = vpop.f32.mrb[0].mxu0
    %v1841 = vadd.f32 0.0, %v1840
    %1842 = vmatprep.mubr.f32.mxu0 0.0
    %1843 = vmatmul.mubr.f32.gmra.mrb[0].mxu0 %v1630
    %v1844 = vpop.f32.mrb[0].mxu0
    %v1845 = vadd.f32 0.0, %v1844
    %v1846 = vpop.f32.mrb[0].mxu0
    %v1847 = vadd.f32 0.0, %v1846
    %1848 = vmatprep.mubr.f32.mxu0 0.0
    %1849 = vmatmul.mubr.f32.gmra.mrb[0].mxu0 %v1633
    %v1850 = vpop.f32.mrb[0].mxu0
    %v1851 = vadd.f32 0.0, %v1850
    %v1852 = vpop.f32.mrb[0].mxu0
    %v1853 = vadd.f32 0.0, %v1852
    %1854 = vdwg.mxu0
    %1855 = vmatprep.subr.mxu0 %v1598
    %1856 = vmatpush1.msra.mxu0 %v1597
    %1857 = vmatprep.subr.mxu0 %v1604
    %1858 = vmatpush1.msra.mxu0 %v1603
    %1859 = vmatprep.subr.mxu0 %v1610
    %1860 = vmatpush1.msra.mxu0 %v1609
    %1861 = vmatprep.subr.mxu0 %v1651
    %1862 = vmatpush1.msra.mxu0 %v1648
    %1863 = vmatprep.subr.mxu0 0.0
    %1864 = vmatpush1.msra.mxu0 0.0
    %1865 = vmatprep.subr.mxu0 0.0
    %1866 = vmatpush1.msra.mxu0 0.0
    %1867 = vmatprep.subr.mxu0 0.0
    %1868 = vmatpush1.msra.mxu0 0.0
    %1869 = vmatprep.subr.mxu0 0.0
    %1870 = vmatpush1.msra.mxu0 0.0
    %1871 = vmatprep.subr.mxu0 0.0
    %1872 = vmatpush1.msra.mxu0 0.0
    %1873 = vmatprep.subr.mxu0 0.0
    %1874 = vmatpush1.msra.mxu0 0.0
    %1875 = vmatprep.subr.mxu0 0.0
    %1876 = vmatpush1.msra.mxu0 0.0
    %1877 = vmatprep.subr.mxu0 0.0
    %1878 = vmatpush1.msra.mxu0 0.0
    %1879 = vmatprep.subr.mxu0 0.0
    %1880 = vmatpush1.msra.mxu0 0.0
    %1881 = vmatprep.subr.mxu0 0.0
    %1882 = vmatpush1.msra.mxu0 0.0
    %1883 = vmatprep.subr.mxu0 0.0
    %1884 = vmatpush1.msra.mxu0 0.0
    %1885 = vmatprep.subr.mxu0 0.0
    %1886 = vmatpush1.msra.mxu0 0.0
    %1887 = vmatprep.subr.mxu0 0.0
    %1888 = vmatpush1.msra.mxu0 0.0
    %1889 = vmatprep.subr.mxu0 0.0
    %1890 = vmatpush1.msra.mxu0 0.0
    %1891 = vmatprep.subr.mxu0 0.0
    %1892 = vmatpush1.msra.mxu0 0.0
    %1893 = vmatprep.subr.mxu0 0.0
    %1894 = vmatpush1.msra.mxu0 0.0
    %1895 = vmatprep.subr.mxu0 0.0
    %1896 = vmatpush1.msra.mxu0 0.0
    %1897 = vmatprep.subr.mxu0 0.0
    %1898 = vmatpush1.msra.mxu0 0.0
    %1899 = vmatprep.subr.mxu0 0.0
    %1900 = vmatpush1.msra.mxu0 0.0
    %1901 = vmatprep.subr.mxu0 0.0
    %1902 = vmatpush1.msra.mxu0 0.0
    %1903 = vmatprep.subr.mxu0 0.0
    %1904 = vmatpush1.msra.mxu0 0.0
    %1905 = vmatprep.subr.mxu0 0.0
    %1906 = vmatpush1.msra.mxu0 0.0
    %1907 = vmatprep.subr.mxu0 0.0
    %1908 = vmatpush1.msra.mxu0 0.0
    %1909 = vmatprep.subr.mxu0 0.0
    %1910 = vmatpush1.msra.mxu0 0.0
    %1911 = vmatprep.subr.mxu0 0.0
    %1912 = vmatpush1.msra.mxu0 0.0
    %1913 = vmatprep.subr.mxu0 0.0
    %1914 = vmatpush1.msra.mxu0 0.0
    %1915 = vmatprep.subr.mxu0 0.0
    %1916 = vmatpush1.msra.mxu0 0.0
    %1917 = vmatprep.subr.mxu0 0.0
    %1918 = vmatpush1.msra.mxu0 0.0
    %1919 = vmatprep.mubr.f32.mxu0 0.0
    %1920 = vmatmul.mubr.f32.gmra.mrb[0].mxu0 %v1618
    %v1921 = vpop.f32.mrb[0].mxu0
    %v1922 = vadd.f32 0.0, %v1921
    %v1923 = vpop.f32.mrb[0].mxu0
    %v1924 = vadd.f32 0.0, %v1923
    %1925 = vmatprep.mubr.f32.mxu0 0.0
    %1926 = vmatmul.mubr.f32.gmra.mrb[0].mxu0 %v1621
    %v1927 = vpop.f32.mrb[0].mxu0
    %v1928 = vadd.f32 0.0, %v1927
    %v1929 = vpop.f32.mrb[0].mxu0
    %v1930 = vadd.f32 0.0, %v1929
    %1931 = vmatprep.mubr.f32.mxu0 0.0
    %1932 = vmatmul.mubr.f32.gmra.mrb[0].mxu0 %v1624
    %v1933 = vpop.f32.mrb[0].mxu0
    %v1934 = vadd.f32 0.0, %v1933
    %v1935 = vpop.f32.mrb[0].mxu0
    %v1936 = vadd.f32 0.0, %v1935
    %1937 = vmatprep.mubr.f32.mxu0 0.0
    %1938 = vmatmul.mubr.f32.gmra.mrb[0].mxu0 %v1627
    %v1939 = vpop.f32.mrb[0].mxu0
    %v1940 = vadd.f32 0.0, %v1939
    %v1941 = vpop.f32.mrb[0].mxu0
    %v1942 = vadd.f32 0.0, %v1941
    %1943 = vmatprep.mubr.f32.mxu0 0.0
    %1944 = vmatmul.mubr.f32.gmra.mrb[0].mxu0 %v1630
    %v1945 = vpop.f32.mrb[0].mxu0
    %v1946 = vadd.f32 0.0, %v1945
    %v1947 = vpop.f32.mrb[0].mxu0
    %v1948 = vadd.f32 0.0, %v1947
    %1949 = vmatprep.mubr.f32.mxu0 0.0
    %1950 = vmatmul.mubr.f32.gmra.mrb[0].mxu0 %v1633
    %v1951 = vpop.f32.mrb[0].mxu0
    %v1952 = vadd.f32 0.0, %v1951
    %v1953 = vpop.f32.mrb[0].mxu0
    %v1954 = vadd.f32 0.0, %v1953
    %1955 = vdwg.mxu0
    %v1956 = vadd.f32 %v1550, %v1720
    %v1957 = vadd.f32 %v1551, %v1722
    %v1958 = vadd.f32 %v1552, %v1821
    %v1959 = vadd.f32 %v1553, %v1823
    %v1960 = vadd.f32 %v1554, %v1922
    %v1961 = vadd.f32 %v1555, %v1924
    %v1962 = vadd.f32 %v1556, %v1726
    %v1963 = vadd.f32 %v1557, %v1728
    %v1964 = vadd.f32 %v1558, %v1827
    %v1965 = vadd.f32 %v1559, %v1829
    %v1966 = vadd.f32 %v1560, %v1928
    %v1967 = vadd.f32 %v1561, %v1930
    %v1968 = vadd.f32 %v1562, %v1732
    %v1969 = vadd.f32 %v1563, %v1734
    %v1970 = vadd.f32 %v1564, %v1833
    %v1971 = vadd.f32 %v1565, %v1835
    %v1972 = vadd.f32 %v1566, %v1934
    %v1973 = vadd.f32 %v1567, %v1936
    %v1974 = vadd.f32 %v1568, %v1738
    %v1975 = vadd.f32 %v1569, %v1740
    %v1976 = vadd.f32 %v1570, %v1839
    %v1977 = vadd.f32 %v1571, %v1841
    %v1978 = vadd.f32 %v1572, %v1940
    %v1979 = vadd.f32 %v1573, %v1942
    %v1980 = vadd.f32 %v1574, %v1744
    %v1981 = vadd.f32 %v1575, %v1746
    %v1982 = vadd.f32 %v1576, %v1845
    %v1983 = vadd.f32 %v1577, %v1847
    %v1984 = vadd.f32 %v1578, %v1946
    %v1985 = vadd.f32 %v1579, %v1948
    %v1986 = vadd.f32 %v1580, %v1750
    %v1987 = vadd.f32 %v1581, %v1752
    %v1988 = vadd.f32 %v1582, %v1851
    %v1989 = vadd.f32 %v1583, %v1853
    %v1990 = vadd.f32 %v1584, %v1952
    %v1991 = vadd.f32 %v1585, %v1954
    %v1992 = vld [vmem:[%s2] sm:$0x3f]
    %v1994 = vlaneseq
    %v1995 = vshrl.u32 %v1994, 7
    %v1996 = vsub.s32 0, %v1995
    %v1997 = vrot.slane %v1992, %v1996
    %v1998 = vlaneseq
    %v1999 = vshrl.u32 %v1998, 7
    %v2000 = vsub.s32 1, %v1999
    %v2001 = vrot.slane %v1992, %v2000
    %v2002 = vlaneseq
    %v2003 = vshrl.u32 %v2002, 7
    %v2004 = vsub.s32 2, %v2003
    %v2005 = vrot.slane %v1992, %v2004
    %v2006 = vlaneseq
    %v2007 = vshrl.u32 %v2006, 7
    %v2008 = vsub.s32 3, %v2007
    %v2009 = vrot.slane %v1992, %v2008
    %v2010 = vlaneseq
    %v2011 = vshrl.u32 %v2010, 7
    %v2012 = vsub.s32 4, %v2011
    %v2013 = vrot.slane %v1992, %v2012
    %v2014 = vlaneseq
    %v2015 = vshrl.u32 %v2014, 7
    %v2016 = vsub.s32 5, %v2015
    %v2017 = vrot.slane %v1992, %v2016
    %v2024 = vmul.f32 %v1956, %v1997
    %v2025 = vmul.f32 %v1957, %v2001
    %v2026 = vmul.f32 %v1958, %v2005
    %v2027 = vmul.f32 %v1959, %v2009
    %v2028 = vmul.f32 %v1960, %v2013
    %v2029 = vmul.f32 %v1961, %v2017
    %v2030 = vmul.f32 %v1962, %v1997
    %v2031 = vmul.f32 %v1963, %v2001
    %v2032 = vmul.f32 %v1964, %v2005
    %v2033 = vmul.f32 %v1965, %v2009
    %v2034 = vmul.f32 %v1966, %v2013
    %v2035 = vmul.f32 %v1967, %v2017
    %v2036 = vmul.f32 %v1968, %v1997
    %v2037 = vmul.f32 %v1969, %v2001
    %v2038 = vmul.f32 %v1970, %v2005
    %v2039 = vmul.f32 %v1971, %v2009
    %v2040 = vmul.f32 %v1972, %v2013
    %v2041 = vmul.f32 %v1973, %v2017
    %v2042 = vmul.f32 %v1974, %v1997
    %v2043 = vmul.f32 %v1975, %v2001
    %v2044 = vmul.f32 %v1976, %v2005
    %v2045 = vmul.f32 %v1977, %v2009
    %v2046 = vmul.f32 %v1978, %v2013
    %v2047 = vmul.f32 %v1979, %v2017
    %v2048 = vmul.f32 %v1980, %v1997
    %v2049 = vmul.f32 %v1981, %v2001
    %v2050 = vmul.f32 %v1982, %v2005
    %v2051 = vmul.f32 %v1983, %v2009
    %v2052 = vmul.f32 %v1984, %v2013
    %v2053 = vmul.f32 %v1985, %v2017
    %v2054 = vmul.f32 %v1986, %v1997
    %v2055 = vmul.f32 %v1987, %v2001
    %v2056 = vmul.f32 %v1988, %v2005
    %v2057 = vmul.f32 %v1989, %v2009
    %v2058 = vmul.f32 %v1990, %v2013
    %v2059 = vmul.f32 %v1991, %v2017
    %v2060 = vld [vmem:[%s3] sm:$0x3f]
    %v2062 = vlaneseq
    %v2063 = vshrl.u32 %v2062, 7
    %v2064 = vsub.s32 0, %v2063
    %v2065 = vrot.slane %v2060, %v2064
    %v2066 = vlaneseq
    %v2067 = vshrl.u32 %v2066, 7
    %v2068 = vsub.s32 1, %v2067
    %v2069 = vrot.slane %v2060, %v2068
    %v2070 = vlaneseq
    %v2071 = vshrl.u32 %v2070, 7
    %v2072 = vsub.s32 2, %v2071
    %v2073 = vrot.slane %v2060, %v2072
    %v2074 = vlaneseq
    %v2075 = vshrl.u32 %v2074, 7
    %v2076 = vsub.s32 3, %v2075
    %v2077 = vrot.slane %v2060, %v2076
    %v2078 = vlaneseq
    %v2079 = vshrl.u32 %v2078, 7
    %v2080 = vsub.s32 4, %v2079
    %v2081 = vrot.slane %v2060, %v2080
    %v2082 = vlaneseq
    %v2083 = vshrl.u32 %v2082, 7
    %v2084 = vsub.s32 5, %v2083
    %v2085 = vrot.slane %v2060, %v2084
    %v2092 = vadd.f32 %v2024, %v2065
    %v2093 = vadd.f32 %v2025, %v2069
    %v2094 = vadd.f32 %v2026, %v2073
    %v2095 = vadd.f32 %v2027, %v2077
    %v2096 = vadd.f32 %v2028, %v2081
    %v2097 = vadd.f32 %v2029, %v2085
    %v2098 = vadd.f32 %v2030, %v2065
    %v2099 = vadd.f32 %v2031, %v2069
    %v2100 = vadd.f32 %v2032, %v2073
    %v2101 = vadd.f32 %v2033, %v2077
    %v2102 = vadd.f32 %v2034, %v2081
    %v2103 = vadd.f32 %v2035, %v2085
    %v2104 = vadd.f32 %v2036, %v2065
    %v2105 = vadd.f32 %v2037, %v2069
    %v2106 = vadd.f32 %v2038, %v2073
    %v2107 = vadd.f32 %v2039, %v2077
    %v2108 = vadd.f32 %v2040, %v2081
    %v2109 = vadd.f32 %v2041, %v2085
    %v2110 = vadd.f32 %v2042, %v2065
    %v2111 = vadd.f32 %v2043, %v2069
    %v2112 = vadd.f32 %v2044, %v2073
    %v2113 = vadd.f32 %v2045, %v2077
    %v2114 = vadd.f32 %v2046, %v2081
    %v2115 = vadd.f32 %v2047, %v2085
    %v2116 = vadd.f32 %v2048, %v2065
    %v2117 = vadd.f32 %v2049, %v2069
    %v2118 = vadd.f32 %v2050, %v2073
    %v2119 = vadd.f32 %v2051, %v2077
    %v2120 = vadd.f32 %v2052, %v2081
    %v2121 = vadd.f32 %v2053, %v2085
    %v2122 = vadd.f32 %v2054, %v2065
    %v2123 = vadd.f32 %v2055, %v2069
    %v2124 = vadd.f32 %v2056, %v2073
    %v2125 = vadd.f32 %v2057, %v2077
    %v2126 = vadd.f32 %v2058, %v2081
    %v2127 = vadd.f32 %v2059, %v2085
    %v2128 = vmax.f32 %v2092, 0.0
    %v2129 = vmax.f32 %v2093, 0.0
    %v2130 = vmax.f32 %v2094, 0.0
    %v2131 = vmax.f32 %v2095, 0.0
    %v2132 = vmax.f32 %v2096, 0.0
    %v2133 = vmax.f32 %v2097, 0.0
    %v2134 = vmax.f32 %v2098, 0.0
    %v2135 = vmax.f32 %v2099, 0.0
    %v2136 = vmax.f32 %v2100, 0.0
    %v2137 = vmax.f32 %v2101, 0.0
    %v2138 = vmax.f32 %v2102, 0.0
    %v2139 = vmax.f32 %v2103, 0.0
    %v2140 = vmax.f32 %v2104, 0.0
    %v2141 = vmax.f32 %v2105, 0.0
    %v2142 = vmax.f32 %v2106, 0.0
    %v2143 = vmax.f32 %v2107, 0.0
    %v2144 = vmax.f32 %v2108, 0.0
    %v2145 = vmax.f32 %v2109, 0.0
    %v2146 = vmax.f32 %v2110, 0.0
    %v2147 = vmax.f32 %v2111, 0.0
    %v2148 = vmax.f32 %v2112, 0.0
    %v2149 = vmax.f32 %v2113, 0.0
    %v2150 = vmax.f32 %v2114, 0.0
    %v2151 = vmax.f32 %v2115, 0.0
    %v2152 = vmax.f32 %v2116, 0.0
    %v2153 = vmax.f32 %v2117, 0.0
    %v2154 = vmax.f32 %v2118, 0.0
    %v2155 = vmax.f32 %v2119, 0.0
    %v2156 = vmax.f32 %v2120, 0.0
    %v2157 = vmax.f32 %v2121, 0.0
    %v2158 = vmax.f32 %v2122, 0.0
    %v2159 = vmax.f32 %v2123, 0.0
    %v2160 = vmax.f32 %v2124, 0.0
    %v2161 = vmax.f32 %v2125, 0.0
    %v2162 = vmax.f32 %v2126, 0.0
    %v2163 = vmax.f32 %v2127, 0.0
    %v2164 = vmax.f32 %v2128, %v2131
    %v2165 = vmax.f32 %v2129, %v2132
    %v2166 = vmax.f32 %v2130, %v2133
    %v2167 = vmax.f32 %v2134, %v2137
    %v2168 = vmax.f32 %v2135, %v2138
    %v2169 = vmax.f32 %v2136, %v2139
    %v2170 = vmax.f32 %v2140, %v2143
    %v2171 = vmax.f32 %v2141, %v2144
    %v2172 = vmax.f32 %v2142, %v2145
    %v2173 = vmax.f32 %v2146, %v2149
    %v2174 = vmax.f32 %v2147, %v2150
    %v2175 = vmax.f32 %v2148, %v2151
    %v2176 = vmax.f32 %v2152, %v2155
    %v2177 = vmax.f32 %v2153, %v2156
    %v2178 = vmax.f32 %v2154, %v2157
    %v2179 = vmax.f32 %v2158, %v2161
    %v2180 = vmax.f32 %v2159, %v2162
    %v2181 = vmax.f32 %v2160, %v2163
    %v2188 = vrot.slane %v2164, 1
    %v2189 = vrot.slane %v2165, 1
    %v2190 = vrot.slane %v2166, 1
    %v2191 = vrot.slane %v2173, 1
    %v2192 = vrot.slane %v2174, 1
    %v2193 = vrot.slane %v2175, 1
    %v2200 = vmax.f32 %v2164, %v2188
    %v2201 = vmax.f32 %v2165, %v2189
    %v2202 = vmax.f32 %v2166, %v2190
    %v2203 = vmax.f32 %v2173, %v2191
    %v2204 = vmax.f32 %v2174, %v2192
    %v2205 = vmax.f32 %v2175, %v2193
    %v2212 = vcombine.low %v2200, %v2201
    %v2214 = vunpack.c.l.s4 1966171168
    %v2215 = vunpack.c.0.s8 %v2214
    %v2216 = vlaneseq
    %v2217 = vshrl.u32 %v2216, 7
    %v2218 = vsub.s32 %v2215, %v2217
    %v2219 = vrot.slane %v2212, %v2218
    %v2221 = vunpack.c.l.s4 1966171168
    %v2222 = vunpack.c.0.s8 %v2221
    %v2223 = vlaneseq
    %v2224 = vshrl.u32 %v2223, 7
    %v2225 = vsub.s32 %v2222, %v2224
    %v2226 = vrot.slane %v2202, %v2225
    %v2227 = vcombine.low %v2219, %v2226
    %v2229 = vunpack.c.l.s4 1966171168
    %v2230 = vunpack.c.0.s8 %v2229
    %v2231 = vlaneseq
    %v2232 = vshrl.u32 %v2231, 7
    %v2233 = vsub.s32 %v2230, %v2232
    %v2234 = vrot.slane %v2227, %v2233
    %v2235 = vcombine.low %v2203, %v2204
    %v2237 = vunpack.c.l.s4 1966171168
    %v2238 = vunpack.c.0.s8 %v2237
    %v2239 = vlaneseq
    %v2240 = vshrl.u32 %v2239, 7
    %v2241 = vsub.s32 %v2238, %v2240
    %v2242 = vrot.slane %v2235, %v2241
    %v2244 = vunpack.c.l.s4 1966171168
    %v2245 = vunpack.c.0.s8 %v2244
    %v2246 = vlaneseq
    %v2247 = vshrl.u32 %v2246, 7
    %v2248 = vsub.s32 %v2245, %v2247
    %v2249 = vrot.slane %v2205, %v2248
    %v2250 = vcombine.low %v2242, %v2249
    %v2252 = vunpack.c.l.s4 1966171168
    %v2253 = vunpack.c.0.s8 %v2252
    %v2254 = vlaneseq
    %v2255 = vshrl.u32 %v2254, 7
    %v2256 = vsub.s32 %v2253, %v2255
    %v2257 = vrot.slane %v2250, %v2256
    %v2260 = vlaneseq
    %vm2261 = vcmp.ge.s32.totalorder %v2260, 0
    %vm2262 = vcmp.lt.s32.totalorder %v2260, 384
    %vm2263 = vmand %vm2261, %vm2262
    %2264 = vst.msk [vmem:[#allocation2] ss:$8 sm:$0x7] %vm2263, %v2234
    %2265 = vst.msk [vmem:[#allocation2] ss:$8 sm:$0x0] %vm2263, %v2234
    %s2266 = scalar_lea.vmem [#allocation2], 48
    %2267 = vst.msk [vmem:[%s2266] ss:$8 sm:$0x7] %vm2263, %v2257
    %2268 = vst.msk [vmem:[%s2266] ss:$8 sm:$0x0] %vm2263, %v2257
    %v2269 = vcombine.high %v2234, %v2234
    %v2270 = vcombine.high %v2257, %v2257
    %s2273 = scalar_lea.vmem [#allocation2], 1
    %2274 = vst.msk [vmem:[%s2273] ss:$8 sm:$0x7] %vm2263, %v2269
    %2275 = vst.msk [vmem:[%s2273] ss:$8 sm:$0x0] %vm2263, %v2269
    %s2276 = scalar_lea.vmem [#allocation2], 49
    %2277 = vst.msk [vmem:[%s2276] ss:$8 sm:$0x7] %vm2263, %v2270
    %2278 = vst.msk [vmem:[%s2276] ss:$8 sm:$0x0] %vm2263, %v2270
    %v2279 = vcombine.high %v2200, %v2201
    %v2280 = vcombine.high %v2202, %v2202
    %v2282 = vunpack.c.l.s4 1966171168
    %v2283 = vunpack.c.0.s8 %v2282
    %v2284 = vlaneseq
    %v2285 = vshrl.u32 %v2284, 7
    %v2286 = vsub.s32 %v2283, %v2285
    %v2287 = vrot.slane %v2279, %v2286
    %v2289 = vunpack.c.l.s4 1966171168
    %v2290 = vunpack.c.0.s8 %v2289
    %v2291 = vlaneseq
    %v2292 = vshrl.u32 %v2291, 7
    %v2293 = vsub.s32 %v2290, %v2292
    %v2294 = vrot.slane %v2280, %v2293
    %v2295 = vcombine.low %v2287, %v2294
    %v2297 = vunpack.c.l.s4 1966171168
    %v2298 = vunpack.c.0.s8 %v2297
    %v2299 = vlaneseq
    %v2300 = vshrl.u32 %v2299, 7
    %v2301 = vsub.s32 %v2298, %v2300
    %v2302 = vrot.slane %v2295, %v2301
    %v2303 = vcombine.high %v2203, %v2204
    %v2304 = vcombine.high %v2205, %v2205
    %v2306 = vunpack.c.l.s4 1966171168
    %v2307 = vunpack.c.0.s8 %v2306
    %v2308 = vlaneseq
    %v2309 = vshrl.u32 %v2308, 7
    %v2310 = vsub.s32 %v2307, %v2309
    %v2311 = vrot.slane %v2303, %v2310
    %v2313 = vunpack.c.l.s4 1966171168
    %v2314 = vunpack.c.0.s8 %v2313
    %v2315 = vlaneseq
    %v2316 = vshrl.u32 %v2315, 7
    %v2317 = vsub.s32 %v2314, %v2316
    %v2318 = vrot.slane %v2304, %v2317
    %v2319 = vcombine.low %v2311, %v2318
    %v2321 = vunpack.c.l.s4 1966171168
    %v2322 = vunpack.c.0.s8 %v2321
    %v2323 = vlaneseq
    %v2324 = vshrl.u32 %v2323, 7
    %v2325 = vsub.s32 %v2322, %v2324
    %v2326 = vrot.slane %v2319, %v2325
    %s2329 = scalar_lea.vmem [#allocation2], 2
    %2330 = vst.msk [vmem:[%s2329] ss:$8 sm:$0x7] %vm2263, %v2302
    %2331 = vst.msk [vmem:[%s2329] ss:$8 sm:$0x0] %vm2263, %v2302
    %s2332 = scalar_lea.vmem [#allocation2], 50
    %2333 = vst.msk [vmem:[%s2332] ss:$8 sm:$0x7] %vm2263, %v2326
    %2334 = vst.msk [vmem:[%s2332] ss:$8 sm:$0x0] %vm2263, %v2326
    %v2335 = vcombine.high %v2302, %v2302
    %v2336 = vcombine.high %v2326, %v2326
    %s2339 = scalar_lea.vmem [#allocation2], 3
    %2340 = vst.msk [vmem:[%s2339] ss:$8 sm:$0x7] %vm2263, %v2335
    %2341 = vst.msk [vmem:[%s2339] ss:$8 sm:$0x0] %vm2263, %v2335
    %s2342 = scalar_lea.vmem [#allocation2], 51
    %2343 = vst.msk [vmem:[%s2342] ss:$8 sm:$0x7] %vm2263, %v2336
    %2344 = vst.msk [vmem:[%s2342] ss:$8 sm:$0x0] %vm2263, %v2336
    %v2351 = vrot.slane %v2167, 1
    %v2352 = vrot.slane %v2168, 1
    %v2353 = vrot.slane %v2169, 1
    %v2354 = vrot.slane %v2176, 1
    %v2355 = vrot.slane %v2177, 1
    %v2356 = vrot.slane %v2178, 1
    %v2363 = vmax.f32 %v2167, %v2351
    %v2364 = vmax.f32 %v2168, %v2352
    %v2365 = vmax.f32 %v2169, %v2353
    %v2366 = vmax.f32 %v2176, %v2354
    %v2367 = vmax.f32 %v2177, %v2355
    %v2368 = vmax.f32 %v2178, %v2356
    %v2375 = vcombine.low %v2363, %v2364
    %v2377 = vunpack.c.l.s4 1966171168
    %v2378 = vunpack.c.0.s8 %v2377
    %v2379 = vlaneseq
    %v2380 = vshrl.u32 %v2379, 7
    %v2381 = vsub.s32 %v2378, %v2380
    %v2382 = vrot.slane %v2375, %v2381
    %v2384 = vunpack.c.l.s4 1966171168
    %v2385 = vunpack.c.0.s8 %v2384
    %v2386 = vlaneseq
    %v2387 = vshrl.u32 %v2386, 7
    %v2388 = vsub.s32 %v2385, %v2387
    %v2389 = vrot.slane %v2365, %v2388
    %v2390 = vcombine.low %v2382, %v2389
    %v2392 = vunpack.c.l.s4 1966171168
    %v2393 = vunpack.c.0.s8 %v2392
    %v2394 = vlaneseq
    %v2395 = vshrl.u32 %v2394, 7
    %v2396 = vsub.s32 %v2393, %v2395
    %v2397 = vrot.slane %v2390, %v2396
    %v2398 = vcombine.low %v2366, %v2367
    %v2400 = vunpack.c.l.s4 1966171168
    %v2401 = vunpack.c.0.s8 %v2400
    %v2402 = vlaneseq
    %v2403 = vshrl.u32 %v2402, 7
    %v2404 = vsub.s32 %v2401, %v2403
    %v2405 = vrot.slane %v2398, %v2404
    %v2407 = vunpack.c.l.s4 1966171168
    %v2408 = vunpack.c.0.s8 %v2407
    %v2409 = vlaneseq
    %v2410 = vshrl.u32 %v2409, 7
    %v2411 = vsub.s32 %v2408, %v2410
    %v2412 = vrot.slane %v2368, %v2411
    %v2413 = vcombine.low %v2405, %v2412
    %v2415 = vunpack.c.l.s4 1966171168
    %v2416 = vunpack.c.0.s8 %v2415
    %v2417 = vlaneseq
    %v2418 = vshrl.u32 %v2417, 7
    %v2419 = vsub.s32 %v2416, %v2418
    %v2420 = vrot.slane %v2413, %v2419
    %s2423 = scalar_lea.vmem [#allocation2], 4
    %2424 = vst.msk [vmem:[%s2423] ss:$8 sm:$0x7] %vm2263, %v2397
    %2425 = vst.msk [vmem:[%s2423] ss:$8 sm:$0x0] %vm2263, %v2397
    %s2426 = scalar_lea.vmem [#allocation2], 52
    %2427 = vst.msk [vmem:[%s2426] ss:$8 sm:$0x7] %vm2263, %v2420
    %2428 = vst.msk [vmem:[%s2426] ss:$8 sm:$0x0] %vm2263, %v2420
    %v2429 = vcombine.high %v2397, %v2397
    %v2430 = vcombine.high %v2420, %v2420
    %s2433 = scalar_lea.vmem [#allocation2], 5
    %2434 = vst.msk [vmem:[%s2433] ss:$8 sm:$0x7] %vm2263, %v2429
    %2435 = vst.msk [vmem:[%s2433] ss:$8 sm:$0x0] %vm2263, %v2429
    %s2436 = scalar_lea.vmem [#allocation2], 53
    %2437 = vst.msk [vmem:[%s2436] ss:$8 sm:$0x7] %vm2263, %v2430
    %2438 = vst.msk [vmem:[%s2436] ss:$8 sm:$0x0] %vm2263, %v2430
    %v2439 = vcombine.high %v2363, %v2364
    %v2440 = vcombine.high %v2365, %v2365
    %v2442 = vunpack.c.l.s4 1966171168
    %v2443 = vunpack.c.0.s8 %v2442
    %v2444 = vlaneseq
    %v2445 = vshrl.u32 %v2444, 7
    %v2446 = vsub.s32 %v2443, %v2445
    %v2447 = vrot.slane %v2439, %v2446
    %v2449 = vunpack.c.l.s4 1966171168
    %v2450 = vunpack.c.0.s8 %v2449
    %v2451 = vlaneseq
    %v2452 = vshrl.u32 %v2451, 7
    %v2453 = vsub.s32 %v2450, %v2452
    %v2454 = vrot.slane %v2440, %v2453
    %v2455 = vcombine.low %v2447, %v2454
    %v2457 = vunpack.c.l.s4 1966171168
    %v2458 = vunpack.c.0.s8 %v2457
    %v2459 = vlaneseq
    %v2460 = vshrl.u32 %v2459, 7
    %v2461 = vsub.s32 %v2458, %v2460
    %v2462 = vrot.slane %v2455, %v2461
    %v2463 = vcombine.high %v2366, %v2367
    %v2464 = vcombine.high %v2368, %v2368
    %v2466 = vunpack.c.l.s4 1966171168
    %v2467 = vunpack.c.0.s8 %v2466
    %v2468 = vlaneseq
    %v2469 = vshrl.u32 %v2468, 7
    %v2470 = vsub.s32 %v2467, %v2469
    %v2471 = vrot.slane %v2463, %v2470
    %v2473 = vunpack.c.l.s4 1966171168
    %v2474 = vunpack.c.0.s8 %v2473
    %v2475 = vlaneseq
    %v2476 = vshrl.u32 %v2475, 7
    %v2477 = vsub.s32 %v2474, %v2476
    %v2478 = vrot.slane %v2464, %v2477
    %v2479 = vcombine.low %v2471, %v2478
    %v2481 = vunpack.c.l.s4 1966171168
    %v2482 = vunpack.c.0.s8 %v2481
    %v2483 = vlaneseq
    %v2484 = vshrl.u32 %v2483, 7
    %v2485 = vsub.s32 %v2482, %v2484
    %v2486 = vrot.slane %v2479, %v2485
    %s2489 = scalar_lea.vmem [#allocation2], 6
    %2490 = vst.msk [vmem:[%s2489] ss:$8 sm:$0x7] %vm2263, %v2462
    %2491 = vst.msk [vmem:[%s2489] ss:$8 sm:$0x0] %vm2263, %v2462
    %s2492 = scalar_lea.vmem [#allocation2], 54
    %2493 = vst.msk [vmem:[%s2492] ss:$8 sm:$0x7] %vm2263, %v2486
    %2494 = vst.msk [vmem:[%s2492] ss:$8 sm:$0x0] %vm2263, %v2486
    %v2495 = vcombine.high %v2462, %v2462
    %v2496 = vcombine.high %v2486, %v2486
    %s2499 = scalar_lea.vmem [#allocation2], 7
    %2500 = vst.msk [vmem:[%s2499] ss:$8 sm:$0x7] %vm2263, %v2495
    %2501 = vst.msk [vmem:[%s2499] ss:$8 sm:$0x0] %vm2263, %v2495
    %s2502 = scalar_lea.vmem [#allocation2], 55
    %2503 = vst.msk [vmem:[%s2502] ss:$8 sm:$0x7] %vm2263, %v2496
    %2504 = vst.msk [vmem:[%s2502] ss:$8 sm:$0x0] %vm2263, %v2496
    %v2511 = vrot.slane %v2170, 1
    %v2512 = vrot.slane %v2171, 1
    %v2513 = vrot.slane %v2172, 1
    %v2514 = vrot.slane %v2179, 1
    %v2515 = vrot.slane %v2180, 1
    %v2516 = vrot.slane %v2181, 1
    %v2523 = vmax.f32 %v2170, %v2511
    %v2524 = vmax.f32 %v2171, %v2512
    %v2525 = vmax.f32 %v2172, %v2513
    %v2526 = vmax.f32 %v2179, %v2514
    %v2527 = vmax.f32 %v2180, %v2515
    %v2528 = vmax.f32 %v2181, %v2516
    %v2535 = vcombine.low %v2523, %v2524
    %v2537 = vunpack.c.l.s4 1966171168
    %v2538 = vunpack.c.0.s8 %v2537
    %v2539 = vlaneseq
    %v2540 = vshrl.u32 %v2539, 7
    %v2541 = vsub.s32 %v2538, %v2540
    %v2542 = vrot.slane %v2535, %v2541
    %v2544 = vunpack.c.l.s4 1966171168
    %v2545 = vunpack.c.0.s8 %v2544
    %v2546 = vlaneseq
    %v2547 = vshrl.u32 %v2546, 7
    %v2548 = vsub.s32 %v2545, %v2547
    %v2549 = vrot.slane %v2525, %v2548
    %v2550 = vcombine.low %v2542, %v2549
    %v2552 = vunpack.c.l.s4 1966171168
    %v2553 = vunpack.c.0.s8 %v2552
    %v2554 = vlaneseq
    %v2555 = vshrl.u32 %v2554, 7
    %v2556 = vsub.s32 %v2553, %v2555
    %v2557 = vrot.slane %v2550, %v2556
    %v2558 = vcombine.low %v2526, %v2527
    %v2560 = vunpack.c.l.s4 1966171168
    %v2561 = vunpack.c.0.s8 %v2560
    %v2562 = vlaneseq
    %v2563 = vshrl.u32 %v2562, 7
    %v2564 = vsub.s32 %v2561, %v2563
    %v2565 = vrot.slane %v2558, %v2564
    %v2567 = vunpack.c.l.s4 1966171168
    %v2568 = vunpack.c.0.s8 %v2567
    %v2569 = vlaneseq
    %v2570 = vshrl.u32 %v2569, 7
    %v2571 = vsub.s32 %v2568, %v2570
    %v2572 = vrot.slane %v2528, %v2571
    %v2573 = vcombine.low %v2565, %v2572
    %v2575 = vunpack.c.l.s4 1966171168
    %v2576 = vunpack.c.0.s8 %v2575
    %v2577 = vlaneseq
    %v2578 = vshrl.u32 %v2577, 7
    %v2579 = vsub.s32 %v2576, %v2578
    %v2580 = vrot.slane %v2573, %v2579
    %s2583 = scalar_lea.vmem [#allocation2], 24
    %2584 = vst.msk [vmem:[%s2583] ss:$8 sm:$0x7] %vm2263, %v2557
    %2585 = vst.msk [vmem:[%s2583] ss:$8 sm:$0x0] %vm2263, %v2557
    %s2586 = scalar_lea.vmem [#allocation2], 72
    %2587 = vst.msk [vmem:[%s2586] ss:$8 sm:$0x7] %vm2263, %v2580
    %2588 = vst.msk [vmem:[%s2586] ss:$8 sm:$0x0] %vm2263, %v2580
    %v2589 = vcombine.high %v2557, %v2557
    %v2590 = vcombine.high %v2580, %v2580
    %s2593 = scalar_lea.vmem [#allocation2], 25
    %2594 = vst.msk [vmem:[%s2593] ss:$8 sm:$0x7] %vm2263, %v2589
    %2595 = vst.msk [vmem:[%s2593] ss:$8 sm:$0x0] %vm2263, %v2589
    %s2596 = scalar_lea.vmem [#allocation2], 73
    %2597 = vst.msk [vmem:[%s2596] ss:$8 sm:$0x7] %vm2263, %v2590
    %2598 = vst.msk [vmem:[%s2596] ss:$8 sm:$0x0] %vm2263, %v2590
    %v2599 = vcombine.high %v2523, %v2524
    %v2600 = vcombine.high %v2525, %v2525
    %v2602 = vunpack.c.l.s4 1966171168
    %v2603 = vunpack.c.0.s8 %v2602
    %v2604 = vlaneseq
    %v2605 = vshrl.u32 %v2604, 7
    %v2606 = vsub.s32 %v2603, %v2605
    %v2607 = vrot.slane %v2599, %v2606
    %v2609 = vunpack.c.l.s4 1966171168
    %v2610 = vunpack.c.0.s8 %v2609
    %v2611 = vlaneseq
    %v2612 = vshrl.u32 %v2611, 7
    %v2613 = vsub.s32 %v2610, %v2612
    %v2614 = vrot.slane %v2600, %v2613
    %v2615 = vcombine.low %v2607, %v2614
    %v2617 = vunpack.c.l.s4 1966171168
    %v2618 = vunpack.c.0.s8 %v2617
    %v2619 = vlaneseq
    %v2620 = vshrl.u32 %v2619, 7
    %v2621 = vsub.s32 %v2618, %v2620
    %v2622 = vrot.slane %v2615, %v2621
    %v2623 = vcombine.high %v2526, %v2527
    %v2624 = vcombine.high %v2528, %v2528
    %v2626 = vunpack.c.l.s4 1966171168
    %v2627 = vunpack.c.0.s8 %v2626
    %v2628 = vlaneseq
    %v2629 = vshrl.u32 %v2628, 7
    %v2630 = vsub.s32 %v2627, %v2629
    %v2631 = vrot.slane %v2623, %v2630
    %v2633 = vunpack.c.l.s4 1966171168
    %v2634 = vunpack.c.0.s8 %v2633
    %v2635 = vlaneseq
    %v2636 = vshrl.u32 %v2635, 7
    %v2637 = vsub.s32 %v2634, %v2636
    %v2638 = vrot.slane %v2624, %v2637
    %v2639 = vcombine.low %v2631, %v2638
    %v2641 = vunpack.c.l.s4 1966171168
    %v2642 = vunpack.c.0.s8 %v2641
    %v2643 = vlaneseq
    %v2644 = vshrl.u32 %v2643, 7
    %v2645 = vsub.s32 %v2642, %v2644
    %v2646 = vrot.slane %v2639, %v2645
    %s2649 = scalar_lea.vmem [#allocation2], 26
    %2650 = vst.msk [vmem:[%s2649] ss:$8 sm:$0x7] %vm2263, %v2622
    %2651 = vst.msk [vmem:[%s2649] ss:$8 sm:$0x0] %vm2263, %v2622
    %s2652 = scalar_lea.vmem [#allocation2], 74
    %2653 = vst.msk [vmem:[%s2652] ss:$8 sm:$0x7] %vm2263, %v2646
    %2654 = vst.msk [vmem:[%s2652] ss:$8 sm:$0x0] %vm2263, %v2646
    %v2655 = vcombine.high %v2622, %v2622
    %v2656 = vcombine.high %v2646, %v2646
    %s2659 = scalar_lea.vmem [#allocation2], 27
    %2660 = vst.msk [vmem:[%s2659] ss:$8 sm:$0x7] %vm2263, %v2655
    %2661 = vst.msk [vmem:[%s2659] ss:$8 sm:$0x0] %vm2263, %v2655
    %s2662 = scalar_lea.vmem [#allocation2], 75
    %2663 = vst.msk [vmem:[%s2662] ss:$8 sm:$0x7] %vm2263, %v2656
    %2664 = vst.msk [vmem:[%s2662] ss:$8 sm:$0x0] %vm2263, %v2656
    %v2665 = vld [vmem:[#allocation2] sm:$0xff]
    %v2666 = vld [vmem:[#allocation2 + $0x8] sm:$0xff]
    %v2667 = vld [vmem:[#allocation2 + $0x10] sm:$0xff]
    %v2668 = vld [vmem:[#allocation2 + $0x30] sm:$0xff]
    %v2669 = vld [vmem:[#allocation2 + $0x38] sm:$0xff]
    %v2670 = vld [vmem:[#allocation2 + $0x40] sm:$0xff]
    %v2671 = vld [vmem:[%s4] sm:$0xff]
    %v2672 = vld [vmem:[%s4 + $0x8] sm:$0xff]
    %v2673 = vld [vmem:[%s4 + $0x10] sm:$0xff]
    %v2674 = vld [vmem:[%s4 + $0x18] sm:$0xff]
    %v2675 = vld [vmem:[%s4 + $0x20] sm:$0xff]
    %v2676 = vld [vmem:[%s4 + $0x28] sm:$0xff]
    %v2677 = vld [vmem:[%s4 + $0x30] sm:$0xff]
    %v2678 = vld [vmem:[%s4 + $0x38] sm:$0xff]
    %v2679 = vld [vmem:[%s4 + $0x40] sm:$0xff]
    %v2680 = vld [vmem:[%s4 + $0x48] sm:$0xff]
    %v2681 = vld [vmem:[%s4 + $0x50] sm:$0xff]
    %v2682 = vld [vmem:[%s4 + $0x58] sm:$0xff]
    %v2683 = vld [vmem:[%s4 + $0x60] sm:$0xff]
    %v2684 = vld [vmem:[%s4 + $0x68] sm:$0xff]
    %v2685 = vld [vmem:[%s4 + $0x70] sm:$0xff]
    %v2686 = vld [vmem:[%s4 + $0x78] sm:$0xff]
    %v2687 = vld [vmem:[%s4 + $0x80] sm:$0xff]
    %v2688 = vld [vmem:[%s4 + $0x88] sm:$0xff]
    %v2689 = vld [vmem:[%s4 + $0x90] sm:$0xff]
    %v2690 = vld [vmem:[%s4 + $0x98] sm:$0xff]
    %v2691 = vld [vmem:[%s4 + $0xa0] sm:$0xff]
    %v2692 = vld [vmem:[%s4 + $0xa8] sm:$0xff]
    %v2693 = vld [vmem:[%s4 + $0xb0] sm:$0xff]
    %v2694 = vld [vmem:[%s4 + $0xb8] sm:$0xff]
    %v2695 = vld [vmem:[%s4 + $0xc0] sm:$0xff]
    %v2696 = vld [vmem:[%s4 + $0xc8] sm:$0xff]
    %v2697 = vld [vmem:[%s4 + $0xd0] sm:$0xff]
    %v2698 = vld [vmem:[%s4 + $0xd8] sm:$0xff]
    %v2699 = vld [vmem:[%s4 + $0xe0] sm:$0xff]
    %v2700 = vld [vmem:[%s4 + $0xe8] sm:$0xff]
    %v2701 = vld [vmem:[%s4 + $0xf0] sm:$0xff]
    %v2702 = vld [vmem:[%s4 + $0xf8] sm:$0xff]
    %v2703 = vld [vmem:[%s4 + $0x100] sm:$0xff]
    %v2704 = vld [vmem:[%s4 + $0x108] sm:$0xff]
    %v2705 = vld [vmem:[%s4 + $0x110] sm:$0xff]
    %v2706 = vld [vmem:[%s4 + $0x118] sm:$0xff]
    %v2707 = vld [vmem:[%s4 + $0x120] sm:$0xff]
    %v2708 = vld [vmem:[%s4 + $0x128] sm:$0xff]
    %v2709 = vld [vmem:[%s4 + $0x130] sm:$0xff]
    %v2710 = vld [vmem:[%s4 + $0x138] sm:$0xff]
    %v2711 = vld [vmem:[%s4 + $0x140] sm:$0xff]
    %v2712 = vld [vmem:[%s4 + $0x148] sm:$0xff]
    %v2713 = vld [vmem:[%s4 + $0x150] sm:$0xff]
    %v2714 = vld [vmem:[%s4 + $0x158] sm:$0xff]
    %v2715 = vld [vmem:[%s4 + $0x160] sm:$0xff]
    %v2716 = vld [vmem:[%s4 + $0x168] sm:$0xff]
    %v2717 = vld [vmem:[%s4 + $0x170] sm:$0xff]
    %v2718 = vld [vmem:[%s4 + $0x178] sm:$0xff]
    %v2719 = vld [vmem:[%s4 + $0x180] sm:$0xff]
    %v2720 = vld [vmem:[%s4 + $0x188] sm:$0xff]
    %v2721 = vld [vmem:[%s4 + $0x190] sm:$0xff]
    %v2722 = vld [vmem:[%s4 + $0x198] sm:$0xff]
    %v2723 = vld [vmem:[%s4 + $0x1a0] sm:$0xff]
    %v2724 = vld [vmem:[%s4 + $0x1a8] sm:$0xff]
    %v2725 = vld [vmem:[%s4 + $0x1b0] sm:$0xff]
    %v2726 = vld [vmem:[%s4 + $0x1b8] sm:$0xff]
    %v2727 = vld [vmem:[%s4 + $0x1c0] sm:$0xff]
    %v2728 = vld [vmem:[%s4 + $0x1c8] sm:$0xff]
    %v2729 = vld [vmem:[%s4 + $0x1d0] sm:$0xff]
    %v2730 = vld [vmem:[%s4 + $0x1d8] sm:$0xff]
    %v2731 = vld [vmem:[%s4 + $0x1e0] sm:$0xff]
    %v2732 = vld [vmem:[%s4 + $0x1e8] sm:$0xff]
    %v2733 = vld [vmem:[%s4 + $0x1f0] sm:$0xff]
    %v2734 = vld [vmem:[%s4 + $0x1f8] sm:$0xff]
    %v2735 = vld [vmem:[%s4 + $0x200] sm:$0xff]
    %v2736 = vld [vmem:[%s4 + $0x208] sm:$0xff]
    %v2737 = vld [vmem:[%s4 + $0x210] sm:$0xff]
    %v2738 = vld [vmem:[%s4 + $0x218] sm:$0xff]
    %v2739 = vld [vmem:[%s4 + $0x220] sm:$0xff]
    %v2740 = vld [vmem:[%s4 + $0x228] sm:$0xff]
    %v2741 = vld [vmem:[%s4 + $0x230] sm:$0xff]
    %v2742 = vld [vmem:[%s4 + $0x238] sm:$0xff]
    %v2743 = vld [vmem:[%s4 + $0x240] sm:$0xff]
    %v2744 = vld [vmem:[%s4 + $0x248] sm:$0xff]
    %v2745 = vld [vmem:[%s4 + $0x250] sm:$0xff]
    %v2746 = vld [vmem:[%s4 + $0x258] sm:$0xff]
    %v2747 = vld [vmem:[%s4 + $0x260] sm:$0xff]
    %v2748 = vld [vmem:[%s4 + $0x268] sm:$0xff]
    %v2749 = vld [vmem:[%s4 + $0x270] sm:$0xff]
    %v2750 = vld [vmem:[%s4 + $0x278] sm:$0xff]
    %v2751 = vld [vmem:[%s4 + $0x280] sm:$0xff]
    %v2752 = vld [vmem:[%s4 + $0x288] sm:$0xff]
    %v2753 = vld [vmem:[%s4 + $0x290] sm:$0xff]
    %v2754 = vld [vmem:[%s4 + $0x298] sm:$0xff]
    %v2755 = vld [vmem:[%s4 + $0x2a0] sm:$0xff]
    %v2756 = vld [vmem:[%s4 + $0x2a8] sm:$0xff]
    %v2757 = vld [vmem:[%s4 + $0x2b0] sm:$0xff]
    %v2758 = vld [vmem:[%s4 + $0x2b8] sm:$0xff]
    %v2759 = vld [vmem:[%s4 + $0x2c0] sm:$0xff]
    %v2760 = vld [vmem:[%s4 + $0x2c8] sm:$0xff]
    %v2761 = vld [vmem:[%s4 + $0x2d0] sm:$0xff]
    %v2762 = vld [vmem:[%s4 + $0x2d8] sm:$0xff]
    %v2763 = vld [vmem:[%s4 + $0x2e0] sm:$0xff]
    %v2764 = vld [vmem:[%s4 + $0x2e8] sm:$0xff]
    %v2765 = vld [vmem:[%s4 + $0x2f0] sm:$0xff]
    %v2766 = vld [vmem:[%s4 + $0x2f8] sm:$0xff]
    %v2767 = vld [vmem:[%s4 + $0x300] sm:$0xff]
    %v2768 = vld [vmem:[%s4 + $0x308] sm:$0xff]
    %v2769 = vld [vmem:[%s4 + $0x310] sm:$0xff]
    %v2770 = vld [vmem:[%s4 + $0x318] sm:$0xff]
    %v2771 = vld [vmem:[%s4 + $0x320] sm:$0xff]
    %v2772 = vld [vmem:[%s4 + $0x328] sm:$0xff]
    %v2773 = vld [vmem:[%s4 + $0x330] sm:$0xff]
    %v2774 = vld [vmem:[%s4 + $0x338] sm:$0xff]
    %v2775 = vld [vmem:[%s4 + $0x340] sm:$0xff]
    %v2776 = vld [vmem:[%s4 + $0x348] sm:$0xff]
    %v2777 = vld [vmem:[%s4 + $0x350] sm:$0xff]
    %v2778 = vld [vmem:[%s4 + $0x358] sm:$0xff]
    %v2779 = vld [vmem:[%s4 + $0x360] sm:$0xff]
    %v2780 = vld [vmem:[%s4 + $0x368] sm:$0xff]
    %v2781 = vld [vmem:[%s4 + $0x370] sm:$0xff]
    %v2782 = vld [vmem:[%s4 + $0x378] sm:$0xff]
    %v2783 = vld [vmem:[%s4 + $0x380] sm:$0xff]
    %v2784 = vld [vmem:[%s4 + $0x388] sm:$0xff]
    %v2785 = vld [vmem:[%s4 + $0x390] sm:$0xff]
    %v2786 = vld [vmem:[%s4 + $0x398] sm:$0xff]
    %v2787 = vld [vmem:[%s4 + $0x3a0] sm:$0xff]
    %v2788 = vld [vmem:[%s4 + $0x3a8] sm:$0xff]
    %v2789 = vld [vmem:[%s4 + $0x3b0] sm:$0xff]
    %v2790 = vld [vmem:[%s4 + $0x3b8] sm:$0xff]
    %v2791 = vld [vmem:[%s4 + $0x3c0] sm:$0xff]
    %v2792 = vld [vmem:[%s4 + $0x3c8] sm:$0xff]
    %v2793 = vld [vmem:[%s4 + $0x3d0] sm:$0xff]
    %v2794 = vld [vmem:[%s4 + $0x3d8] sm:$0xff]
    %v2795 = vld [vmem:[%s4 + $0x3e0] sm:$0xff]
    %v2796 = vld [vmem:[%s4 + $0x3e8] sm:$0xff]
    %v2797 = vld [vmem:[%s4 + $0x3f0] sm:$0xff]
    %v2798 = vld [vmem:[%s4 + $0x3f8] sm:$0xff]
    %v2799 = vld [vmem:[%s4 + $0x400] sm:$0xff]
    %v2800 = vld [vmem:[%s4 + $0x408] sm:$0xff]
    %v2801 = vld [vmem:[%s4 + $0x410] sm:$0xff]
    %v2802 = vld [vmem:[%s4 + $0x418] sm:$0xff]
    %v2803 = vld [vmem:[%s4 + $0x420] sm:$0xff]
    %v2804 = vld [vmem:[%s4 + $0x428] sm:$0xff]
    %v2805 = vld [vmem:[%s4 + $0x430] sm:$0xff]
    %v2806 = vld [vmem:[%s4 + $0x438] sm:$0xff]
    %v2807 = vld [vmem:[%s4 + $0x440] sm:$0xff]
    %v2808 = vld [vmem:[%s4 + $0x448] sm:$0xff]
    %v2809 = vld [vmem:[%s4 + $0x450] sm:$0xff]
    %v2810 = vld [vmem:[%s4 + $0x458] sm:$0xff]
    %v2811 = vld [vmem:[%s4 + $0x460] sm:$0xff]
    %v2812 = vld [vmem:[%s4 + $0x468] sm:$0xff]
    %v2813 = vld [vmem:[%s4 + $0x470] sm:$0xff]
    %v2814 = vld [vmem:[%s4 + $0x478] sm:$0xff]
    %v2815 = vld [vmem:[%s4 + $0x480] sm:$0xff]
    %v2816 = vld [vmem:[%s4 + $0x488] sm:$0xff]
    %v2817 = vld [vmem:[%s4 + $0x490] sm:$0xff]
    %v2818 = vld [vmem:[%s4 + $0x498] sm:$0xff]
    %v2819 = vld [vmem:[%s4 + $0x4a0] sm:$0xff]
    %v2820 = vld [vmem:[%s4 + $0x4a8] sm:$0xff]
    %v2821 = vld [vmem:[%s4 + $0x4b0] sm:$0xff]
    %v2822 = vld [vmem:[%s4 + $0x4b8] sm:$0xff]
    %v2823 = vld [vmem:[%s4 + $0x4c0] sm:$0xff]
    %v2824 = vld [vmem:[%s4 + $0x4c8] sm:$0xff]
    %v2825 = vld [vmem:[%s4 + $0x4d0] sm:$0xff]
    %v2826 = vld [vmem:[%s4 + $0x4d8] sm:$0xff]
    %v2827 = vld [vmem:[%s4 + $0x4e0] sm:$0xff]
    %v2828 = vld [vmem:[%s4 + $0x4e8] sm:$0xff]
    %v2829 = vld [vmem:[%s4 + $0x4f0] sm:$0xff]
    %v2830 = vld [vmem:[%s4 + $0x4f8] sm:$0xff]
    %v2831 = vld [vmem:[%s4 + $0x500] sm:$0xff]
    %v2832 = vld [vmem:[%s4 + $0x508] sm:$0xff]
    %v2833 = vld [vmem:[%s4 + $0x510] sm:$0xff]
    %v2834 = vld [vmem:[%s4 + $0x518] sm:$0xff]
    %v2835 = vld [vmem:[%s4 + $0x520] sm:$0xff]
    %v2836 = vld [vmem:[%s4 + $0x528] sm:$0xff]
    %v2837 = vld [vmem:[%s4 + $0x530] sm:$0xff]
    %v2838 = vld [vmem:[%s4 + $0x538] sm:$0xff]
    %v2839 = vld [vmem:[%s4 + $0x540] sm:$0xff]
    %v2840 = vld [vmem:[%s4 + $0x548] sm:$0xff]
    %v2841 = vld [vmem:[%s4 + $0x550] sm:$0xff]
    %v2842 = vld [vmem:[%s4 + $0x558] sm:$0xff]
    %v2843 = vld [vmem:[%s4 + $0x560] sm:$0xff]
    %v2844 = vld [vmem:[%s4 + $0x568] sm:$0xff]
    %v2845 = vld [vmem:[%s4 + $0x570] sm:$0xff]
    %v2846 = vld [vmem:[%s4 + $0x578] sm:$0xff]
    %v2847 = vld [vmem:[%s4 + $0x580] sm:$0xff]
    %v2848 = vld [vmem:[%s4 + $0x588] sm:$0xff]
    %v2849 = vld [vmem:[%s4 + $0x590] sm:$0xff]
    %v2850 = vld [vmem:[%s4 + $0x598] sm:$0xff]
    %v2851 = vld [vmem:[%s4 + $0x5a0] sm:$0xff]
    %v2852 = vld [vmem:[%s4 + $0x5a8] sm:$0xff]
    %v2853 = vld [vmem:[%s4 + $0x5b0] sm:$0xff]
    %v2854 = vld [vmem:[%s4 + $0x5b8] sm:$0xff]
    %v2855 = vld [vmem:[%s4 + $0x5c0] sm:$0xff]
    %v2856 = vld [vmem:[%s4 + $0x5c8] sm:$0xff]
    %v2857 = vld [vmem:[%s4 + $0x5d0] sm:$0xff]
    %v2858 = vld [vmem:[%s4 + $0x5d8] sm:$0xff]
    %v2859 = vld [vmem:[%s4 + $0x5e0] sm:$0xff]
    %v2860 = vld [vmem:[%s4 + $0x5e8] sm:$0xff]
    %v2861 = vld [vmem:[%s4 + $0x5f0] sm:$0xff]
    %v2862 = vld [vmem:[%s4 + $0x5f8] sm:$0xff]
    %v2863 = vld [vmem:[#allocation2] sm:$0xfe]
    %v2864 = vld [vmem:[#allocation2 + $0x8] sm:$0xfe]
    %v2865 = vld [vmem:[#allocation2 + $0x10] sm:$0xfe]
    %v2866 = vld [vmem:[#allocation2 + $0x18] sm:$0x1]
    %v2867 = vld [vmem:[#allocation2 + $0x20] sm:$0x1]
    %v2868 = vld [vmem:[#allocation2 + $0x28] sm:$0x1]
    %v2869 = vld [vmem:[#allocation2 + $0x30] sm:$0xfe]
    %v2870 = vld [vmem:[#allocation2 + $0x38] sm:$0xfe]
    %v2871 = vld [vmem:[#allocation2 + $0x40] sm:$0xfe]
    %v2872 = vld [vmem:[#allocation2 + $0x48] sm:$0x1]
    %v2873 = vld [vmem:[#allocation2 + $0x50] sm:$0x1]
    %v2874 = vld [vmem:[#allocation2 + $0x58] sm:$0x1]
    %vm2887 = vcmask 1046528
    %v2888 = vrot.slane %v2863, 1
    %v2889 = vrot.slane %v2866, 1
    %v2890 = vsel %vm2887, %v2888, %v2889
    %v2891 = vrot.slane %v2864, 1
    %v2892 = vrot.slane %v2867, 1
    %v2893 = vsel %vm2887, %v2891, %v2892
    %v2894 = vrot.slane %v2865, 1
    %v2895 = vrot.slane %v2868, 1
    %v2896 = vsel %vm2887, %v2894, %v2895
    %v2897 = vrot.slane %v2869, 1
    %v2898 = vrot.slane %v2872, 1
    %v2899 = vsel %vm2887, %v2897, %v2898
    %v2900 = vrot.slane %v2870, 1
    %v2901 = vrot.slane %v2873, 1
    %v2902 = vsel %vm2887, %v2900, %v2901
    %v2903 = vrot.slane %v2871, 1
    %v2904 = vrot.slane %v2874, 1
    %v2905 = vsel %vm2887, %v2903, %v2904
    %s2912 = scalar_lea.vmem %s4, 1536
    %v2913 = vld [vmem:[%s2912] sm:$0xff]
    %v2914 = vld [vmem:[%s2912 + $0x8] sm:$0xff]
    %v2915 = vld [vmem:[%s2912 + $0x10] sm:$0xff]
    %v2916 = vld [vmem:[%s2912 + $0x18] sm:$0xff]
    %v2917 = vld [vmem:[%s2912 + $0x20] sm:$0xff]
    %v2918 = vld [vmem:[%s2912 + $0x28] sm:$0xff]
    %v2919 = vld [vmem:[%s2912 + $0x30] sm:$0xff]
    %v2920 = vld [vmem:[%s2912 + $0x38] sm:$0xff]
    %v2921 = vld [vmem:[%s2912 + $0x40] sm:$0xff]
    %v2922 = vld [vmem:[%s2912 + $0x48] sm:$0xff]
    %v2923 = vld [vmem:[%s2912 + $0x50] sm:$0xff]
    %v2924 = vld [vmem:[%s2912 + $0x58] sm:$0xff]
    %v2925 = vld [vmem:[%s2912 + $0x60] sm:$0xff]
    %v2926 = vld [vmem:[%s2912 + $0x68] sm:$0xff]
    %v2927 = vld [vmem:[%s2912 + $0x70] sm:$0xff]
    %v2928 = vld [vmem:[%s2912 + $0x78] sm:$0xff]
    %v2929 = vld [vmem:[%s2912 + $0x80] sm:$0xff]
    %v2930 = vld [vmem:[%s2912 + $0x88] sm:$0xff]
    %v2931 = vld [vmem:[%s2912 + $0x90] sm:$0xff]
    %v2932 = vld [vmem:[%s2912 + $0x98] sm:$0xff]
    %v2933 = vld [vmem:[%s2912 + $0xa0] sm:$0xff]
    %v2934 = vld [vmem:[%s2912 + $0xa8] sm:$0xff]
    %v2935 = vld [vmem:[%s2912 + $0xb0] sm:$0xff]
    %v2936 = vld [vmem:[%s2912 + $0xb8] sm:$0xff]
    %v2937 = vld [vmem:[%s2912 + $0xc0] sm:$0xff]
    %v2938 = vld [vmem:[%s2912 + $0xc8] sm:$0xff]
    %v2939 = vld [vmem:[%s2912 + $0xd0] sm:$0xff]
    %v2940 = vld [vmem:[%s2912 + $0xd8] sm:$0xff]
    %v2941 = vld [vmem:[%s2912 + $0xe0] sm:$0xff]
    %v2942 = vld [vmem:[%s2912 + $0xe8] sm:$0xff]
    %v2943 = vld [vmem:[%s2912 + $0xf0] sm:$0xff]
    %v2944 = vld [vmem:[%s2912 + $0xf8] sm:$0xff]
    %v2945 = vld [vmem:[%s2912 + $0x100] sm:$0xff]
    %v2946 = vld [vmem:[%s2912 + $0x108] sm:$0xff]
    %v2947 = vld [vmem:[%s2912 + $0x110] sm:$0xff]
    %v2948 = vld [vmem:[%s2912 + $0x118] sm:$0xff]
    %v2949 = vld [vmem:[%s2912 + $0x120] sm:$0xff]
    %v2950 = vld [vmem:[%s2912 + $0x128] sm:$0xff]
    %v2951 = vld [vmem:[%s2912 + $0x130] sm:$0xff]
    %v2952 = vld [vmem:[%s2912 + $0x138] sm:$0xff]
    %v2953 = vld [vmem:[%s2912 + $0x140] sm:$0xff]
    %v2954 = vld [vmem:[%s2912 + $0x148] sm:$0xff]
    %v2955 = vld [vmem:[%s2912 + $0x150] sm:$0xff]
    %v2956 = vld [vmem:[%s2912 + $0x158] sm:$0xff]
    %v2957 = vld [vmem:[%s2912 + $0x160] sm:$0xff]
    %v2958 = vld [vmem:[%s2912 + $0x168] sm:$0xff]
    %v2959 = vld [vmem:[%s2912 + $0x170] sm:$0xff]
    %v2960 = vld [vmem:[%s2912 + $0x178] sm:$0xff]
    %v2961 = vld [vmem:[%s2912 + $0x180] sm:$0xff]
    %v2962 = vld [vmem:[%s2912 + $0x188] sm:$0xff]
    %v2963 = vld [vmem:[%s2912 + $0x190] sm:$0xff]
    %v2964 = vld [vmem:[%s2912 + $0x198] sm:$0xff]
    %v2965 = vld [vmem:[%s2912 + $0x1a0] sm:$0xff]
    %v2966 = vld [vmem:[%s2912 + $0x1a8] sm:$0xff]
    %v2967 = vld [vmem:[%s2912 + $0x1b0] sm:$0xff]
    %v2968 = vld [vmem:[%s2912 + $0x1b8] sm:$0xff]
    %v2969 = vld [vmem:[%s2912 + $0x1c0] sm:$0xff]
    %v2970 = vld [vmem:[%s2912 + $0x1c8] sm:$0xff]
    %v2971 = vld [vmem:[%s2912 + $0x1d0] sm:$0xff]
    %v2972 = vld [vmem:[%s2912 + $0x1d8] sm:$0xff]
    %v2973 = vld [vmem:[%s2912 + $0x1e0] sm:$0xff]
    %v2974 = vld [vmem:[%s2912 + $0x1e8] sm:$0xff]
    %v2975 = vld [vmem:[%s2912 + $0x1f0] sm:$0xff]
    %v2976 = vld [vmem:[%s2912 + $0x1f8] sm:$0xff]
    %v2977 = vld [vmem:[%s2912 + $0x200] sm:$0xff]
    %v2978 = vld [vmem:[%s2912 + $0x208] sm:$0xff]
    %v2979 = vld [vmem:[%s2912 + $0x210] sm:$0xff]
    %v2980 = vld [vmem:[%s2912 + $0x218] sm:$0xff]
    %v2981 = vld [vmem:[%s2912 + $0x220] sm:$0xff]
    %v2982 = vld [vmem:[%s2912 + $0x228] sm:$0xff]
    %v2983 = vld [vmem:[%s2912 + $0x230] sm:$0xff]
    %v2984 = vld [vmem:[%s2912 + $0x238] sm:$0xff]
    %v2985 = vld [vmem:[%s2912 + $0x240] sm:$0xff]
    %v2986 = vld [vmem:[%s2912 + $0x248] sm:$0xff]
    %v2987 = vld [vmem:[%s2912 + $0x250] sm:$0xff]
    %v2988 = vld [vmem:[%s2912 + $0x258] sm:$0xff]
    %v2989 = vld [vmem:[%s2912 + $0x260] sm:$0xff]
    %v2990 = vld [vmem:[%s2912 + $0x268] sm:$0xff]
    %v2991 = vld [vmem:[%s2912 + $0x270] sm:$0xff]
    %v2992 = vld [vmem:[%s2912 + $0x278] sm:$0xff]
    %v2993 = vld [vmem:[%s2912 + $0x280] sm:$0xff]
    %v2994 = vld [vmem:[%s2912 + $0x288] sm:$0xff]
    %v2995 = vld [vmem:[%s2912 + $0x290] sm:$0xff]
    %v2996 = vld [vmem:[%s2912 + $0x298] sm:$0xff]
    %v2997 = vld [vmem:[%s2912 + $0x2a0] sm:$0xff]
    %v2998 = vld [vmem:[%s2912 + $0x2a8] sm:$0xff]
    %v2999 = vld [vmem:[%s2912 + $0x2b0] sm:$0xff]
    %v3000 = vld [vmem:[%s2912 + $0x2b8] sm:$0xff]
    %v3001 = vld [vmem:[%s2912 + $0x2c0] sm:$0xff]
    %v3002 = vld [vmem:[%s2912 + $0x2c8] sm:$0xff]
    %v3003 = vld [vmem:[%s2912 + $0x2d0] sm:$0xff]
    %v3004 = vld [vmem:[%s2912 + $0x2d8] sm:$0xff]
    %v3005 = vld [vmem:[%s2912 + $0x2e0] sm:$0xff]
    %v3006 = vld [vmem:[%s2912 + $0x2e8] sm:$0xff]
    %v3007 = vld [vmem:[%s2912 + $0x2f0] sm:$0xff]
    %v3008 = vld [vmem:[%s2912 + $0x2f8] sm:$0xff]
    %v3009 = vld [vmem:[%s2912 + $0x300] sm:$0xff]
    %v3010 = vld [vmem:[%s2912 + $0x308] sm:$0xff]
    %v3011 = vld [vmem:[%s2912 + $0x310] sm:$0xff]
    %v3012 = vld [vmem:[%s2912 + $0x318] sm:$0xff]
    %v3013 = vld [vmem:[%s2912 + $0x320] sm:$0xff]
    %v3014 = vld [vmem:[%s2912 + $0x328] sm:$0xff]
    %v3015 = vld [vmem:[%s2912 + $0x330] sm:$0xff]
    %v3016 = vld [vmem:[%s2912 + $0x338] sm:$0xff]
    %v3017 = vld [vmem:[%s2912 + $0x340] sm:$0xff]
    %v3018 = vld [vmem:[%s2912 + $0x348] sm:$0xff]
    %v3019 = vld [vmem:[%s2912 + $0x350] sm:$0xff]
    %v3020 = vld [vmem:[%s2912 + $0x358] sm:$0xff]
    %v3021 = vld [vmem:[%s2912 + $0x360] sm:$0xff]
    %v3022 = vld [vmem:[%s2912 + $0x368] sm:$0xff]
    %v3023 = vld [vmem:[%s2912 + $0x370] sm:$0xff]
    %v3024 = vld [vmem:[%s2912 + $0x378] sm:$0xff]
    %v3025 = vld [vmem:[%s2912 + $0x380] sm:$0xff]
    %v3026 = vld [vmem:[%s2912 + $0x388] sm:$0xff]
    %v3027 = vld [vmem:[%s2912 + $0x390] sm:$0xff]
    %v3028 = vld [vmem:[%s2912 + $0x398] sm:$0xff]
    %v3029 = vld [vmem:[%s2912 + $0x3a0] sm:$0xff]
    %v3030 = vld [vmem:[%s2912 + $0x3a8] sm:$0xff]
    %v3031 = vld [vmem:[%s2912 + $0x3b0] sm:$0xff]
    %v3032 = vld [vmem:[%s2912 + $0x3b8] sm:$0xff]
    %v3033 = vld [vmem:[%s2912 + $0x3c0] sm:$0xff]
    %v3034 = vld [vmem:[%s2912 + $0x3c8] sm:$0xff]
    %v3035 = vld [vmem:[%s2912 + $0x3d0] sm:$0xff]
    %v3036 = vld [vmem:[%s2912 + $0x3d8] sm:$0xff]
    %v3037 = vld [vmem:[%s2912 + $0x3e0] sm:$0xff]
    %v3038 = vld [vmem:[%s2912 + $0x3e8] sm:$0xff]
    %v3039 = vld [vmem:[%s2912 + $0x3f0] sm:$0xff]
    %v3040 = vld [vmem:[%s2912 + $0x3f8] sm:$0xff]
    %v3041 = vld [vmem:[%s2912 + $0x400] sm:$0xff]
    %v3042 = vld [vmem:[%s2912 + $0x408] sm:$0xff]
    %v3043 = vld [vmem:[%s2912 + $0x410] sm:$0xff]
    %v3044 = vld [vmem:[%s2912 + $0x418] sm:$0xff]
    %v3045 = vld [vmem:[%s2912 + $0x420] sm:$0xff]
    %v3046 = vld [vmem:[%s2912 + $0x428] sm:$0xff]
    %v3047 = vld [vmem:[%s2912 + $0x430] sm:$0xff]
    %v3048 = vld [vmem:[%s2912 + $0x438] sm:$0xff]
    %v3049 = vld [vmem:[%s2912 + $0x440] sm:$0xff]
    %v3050 = vld [vmem:[%s2912 + $0x448] sm:$0xff]
    %v3051 = vld [vmem:[%s2912 + $0x450] sm:$0xff]
    %v3052 = vld [vmem:[%s2912 + $0x458] sm:$0xff]
    %v3053 = vld [vmem:[%s2912 + $0x460] sm:$0xff]
    %v3054 = vld [vmem:[%s2912 + $0x468] sm:$0xff]
    %v3055 = vld [vmem:[%s2912 + $0x470] sm:$0xff]
    %v3056 = vld [vmem:[%s2912 + $0x478] sm:$0xff]
    %v3057 = vld [vmem:[%s2912 + $0x480] sm:$0xff]
    %v3058 = vld [vmem:[%s2912 + $0x488] sm:$0xff]
    %v3059 = vld [vmem:[%s2912 + $0x490] sm:$0xff]
    %v3060 = vld [vmem:[%s2912 + $0x498] sm:$0xff]
    %v3061 = vld [vmem:[%s2912 + $0x4a0] sm:$0xff]
    %v3062 = vld [vmem:[%s2912 + $0x4a8] sm:$0xff]
    %v3063 = vld [vmem:[%s2912 + $0x4b0] sm:$0xff]
    %v3064 = vld [vmem:[%s2912 + $0x4b8] sm:$0xff]
    %v3065 = vld [vmem:[%s2912 + $0x4c0] sm:$0xff]
    %v3066 = vld [vmem:[%s2912 + $0x4c8] sm:$0xff]
    %v3067 = vld [vmem:[%s2912 + $0x4d0] sm:$0xff]
    %v3068 = vld [vmem:[%s2912 + $0x4d8] sm:$0xff]
    %v3069 = vld [vmem:[%s2912 + $0x4e0] sm:$0xff]
    %v3070 = vld [vmem:[%s2912 + $0x4e8] sm:$0xff]
    %v3071 = vld [vmem:[%s2912 + $0x4f0] sm:$0xff]
    %v3072 = vld [vmem:[%s2912 + $0x4f8] sm:$0xff]
    %v3073 = vld [vmem:[%s2912 + $0x500] sm:$0xff]
    %v3074 = vld [vmem:[%s2912 + $0x508] sm:$0xff]
    %v3075 = vld [vmem:[%s2912 + $0x510] sm:$0xff]
    %v3076 = vld [vmem:[%s2912 + $0x518] sm:$0xff]
    %v3077 = vld [vmem:[%s2912 + $0x520] sm:$0xff]
    %v3078 = vld [vmem:[%s2912 + $0x528] sm:$0xff]
    %v3079 = vld [vmem:[%s2912 + $0x530] sm:$0xff]
    %v3080 = vld [vmem:[%s2912 + $0x538] sm:$0xff]
    %v3081 = vld [vmem:[%s2912 + $0x540] sm:$0xff]
    %v3082 = vld [vmem:[%s2912 + $0x548] sm:$0xff]
    %v3083 = vld [vmem:[%s2912 + $0x550] sm:$0xff]
    %v3084 = vld [vmem:[%s2912 + $0x558] sm:$0xff]
    %v3085 = vld [vmem:[%s2912 + $0x560] sm:$0xff]
    %v3086 = vld [vmem:[%s2912 + $0x568] sm:$0xff]
    %v3087 = vld [vmem:[%s2912 + $0x570] sm:$0xff]
    %v3088 = vld [vmem:[%s2912 + $0x578] sm:$0xff]
    %v3089 = vld [vmem:[%s2912 + $0x580] sm:$0xff]
    %v3090 = vld [vmem:[%s2912 + $0x588] sm:$0xff]
    %v3091 = vld [vmem:[%s2912 + $0x590] sm:$0xff]
    %v3092 = vld [vmem:[%s2912 + $0x598] sm:$0xff]
    %v3093 = vld [vmem:[%s2912 + $0x5a0] sm:$0xff]
    %v3094 = vld [vmem:[%s2912 + $0x5a8] sm:$0xff]
    %v3095 = vld [vmem:[%s2912 + $0x5b0] sm:$0xff]
    %v3096 = vld [vmem:[%s2912 + $0x5b8] sm:$0xff]
    %v3097 = vld [vmem:[%s2912 + $0x5c0] sm:$0xff]
    %v3098 = vld [vmem:[%s2912 + $0x5c8] sm:$0xff]
    %v3099 = vld [vmem:[%s2912 + $0x5d0] sm:$0xff]
    %v3100 = vld [vmem:[%s2912 + $0x5d8] sm:$0xff]
    %v3101 = vld [vmem:[%s2912 + $0x5e0] sm:$0xff]
    %v3102 = vld [vmem:[%s2912 + $0x5e8] sm:$0xff]
    %v3103 = vld [vmem:[%s2912 + $0x5f0] sm:$0xff]
    %v3104 = vld [vmem:[%s2912 + $0x5f8] sm:$0xff]
    %3105 = vmatprep.subr.mxu0 %v2914
    %3106 = vmatpush1.msra.mxu0 %v2913
    %3107 = vmatprep.subr.mxu0 %v2918
    %3108 = vmatpush1.msra.mxu0 %v2917
    %3109 = vmatprep.subr.mxu0 %v2922
    %3110 = vmatpush1.msra.mxu0 %v2921
    %3111 = vmatprep.subr.mxu0 %v2926
    %3112 = vmatpush1.msra.mxu0 %v2925
    %3113 = vmatprep.subr.mxu0 %v2930
    %3114 = vmatpush1.msra.mxu0 %v2929
    %3115 = vmatprep.subr.mxu0 %v2934
    %3116 = vmatpush1.msra.mxu0 %v2933
    %3117 = vmatprep.subr.mxu0 %v2938
    %3118 = vmatpush1.msra.mxu0 %v2937
    %3119 = vmatprep.subr.mxu0 %v2942
    %3120 = vmatpush1.msra.mxu0 %v2941
    %3121 = vmatprep.subr.mxu0 %v2946
    %3122 = vmatpush1.msra.mxu0 %v2945
    %3123 = vmatprep.subr.mxu0 %v2950
    %3124 = vmatpush1.msra.mxu0 %v2949
    %3125 = vmatprep.subr.mxu0 %v2954
    %3126 = vmatpush1.msra.mxu0 %v2953
    %3127 = vmatprep.subr.mxu0 %v2958
    %3128 = vmatpush1.msra.mxu0 %v2957
    %3129 = vmatprep.subr.mxu0 %v2962
    %3130 = vmatpush1.msra.mxu0 %v2961
    %3131 = vmatprep.subr.mxu0 %v2966
    %3132 = vmatpush1.msra.mxu0 %v2965
    %3133 = vmatprep.subr.mxu0 %v2970
    %3134 = vmatpush1.msra.mxu0 %v2969
    %3135 = vmatprep.subr.mxu0 %v2974
    %3136 = vmatpush1.msra.mxu0 %v2973
    %3137 = vmatprep.subr.mxu0 %v2978
    %3138 = vmatpush1.msra.mxu0 %v2977
    %3139 = vmatprep.subr.mxu0 %v2982
    %3140 = vmatpush1.msra.mxu0 %v2981
    %3141 = vmatprep.subr.mxu0 %v2986
    %3142 = vmatpush1.msra.mxu0 %v2985
    %3143 = vmatprep.subr.mxu0 %v2990
    %3144 = vmatpush1.msra.mxu0 %v2989
    %3145 = vmatprep.subr.mxu0 %v2994
    %3146 = vmatpush1.msra.mxu0 %v2993
    %3147 = vmatprep.subr.mxu0 %v2998
    %3148 = vmatpush1.msra.mxu0 %v2997
    %3149 = vmatprep.subr.mxu0 %v3002
    %3150 = vmatpush1.msra.mxu0 %v3001
    %3151 = vmatprep.subr.mxu0 %v3006
    %3152 = vmatpush1.msra.mxu0 %v3005
    %3153 = vmatprep.subr.mxu0 %v3010
    %3154 = vmatpush1.msra.mxu0 %v3009
    %3155 = vmatprep.subr.mxu0 %v3014
    %3156 = vmatpush1.msra.mxu0 %v3013
    %3157 = vmatprep.subr.mxu0 %v3018
    %3158 = vmatpush1.msra.mxu0 %v3017
    %3159 = vmatprep.subr.mxu0 %v3022
    %3160 = vmatpush1.msra.mxu0 %v3021
    %3161 = vmatprep.subr.mxu0 %v3026
    %3162 = vmatpush1.msra.mxu0 %v3025
    %3163 = vmatprep.subr.mxu0 %v3030
    %3164 = vmatpush1.msra.mxu0 %v3029
    %3165 = vmatprep.subr.mxu0 %v3034
    %3166 = vmatpush1.msra.mxu0 %v3033
    %3167 = vmatprep.subr.mxu0 %v3038
    %3168 = vmatpush1.msra.mxu0 %v3037
    %3169 = vmatprep.mubr.f32.mxu0 %v2893
    %3170 = vmatmul.mubr.f32.gmra.mrb[0].mxu0 %v2890
    %v3171 = vpop.f32.mrb[0].mxu0
    %v3172 = vadd.f32 0.0, %v3171
    %v3173 = vpop.f32.mrb[0].mxu0
    %v3174 = vadd.f32 0.0, %v3173
    %3175 = vmatprep.mubr.f32.mxu0 %v2902
    %3176 = vmatmul.mubr.f32.gmra.mrb[0].mxu0 %v2899
    %v3177 = vpop.f32.mrb[0].mxu0
    %v3178 = vadd.f32 0.0, %v3177
    %v3179 = vpop.f32.mrb[0].mxu0
    %v3180 = vadd.f32 0.0, %v3179
    %3181 = vdwg.mxu0
    %3182 = vmatprep.subr.mxu0 %v3042
    %3183 = vmatpush1.msra.mxu0 %v3041
    %3184 = vmatprep.subr.mxu0 %v3046
    %3185 = vmatpush1.msra.mxu0 %v3045
    %3186 = vmatprep.subr.mxu0 %v3050
    %3187 = vmatpush1.msra.mxu0 %v3049
    %3188 = vmatprep.subr.mxu0 %v3054
    %3189 = vmatpush1.msra.mxu0 %v3053
    %3190 = vmatprep.subr.mxu0 %v3058
    %3191 = vmatpush1.msra.mxu0 %v3057
    %3192 = vmatprep.subr.mxu0 %v3062
    %3193 = vmatpush1.msra.mxu0 %v3061
    %3194 = vmatprep.subr.mxu0 %v3066
    %3195 = vmatpush1.msra.mxu0 %v3065
    %3196 = vmatprep.subr.mxu0 %v3070
    %3197 = vmatpush1.msra.mxu0 %v3069
    %3198 = vmatprep.subr.mxu0 %v3074
    %3199 = vmatpush1.msra.mxu0 %v3073
    %3200 = vmatprep.subr.mxu0 %v3078
    %3201 = vmatpush1.msra.mxu0 %v3077
    %3202 = vmatprep.subr.mxu0 %v3082
    %3203 = vmatpush1.msra.mxu0 %v3081
    %3204 = vmatprep.subr.mxu0 %v3086
    %3205 = vmatpush1.msra.mxu0 %v3085
    %3206 = vmatprep.subr.mxu0 %v3090
    %3207 = vmatpush1.msra.mxu0 %v3089
    %3208 = vmatprep.subr.mxu0 %v3094
    %3209 = vmatpush1.msra.mxu0 %v3093
    %3210 = vmatprep.subr.mxu0 %v3098
    %3211 = vmatpush1.msra.mxu0 %v3097
    %3212 = vmatprep.subr.mxu0 %v3102
    %3213 = vmatpush1.msra.mxu0 %v3101
    %3214 = vmatprep.subr.mxu0 0.0
    %3215 = vmatpush1.msra.mxu0 0.0
    %3216 = vmatprep.subr.mxu0 0.0
    %3217 = vmatpush1.msra.mxu0 0.0
    %3218 = vmatprep.subr.mxu0 0.0
    %3219 = vmatpush1.msra.mxu0 0.0
    %3220 = vmatprep.subr.mxu0 0.0
    %3221 = vmatpush1.msra.mxu0 0.0
    %3222 = vmatprep.subr.mxu0 0.0
    %3223 = vmatpush1.msra.mxu0 0.0
    %3224 = vmatprep.subr.mxu0 0.0
    %3225 = vmatpush1.msra.mxu0 0.0
    %3226 = vmatprep.subr.mxu0 0.0
    %3227 = vmatpush1.msra.mxu0 0.0
    %3228 = vmatprep.subr.mxu0 0.0
    %3229 = vmatpush1.msra.mxu0 0.0
    %3230 = vmatprep.subr.mxu0 0.0
    %3231 = vmatpush1.msra.mxu0 0.0
    %3232 = vmatprep.subr.mxu0 0.0
    %3233 = vmatpush1.msra.mxu0 0.0
    %3234 = vmatprep.subr.mxu0 0.0
    %3235 = vmatpush1.msra.mxu0 0.0
    %3236 = vmatprep.subr.mxu0 0.0
    %3237 = vmatpush1.msra.mxu0 0.0
    %3238 = vmatprep.subr.mxu0 0.0
    %3239 = vmatpush1.msra.mxu0 0.0
    %3240 = vmatprep.subr.mxu0 0.0
    %3241 = vmatpush1.msra.mxu0 0.0
    %3242 = vmatprep.subr.mxu0 0.0
    %3243 = vmatpush1.msra.mxu0 0.0
    %3244 = vmatprep.subr.mxu0 0.0
    %3245 = vmatpush1.msra.mxu0 0.0
    %3246 = vmatprep.mubr.f32.mxu0 0.0
    %3247 = vmatmul.mubr.f32.gmra.mrb[0].mxu0 %v2896
    %v3248 = vpop.f32.mrb[0].mxu0
    %v3249 = vadd.f32 %v3172, %v3248
    %v3250 = vpop.f32.mrb[0].mxu0
    %v3251 = vadd.f32 %v3174, %v3250
    %3252 = vmatprep.mubr.f32.mxu0 0.0
    %3253 = vmatmul.mubr.f32.gmra.mrb[0].mxu0 %v2905
    %v3254 = vpop.f32.mrb[0].mxu0
    %v3255 = vadd.f32 %v3178, %v3254
    %v3256 = vpop.f32.mrb[0].mxu0
    %v3257 = vadd.f32 %v3180, %v3256
    %3258 = vdwg.mxu0
    %3259 = vmatprep.subr.mxu0 %v2916
    %3260 = vmatpush1.msra.mxu0 %v2915
    %3261 = vmatprep.subr.mxu0 %v2920
    %3262 = vmatpush1.msra.mxu0 %v2919
    %3263 = vmatprep.subr.mxu0 %v2924
    %3264 = vmatpush1.msra.mxu0 %v2923
    %3265 = vmatprep.subr.mxu0 %v2928
    %3266 = vmatpush1.msra.mxu0 %v2927
    %3267 = vmatprep.subr.mxu0 %v2932
    %3268 = vmatpush1.msra.mxu0 %v2931
    %3269 = vmatprep.subr.mxu0 %v2936
    %3270 = vmatpush1.msra.mxu0 %v2935
    %3271 = vmatprep.subr.mxu0 %v2940
    %3272 = vmatpush1.msra.mxu0 %v2939
    %3273 = vmatprep.subr.mxu0 %v2944
    %3274 = vmatpush1.msra.mxu0 %v2943
    %3275 = vmatprep.subr.mxu0 %v2948
    %3276 = vmatpush1.msra.mxu0 %v2947
    %3277 = vmatprep.subr.mxu0 %v2952
    %3278 = vmatpush1.msra.mxu0 %v2951
    %3279 = vmatprep.subr.mxu0 %v2956
    %3280 = vmatpush1.msra.mxu0 %v2955
    %3281 = vmatprep.subr.mxu0 %v2960
    %3282 = vmatpush1.msra.mxu0 %v2959
    %3283 = vmatprep.subr.mxu0 %v2964
    %3284 = vmatpush1.msra.mxu0 %v2963
    %3285 = vmatprep.subr.mxu0 %v2968
    %3286 = vmatpush1.msra.mxu0 %v2967
    %3287 = vmatprep.subr.mxu0 %v2972
    %3288 = vmatpush1.msra.mxu0 %v2971
    %3289 = vmatprep.subr.mxu0 %v2976
    %3290 = vmatpush1.msra.mxu0 %v2975
    %3291 = vmatprep.subr.mxu0 %v2980
    %3292 = vmatpush1.msra.mxu0 %v2979
    %3293 = vmatprep.subr.mxu0 %v2984
    %3294 = vmatpush1.msra.mxu0 %v2983
    %3295 = vmatprep.subr.mxu0 %v2988
    %3296 = vmatpush1.msra.mxu0 %v2987
    %3297 = vmatprep.subr.mxu0 %v2992
    %3298 = vmatpush1.msra.mxu0 %v2991
    %3299 = vmatprep.subr.mxu0 %v2996
    %3300 = vmatpush1.msra.mxu0 %v2995
    %3301 = vmatprep.subr.mxu0 %v3000
    %3302 = vmatpush1.msra.mxu0 %v2999
    %3303 = vmatprep.subr.mxu0 %v3004
    %3304 = vmatpush1.msra.mxu0 %v3003
    %3305 = vmatprep.subr.mxu0 %v3008
    %3306 = vmatpush1.msra.mxu0 %v3007
    %3307 = vmatprep.subr.mxu0 %v3012
    %3308 = vmatpush1.msra.mxu0 %v3011
    %3309 = vmatprep.subr.mxu0 %v3016
    %3310 = vmatpush1.msra.mxu0 %v3015
    %3311 = vmatprep.subr.mxu0 %v3020
    %3312 = vmatpush1.msra.mxu0 %v3019
    %3313 = vmatprep.subr.mxu0 %v3024
    %3314 = vmatpush1.msra.mxu0 %v3023
    %3315 = vmatprep.subr.mxu0 %v3028
    %3316 = vmatpush1.msra.mxu0 %v3027
    %3317 = vmatprep.subr.mxu0 %v3032
    %3318 = vmatpush1.msra.mxu0 %v3031
    %3319 = vmatprep.subr.mxu0 %v3036
    %3320 = vmatpush1.msra.mxu0 %v3035
    %3321 = vmatprep.subr.mxu0 %v3040
    %3322 = vmatpush1.msra.mxu0 %v3039
    %3323 = vmatprep.mubr.f32.mxu0 %v2893
    %3324 = vmatmul.mubr.f32.gmra.mrb[0].mxu0 %v2890
    %v3325 = vpop.f32.mrb[0].mxu0
    %v3326 = vadd.f32 0.0, %v3325
    %v3327 = vpop.f32.mrb[0].mxu0
    %v3328 = vadd.f32 0.0, %v3327
    %3329 = vmatprep.mubr.f32.mxu0 %v2902
    %3330 = vmatmul.mubr.f32.gmra.mrb[0].mxu0 %v2899
    %v3331 = vpop.f32.mrb[0].mxu0
    %v3332 = vadd.f32 0.0, %v3331
    %v3333 = vpop.f32.mrb[0].mxu0
    %v3334 = vadd.f32 0.0, %v3333
    %3335 = vdwg.mxu0
    %3336 = vmatprep.subr.mxu0 %v3044
    %3337 = vmatpush1.msra.mxu0 %v3043
    %3338 = vmatprep.subr.mxu0 %v3048
    %3339 = vmatpush1.msra.mxu0 %v3047
    %3340 = vmatprep.subr.mxu0 %v3052
    %3341 = vmatpush1.msra.mxu0 %v3051
    %3342 = vmatprep.subr.mxu0 %v3056
    %3343 = vmatpush1.msra.mxu0 %v3055
    %3344 = vmatprep.subr.mxu0 %v3060
    %3345 = vmatpush1.msra.mxu0 %v3059
    %3346 = vmatprep.subr.mxu0 %v3064
    %3347 = vmatpush1.msra.mxu0 %v3063
    %3348 = vmatprep.subr.mxu0 %v3068
    %3349 = vmatpush1.msra.mxu0 %v3067
    %3350 = vmatprep.subr.mxu0 %v3072
    %3351 = vmatpush1.msra.mxu0 %v3071
    %3352 = vmatprep.subr.mxu0 %v3076
    %3353 = vmatpush1.msra.mxu0 %v3075
    %3354 = vmatprep.subr.mxu0 %v3080
    %3355 = vmatpush1.msra.mxu0 %v3079
    %3356 = vmatprep.subr.mxu0 %v3084
    %3357 = vmatpush1.msra.mxu0 %v3083
    %3358 = vmatprep.subr.mxu0 %v3088
    %3359 = vmatpush1.msra.mxu0 %v3087
    %3360 = vmatprep.subr.mxu0 %v3092
    %3361 = vmatpush1.msra.mxu0 %v3091
    %3362 = vmatprep.subr.mxu0 %v3096
    %3363 = vmatpush1.msra.mxu0 %v3095
    %3364 = vmatprep.subr.mxu0 %v3100
    %3365 = vmatpush1.msra.mxu0 %v3099
    %3366 = vmatprep.subr.mxu0 %v3104
    %3367 = vmatpush1.msra.mxu0 %v3103
    %3368 = vmatprep.subr.mxu0 0.0
    %3369 = vmatpush1.msra.mxu0 0.0
    %3370 = vmatprep.subr.mxu0 0.0
    %3371 = vmatpush1.msra.mxu0 0.0
    %3372 = vmatprep.subr.mxu0 0.0
    %3373 = vmatpush1.msra.mxu0 0.0
    %3374 = vmatprep.subr.mxu0 0.0
    %3375 = vmatpush1.msra.mxu0 0.0
    %3376 = vmatprep.subr.mxu0 0.0
    %3377 = vmatpush1.msra.mxu0 0.0
    %3378 = vmatprep.subr.mxu0 0.0
    %3379 = vmatpush1.msra.mxu0 0.0
    %3380 = vmatprep.subr.mxu0 0.0
    %3381 = vmatpush1.msra.mxu0 0.0
    %3382 = vmatprep.subr.mxu0 0.0
    %3383 = vmatpush1.msra.mxu0 0.0
    %3384 = vmatprep.subr.mxu0 0.0
    %3385 = vmatpush1.msra.mxu0 0.0
    %3386 = vmatprep.subr.mxu0 0.0
    %3387 = vmatpush1.msra.mxu0 0.0
    %3388 = vmatprep.subr.mxu0 0.0
    %3389 = vmatpush1.msra.mxu0 0.0
    %3390 = vmatprep.subr.mxu0 0.0
    %3391 = vmatpush1.msra.mxu0 0.0
    %3392 = vmatprep.subr.mxu0 0.0
    %3393 = vmatpush1.msra.mxu0 0.0
    %3394 = vmatprep.subr.mxu0 0.0
    %3395 = vmatpush1.msra.mxu0 0.0
    %3396 = vmatprep.subr.mxu0 0.0
    %3397 = vmatpush1.msra.mxu0 0.0
    %3398 = vmatprep.subr.mxu0 0.0
    %3399 = vmatpush1.msra.mxu0 0.0
    %3400 = vmatprep.mubr.f32.mxu0 0.0
    %3401 = vmatmul.mubr.f32.gmra.mrb[0].mxu0 %v2896
    %v3402 = vpop.f32.mrb[0].mxu0
    %v3403 = vadd.f32 %v3326, %v3402
    %v3404 = vpop.f32.mrb[0].mxu0
    %v3405 = vadd.f32 %v3328, %v3404
    %3406 = vmatprep.mubr.f32.mxu0 0.0
    %3407 = vmatmul.mubr.f32.gmra.mrb[0].mxu0 %v2905
    %v3408 = vpop.f32.mrb[0].mxu0
    %v3409 = vadd.f32 %v3332, %v3408
    %v3410 = vpop.f32.mrb[0].mxu0
    %v3411 = vadd.f32 %v3334, %v3410
    %3412 = vdwg.mxu0
    %3413 = vmatprep.subr.mxu0 %v2672
    %3414 = vmatpush1.msra.mxu0 %v2671
    %3415 = vmatprep.subr.mxu0 %v2676
    %3416 = vmatpush1.msra.mxu0 %v2675
    %3417 = vmatprep.subr.mxu0 %v2680
    %3418 = vmatpush1.msra.mxu0 %v2679
    %3419 = vmatprep.subr.mxu0 %v2684
    %3420 = vmatpush1.msra.mxu0 %v2683
    %3421 = vmatprep.subr.mxu0 %v2688
    %3422 = vmatpush1.msra.mxu0 %v2687
    %3423 = vmatprep.subr.mxu0 %v2692
    %3424 = vmatpush1.msra.mxu0 %v2691
    %3425 = vmatprep.subr.mxu0 %v2696
    %3426 = vmatpush1.msra.mxu0 %v2695
    %3427 = vmatprep.subr.mxu0 %v2700
    %3428 = vmatpush1.msra.mxu0 %v2699
    %3429 = vmatprep.subr.mxu0 %v2704
    %3430 = vmatpush1.msra.mxu0 %v2703
    %3431 = vmatprep.subr.mxu0 %v2708
    %3432 = vmatpush1.msra.mxu0 %v2707
    %3433 = vmatprep.subr.mxu0 %v2712
    %3434 = vmatpush1.msra.mxu0 %v2711
    %3435 = vmatprep.subr.mxu0 %v2716
    %3436 = vmatpush1.msra.mxu0 %v2715
    %3437 = vmatprep.subr.mxu0 %v2720
    %3438 = vmatpush1.msra.mxu0 %v2719
    %3439 = vmatprep.subr.mxu0 %v2724
    %3440 = vmatpush1.msra.mxu0 %v2723
    %3441 = vmatprep.subr.mxu0 %v2728
    %3442 = vmatpush1.msra.mxu0 %v2727
    %3443 = vmatprep.subr.mxu0 %v2732
    %3444 = vmatpush1.msra.mxu0 %v2731
    %3445 = vmatprep.subr.mxu0 %v2736
    %3446 = vmatpush1.msra.mxu0 %v2735
    %3447 = vmatprep.subr.mxu0 %v2740
    %3448 = vmatpush1.msra.mxu0 %v2739
    %3449 = vmatprep.subr.mxu0 %v2744
    %3450 = vmatpush1.msra.mxu0 %v2743
    %3451 = vmatprep.subr.mxu0 %v2748
    %3452 = vmatpush1.msra.mxu0 %v2747
    %3453 = vmatprep.subr.mxu0 %v2752
    %3454 = vmatpush1.msra.mxu0 %v2751
    %3455 = vmatprep.subr.mxu0 %v2756
    %3456 = vmatpush1.msra.mxu0 %v2755
    %3457 = vmatprep.subr.mxu0 %v2760
    %3458 = vmatpush1.msra.mxu0 %v2759
    %3459 = vmatprep.subr.mxu0 %v2764
    %3460 = vmatpush1.msra.mxu0 %v2763
    %3461 = vmatprep.subr.mxu0 %v2768
    %3462 = vmatpush1.msra.mxu0 %v2767
    %3463 = vmatprep.subr.mxu0 %v2772
    %3464 = vmatpush1.msra.mxu0 %v2771
    %3465 = vmatprep.subr.mxu0 %v2776
    %3466 = vmatpush1.msra.mxu0 %v2775
    %3467 = vmatprep.subr.mxu0 %v2780
    %3468 = vmatpush1.msra.mxu0 %v2779
    %3469 = vmatprep.subr.mxu0 %v2784
    %3470 = vmatpush1.msra.mxu0 %v2783
    %3471 = vmatprep.subr.mxu0 %v2788
    %3472 = vmatpush1.msra.mxu0 %v2787
    %3473 = vmatprep.subr.mxu0 %v2792
    %3474 = vmatpush1.msra.mxu0 %v2791
    %3475 = vmatprep.subr.mxu0 %v2796
    %3476 = vmatpush1.msra.mxu0 %v2795
    %3477 = vmatprep.mubr.f32.mxu0 %v2666
    %3478 = vmatmul.mubr.f32.gmra.mrb[0].mxu0 %v2665
    %v3479 = vpop.f32.mrb[0].mxu0
    %v3480 = vadd.f32 %v3249, %v3479
    %v3481 = vpop.f32.mrb[0].mxu0
    %v3482 = vadd.f32 %v3251, %v3481
    %3483 = vmatprep.mubr.f32.mxu0 %v2669
    %3484 = vmatmul.mubr.f32.gmra.mrb[0].mxu0 %v2668
    %v3485 = vpop.f32.mrb[0].mxu0
    %v3486 = vadd.f32 %v3255, %v3485
    %v3487 = vpop.f32.mrb[0].mxu0
    %v3488 = vadd.f32 %v3257, %v3487
    %3489 = vdwg.mxu0
    %3490 = vmatprep.subr.mxu0 %v2800
    %3491 = vmatpush1.msra.mxu0 %v2799
    %3492 = vmatprep.subr.mxu0 %v2804
    %3493 = vmatpush1.msra.mxu0 %v2803
    %3494 = vmatprep.subr.mxu0 %v2808
    %3495 = vmatpush1.msra.mxu0 %v2807
    %3496 = vmatprep.subr.mxu0 %v2812
    %3497 = vmatpush1.msra.mxu0 %v2811
    %3498 = vmatprep.subr.mxu0 %v2816
    %3499 = vmatpush1.msra.mxu0 %v2815
    %3500 = vmatprep.subr.mxu0 %v2820
    %3501 = vmatpush1.msra.mxu0 %v2819
    %3502 = vmatprep.subr.mxu0 %v2824
    %3503 = vmatpush1.msra.mxu0 %v2823
    %3504 = vmatprep.subr.mxu0 %v2828
    %3505 = vmatpush1.msra.mxu0 %v2827
    %3506 = vmatprep.subr.mxu0 %v2832
    %3507 = vmatpush1.msra.mxu0 %v2831
    %3508 = vmatprep.subr.mxu0 %v2836
    %3509 = vmatpush1.msra.mxu0 %v2835
    %3510 = vmatprep.subr.mxu0 %v2840
    %3511 = vmatpush1.msra.mxu0 %v2839
    %3512 = vmatprep.subr.mxu0 %v2844
    %3513 = vmatpush1.msra.mxu0 %v2843
    %3514 = vmatprep.subr.mxu0 %v2848
    %3515 = vmatpush1.msra.mxu0 %v2847
    %3516 = vmatprep.subr.mxu0 %v2852
    %3517 = vmatpush1.msra.mxu0 %v2851
    %3518 = vmatprep.subr.mxu0 %v2856
    %3519 = vmatpush1.msra.mxu0 %v2855
    %3520 = vmatprep.subr.mxu0 %v2860
    %3521 = vmatpush1.msra.mxu0 %v2859
    %3522 = vmatprep.subr.mxu0 0.0
    %3523 = vmatpush1.msra.mxu0 0.0
    %3524 = vmatprep.subr.mxu0 0.0
    %3525 = vmatpush1.msra.mxu0 0.0
    %3526 = vmatprep.subr.mxu0 0.0
    %3527 = vmatpush1.msra.mxu0 0.0
    %3528 = vmatprep.subr.mxu0 0.0
    %3529 = vmatpush1.msra.mxu0 0.0
    %3530 = vmatprep.subr.mxu0 0.0
    %3531 = vmatpush1.msra.mxu0 0.0
    %3532 = vmatprep.subr.mxu0 0.0
    %3533 = vmatpush1.msra.mxu0 0.0
    %3534 = vmatprep.subr.mxu0 0.0
    %3535 = vmatpush1.msra.mxu0 0.0
    %3536 = vmatprep.subr.mxu0 0.0
    %3537 = vmatpush1.msra.mxu0 0.0
    %3538 = vmatprep.subr.mxu0 0.0
    %3539 = vmatpush1.msra.mxu0 0.0
    %3540 = vmatprep.subr.mxu0 0.0
    %3541 = vmatpush1.msra.mxu0 0.0
    %3542 = vmatprep.subr.mxu0 0.0
    %3543 = vmatpush1.msra.mxu0 0.0
    %3544 = vmatprep.subr.mxu0 0.0
    %3545 = vmatpush1.msra.mxu0 0.0
    %3546 = vmatprep.subr.mxu0 0.0
    %3547 = vmatpush1.msra.mxu0 0.0
    %3548 = vmatprep.subr.mxu0 0.0
    %3549 = vmatpush1.msra.mxu0 0.0
    %3550 = vmatprep.subr.mxu0 0.0
    %3551 = vmatpush1.msra.mxu0 0.0
    %3552 = vmatprep.subr.mxu0 0.0
    %3553 = vmatpush1.msra.mxu0 0.0
    %3554 = vmatprep.mubr.f32.mxu0 0.0
    %3555 = vmatmul.mubr.f32.gmra.mrb[0].mxu0 %v2667
    %v3556 = vpop.f32.mrb[0].mxu0
    %v3557 = vadd.f32 %v3480, %v3556
    %v3558 = vpop.f32.mrb[0].mxu0
    %v3559 = vadd.f32 %v3482, %v3558
    %3560 = vmatprep.mubr.f32.mxu0 0.0
    %3561 = vmatmul.mubr.f32.gmra.mrb[0].mxu0 %v2670
    %v3562 = vpop.f32.mrb[0].mxu0
    %v3563 = vadd.f32 %v3486, %v3562
    %v3564 = vpop.f32.mrb[0].mxu0
    %v3565 = vadd.f32 %v3488, %v3564
    %3566 = vdwg.mxu0
    %3567 = vmatprep.subr.mxu0 %v2674
    %3568 = vmatpush1.msra.mxu0 %v2673
    %3569 = vmatprep.subr.mxu0 %v2678
    %3570 = vmatpush1.msra.mxu0 %v2677
    %3571 = vmatprep.subr.mxu0 %v2682
    %3572 = vmatpush1.msra.mxu0 %v2681
    %3573 = vmatprep.subr.mxu0 %v2686
    %3574 = vmatpush1.msra.mxu0 %v2685
    %3575 = vmatprep.subr.mxu0 %v2690
    %3576 = vmatpush1.msra.mxu0 %v2689
    %3577 = vmatprep.subr.mxu0 %v2694
    %3578 = vmatpush1.msra.mxu0 %v2693
    %3579 = vmatprep.subr.mxu0 %v2698
    %3580 = vmatpush1.msra.mxu0 %v2697
    %3581 = vmatprep.subr.mxu0 %v2702
    %3582 = vmatpush1.msra.mxu0 %v2701
    %3583 = vmatprep.subr.mxu0 %v2706
    %3584 = vmatpush1.msra.mxu0 %v2705
    %3585 = vmatprep.subr.mxu0 %v2710
    %3586 = vmatpush1.msra.mxu0 %v2709
    %3587 = vmatprep.subr.mxu0 %v2714
    %3588 = vmatpush1.msra.mxu0 %v2713
    %3589 = vmatprep.subr.mxu0 %v2718
    %3590 = vmatpush1.msra.mxu0 %v2717
    %3591 = vmatprep.subr.mxu0 %v2722
    %3592 = vmatpush1.msra.mxu0 %v2721
    %3593 = vmatprep.subr.mxu0 %v2726
    %3594 = vmatpush1.msra.mxu0 %v2725
    %3595 = vmatprep.subr.mxu0 %v2730
    %3596 = vmatpush1.msra.mxu0 %v2729
    %3597 = vmatprep.subr.mxu0 %v2734
    %3598 = vmatpush1.msra.mxu0 %v2733
    %3599 = vmatprep.subr.mxu0 %v2738
    %3600 = vmatpush1.msra.mxu0 %v2737
    %3601 = vmatprep.subr.mxu0 %v2742
    %3602 = vmatpush1.msra.mxu0 %v2741
    %3603 = vmatprep.subr.mxu0 %v2746
    %3604 = vmatpush1.msra.mxu0 %v2745
    %3605 = vmatprep.subr.mxu0 %v2750
    %3606 = vmatpush1.msra.mxu0 %v2749
    %3607 = vmatprep.subr.mxu0 %v2754
    %3608 = vmatpush1.msra.mxu0 %v2753
    %3609 = vmatprep.subr.mxu0 %v2758
    %3610 = vmatpush1.msra.mxu0 %v2757
    %3611 = vmatprep.subr.mxu0 %v2762
    %3612 = vmatpush1.msra.mxu0 %v2761
    %3613 = vmatprep.subr.mxu0 %v2766
    %3614 = vmatpush1.msra.mxu0 %v2765
    %3615 = vmatprep.subr.mxu0 %v2770
    %3616 = vmatpush1.msra.mxu0 %v2769
    %3617 = vmatprep.subr.mxu0 %v2774
    %3618 = vmatpush1.msra.mxu0 %v2773
    %3619 = vmatprep.subr.mxu0 %v2778
    %3620 = vmatpush1.msra.mxu0 %v2777
    %3621 = vmatprep.subr.mxu0 %v2782
    %3622 = vmatpush1.msra.mxu0 %v2781
    %3623 = vmatprep.subr.mxu0 %v2786
    %3624 = vmatpush1.msra.mxu0 %v2785
    %3625 = vmatprep.subr.mxu0 %v2790
    %3626 = vmatpush1.msra.mxu0 %v2789
    %3627 = vmatprep.subr.mxu0 %v2794
    %3628 = vmatpush1.msra.mxu0 %v2793
    %3629 = vmatprep.subr.mxu0 %v2798
    %3630 = vmatpush1.msra.mxu0 %v2797
    %3631 = vmatprep.mubr.f32.mxu0 %v2666
    %3632 = vmatmul.mubr.f32.gmra.mrb[0].mxu0 %v2665
    %v3633 = vpop.f32.mrb[0].mxu0
    %v3634 = vadd.f32 %v3403, %v3633
    %v3635 = vpop.f32.mrb[0].mxu0
    %v3636 = vadd.f32 %v3405, %v3635
    %3637 = vmatprep.mubr.f32.mxu0 %v2669
    %3638 = vmatmul.mubr.f32.gmra.mrb[0].mxu0 %v2668
    %v3639 = vpop.f32.mrb[0].mxu0
    %v3640 = vadd.f32 %v3409, %v3639
    %v3641 = vpop.f32.mrb[0].mxu0
    %v3642 = vadd.f32 %v3411, %v3641
    %3643 = vdwg.mxu0
    %3644 = vmatprep.subr.mxu0 %v2802
    %3645 = vmatpush1.msra.mxu0 %v2801
    %3646 = vmatprep.subr.mxu0 %v2806
    %3647 = vmatpush1.msra.mxu0 %v2805
    %3648 = vmatprep.subr.mxu0 %v2810
    %3649 = vmatpush1.msra.mxu0 %v2809
    %3650 = vmatprep.subr.mxu0 %v2814
    %3651 = vmatpush1.msra.mxu0 %v2813
    %3652 = vmatprep.subr.mxu0 %v2818
    %3653 = vmatpush1.msra.mxu0 %v2817
    %3654 = vmatprep.subr.mxu0 %v2822
    %3655 = vmatpush1.msra.mxu0 %v2821
    %3656 = vmatprep.subr.mxu0 %v2826
    %3657 = vmatpush1.msra.mxu0 %v2825
    %3658 = vmatprep.subr.mxu0 %v2830
    %3659 = vmatpush1.msra.mxu0 %v2829
    %3660 = vmatprep.subr.mxu0 %v2834
    %3661 = vmatpush1.msra.mxu0 %v2833
    %3662 = vmatprep.subr.mxu0 %v2838
    %3663 = vmatpush1.msra.mxu0 %v2837
    %3664 = vmatprep.subr.mxu0 %v2842
    %3665 = vmatpush1.msra.mxu0 %v2841
    %3666 = vmatprep.subr.mxu0 %v2846
    %3667 = vmatpush1.msra.mxu0 %v2845
    %3668 = vmatprep.subr.mxu0 %v2850
    %3669 = vmatpush1.msra.mxu0 %v2849
    %3670 = vmatprep.subr.mxu0 %v2854
    %3671 = vmatpush1.msra.mxu0 %v2853
    %3672 = vmatprep.subr.mxu0 %v2858
    %3673 = vmatpush1.msra.mxu0 %v2857
    %3674 = vmatprep.subr.mxu0 %v2862
    %3675 = vmatpush1.msra.mxu0 %v2861
    %3676 = vmatprep.subr.mxu0 0.0
    %3677 = vmatpush1.msra.mxu0 0.0
    %3678 = vmatprep.subr.mxu0 0.0
    %3679 = vmatpush1.msra.mxu0 0.0
    %3680 = vmatprep.subr.mxu0 0.0
    %3681 = vmatpush1.msra.mxu0 0.0
    %3682 = vmatprep.subr.mxu0 0.0
    %3683 = vmatpush1.msra.mxu0 0.0
    %3684 = vmatprep.subr.mxu0 0.0
    %3685 = vmatpush1.msra.mxu0 0.0
    %3686 = vmatprep.subr.mxu0 0.0
    %3687 = vmatpush1.msra.mxu0 0.0
    %3688 = vmatprep.subr.mxu0 0.0
    %3689 = vmatpush1.msra.mxu0 0.0
    %3690 = vmatprep.subr.mxu0 0.0
    %3691 = vmatpush1.msra.mxu0 0.0
    %3692 = vmatprep.subr.mxu0 0.0
    %3693 = vmatpush1.msra.mxu0 0.0
    %3694 = vmatprep.subr.mxu0 0.0
    %3695 = vmatpush1.msra.mxu0 0.0
    %3696 = vmatprep.subr.mxu0 0.0
    %3697 = vmatpush1.msra.mxu0 0.0
    %3698 = vmatprep.subr.mxu0 0.0
    %3699 = vmatpush1.msra.mxu0 0.0
    %3700 = vmatprep.subr.mxu0 0.0
    %3701 = vmatpush1.msra.mxu0 0.0
    %3702 = vmatprep.subr.mxu0 0.0
    %3703 = vmatpush1.msra.mxu0 0.0
    %3704 = vmatprep.subr.mxu0 0.0
    %3705 = vmatpush1.msra.mxu0 0.0
    %3706 = vmatprep.subr.mxu0 0.0
    %3707 = vmatpush1.msra.mxu0 0.0
    %3708 = vmatprep.mubr.f32.mxu0 0.0
    %3709 = vmatmul.mubr.f32.gmra.mrb[0].mxu0 %v2667
    %v3710 = vpop.f32.mrb[0].mxu0
    %v3711 = vadd.f32 %v3634, %v3710
    %v3712 = vpop.f32.mrb[0].mxu0
    %v3713 = vadd.f32 %v3636, %v3712
    %3714 = vmatprep.mubr.f32.mxu0 0.0
    %3715 = vmatmul.mubr.f32.gmra.mrb[0].mxu0 %v2670
    %v3716 = vpop.f32.mrb[0].mxu0
    %v3717 = vadd.f32 %v3640, %v3716
    %v3718 = vpop.f32.mrb[0].mxu0
    %v3719 = vadd.f32 %v3642, %v3718
    %3720 = vdwg.mxu0
    %v3721 = vld [vmem:[#allocation2] sm:$0xfc]
    %v3722 = vld [vmem:[#allocation2 + $0x8] sm:$0xfc]
    %v3723 = vld [vmem:[#allocation2 + $0x10] sm:$0xfc]
    %v3724 = vld [vmem:[#allocation2 + $0x18] sm:$0x3]
    %v3725 = vld [vmem:[#allocation2 + $0x20] sm:$0x3]
    %v3726 = vld [vmem:[#allocation2 + $0x28] sm:$0x3]
    %v3727 = vld [vmem:[#allocation2 + $0x30] sm:$0xfc]
    %v3728 = vld [vmem:[#allocation2 + $0x38] sm:$0xfc]
    %v3729 = vld [vmem:[#allocation2 + $0x40] sm:$0xfc]
    %v3730 = vld [vmem:[#allocation2 + $0x48] sm:$0x3]
    %v3731 = vld [vmem:[#allocation2 + $0x50] sm:$0x3]
    %v3732 = vld [vmem:[#allocation2 + $0x58] sm:$0x3]
    %vm3745 = vcmask 1045504
    %v3746 = vrot.slane %v3721, 2
    %v3747 = vrot.slane %v3724, 2
    %v3748 = vsel %vm3745, %v3746, %v3747
    %v3749 = vrot.slane %v3722, 2
    %v3750 = vrot.slane %v3725, 2
    %v3751 = vsel %vm3745, %v3749, %v3750
    %v3752 = vrot.slane %v3723, 2
    %v3753 = vrot.slane %v3726, 2
    %v3754 = vsel %vm3745, %v3752, %v3753
    %v3755 = vrot.slane %v3727, 2
    %v3756 = vrot.slane %v3730, 2
    %v3757 = vsel %vm3745, %v3755, %v3756
    %v3758 = vrot.slane %v3728, 2
    %v3759 = vrot.slane %v3731, 2
    %v3760 = vsel %vm3745, %v3758, %v3759
    %v3761 = vrot.slane %v3729, 2
    %v3762 = vrot.slane %v3732, 2
    %v3763 = vsel %vm3745, %v3761, %v3762
    %s3770 = scalar_lea.vmem %s4, 3072
    %v3771 = vld [vmem:[%s3770] sm:$0xff]
    %v3772 = vld [vmem:[%s3770 + $0x8] sm:$0xff]
    %v3773 = vld [vmem:[%s3770 + $0x10] sm:$0xff]
    %v3774 = vld [vmem:[%s3770 + $0x18] sm:$0xff]
    %v3775 = vld [vmem:[%s3770 + $0x20] sm:$0xff]
    %v3776 = vld [vmem:[%s3770 + $0x28] sm:$0xff]
    %v3777 = vld [vmem:[%s3770 + $0x30] sm:$0xff]
    %v3778 = vld [vmem:[%s3770 + $0x38] sm:$0xff]
    %v3779 = vld [vmem:[%s3770 + $0x40] sm:$0xff]
    %v3780 = vld [vmem:[%s3770 + $0x48] sm:$0xff]
    %v3781 = vld [vmem:[%s3770 + $0x50] sm:$0xff]
    %v3782 = vld [vmem:[%s3770 + $0x58] sm:$0xff]
    %v3783 = vld [vmem:[%s3770 + $0x60] sm:$0xff]
    %v3784 = vld [vmem:[%s3770 + $0x68] sm:$0xff]
    %v3785 = vld [vmem:[%s3770 + $0x70] sm:$0xff]
    %v3786 = vld [vmem:[%s3770 + $0x78] sm:$0xff]
    %v3787 = vld [vmem:[%s3770 + $0x80] sm:$0xff]
    %v3788 = vld [vmem:[%s3770 + $0x88] sm:$0xff]
    %v3789 = vld [vmem:[%s3770 + $0x90] sm:$0xff]
    %v3790 = vld [vmem:[%s3770 + $0x98] sm:$0xff]
    %v3791 = vld [vmem:[%s3770 + $0xa0] sm:$0xff]
    %v3792 = vld [vmem:[%s3770 + $0xa8] sm:$0xff]
    %v3793 = vld [vmem:[%s3770 + $0xb0] sm:$0xff]
    %v3794 = vld [vmem:[%s3770 + $0xb8] sm:$0xff]
    %v3795 = vld [vmem:[%s3770 + $0xc0] sm:$0xff]
    %v3796 = vld [vmem:[%s3770 + $0xc8] sm:$0xff]
    %v3797 = vld [vmem:[%s3770 + $0xd0] sm:$0xff]
    %v3798 = vld [vmem:[%s3770 + $0xd8] sm:$0xff]
    %v3799 = vld [vmem:[%s3770 + $0xe0] sm:$0xff]
    %v3800 = vld [vmem:[%s3770 + $0xe8] sm:$0xff]
    %v3801 = vld [vmem:[%s3770 + $0xf0] sm:$0xff]
    %v3802 = vld [vmem:[%s3770 + $0xf8] sm:$0xff]
    %v3803 = vld [vmem:[%s3770 + $0x100] sm:$0xff]
    %v3804 = vld [vmem:[%s3770 + $0x108] sm:$0xff]
    %v3805 = vld [vmem:[%s3770 + $0x110] sm:$0xff]
    %v3806 = vld [vmem:[%s3770 + $0x118] sm:$0xff]
    %v3807 = vld [vmem:[%s3770 + $0x120] sm:$0xff]
    %v3808 = vld [vmem:[%s3770 + $0x128] sm:$0xff]
    %v3809 = vld [vmem:[%s3770 + $0x130] sm:$0xff]
    %v3810 = vld [vmem:[%s3770 + $0x138] sm:$0xff]
    %v3811 = vld [vmem:[%s3770 + $0x140] sm:$0xff]
    %v3812 = vld [vmem:[%s3770 + $0x148] sm:$0xff]
    %v3813 = vld [vmem:[%s3770 + $0x150] sm:$0xff]
    %v3814 = vld [vmem:[%s3770 + $0x158] sm:$0xff]
    %v3815 = vld [vmem:[%s3770 + $0x160] sm:$0xff]
    %v3816 = vld [vmem:[%s3770 + $0x168] sm:$0xff]
    %v3817 = vld [vmem:[%s3770 + $0x170] sm:$0xff]
    %v3818 = vld [vmem:[%s3770 + $0x178] sm:$0xff]
    %v3819 = vld [vmem:[%s3770 + $0x180] sm:$0xff]
    %v3820 = vld [vmem:[%s3770 + $0x188] sm:$0xff]
    %v3821 = vld [vmem:[%s3770 + $0x190] sm:$0xff]
    %v3822 = vld [vmem:[%s3770 + $0x198] sm:$0xff]
    %v3823 = vld [vmem:[%s3770 + $0x1a0] sm:$0xff]
    %v3824 = vld [vmem:[%s3770 + $0x1a8] sm:$0xff]
    %v3825 = vld [vmem:[%s3770 + $0x1b0] sm:$0xff]
    %v3826 = vld [vmem:[%s3770 + $0x1b8] sm:$0xff]
    %v3827 = vld [vmem:[%s3770 + $0x1c0] sm:$0xff]
    %v3828 = vld [vmem:[%s3770 + $0x1c8] sm:$0xff]
    %v3829 = vld [vmem:[%s3770 + $0x1d0] sm:$0xff]
    %v3830 = vld [vmem:[%s3770 + $0x1d8] sm:$0xff]
    %v3831 = vld [vmem:[%s3770 + $0x1e0] sm:$0xff]
    %v3832 = vld [vmem:[%s3770 + $0x1e8] sm:$0xff]
    %v3833 = vld [vmem:[%s3770 + $0x1f0] sm:$0xff]
    %v3834 = vld [vmem:[%s3770 + $0x1f8] sm:$0xff]
    %v3835 = vld [vmem:[%s3770 + $0x200] sm:$0xff]
    %v3836 = vld [vmem:[%s3770 + $0x208] sm:$0xff]
    %v3837 = vld [vmem:[%s3770 + $0x210] sm:$0xff]
    %v3838 = vld [vmem:[%s3770 + $0x218] sm:$0xff]
    %v3839 = vld [vmem:[%s3770 + $0x220] sm:$0xff]
    %v3840 = vld [vmem:[%s3770 + $0x228] sm:$0xff]
    %v3841 = vld [vmem:[%s3770 + $0x230] sm:$0xff]
    %v3842 = vld [vmem:[%s3770 + $0x238] sm:$0xff]
    %v3843 = vld [vmem:[%s3770 + $0x240] sm:$0xff]
    %v3844 = vld [vmem:[%s3770 + $0x248] sm:$0xff]
    %v3845 = vld [vmem:[%s3770 + $0x250] sm:$0xff]
    %v3846 = vld [vmem:[%s3770 + $0x258] sm:$0xff]
    %v3847 = vld [vmem:[%s3770 + $0x260] sm:$0xff]
    %v3848 = vld [vmem:[%s3770 + $0x268] sm:$0xff]
    %v3849 = vld [vmem:[%s3770 + $0x270] sm:$0xff]
    %v3850 = vld [vmem:[%s3770 + $0x278] sm:$0xff]
    %v3851 = vld [vmem:[%s3770 + $0x280] sm:$0xff]
    %v3852 = vld [vmem:[%s3770 + $0x288] sm:$0xff]
    %v3853 = vld [vmem:[%s3770 + $0x290] sm:$0xff]
    %v3854 = vld [vmem:[%s3770 + $0x298] sm:$0xff]
    %v3855 = vld [vmem:[%s3770 + $0x2a0] sm:$0xff]
    %v3856 = vld [vmem:[%s3770 + $0x2a8] sm:$0xff]
    %v3857 = vld [vmem:[%s3770 + $0x2b0] sm:$0xff]
    %v3858 = vld [vmem:[%s3770 + $0x2b8] sm:$0xff]
    %v3859 = vld [vmem:[%s3770 + $0x2c0] sm:$0xff]
    %v3860 = vld [vmem:[%s3770 + $0x2c8] sm:$0xff]
    %v3861 = vld [vmem:[%s3770 + $0x2d0] sm:$0xff]
    %v3862 = vld [vmem:[%s3770 + $0x2d8] sm:$0xff]
    %v3863 = vld [vmem:[%s3770 + $0x2e0] sm:$0xff]
    %v3864 = vld [vmem:[%s3770 + $0x2e8] sm:$0xff]
    %v3865 = vld [vmem:[%s3770 + $0x2f0] sm:$0xff]
    %v3866 = vld [vmem:[%s3770 + $0x2f8] sm:$0xff]
    %v3867 = vld [vmem:[%s3770 + $0x300] sm:$0xff]
    %v3868 = vld [vmem:[%s3770 + $0x308] sm:$0xff]
    %v3869 = vld [vmem:[%s3770 + $0x310] sm:$0xff]
    %v3870 = vld [vmem:[%s3770 + $0x318] sm:$0xff]
    %v3871 = vld [vmem:[%s3770 + $0x320] sm:$0xff]
    %v3872 = vld [vmem:[%s3770 + $0x328] sm:$0xff]
    %v3873 = vld [vmem:[%s3770 + $0x330] sm:$0xff]
    %v3874 = vld [vmem:[%s3770 + $0x338] sm:$0xff]
    %v3875 = vld [vmem:[%s3770 + $0x340] sm:$0xff]
    %v3876 = vld [vmem:[%s3770 + $0x348] sm:$0xff]
    %v3877 = vld [vmem:[%s3770 + $0x350] sm:$0xff]
    %v3878 = vld [vmem:[%s3770 + $0x358] sm:$0xff]
    %v3879 = vld [vmem:[%s3770 + $0x360] sm:$0xff]
    %v3880 = vld [vmem:[%s3770 + $0x368] sm:$0xff]
    %v3881 = vld [vmem:[%s3770 + $0x370] sm:$0xff]
    %v3882 = vld [vmem:[%s3770 + $0x378] sm:$0xff]
    %v3883 = vld [vmem:[%s3770 + $0x380] sm:$0xff]
    %v3884 = vld [vmem:[%s3770 + $0x388] sm:$0xff]
    %v3885 = vld [vmem:[%s3770 + $0x390] sm:$0xff]
    %v3886 = vld [vmem:[%s3770 + $0x398] sm:$0xff]
    %v3887 = vld [vmem:[%s3770 + $0x3a0] sm:$0xff]
    %v3888 = vld [vmem:[%s3770 + $0x3a8] sm:$0xff]
    %v3889 = vld [vmem:[%s3770 + $0x3b0] sm:$0xff]
    %v3890 = vld [vmem:[%s3770 + $0x3b8] sm:$0xff]
    %v3891 = vld [vmem:[%s3770 + $0x3c0] sm:$0xff]
    %v3892 = vld [vmem:[%s3770 + $0x3c8] sm:$0xff]
    %v3893 = vld [vmem:[%s3770 + $0x3d0] sm:$0xff]
    %v3894 = vld [vmem:[%s3770 + $0x3d8] sm:$0xff]
    %v3895 = vld [vmem:[%s3770 + $0x3e0] sm:$0xff]
    %v3896 = vld [vmem:[%s3770 + $0x3e8] sm:$0xff]
    %v3897 = vld [vmem:[%s3770 + $0x3f0] sm:$0xff]
    %v3898 = vld [vmem:[%s3770 + $0x3f8] sm:$0xff]
    %v3899 = vld [vmem:[%s3770 + $0x400] sm:$0xff]
    %v3900 = vld [vmem:[%s3770 + $0x408] sm:$0xff]
    %v3901 = vld [vmem:[%s3770 + $0x410] sm:$0xff]
    %v3902 = vld [vmem:[%s3770 + $0x418] sm:$0xff]
    %v3903 = vld [vmem:[%s3770 + $0x420] sm:$0xff]
    %v3904 = vld [vmem:[%s3770 + $0x428] sm:$0xff]
    %v3905 = vld [vmem:[%s3770 + $0x430] sm:$0xff]
    %v3906 = vld [vmem:[%s3770 + $0x438] sm:$0xff]
    %v3907 = vld [vmem:[%s3770 + $0x440] sm:$0xff]
    %v3908 = vld [vmem:[%s3770 + $0x448] sm:$0xff]
    %v3909 = vld [vmem:[%s3770 + $0x450] sm:$0xff]
    %v3910 = vld [vmem:[%s3770 + $0x458] sm:$0xff]
    %v3911 = vld [vmem:[%s3770 + $0x460] sm:$0xff]
    %v3912 = vld [vmem:[%s3770 + $0x468] sm:$0xff]
    %v3913 = vld [vmem:[%s3770 + $0x470] sm:$0xff]
    %v3914 = vld [vmem:[%s3770 + $0x478] sm:$0xff]
    %v3915 = vld [vmem:[%s3770 + $0x480] sm:$0xff]
    %v3916 = vld [vmem:[%s3770 + $0x488] sm:$0xff]
    %v3917 = vld [vmem:[%s3770 + $0x490] sm:$0xff]
    %v3918 = vld [vmem:[%s3770 + $0x498] sm:$0xff]
    %v3919 = vld [vmem:[%s3770 + $0x4a0] sm:$0xff]
    %v3920 = vld [vmem:[%s3770 + $0x4a8] sm:$0xff]
    %v3921 = vld [vmem:[%s3770 + $0x4b0] sm:$0xff]
    %v3922 = vld [vmem:[%s3770 + $0x4b8] sm:$0xff]
    %v3923 = vld [vmem:[%s3770 + $0x4c0] sm:$0xff]
    %v3924 = vld [vmem:[%s3770 + $0x4c8] sm:$0xff]
    %v3925 = vld [vmem:[%s3770 + $0x4d0] sm:$0xff]
    %v3926 = vld [vmem:[%s3770 + $0x4d8] sm:$0xff]
    %v3927 = vld [vmem:[%s3770 + $0x4e0] sm:$0xff]
    %v3928 = vld [vmem:[%s3770 + $0x4e8] sm:$0xff]
    %v3929 = vld [vmem:[%s3770 + $0x4f0] sm:$0xff]
    %v3930 = vld [vmem:[%s3770 + $0x4f8] sm:$0xff]
    %v3931 = vld [vmem:[%s3770 + $0x500] sm:$0xff]
    %v3932 = vld [vmem:[%s3770 + $0x508] sm:$0xff]
    %v3933 = vld [vmem:[%s3770 + $0x510] sm:$0xff]
    %v3934 = vld [vmem:[%s3770 + $0x518] sm:$0xff]
    %v3935 = vld [vmem:[%s3770 + $0x520] sm:$0xff]
    %v3936 = vld [vmem:[%s3770 + $0x528] sm:$0xff]
    %v3937 = vld [vmem:[%s3770 + $0x530] sm:$0xff]
    %v3938 = vld [vmem:[%s3770 + $0x538] sm:$0xff]
    %v3939 = vld [vmem:[%s3770 + $0x540] sm:$0xff]
    %v3940 = vld [vmem:[%s3770 + $0x548] sm:$0xff]
    %v3941 = vld [vmem:[%s3770 + $0x550] sm:$0xff]
    %v3942 = vld [vmem:[%s3770 + $0x558] sm:$0xff]
    %v3943 = vld [vmem:[%s3770 + $0x560] sm:$0xff]
    %v3944 = vld [vmem:[%s3770 + $0x568] sm:$0xff]
    %v3945 = vld [vmem:[%s3770 + $0x570] sm:$0xff]
    %v3946 = vld [vmem:[%s3770 + $0x578] sm:$0xff]
    %v3947 = vld [vmem:[%s3770 + $0x580] sm:$0xff]
    %v3948 = vld [vmem:[%s3770 + $0x588] sm:$0xff]
    %v3949 = vld [vmem:[%s3770 + $0x590] sm:$0xff]
    %v3950 = vld [vmem:[%s3770 + $0x598] sm:$0xff]
    %v3951 = vld [vmem:[%s3770 + $0x5a0] sm:$0xff]
    %v3952 = vld [vmem:[%s3770 + $0x5a8] sm:$0xff]
    %v3953 = vld [vmem:[%s3770 + $0x5b0] sm:$0xff]
    %v3954 = vld [vmem:[%s3770 + $0x5b8] sm:$0xff]
    %v3955 = vld [vmem:[%s3770 + $0x5c0] sm:$0xff]
    %v3956 = vld [vmem:[%s3770 + $0x5c8] sm:$0xff]
    %v3957 = vld [vmem:[%s3770 + $0x5d0] sm:$0xff]
    %v3958 = vld [vmem:[%s3770 + $0x5d8] sm:$0xff]
    %v3959 = vld [vmem:[%s3770 + $0x5e0] sm:$0xff]
    %v3960 = vld [vmem:[%s3770 + $0x5e8] sm:$0xff]
    %v3961 = vld [vmem:[%s3770 + $0x5f0] sm:$0xff]
    %v3962 = vld [vmem:[%s3770 + $0x5f8] sm:$0xff]
    %3963 = vmatprep.subr.mxu0 %v3772
    %3964 = vmatpush1.msra.mxu0 %v3771
    %3965 = vmatprep.subr.mxu0 %v3776
    %3966 = vmatpush1.msra.mxu0 %v3775
    %3967 = vmatprep.subr.mxu0 %v3780
    %3968 = vmatpush1.msra.mxu0 %v3779
    %3969 = vmatprep.subr.mxu0 %v3784
    %3970 = vmatpush1.msra.mxu0 %v3783
    %3971 = vmatprep.subr.mxu0 %v3788
    %3972 = vmatpush1.msra.mxu0 %v3787
    %3973 = vmatprep.subr.mxu0 %v3792
    %3974 = vmatpush1.msra.mxu0 %v3791
    %3975 = vmatprep.subr.mxu0 %v3796
    %3976 = vmatpush1.msra.mxu0 %v3795
    %3977 = vmatprep.subr.mxu0 %v3800
    %3978 = vmatpush1.msra.mxu0 %v3799
    %3979 = vmatprep.subr.mxu0 %v3804
    %3980 = vmatpush1.msra.mxu0 %v3803
    %3981 = vmatprep.subr.mxu0 %v3808
    %3982 = vmatpush1.msra.mxu0 %v3807
    %3983 = vmatprep.subr.mxu0 %v3812
    %3984 = vmatpush1.msra.mxu0 %v3811
    %3985 = vmatprep.subr.mxu0 %v3816
    %3986 = vmatpush1.msra.mxu0 %v3815
    %3987 = vmatprep.subr.mxu0 %v3820
    %3988 = vmatpush1.msra.mxu0 %v3819
    %3989 = vmatprep.subr.mxu0 %v3824
    %3990 = vmatpush1.msra.mxu0 %v3823
    %3991 = vmatprep.subr.mxu0 %v3828
    %3992 = vmatpush1.msra.mxu0 %v3827
    %3993 = vmatprep.subr.mxu0 %v3832
    %3994 = vmatpush1.msra.mxu0 %v3831
    %3995 = vmatprep.subr.mxu0 %v3836
    %3996 = vmatpush1.msra.mxu0 %v3835
    %3997 = vmatprep.subr.mxu0 %v3840
    %3998 = vmatpush1.msra.mxu0 %v3839
    %3999 = vmatprep.subr.mxu0 %v3844
    %4000 = vmatpush1.msra.mxu0 %v3843
    %4001 = vmatprep.subr.mxu0 %v3848
    %4002 = vmatpush1.msra.mxu0 %v3847
    %4003 = vmatprep.subr.mxu0 %v3852
    %4004 = vmatpush1.msra.mxu0 %v3851
    %4005 = vmatprep.subr.mxu0 %v3856
    %4006 = vmatpush1.msra.mxu0 %v3855
    %4007 = vmatprep.subr.mxu0 %v3860
    %4008 = vmatpush1.msra.mxu0 %v3859
    %4009 = vmatprep.subr.mxu0 %v3864
    %4010 = vmatpush1.msra.mxu0 %v3863
    %4011 = vmatprep.subr.mxu0 %v3868
    %4012 = vmatpush1.msra.mxu0 %v3867
    %4013 = vmatprep.subr.mxu0 %v3872
    %4014 = vmatpush1.msra.mxu0 %v3871
    %4015 = vmatprep.subr.mxu0 %v3876
    %4016 = vmatpush1.msra.mxu0 %v3875
    %4017 = vmatprep.subr.mxu0 %v3880
    %4018 = vmatpush1.msra.mxu0 %v3879
    %4019 = vmatprep.subr.mxu0 %v3884
    %4020 = vmatpush1.msra.mxu0 %v3883
    %4021 = vmatprep.subr.mxu0 %v3888
    %4022 = vmatpush1.msra.mxu0 %v3887
    %4023 = vmatprep.subr.mxu0 %v3892
    %4024 = vmatpush1.msra.mxu0 %v3891
    %4025 = vmatprep.subr.mxu0 %v3896
    %4026 = vmatpush1.msra.mxu0 %v3895
    %4027 = vmatprep.mubr.f32.mxu0 %v3751
    %4028 = vmatmul.mubr.f32.gmra.mrb[0].mxu0 %v3748
    %v4029 = vpop.f32.mrb[0].mxu0
    %v4030 = vadd.f32 0.0, %v4029
    %v4031 = vpop.f32.mrb[0].mxu0
    %v4032 = vadd.f32 0.0, %v4031
    %4033 = vmatprep.mubr.f32.mxu0 %v3760
    %4034 = vmatmul.mubr.f32.gmra.mrb[0].mxu0 %v3757
    %v4035 = vpop.f32.mrb[0].mxu0
    %v4036 = vadd.f32 0.0, %v4035
    %v4037 = vpop.f32.mrb[0].mxu0
    %v4038 = vadd.f32 0.0, %v4037
    %4039 = vdwg.mxu0
    %4040 = vmatprep.subr.mxu0 %v3900
    %4041 = vmatpush1.msra.mxu0 %v3899
    %4042 = vmatprep.subr.mxu0 %v3904
    %4043 = vmatpush1.msra.mxu0 %v3903
    %4044 = vmatprep.subr.mxu0 %v3908
    %4045 = vmatpush1.msra.mxu0 %v3907
    %4046 = vmatprep.subr.mxu0 %v3912
    %4047 = vmatpush1.msra.mxu0 %v3911
    %4048 = vmatprep.subr.mxu0 %v3916
    %4049 = vmatpush1.msra.mxu0 %v3915
    %4050 = vmatprep.subr.mxu0 %v3920
    %4051 = vmatpush1.msra.mxu0 %v3919
    %4052 = vmatprep.subr.mxu0 %v3924
    %4053 = vmatpush1.msra.mxu0 %v3923
    %4054 = vmatprep.subr.mxu0 %v3928
    %4055 = vmatpush1.msra.mxu0 %v3927
    %4056 = vmatprep.subr.mxu0 %v3932
    %4057 = vmatpush1.msra.mxu0 %v3931
    %4058 = vmatprep.subr.mxu0 %v3936
    %4059 = vmatpush1.msra.mxu0 %v3935
    %4060 = vmatprep.subr.mxu0 %v3940
    %4061 = vmatpush1.msra.mxu0 %v3939
    %4062 = vmatprep.subr.mxu0 %v3944
    %4063 = vmatpush1.msra.mxu0 %v3943
    %4064 = vmatprep.subr.mxu0 %v3948
    %4065 = vmatpush1.msra.mxu0 %v3947
    %4066 = vmatprep.subr.mxu0 %v3952
    %4067 = vmatpush1.msra.mxu0 %v3951
    %4068 = vmatprep.subr.mxu0 %v3956
    %4069 = vmatpush1.msra.mxu0 %v3955
    %4070 = vmatprep.subr.mxu0 %v3960
    %4071 = vmatpush1.msra.mxu0 %v3959
    %4072 = vmatprep.subr.mxu0 0.0
    %4073 = vmatpush1.msra.mxu0 0.0
    %4074 = vmatprep.subr.mxu0 0.0
    %4075 = vmatpush1.msra.mxu0 0.0
    %4076 = vmatprep.subr.mxu0 0.0
    %4077 = vmatpush1.msra.mxu0 0.0
    %4078 = vmatprep.subr.mxu0 0.0
    %4079 = vmatpush1.msra.mxu0 0.0
    %4080 = vmatprep.subr.mxu0 0.0
    %4081 = vmatpush1.msra.mxu0 0.0
    %4082 = vmatprep.subr.mxu0 0.0
    %4083 = vmatpush1.msra.mxu0 0.0
    %4084 = vmatprep.subr.mxu0 0.0
    %4085 = vmatpush1.msra.mxu0 0.0
    %4086 = vmatprep.subr.mxu0 0.0
    %4087 = vmatpush1.msra.mxu0 0.0
    %4088 = vmatprep.subr.mxu0 0.0
    %4089 = vmatpush1.msra.mxu0 0.0
    %4090 = vmatprep.subr.mxu0 0.0
    %4091 = vmatpush1.msra.mxu0 0.0
    %4092 = vmatprep.subr.mxu0 0.0
    %4093 = vmatpush1.msra.mxu0 0.0
    %4094 = vmatprep.subr.mxu0 0.0
    %4095 = vmatpush1.msra.mxu0 0.0
    %4096 = vmatprep.subr.mxu0 0.0
    %4097 = vmatpush1.msra.mxu0 0.0
    %4098 = vmatprep.subr.mxu0 0.0
    %4099 = vmatpush1.msra.mxu0 0.0
    %4100 = vmatprep.subr.mxu0 0.0
    %4101 = vmatpush1.msra.mxu0 0.0
    %4102 = vmatprep.subr.mxu0 0.0
    %4103 = vmatpush1.msra.mxu0 0.0
    %4104 = vmatprep.mubr.f32.mxu0 0.0
    %4105 = vmatmul.mubr.f32.gmra.mrb[0].mxu0 %v3754
    %v4106 = vpop.f32.mrb[0].mxu0
    %v4107 = vadd.f32 %v4030, %v4106
    %v4108 = vpop.f32.mrb[0].mxu0
    %v4109 = vadd.f32 %v4032, %v4108
    %4110 = vmatprep.mubr.f32.mxu0 0.0
    %4111 = vmatmul.mubr.f32.gmra.mrb[0].mxu0 %v3763
    %v4112 = vpop.f32.mrb[0].mxu0
    %v4113 = vadd.f32 %v4036, %v4112
    %v4114 = vpop.f32.mrb[0].mxu0
    %v4115 = vadd.f32 %v4038, %v4114
    %4116 = vdwg.mxu0
    %4117 = vmatprep.subr.mxu0 %v3774
    %4118 = vmatpush1.msra.mxu0 %v3773
    %4119 = vmatprep.subr.mxu0 %v3778
    %4120 = vmatpush1.msra.mxu0 %v3777
    %4121 = vmatprep.subr.mxu0 %v3782
    %4122 = vmatpush1.msra.mxu0 %v3781
    %4123 = vmatprep.subr.mxu0 %v3786
    %4124 = vmatpush1.msra.mxu0 %v3785
    %4125 = vmatprep.subr.mxu0 %v3790
    %4126 = vmatpush1.msra.mxu0 %v3789
    %4127 = vmatprep.subr.mxu0 %v3794
    %4128 = vmatpush1.msra.mxu0 %v3793
    %4129 = vmatprep.subr.mxu0 %v3798
    %4130 = vmatpush1.msra.mxu0 %v3797
    %4131 = vmatprep.subr.mxu0 %v3802
    %4132 = vmatpush1.msra.mxu0 %v3801
    %4133 = vmatprep.subr.mxu0 %v3806
    %4134 = vmatpush1.msra.mxu0 %v3805
    %4135 = vmatprep.subr.mxu0 %v3810
    %4136 = vmatpush1.msra.mxu0 %v3809
    %4137 = vmatprep.subr.mxu0 %v3814
    %4138 = vmatpush1.msra.mxu0 %v3813
    %4139 = vmatprep.subr.mxu0 %v3818
    %4140 = vmatpush1.msra.mxu0 %v3817
    %4141 = vmatprep.subr.mxu0 %v3822
    %4142 = vmatpush1.msra.mxu0 %v3821
    %4143 = vmatprep.subr.mxu0 %v3826
    %4144 = vmatpush1.msra.mxu0 %v3825
    %4145 = vmatprep.subr.mxu0 %v3830
    %4146 = vmatpush1.msra.mxu0 %v3829
    %4147 = vmatprep.subr.mxu0 %v3834
    %4148 = vmatpush1.msra.mxu0 %v3833
    %4149 = vmatprep.subr.mxu0 %v3838
    %4150 = vmatpush1.msra.mxu0 %v3837
    %4151 = vmatprep.subr.mxu0 %v3842
    %4152 = vmatpush1.msra.mxu0 %v3841
    %4153 = vmatprep.subr.mxu0 %v3846
    %4154 = vmatpush1.msra.mxu0 %v3845
    %4155 = vmatprep.subr.mxu0 %v3850
    %4156 = vmatpush1.msra.mxu0 %v3849
    %4157 = vmatprep.subr.mxu0 %v3854
    %4158 = vmatpush1.msra.mxu0 %v3853
    %4159 = vmatprep.subr.mxu0 %v3858
    %4160 = vmatpush1.msra.mxu0 %v3857
    %4161 = vmatprep.subr.mxu0 %v3862
    %4162 = vmatpush1.msra.mxu0 %v3861
    %4163 = vmatprep.subr.mxu0 %v3866
    %4164 = vmatpush1.msra.mxu0 %v3865
    %4165 = vmatprep.subr.mxu0 %v3870
    %4166 = vmatpush1.msra.mxu0 %v3869
    %4167 = vmatprep.subr.mxu0 %v3874
    %4168 = vmatpush1.msra.mxu0 %v3873
    %4169 = vmatprep.subr.mxu0 %v3878
    %4170 = vmatpush1.msra.mxu0 %v3877
    %4171 = vmatprep.subr.mxu0 %v3882
    %4172 = vmatpush1.msra.mxu0 %v3881
    %4173 = vmatprep.subr.mxu0 %v3886
    %4174 = vmatpush1.msra.mxu0 %v3885
    %4175 = vmatprep.subr.mxu0 %v3890
    %4176 = vmatpush1.msra.mxu0 %v3889
    %4177 = vmatprep.subr.mxu0 %v3894
    %4178 = vmatpush1.msra.mxu0 %v3893
    %4179 = vmatprep.subr.mxu0 %v3898
    %4180 = vmatpush1.msra.mxu0 %v3897
    %4181 = vmatprep.mubr.f32.mxu0 %v3751
    %4182 = vmatmul.mubr.f32.gmra.mrb[0].mxu0 %v3748
    %v4183 = vpop.f32.mrb[0].mxu0
    %v4184 = vadd.f32 0.0, %v4183
    %v4185 = vpop.f32.mrb[0].mxu0
    %v4186 = vadd.f32 0.0, %v4185
    %4187 = vmatprep.mubr.f32.mxu0 %v3760
    %4188 = vmatmul.mubr.f32.gmra.mrb[0].mxu0 %v3757
    %v4189 = vpop.f32.mrb[0].mxu0
    %v4190 = vadd.f32 0.0, %v4189
    %v4191 = vpop.f32.mrb[0].mxu0
    %v4192 = vadd.f32 0.0, %v4191
    %4193 = vdwg.mxu0
    %4194 = vmatprep.subr.mxu0 %v3902
    %4195 = vmatpush1.msra.mxu0 %v3901
    %4196 = vmatprep.subr.mxu0 %v3906
    %4197 = vmatpush1.msra.mxu0 %v3905
    %4198 = vmatprep.subr.mxu0 %v3910
    %4199 = vmatpush1.msra.mxu0 %v3909
    %4200 = vmatprep.subr.mxu0 %v3914
    %4201 = vmatpush1.msra.mxu0 %v3913
    %4202 = vmatprep.subr.mxu0 %v3918
    %4203 = vmatpush1.msra.mxu0 %v3917
    %4204 = vmatprep.subr.mxu0 %v3922
    %4205 = vmatpush1.msra.mxu0 %v3921
    %4206 = vmatprep.subr.mxu0 %v3926
    %4207 = vmatpush1.msra.mxu0 %v3925
    %4208 = vmatprep.subr.mxu0 %v3930
    %4209 = vmatpush1.msra.mxu0 %v3929
    %4210 = vmatprep.subr.mxu0 %v3934
    %4211 = vmatpush1.msra.mxu0 %v3933
    %4212 = vmatprep.subr.mxu0 %v3938
    %4213 = vmatpush1.msra.mxu0 %v3937
    %4214 = vmatprep.subr.mxu0 %v3942
    %4215 = vmatpush1.msra.mxu0 %v3941
    %4216 = vmatprep.subr.mxu0 %v3946
    %4217 = vmatpush1.msra.mxu0 %v3945
    %4218 = vmatprep.subr.mxu0 %v3950
    %4219 = vmatpush1.msra.mxu0 %v3949
    %4220 = vmatprep.subr.mxu0 %v3954
    %4221 = vmatpush1.msra.mxu0 %v3953
    %4222 = vmatprep.subr.mxu0 %v3958
    %4223 = vmatpush1.msra.mxu0 %v3957
    %4224 = vmatprep.subr.mxu0 %v3962
    %4225 = vmatpush1.msra.mxu0 %v3961
    %4226 = vmatprep.subr.mxu0 0.0
    %4227 = vmatpush1.msra.mxu0 0.0
    %4228 = vmatprep.subr.mxu0 0.0
    %4229 = vmatpush1.msra.mxu0 0.0
    %4230 = vmatprep.subr.mxu0 0.0
    %4231 = vmatpush1.msra.mxu0 0.0
    %4232 = vmatprep.subr.mxu0 0.0
    %4233 = vmatpush1.msra.mxu0 0.0
    %4234 = vmatprep.subr.mxu0 0.0
    %4235 = vmatpush1.msra.mxu0 0.0
    %4236 = vmatprep.subr.mxu0 0.0
    %4237 = vmatpush1.msra.mxu0 0.0
    %4238 = vmatprep.subr.mxu0 0.0
    %4239 = vmatpush1.msra.mxu0 0.0
    %4240 = vmatprep.subr.mxu0 0.0
    %4241 = vmatpush1.msra.mxu0 0.0
    %4242 = vmatprep.subr.mxu0 0.0
    %4243 = vmatpush1.msra.mxu0 0.0
    %4244 = vmatprep.subr.mxu0 0.0
    %4245 = vmatpush1.msra.mxu0 0.0
    %4246 = vmatprep.subr.mxu0 0.0
    %4247 = vmatpush1.msra.mxu0 0.0
    %4248 = vmatprep.subr.mxu0 0.0
    %4249 = vmatpush1.msra.mxu0 0.0
    %4250 = vmatprep.subr.mxu0 0.0
    %4251 = vmatpush1.msra.mxu0 0.0
    %4252 = vmatprep.subr.mxu0 0.0
    %4253 = vmatpush1.msra.mxu0 0.0
    %4254 = vmatprep.subr.mxu0 0.0
    %4255 = vmatpush1.msra.mxu0 0.0
    %4256 = vmatprep.subr.mxu0 0.0
    %4257 = vmatpush1.msra.mxu0 0.0
    %4258 = vmatprep.mubr.f32.mxu0 0.0
    %4259 = vmatmul.mubr.f32.gmra.mrb[0].mxu0 %v3754
    %v4260 = vpop.f32.mrb[0].mxu0
    %v4261 = vadd.f32 %v4184, %v4260
    %v4262 = vpop.f32.mrb[0].mxu0
    %v4263 = vadd.f32 %v4186, %v4262
    %4264 = vmatprep.mubr.f32.mxu0 0.0
    %4265 = vmatmul.mubr.f32.gmra.mrb[0].mxu0 %v3763
    %v4266 = vpop.f32.mrb[0].mxu0
    %v4267 = vadd.f32 %v4190, %v4266
    %v4268 = vpop.f32.mrb[0].mxu0
    %v4269 = vadd.f32 %v4192, %v4268
    %4270 = vdwg.mxu0
    %v4271 = vadd.f32 %v3557, %v4107
    %v4272 = vadd.f32 %v3559, %v4109
    %v4273 = vadd.f32 %v3711, %v4261
    %v4274 = vadd.f32 %v3713, %v4263
    %v4275 = vadd.f32 %v3563, %v4113
    %v4276 = vadd.f32 %v3565, %v4115
    %v4277 = vadd.f32 %v3717, %v4267
    %v4278 = vadd.f32 %v3719, %v4269
    %v4279 = vld [vmem:[#allocation2] sm:$0xf8]
    %v4280 = vld [vmem:[#allocation2 + $0x8] sm:$0xf8]
    %v4281 = vld [vmem:[#allocation2 + $0x10] sm:$0xf8]
    %v4282 = vld [vmem:[#allocation2 + $0x18] sm:$0x7]
    %v4283 = vld [vmem:[#allocation2 + $0x20] sm:$0x7]
    %v4284 = vld [vmem:[#allocation2 + $0x28] sm:$0x7]
    %v4285 = vld [vmem:[#allocation2 + $0x30] sm:$0xf8]
    %v4286 = vld [vmem:[#allocation2 + $0x38] sm:$0xf8]
    %v4287 = vld [vmem:[#allocation2 + $0x40] sm:$0xf8]
    %v4288 = vld [vmem:[#allocation2 + $0x48] sm:$0x7]
    %v4289 = vld [vmem:[#allocation2 + $0x50] sm:$0x7]
    %v4290 = vld [vmem:[#allocation2 + $0x58] sm:$0x7]
    %vm4303 = vcmask 1044480
    %v4304 = vrot.slane %v4279, 3
    %v4305 = vrot.slane %v4282, 3
    %v4306 = vsel %vm4303, %v4304, %v4305
    %v4307 = vrot.slane %v4280, 3
    %v4308 = vrot.slane %v4283, 3
    %v4309 = vsel %vm4303, %v4307, %v4308
    %v4310 = vrot.slane %v4281, 3
    %v4311 = vrot.slane %v4284, 3
    %v4312 = vsel %vm4303, %v4310, %v4311
    %v4313 = vrot.slane %v4285, 3
    %v4314 = vrot.slane %v4288, 3
    %v4315 = vsel %vm4303, %v4313, %v4314
    %v4316 = vrot.slane %v4286, 3
    %v4317 = vrot.slane %v4289, 3
    %v4318 = vsel %vm4303, %v4316, %v4317
    %v4319 = vrot.slane %v4287, 3
    %v4320 = vrot.slane %v4290, 3
    %v4321 = vsel %vm4303, %v4319, %v4320
    %s4328 = scalar_lea.vmem %s4, 4608
    %v4329 = vld [vmem:[%s4328] sm:$0xff]
    %v4330 = vld [vmem:[%s4328 + $0x8] sm:$0xff]
    %v4331 = vld [vmem:[%s4328 + $0x10] sm:$0xff]
    %v4332 = vld [vmem:[%s4328 + $0x18] sm:$0xff]
    %v4333 = vld [vmem:[%s4328 + $0x20] sm:$0xff]
    %v4334 = vld [vmem:[%s4328 + $0x28] sm:$0xff]
    %v4335 = vld [vmem:[%s4328 + $0x30] sm:$0xff]
    %v4336 = vld [vmem:[%s4328 + $0x38] sm:$0xff]
    %v4337 = vld [vmem:[%s4328 + $0x40] sm:$0xff]
    %v4338 = vld [vmem:[%s4328 + $0x48] sm:$0xff]
    %v4339 = vld [vmem:[%s4328 + $0x50] sm:$0xff]
    %v4340 = vld [vmem:[%s4328 + $0x58] sm:$0xff]
    %v4341 = vld [vmem:[%s4328 + $0x60] sm:$0xff]
    %v4342 = vld [vmem:[%s4328 + $0x68] sm:$0xff]
    %v4343 = vld [vmem:[%s4328 + $0x70] sm:$0xff]
    %v4344 = vld [vmem:[%s4328 + $0x78] sm:$0xff]
    %v4345 = vld [vmem:[%s4328 + $0x80] sm:$0xff]
    %v4346 = vld [vmem:[%s4328 + $0x88] sm:$0xff]
    %v4347 = vld [vmem:[%s4328 + $0x90] sm:$0xff]
    %v4348 = vld [vmem:[%s4328 + $0x98] sm:$0xff]
    %v4349 = vld [vmem:[%s4328 + $0xa0] sm:$0xff]
    %v4350 = vld [vmem:[%s4328 + $0xa8] sm:$0xff]
    %v4351 = vld [vmem:[%s4328 + $0xb0] sm:$0xff]
    %v4352 = vld [vmem:[%s4328 + $0xb8] sm:$0xff]
    %v4353 = vld [vmem:[%s4328 + $0xc0] sm:$0xff]
    %v4354 = vld [vmem:[%s4328 + $0xc8] sm:$0xff]
    %v4355 = vld [vmem:[%s4328 + $0xd0] sm:$0xff]
    %v4356 = vld [vmem:[%s4328 + $0xd8] sm:$0xff]
    %v4357 = vld [vmem:[%s4328 + $0xe0] sm:$0xff]
    %v4358 = vld [vmem:[%s4328 + $0xe8] sm:$0xff]
    %v4359 = vld [vmem:[%s4328 + $0xf0] sm:$0xff]
    %v4360 = vld [vmem:[%s4328 + $0xf8] sm:$0xff]
    %v4361 = vld [vmem:[%s4328 + $0x100] sm:$0xff]
    %v4362 = vld [vmem:[%s4328 + $0x108] sm:$0xff]
    %v4363 = vld [vmem:[%s4328 + $0x110] sm:$0xff]
    %v4364 = vld [vmem:[%s4328 + $0x118] sm:$0xff]
    %v4365 = vld [vmem:[%s4328 + $0x120] sm:$0xff]
    %v4366 = vld [vmem:[%s4328 + $0x128] sm:$0xff]
    %v4367 = vld [vmem:[%s4328 + $0x130] sm:$0xff]
    %v4368 = vld [vmem:[%s4328 + $0x138] sm:$0xff]
    %v4369 = vld [vmem:[%s4328 + $0x140] sm:$0xff]
    %v4370 = vld [vmem:[%s4328 + $0x148] sm:$0xff]
    %v4371 = vld [vmem:[%s4328 + $0x150] sm:$0xff]
    %v4372 = vld [vmem:[%s4328 + $0x158] sm:$0xff]
    %v4373 = vld [vmem:[%s4328 + $0x160] sm:$0xff]
    %v4374 = vld [vmem:[%s4328 + $0x168] sm:$0xff]
    %v4375 = vld [vmem:[%s4328 + $0x170] sm:$0xff]
    %v4376 = vld [vmem:[%s4328 + $0x178] sm:$0xff]
    %v4377 = vld [vmem:[%s4328 + $0x180] sm:$0xff]
    %v4378 = vld [vmem:[%s4328 + $0x188] sm:$0xff]
    %v4379 = vld [vmem:[%s4328 + $0x190] sm:$0xff]
    %v4380 = vld [vmem:[%s4328 + $0x198] sm:$0xff]
    %v4381 = vld [vmem:[%s4328 + $0x1a0] sm:$0xff]
    %v4382 = vld [vmem:[%s4328 + $0x1a8] sm:$0xff]
    %v4383 = vld [vmem:[%s4328 + $0x1b0] sm:$0xff]
    %v4384 = vld [vmem:[%s4328 + $0x1b8] sm:$0xff]
    %v4385 = vld [vmem:[%s4328 + $0x1c0] sm:$0xff]
    %v4386 = vld [vmem:[%s4328 + $0x1c8] sm:$0xff]
    %v4387 = vld [vmem:[%s4328 + $0x1d0] sm:$0xff]
    %v4388 = vld [vmem:[%s4328 + $0x1d8] sm:$0xff]
    %v4389 = vld [vmem:[%s4328 + $0x1e0] sm:$0xff]
    %v4390 = vld [vmem:[%s4328 + $0x1e8] sm:$0xff]
    %v4391 = vld [vmem:[%s4328 + $0x1f0] sm:$0xff]
    %v4392 = vld [vmem:[%s4328 + $0x1f8] sm:$0xff]
    %v4393 = vld [vmem:[%s4328 + $0x200] sm:$0xff]
    %v4394 = vld [vmem:[%s4328 + $0x208] sm:$0xff]
    %v4395 = vld [vmem:[%s4328 + $0x210] sm:$0xff]
    %v4396 = vld [vmem:[%s4328 + $0x218] sm:$0xff]
    %v4397 = vld [vmem:[%s4328 + $0x220] sm:$0xff]
    %v4398 = vld [vmem:[%s4328 + $0x228] sm:$0xff]
    %v4399 = vld [vmem:[%s4328 + $0x230] sm:$0xff]
    %v4400 = vld [vmem:[%s4328 + $0x238] sm:$0xff]
    %v4401 = vld [vmem:[%s4328 + $0x240] sm:$0xff]
    %v4402 = vld [vmem:[%s4328 + $0x248] sm:$0xff]
    %v4403 = vld [vmem:[%s4328 + $0x250] sm:$0xff]
    %v4404 = vld [vmem:[%s4328 + $0x258] sm:$0xff]
    %v4405 = vld [vmem:[%s4328 + $0x260] sm:$0xff]
    %v4406 = vld [vmem:[%s4328 + $0x268] sm:$0xff]
    %v4407 = vld [vmem:[%s4328 + $0x270] sm:$0xff]
    %v4408 = vld [vmem:[%s4328 + $0x278] sm:$0xff]
    %v4409 = vld [vmem:[%s4328 + $0x280] sm:$0xff]
    %v4410 = vld [vmem:[%s4328 + $0x288] sm:$0xff]
    %v4411 = vld [vmem:[%s4328 + $0x290] sm:$0xff]
    %v4412 = vld [vmem:[%s4328 + $0x298] sm:$0xff]
    %v4413 = vld [vmem:[%s4328 + $0x2a0] sm:$0xff]
    %v4414 = vld [vmem:[%s4328 + $0x2a8] sm:$0xff]
    %v4415 = vld [vmem:[%s4328 + $0x2b0] sm:$0xff]
    %v4416 = vld [vmem:[%s4328 + $0x2b8] sm:$0xff]
    %v4417 = vld [vmem:[%s4328 + $0x2c0] sm:$0xff]
    %v4418 = vld [vmem:[%s4328 + $0x2c8] sm:$0xff]
    %v4419 = vld [vmem:[%s4328 + $0x2d0] sm:$0xff]
    %v4420 = vld [vmem:[%s4328 + $0x2d8] sm:$0xff]
    %v4421 = vld [vmem:[%s4328 + $0x2e0] sm:$0xff]
    %v4422 = vld [vmem:[%s4328 + $0x2e8] sm:$0xff]
    %v4423 = vld [vmem:[%s4328 + $0x2f0] sm:$0xff]
    %v4424 = vld [vmem:[%s4328 + $0x2f8] sm:$0xff]
    %v4425 = vld [vmem:[%s4328 + $0x300] sm:$0xff]
    %v4426 = vld [vmem:[%s4328 + $0x308] sm:$0xff]
    %v4427 = vld [vmem:[%s4328 + $0x310] sm:$0xff]
    %v4428 = vld [vmem:[%s4328 + $0x318] sm:$0xff]
    %v4429 = vld [vmem:[%s4328 + $0x320] sm:$0xff]
    %v4430 = vld [vmem:[%s4328 + $0x328] sm:$0xff]
    %v4431 = vld [vmem:[%s4328 + $0x330] sm:$0xff]
    %v4432 = vld [vmem:[%s4328 + $0x338] sm:$0xff]
    %v4433 = vld [vmem:[%s4328 + $0x340] sm:$0xff]
    %v4434 = vld [vmem:[%s4328 + $0x348] sm:$0xff]
    %v4435 = vld [vmem:[%s4328 + $0x350] sm:$0xff]
    %v4436 = vld [vmem:[%s4328 + $0x358] sm:$0xff]
    %v4437 = vld [vmem:[%s4328 + $0x360] sm:$0xff]
    %v4438 = vld [vmem:[%s4328 + $0x368] sm:$0xff]
    %v4439 = vld [vmem:[%s4328 + $0x370] sm:$0xff]
    %v4440 = vld [vmem:[%s4328 + $0x378] sm:$0xff]
    %v4441 = vld [vmem:[%s4328 + $0x380] sm:$0xff]
    %v4442 = vld [vmem:[%s4328 + $0x388] sm:$0xff]
    %v4443 = vld [vmem:[%s4328 + $0x390] sm:$0xff]
    %v4444 = vld [vmem:[%s4328 + $0x398] sm:$0xff]
    %v4445 = vld [vmem:[%s4328 + $0x3a0] sm:$0xff]
    %v4446 = vld [vmem:[%s4328 + $0x3a8] sm:$0xff]
    %v4447 = vld [vmem:[%s4328 + $0x3b0] sm:$0xff]
    %v4448 = vld [vmem:[%s4328 + $0x3b8] sm:$0xff]
    %v4449 = vld [vmem:[%s4328 + $0x3c0] sm:$0xff]
    %v4450 = vld [vmem:[%s4328 + $0x3c8] sm:$0xff]
    %v4451 = vld [vmem:[%s4328 + $0x3d0] sm:$0xff]
    %v4452 = vld [vmem:[%s4328 + $0x3d8] sm:$0xff]
    %v4453 = vld [vmem:[%s4328 + $0x3e0] sm:$0xff]
    %v4454 = vld [vmem:[%s4328 + $0x3e8] sm:$0xff]
    %v4455 = vld [vmem:[%s4328 + $0x3f0] sm:$0xff]
    %v4456 = vld [vmem:[%s4328 + $0x3f8] sm:$0xff]
    %v4457 = vld [vmem:[%s4328 + $0x400] sm:$0xff]
    %v4458 = vld [vmem:[%s4328 + $0x408] sm:$0xff]
    %v4459 = vld [vmem:[%s4328 + $0x410] sm:$0xff]
    %v4460 = vld [vmem:[%s4328 + $0x418] sm:$0xff]
    %v4461 = vld [vmem:[%s4328 + $0x420] sm:$0xff]
    %v4462 = vld [vmem:[%s4328 + $0x428] sm:$0xff]
    %v4463 = vld [vmem:[%s4328 + $0x430] sm:$0xff]
    %v4464 = vld [vmem:[%s4328 + $0x438] sm:$0xff]
    %v4465 = vld [vmem:[%s4328 + $0x440] sm:$0xff]
    %v4466 = vld [vmem:[%s4328 + $0x448] sm:$0xff]
    %v4467 = vld [vmem:[%s4328 + $0x450] sm:$0xff]
    %v4468 = vld [vmem:[%s4328 + $0x458] sm:$0xff]
    %v4469 = vld [vmem:[%s4328 + $0x460] sm:$0xff]
    %v4470 = vld [vmem:[%s4328 + $0x468] sm:$0xff]
    %v4471 = vld [vmem:[%s4328 + $0x470] sm:$0xff]
    %v4472 = vld [vmem:[%s4328 + $0x478] sm:$0xff]
    %v4473 = vld [vmem:[%s4328 + $0x480] sm:$0xff]
    %v4474 = vld [vmem:[%s4328 + $0x488] sm:$0xff]
    %v4475 = vld [vmem:[%s4328 + $0x490] sm:$0xff]
    %v4476 = vld [vmem:[%s4328 + $0x498] sm:$0xff]
    %v4477 = vld [vmem:[%s4328 + $0x4a0] sm:$0xff]
    %v4478 = vld [vmem:[%s4328 + $0x4a8] sm:$0xff]
    %v4479 = vld [vmem:[%s4328 + $0x4b0] sm:$0xff]
    %v4480 = vld [vmem:[%s4328 + $0x4b8] sm:$0xff]
    %v4481 = vld [vmem:[%s4328 + $0x4c0] sm:$0xff]
    %v4482 = vld [vmem:[%s4328 + $0x4c8] sm:$0xff]
    %v4483 = vld [vmem:[%s4328 + $0x4d0] sm:$0xff]
    %v4484 = vld [vmem:[%s4328 + $0x4d8] sm:$0xff]
    %v4485 = vld [vmem:[%s4328 + $0x4e0] sm:$0xff]
    %v4486 = vld [vmem:[%s4328 + $0x4e8] sm:$0xff]
    %v4487 = vld [vmem:[%s4328 + $0x4f0] sm:$0xff]
    %v4488 = vld [vmem:[%s4328 + $0x4f8] sm:$0xff]
    %v4489 = vld [vmem:[%s4328 + $0x500] sm:$0xff]
    %v4490 = vld [vmem:[%s4328 + $0x508] sm:$0xff]
    %v4491 = vld [vmem:[%s4328 + $0x510] sm:$0xff]
    %v4492 = vld [vmem:[%s4328 + $0x518] sm:$0xff]
    %v4493 = vld [vmem:[%s4328 + $0x520] sm:$0xff]
    %v4494 = vld [vmem:[%s4328 + $0x528] sm:$0xff]
    %v4495 = vld [vmem:[%s4328 + $0x530] sm:$0xff]
    %v4496 = vld [vmem:[%s4328 + $0x538] sm:$0xff]
    %v4497 = vld [vmem:[%s4328 + $0x540] sm:$0xff]
    %v4498 = vld [vmem:[%s4328 + $0x548] sm:$0xff]
    %v4499 = vld [vmem:[%s4328 + $0x550] sm:$0xff]
    %v4500 = vld [vmem:[%s4328 + $0x558] sm:$0xff]
    %v4501 = vld [vmem:[%s4328 + $0x560] sm:$0xff]
    %v4502 = vld [vmem:[%s4328 + $0x568] sm:$0xff]
    %v4503 = vld [vmem:[%s4328 + $0x570] sm:$0xff]
    %v4504 = vld [vmem:[%s4328 + $0x578] sm:$0xff]
    %v4505 = vld [vmem:[%s4328 + $0x580] sm:$0xff]
    %v4506 = vld [vmem:[%s4328 + $0x588] sm:$0xff]
    %v4507 = vld [vmem:[%s4328 + $0x590] sm:$0xff]
    %v4508 = vld [vmem:[%s4328 + $0x598] sm:$0xff]
    %v4509 = vld [vmem:[%s4328 + $0x5a0] sm:$0xff]
    %v4510 = vld [vmem:[%s4328 + $0x5a8] sm:$0xff]
    %v4511 = vld [vmem:[%s4328 + $0x5b0] sm:$0xff]
    %v4512 = vld [vmem:[%s4328 + $0x5b8] sm:$0xff]
    %v4513 = vld [vmem:[%s4328 + $0x5c0] sm:$0xff]
    %v4514 = vld [vmem:[%s4328 + $0x5c8] sm:$0xff]
    %v4515 = vld [vmem:[%s4328 + $0x5d0] sm:$0xff]
    %v4516 = vld [vmem:[%s4328 + $0x5d8] sm:$0xff]
    %v4517 = vld [vmem:[%s4328 + $0x5e0] sm:$0xff]
    %v4518 = vld [vmem:[%s4328 + $0x5e8] sm:$0xff]
    %v4519 = vld [vmem:[%s4328 + $0x5f0] sm:$0xff]
    %v4520 = vld [vmem:[%s4328 + $0x5f8] sm:$0xff]
    %4521 = vmatprep.subr.mxu0 %v4330
    %4522 = vmatpush1.msra.mxu0 %v4329
    %4523 = vmatprep.subr.mxu0 %v4334
    %4524 = vmatpush1.msra.mxu0 %v4333
    %4525 = vmatprep.subr.mxu0 %v4338
    %4526 = vmatpush1.msra.mxu0 %v4337
    %4527 = vmatprep.subr.mxu0 %v4342
    %4528 = vmatpush1.msra.mxu0 %v4341
    %4529 = vmatprep.subr.mxu0 %v4346
    %4530 = vmatpush1.msra.mxu0 %v4345
    %4531 = vmatprep.subr.mxu0 %v4350
    %4532 = vmatpush1.msra.mxu0 %v4349
    %4533 = vmatprep.subr.mxu0 %v4354
    %4534 = vmatpush1.msra.mxu0 %v4353
    %4535 = vmatprep.subr.mxu0 %v4358
    %4536 = vmatpush1.msra.mxu0 %v4357
    %4537 = vmatprep.subr.mxu0 %v4362
    %4538 = vmatpush1.msra.mxu0 %v4361
    %4539 = vmatprep.subr.mxu0 %v4366
    %4540 = vmatpush1.msra.mxu0 %v4365
    %4541 = vmatprep.subr.mxu0 %v4370
    %4542 = vmatpush1.msra.mxu0 %v4369
    %4543 = vmatprep.subr.mxu0 %v4374
    %4544 = vmatpush1.msra.mxu0 %v4373
    %4545 = vmatprep.subr.mxu0 %v4378
    %4546 = vmatpush1.msra.mxu0 %v4377
    %4547 = vmatprep.subr.mxu0 %v4382
    %4548 = vmatpush1.msra.mxu0 %v4381
    %4549 = vmatprep.subr.mxu0 %v4386
    %4550 = vmatpush1.msra.mxu0 %v4385
    %4551 = vmatprep.subr.mxu0 %v4390
    %4552 = vmatpush1.msra.mxu0 %v4389
    %4553 = vmatprep.subr.mxu0 %v4394
    %4554 = vmatpush1.msra.mxu0 %v4393
    %4555 = vmatprep.subr.mxu0 %v4398
    %4556 = vmatpush1.msra.mxu0 %v4397
    %4557 = vmatprep.subr.mxu0 %v4402
    %4558 = vmatpush1.msra.mxu0 %v4401
    %4559 = vmatprep.subr.mxu0 %v4406
    %4560 = vmatpush1.msra.mxu0 %v4405
    %4561 = vmatprep.subr.mxu0 %v4410
    %4562 = vmatpush1.msra.mxu0 %v4409
    %4563 = vmatprep.subr.mxu0 %v4414
    %4564 = vmatpush1.msra.mxu0 %v4413
    %4565 = vmatprep.subr.mxu0 %v4418
    %4566 = vmatpush1.msra.mxu0 %v4417
    %4567 = vmatprep.subr.mxu0 %v4422
    %4568 = vmatpush1.msra.mxu0 %v4421
    %4569 = vmatprep.subr.mxu0 %v4426
    %4570 = vmatpush1.msra.mxu0 %v4425
    %4571 = vmatprep.subr.mxu0 %v4430
    %4572 = vmatpush1.msra.mxu0 %v4429
    %4573 = vmatprep.subr.mxu0 %v4434
    %4574 = vmatpush1.msra.mxu0 %v4433
    %4575 = vmatprep.subr.mxu0 %v4438
    %4576 = vmatpush1.msra.mxu0 %v4437
    %4577 = vmatprep.subr.mxu0 %v4442
    %4578 = vmatpush1.msra.mxu0 %v4441
    %4579 = vmatprep.subr.mxu0 %v4446
    %4580 = vmatpush1.msra.mxu0 %v4445
    %4581 = vmatprep.subr.mxu0 %v4450
    %4582 = vmatpush1.msra.mxu0 %v4449
    %4583 = vmatprep.subr.mxu0 %v4454
    %4584 = vmatpush1.msra.mxu0 %v4453
    %4585 = vmatprep.mubr.f32.mxu0 %v4309
    %4586 = vmatmul.mubr.f32.gmra.mrb[0].mxu0 %v4306
    %v4587 = vpop.f32.mrb[0].mxu0
    %v4588 = vadd.f32 0.0, %v4587
    %v4589 = vpop.f32.mrb[0].mxu0
    %v4590 = vadd.f32 0.0, %v4589
    %4591 = vmatprep.mubr.f32.mxu0 %v4318
    %4592 = vmatmul.mubr.f32.gmra.mrb[0].mxu0 %v4315
    %v4593 = vpop.f32.mrb[0].mxu0
    %v4594 = vadd.f32 0.0, %v4593
    %v4595 = vpop.f32.mrb[0].mxu0
    %v4596 = vadd.f32 0.0, %v4595
    %4597 = vdwg.mxu0
    %4598 = vmatprep.subr.mxu0 %v4458
    %4599 = vmatpush1.msra.mxu0 %v4457
    %4600 = vmatprep.subr.mxu0 %v4462
    %4601 = vmatpush1.msra.mxu0 %v4461
    %4602 = vmatprep.subr.mxu0 %v4466
    %4603 = vmatpush1.msra.mxu0 %v4465
    %4604 = vmatprep.subr.mxu0 %v4470
    %4605 = vmatpush1.msra.mxu0 %v4469
    %4606 = vmatprep.subr.mxu0 %v4474
    %4607 = vmatpush1.msra.mxu0 %v4473
    %4608 = vmatprep.subr.mxu0 %v4478
    %4609 = vmatpush1.msra.mxu0 %v4477
    %4610 = vmatprep.subr.mxu0 %v4482
    %4611 = vmatpush1.msra.mxu0 %v4481
    %4612 = vmatprep.subr.mxu0 %v4486
    %4613 = vmatpush1.msra.mxu0 %v4485
    %4614 = vmatprep.subr.mxu0 %v4490
    %4615 = vmatpush1.msra.mxu0 %v4489
    %4616 = vmatprep.subr.mxu0 %v4494
    %4617 = vmatpush1.msra.mxu0 %v4493
    %4618 = vmatprep.subr.mxu0 %v4498
    %4619 = vmatpush1.msra.mxu0 %v4497
    %4620 = vmatprep.subr.mxu0 %v4502
    %4621 = vmatpush1.msra.mxu0 %v4501
    %4622 = vmatprep.subr.mxu0 %v4506
    %4623 = vmatpush1.msra.mxu0 %v4505
    %4624 = vmatprep.subr.mxu0 %v4510
    %4625 = vmatpush1.msra.mxu0 %v4509
    %4626 = vmatprep.subr.mxu0 %v4514
    %4627 = vmatpush1.msra.mxu0 %v4513
    %4628 = vmatprep.subr.mxu0 %v4518
    %4629 = vmatpush1.msra.mxu0 %v4517
    %4630 = vmatprep.subr.mxu0 0.0
    %4631 = vmatpush1.msra.mxu0 0.0
    %4632 = vmatprep.subr.mxu0 0.0
    %4633 = vmatpush1.msra.mxu0 0.0
    %4634 = vmatprep.subr.mxu0 0.0
    %4635 = vmatpush1.msra.mxu0 0.0
    %4636 = vmatprep.subr.mxu0 0.0
    %4637 = vmatpush1.msra.mxu0 0.0
    %4638 = vmatprep.subr.mxu0 0.0
    %4639 = vmatpush1.msra.mxu0 0.0
    %4640 = vmatprep.subr.mxu0 0.0
    %4641 = vmatpush1.msra.mxu0 0.0
    %4642 = vmatprep.subr.mxu0 0.0
    %4643 = vmatpush1.msra.mxu0 0.0
    %4644 = vmatprep.subr.mxu0 0.0
    %4645 = vmatpush1.msra.mxu0 0.0
    %4646 = vmatprep.subr.mxu0 0.0
    %4647 = vmatpush1.msra.mxu0 0.0
    %4648 = vmatprep.subr.mxu0 0.0
    %4649 = vmatpush1.msra.mxu0 0.0
    %4650 = vmatprep.subr.mxu0 0.0
    %4651 = vmatpush1.msra.mxu0 0.0
    %4652 = vmatprep.subr.mxu0 0.0
    %4653 = vmatpush1.msra.mxu0 0.0
    %4654 = vmatprep.subr.mxu0 0.0
    %4655 = vmatpush1.msra.mxu0 0.0
    %4656 = vmatprep.subr.mxu0 0.0
    %4657 = vmatpush1.msra.mxu0 0.0
    %4658 = vmatprep.subr.mxu0 0.0
    %4659 = vmatpush1.msra.mxu0 0.0
    %4660 = vmatprep.subr.mxu0 0.0
    %4661 = vmatpush1.msra.mxu0 0.0
    %4662 = vmatprep.mubr.f32.mxu0 0.0
    %4663 = vmatmul.mubr.f32.gmra.mrb[0].mxu0 %v4312
    %v4664 = vpop.f32.mrb[0].mxu0
    %v4665 = vadd.f32 %v4588, %v4664
    %v4666 = vpop.f32.mrb[0].mxu0
    %v4667 = vadd.f32 %v4590, %v4666
    %4668 = vmatprep.mubr.f32.mxu0 0.0
    %4669 = vmatmul.mubr.f32.gmra.mrb[0].mxu0 %v4321
    %v4670 = vpop.f32.mrb[0].mxu0
    %v4671 = vadd.f32 %v4594, %v4670
    %v4672 = vpop.f32.mrb[0].mxu0
    %v4673 = vadd.f32 %v4596, %v4672
    %4674 = vdwg.mxu0
    %4675 = vmatprep.subr.mxu0 %v4332
    %4676 = vmatpush1.msra.mxu0 %v4331
    %4677 = vmatprep.subr.mxu0 %v4336
    %4678 = vmatpush1.msra.mxu0 %v4335
    %4679 = vmatprep.subr.mxu0 %v4340
    %4680 = vmatpush1.msra.mxu0 %v4339
    %4681 = vmatprep.subr.mxu0 %v4344
    %4682 = vmatpush1.msra.mxu0 %v4343
    %4683 = vmatprep.subr.mxu0 %v4348
    %4684 = vmatpush1.msra.mxu0 %v4347
    %4685 = vmatprep.subr.mxu0 %v4352
    %4686 = vmatpush1.msra.mxu0 %v4351
    %4687 = vmatprep.subr.mxu0 %v4356
    %4688 = vmatpush1.msra.mxu0 %v4355
    %4689 = vmatprep.subr.mxu0 %v4360
    %4690 = vmatpush1.msra.mxu0 %v4359
    %4691 = vmatprep.subr.mxu0 %v4364
    %4692 = vmatpush1.msra.mxu0 %v4363
    %4693 = vmatprep.subr.mxu0 %v4368
    %4694 = vmatpush1.msra.mxu0 %v4367
    %4695 = vmatprep.subr.mxu0 %v4372
    %4696 = vmatpush1.msra.mxu0 %v4371
    %4697 = vmatprep.subr.mxu0 %v4376
    %4698 = vmatpush1.msra.mxu0 %v4375
    %4699 = vmatprep.subr.mxu0 %v4380
    %4700 = vmatpush1.msra.mxu0 %v4379
    %4701 = vmatprep.subr.mxu0 %v4384
    %4702 = vmatpush1.msra.mxu0 %v4383
    %4703 = vmatprep.subr.mxu0 %v4388
    %4704 = vmatpush1.msra.mxu0 %v4387
    %4705 = vmatprep.subr.mxu0 %v4392
    %4706 = vmatpush1.msra.mxu0 %v4391
    %4707 = vmatprep.subr.mxu0 %v4396
    %4708 = vmatpush1.msra.mxu0 %v4395
    %4709 = vmatprep.subr.mxu0 %v4400
    %4710 = vmatpush1.msra.mxu0 %v4399
    %4711 = vmatprep.subr.mxu0 %v4404
    %4712 = vmatpush1.msra.mxu0 %v4403
    %4713 = vmatprep.subr.mxu0 %v4408
    %4714 = vmatpush1.msra.mxu0 %v4407
    %4715 = vmatprep.subr.mxu0 %v4412
    %4716 = vmatpush1.msra.mxu0 %v4411
    %4717 = vmatprep.subr.mxu0 %v4416
    %4718 = vmatpush1.msra.mxu0 %v4415
    %4719 = vmatprep.subr.mxu0 %v4420
    %4720 = vmatpush1.msra.mxu0 %v4419
    %4721 = vmatprep.subr.mxu0 %v4424
    %4722 = vmatpush1.msra.mxu0 %v4423
    %4723 = vmatprep.subr.mxu0 %v4428
    %4724 = vmatpush1.msra.mxu0 %v4427
    %4725 = vmatprep.subr.mxu0 %v4432
    %4726 = vmatpush1.msra.mxu0 %v4431
    %4727 = vmatprep.subr.mxu0 %v4436
    %4728 = vmatpush1.msra.mxu0 %v4435
    %4729 = vmatprep.subr.mxu0 %v4440
    %4730 = vmatpush1.msra.mxu0 %v4439
    %4731 = vmatprep.subr.mxu0 %v4444
    %4732 = vmatpush1.msra.mxu0 %v4443
    %4733 = vmatprep.subr.mxu0 %v4448
    %4734 = vmatpush1.msra.mxu0 %v4447
    %4735 = vmatprep.subr.mxu0 %v4452
    %4736 = vmatpush1.msra.mxu0 %v4451
    %4737 = vmatprep.subr.mxu0 %v4456
    %4738 = vmatpush1.msra.mxu0 %v4455
    %4739 = vmatprep.mubr.f32.mxu0 %v4309
    %4740 = vmatmul.mubr.f32.gmra.mrb[0].mxu0 %v4306
    %v4741 = vpop.f32.mrb[0].mxu0
    %v4742 = vadd.f32 0.0, %v4741
    %v4743 = vpop.f32.mrb[0].mxu0
    %v4744 = vadd.f32 0.0, %v4743
    %4745 = vmatprep.mubr.f32.mxu0 %v4318
    %4746 = vmatmul.mubr.f32.gmra.mrb[0].mxu0 %v4315
    %v4747 = vpop.f32.mrb[0].mxu0
    %v4748 = vadd.f32 0.0, %v4747
    %v4749 = vpop.f32.mrb[0].mxu0
    %v4750 = vadd.f32 0.0, %v4749
    %4751 = vdwg.mxu0
    %4752 = vmatprep.subr.mxu0 %v4460
    %4753 = vmatpush1.msra.mxu0 %v4459
    %4754 = vmatprep.subr.mxu0 %v4464
    %4755 = vmatpush1.msra.mxu0 %v4463
    %4756 = vmatprep.subr.mxu0 %v4468
    %4757 = vmatpush1.msra.mxu0 %v4467
    %4758 = vmatprep.subr.mxu0 %v4472
    %4759 = vmatpush1.msra.mxu0 %v4471
    %4760 = vmatprep.subr.mxu0 %v4476
    %4761 = vmatpush1.msra.mxu0 %v4475
    %4762 = vmatprep.subr.mxu0 %v4480
    %4763 = vmatpush1.msra.mxu0 %v4479
    %4764 = vmatprep.subr.mxu0 %v4484
    %4765 = vmatpush1.msra.mxu0 %v4483
    %4766 = vmatprep.subr.mxu0 %v4488
    %4767 = vmatpush1.msra.mxu0 %v4487
    %4768 = vmatprep.subr.mxu0 %v4492
    %4769 = vmatpush1.msra.mxu0 %v4491
    %4770 = vmatprep.subr.mxu0 %v4496
    %4771 = vmatpush1.msra.mxu0 %v4495
    %4772 = vmatprep.subr.mxu0 %v4500
    %4773 = vmatpush1.msra.mxu0 %v4499
    %4774 = vmatprep.subr.mxu0 %v4504
    %4775 = vmatpush1.msra.mxu0 %v4503
    %4776 = vmatprep.subr.mxu0 %v4508
    %4777 = vmatpush1.msra.mxu0 %v4507
    %4778 = vmatprep.subr.mxu0 %v4512
    %4779 = vmatpush1.msra.mxu0 %v4511
    %4780 = vmatprep.subr.mxu0 %v4516
    %4781 = vmatpush1.msra.mxu0 %v4515
    %4782 = vmatprep.subr.mxu0 %v4520
    %4783 = vmatpush1.msra.mxu0 %v4519
    %4784 = vmatprep.subr.mxu0 0.0
    %4785 = vmatpush1.msra.mxu0 0.0
    %4786 = vmatprep.subr.mxu0 0.0
    %4787 = vmatpush1.msra.mxu0 0.0
    %4788 = vmatprep.subr.mxu0 0.0
    %4789 = vmatpush1.msra.mxu0 0.0
    %4790 = vmatprep.subr.mxu0 0.0
    %4791 = vmatpush1.msra.mxu0 0.0
    %4792 = vmatprep.subr.mxu0 0.0
    %4793 = vmatpush1.msra.mxu0 0.0
    %4794 = vmatprep.subr.mxu0 0.0
    %4795 = vmatpush1.msra.mxu0 0.0
    %4796 = vmatprep.subr.mxu0 0.0
    %4797 = vmatpush1.msra.mxu0 0.0
    %4798 = vmatprep.subr.mxu0 0.0
    %4799 = vmatpush1.msra.mxu0 0.0
    %4800 = vmatprep.subr.mxu0 0.0
    %4801 = vmatpush1.msra.mxu0 0.0
    %4802 = vmatprep.subr.mxu0 0.0
    %4803 = vmatpush1.msra.mxu0 0.0
    %4804 = vmatprep.subr.mxu0 0.0
    %4805 = vmatpush1.msra.mxu0 0.0
    %4806 = vmatprep.subr.mxu0 0.0
    %4807 = vmatpush1.msra.mxu0 0.0
    %4808 = vmatprep.subr.mxu0 0.0
    %4809 = vmatpush1.msra.mxu0 0.0
    %4810 = vmatprep.subr.mxu0 0.0
    %4811 = vmatpush1.msra.mxu0 0.0
    %4812 = vmatprep.subr.mxu0 0.0
    %4813 = vmatpush1.msra.mxu0 0.0
    %4814 = vmatprep.subr.mxu0 0.0
    %4815 = vmatpush1.msra.mxu0 0.0
    %4816 = vmatprep.mubr.f32.mxu0 0.0
    %4817 = vmatmul.mubr.f32.gmra.mrb[0].mxu0 %v4312
    %v4818 = vpop.f32.mrb[0].mxu0
    %v4819 = vadd.f32 %v4742, %v4818
    %v4820 = vpop.f32.mrb[0].mxu0
    %v4821 = vadd.f32 %v4744, %v4820
    %4822 = vmatprep.mubr.f32.mxu0 0.0
    %4823 = vmatmul.mubr.f32.gmra.mrb[0].mxu0 %v4321
    %v4824 = vpop.f32.mrb[0].mxu0
    %v4825 = vadd.f32 %v4748, %v4824
    %v4826 = vpop.f32.mrb[0].mxu0
    %v4827 = vadd.f32 %v4750, %v4826
    %4828 = vdwg.mxu0
    %v4829 = vadd.f32 %v4271, %v4665
    %v4830 = vadd.f32 %v4272, %v4667
    %v4831 = vadd.f32 %v4273, %v4819
    %v4832 = vadd.f32 %v4274, %v4821
    %v4833 = vadd.f32 %v4275, %v4671
    %v4834 = vadd.f32 %v4276, %v4673
    %v4835 = vadd.f32 %v4277, %v4825
    %v4836 = vadd.f32 %v4278, %v4827
    %v4837 = vld [vmem:[#allocation2] sm:$0xf0]
    %v4838 = vld [vmem:[#allocation2 + $0x8] sm:$0xf0]
    %v4839 = vld [vmem:[#allocation2 + $0x10] sm:$0xf0]
    %v4840 = vld [vmem:[#allocation2 + $0x18] sm:$0xf]
    %v4841 = vld [vmem:[#allocation2 + $0x20] sm:$0xf]
    %v4842 = vld [vmem:[#allocation2 + $0x28] sm:$0xf]
    %v4843 = vld [vmem:[#allocation2 + $0x30] sm:$0xf0]
    %v4844 = vld [vmem:[#allocation2 + $0x38] sm:$0xf0]
    %v4845 = vld [vmem:[#allocation2 + $0x40] sm:$0xf0]
    %v4846 = vld [vmem:[#allocation2 + $0x48] sm:$0xf]
    %v4847 = vld [vmem:[#allocation2 + $0x50] sm:$0xf]
    %v4848 = vld [vmem:[#allocation2 + $0x58] sm:$0xf]
    %v4861 = vrot.slane %v4837, 4
    %v4862 = vrot.slane %v4840, 4
    %v4863 = vsel %vm113, %v4861, %v4862
    %v4864 = vrot.slane %v4838, 4
    %v4865 = vrot.slane %v4841, 4
    %v4866 = vsel %vm113, %v4864, %v4865
    %v4867 = vrot.slane %v4839, 4
    %v4868 = vrot.slane %v4842, 4
    %v4869 = vsel %vm113, %v4867, %v4868
    %v4870 = vrot.slane %v4843, 4
    %v4871 = vrot.slane %v4846, 4
    %v4872 = vsel %vm113, %v4870, %v4871
    %v4873 = vrot.slane %v4844, 4
    %v4874 = vrot.slane %v4847, 4
    %v4875 = vsel %vm113, %v4873, %v4874
    %v4876 = vrot.slane %v4845, 4
    %v4877 = vrot.slane %v4848, 4
    %v4878 = vsel %vm113, %v4876, %v4877
    %s4885 = scalar_lea.vmem %s4, 6144
    %v4886 = vld [vmem:[%s4885] sm:$0xff]
    %v4887 = vld [vmem:[%s4885 + $0x8] sm:$0xff]
    %v4888 = vld [vmem:[%s4885 + $0x10] sm:$0xff]
    %v4889 = vld [vmem:[%s4885 + $0x18] sm:$0xff]
    %v4890 = vld [vmem:[%s4885 + $0x20] sm:$0xff]
    %v4891 = vld [vmem:[%s4885 + $0x28] sm:$0xff]
    %v4892 = vld [vmem:[%s4885 + $0x30] sm:$0xff]
    %v4893 = vld [vmem:[%s4885 + $0x38] sm:$0xff]
    %v4894 = vld [vmem:[%s4885 + $0x40] sm:$0xff]
    %v4895 = vld [vmem:[%s4885 + $0x48] sm:$0xff]
    %v4896 = vld [vmem:[%s4885 + $0x50] sm:$0xff]
    %v4897 = vld [vmem:[%s4885 + $0x58] sm:$0xff]
    %v4898 = vld [vmem:[%s4885 + $0x60] sm:$0xff]
    %v4899 = vld [vmem:[%s4885 + $0x68] sm:$0xff]
    %v4900 = vld [vmem:[%s4885 + $0x70] sm:$0xff]
    %v4901 = vld [vmem:[%s4885 + $0x78] sm:$0xff]
    %v4902 = vld [vmem:[%s4885 + $0x80] sm:$0xff]
    %v4903 = vld [vmem:[%s4885 + $0x88] sm:$0xff]
    %v4904 = vld [vmem:[%s4885 + $0x90] sm:$0xff]
    %v4905 = vld [vmem:[%s4885 + $0x98] sm:$0xff]
    %v4906 = vld [vmem:[%s4885 + $0xa0] sm:$0xff]
    %v4907 = vld [vmem:[%s4885 + $0xa8] sm:$0xff]
    %v4908 = vld [vmem:[%s4885 + $0xb0] sm:$0xff]
    %v4909 = vld [vmem:[%s4885 + $0xb8] sm:$0xff]
    %v4910 = vld [vmem:[%s4885 + $0xc0] sm:$0xff]
    %v4911 = vld [vmem:[%s4885 + $0xc8] sm:$0xff]
    %v4912 = vld [vmem:[%s4885 + $0xd0] sm:$0xff]
    %v4913 = vld [vmem:[%s4885 + $0xd8] sm:$0xff]
    %v4914 = vld [vmem:[%s4885 + $0xe0] sm:$0xff]
    %v4915 = vld [vmem:[%s4885 + $0xe8] sm:$0xff]
    %v4916 = vld [vmem:[%s4885 + $0xf0] sm:$0xff]
    %v4917 = vld [vmem:[%s4885 + $0xf8] sm:$0xff]
    %v4918 = vld [vmem:[%s4885 + $0x100] sm:$0xff]
    %v4919 = vld [vmem:[%s4885 + $0x108] sm:$0xff]
    %v4920 = vld [vmem:[%s4885 + $0x110] sm:$0xff]
    %v4921 = vld [vmem:[%s4885 + $0x118] sm:$0xff]
    %v4922 = vld [vmem:[%s4885 + $0x120] sm:$0xff]
    %v4923 = vld [vmem:[%s4885 + $0x128] sm:$0xff]
    %v4924 = vld [vmem:[%s4885 + $0x130] sm:$0xff]
    %v4925 = vld [vmem:[%s4885 + $0x138] sm:$0xff]
    %v4926 = vld [vmem:[%s4885 + $0x140] sm:$0xff]
    %v4927 = vld [vmem:[%s4885 + $0x148] sm:$0xff]
    %v4928 = vld [vmem:[%s4885 + $0x150] sm:$0xff]
    %v4929 = vld [vmem:[%s4885 + $0x158] sm:$0xff]
    %v4930 = vld [vmem:[%s4885 + $0x160] sm:$0xff]
    %v4931 = vld [vmem:[%s4885 + $0x168] sm:$0xff]
    %v4932 = vld [vmem:[%s4885 + $0x170] sm:$0xff]
    %v4933 = vld [vmem:[%s4885 + $0x178] sm:$0xff]
    %v4934 = vld [vmem:[%s4885 + $0x180] sm:$0xff]
    %v4935 = vld [vmem:[%s4885 + $0x188] sm:$0xff]
    %v4936 = vld [vmem:[%s4885 + $0x190] sm:$0xff]
    %v4937 = vld [vmem:[%s4885 + $0x198] sm:$0xff]
    %v4938 = vld [vmem:[%s4885 + $0x1a0] sm:$0xff]
    %v4939 = vld [vmem:[%s4885 + $0x1a8] sm:$0xff]
    %v4940 = vld [vmem:[%s4885 + $0x1b0] sm:$0xff]
    %v4941 = vld [vmem:[%s4885 + $0x1b8] sm:$0xff]
    %v4942 = vld [vmem:[%s4885 + $0x1c0] sm:$0xff]
    %v4943 = vld [vmem:[%s4885 + $0x1c8] sm:$0xff]
    %v4944 = vld [vmem:[%s4885 + $0x1d0] sm:$0xff]
    %v4945 = vld [vmem:[%s4885 + $0x1d8] sm:$0xff]
    %v4946 = vld [vmem:[%s4885 + $0x1e0] sm:$0xff]
    %v4947 = vld [vmem:[%s4885 + $0x1e8] sm:$0xff]
    %v4948 = vld [vmem:[%s4885 + $0x1f0] sm:$0xff]
    %v4949 = vld [vmem:[%s4885 + $0x1f8] sm:$0xff]
    %v4950 = vld [vmem:[%s4885 + $0x200] sm:$0xff]
    %v4951 = vld [vmem:[%s4885 + $0x208] sm:$0xff]
    %v4952 = vld [vmem:[%s4885 + $0x210] sm:$0xff]
    %v4953 = vld [vmem:[%s4885 + $0x218] sm:$0xff]
    %v4954 = vld [vmem:[%s4885 + $0x220] sm:$0xff]
    %v4955 = vld [vmem:[%s4885 + $0x228] sm:$0xff]
    %v4956 = vld [vmem:[%s4885 + $0x230] sm:$0xff]
    %v4957 = vld [vmem:[%s4885 + $0x238] sm:$0xff]
    %v4958 = vld [vmem:[%s4885 + $0x240] sm:$0xff]
    %v4959 = vld [vmem:[%s4885 + $0x248] sm:$0xff]
    %v4960 = vld [vmem:[%s4885 + $0x250] sm:$0xff]
    %v4961 = vld [vmem:[%s4885 + $0x258] sm:$0xff]
    %v4962 = vld [vmem:[%s4885 + $0x260] sm:$0xff]
    %v4963 = vld [vmem:[%s4885 + $0x268] sm:$0xff]
    %v4964 = vld [vmem:[%s4885 + $0x270] sm:$0xff]
    %v4965 = vld [vmem:[%s4885 + $0x278] sm:$0xff]
    %v4966 = vld [vmem:[%s4885 + $0x280] sm:$0xff]
    %v4967 = vld [vmem:[%s4885 + $0x288] sm:$0xff]
    %v4968 = vld [vmem:[%s4885 + $0x290] sm:$0xff]
    %v4969 = vld [vmem:[%s4885 + $0x298] sm:$0xff]
    %v4970 = vld [vmem:[%s4885 + $0x2a0] sm:$0xff]
    %v4971 = vld [vmem:[%s4885 + $0x2a8] sm:$0xff]
    %v4972 = vld [vmem:[%s4885 + $0x2b0] sm:$0xff]
    %v4973 = vld [vmem:[%s4885 + $0x2b8] sm:$0xff]
    %v4974 = vld [vmem:[%s4885 + $0x2c0] sm:$0xff]
    %v4975 = vld [vmem:[%s4885 + $0x2c8] sm:$0xff]
    %v4976 = vld [vmem:[%s4885 + $0x2d0] sm:$0xff]
    %v4977 = vld [vmem:[%s4885 + $0x2d8] sm:$0xff]
    %v4978 = vld [vmem:[%s4885 + $0x2e0] sm:$0xff]
    %v4979 = vld [vmem:[%s4885 + $0x2e8] sm:$0xff]
    %v4980 = vld [vmem:[%s4885 + $0x2f0] sm:$0xff]
    %v4981 = vld [vmem:[%s4885 + $0x2f8] sm:$0xff]
    %v4982 = vld [vmem:[%s4885 + $0x300] sm:$0xff]
    %v4983 = vld [vmem:[%s4885 + $0x308] sm:$0xff]
    %v4984 = vld [vmem:[%s4885 + $0x310] sm:$0xff]
    %v4985 = vld [vmem:[%s4885 + $0x318] sm:$0xff]
    %v4986 = vld [vmem:[%s4885 + $0x320] sm:$0xff]
    %v4987 = vld [vmem:[%s4885 + $0x328] sm:$0xff]
    %v4988 = vld [vmem:[%s4885 + $0x330] sm:$0xff]
    %v4989 = vld [vmem:[%s4885 + $0x338] sm:$0xff]
    %v4990 = vld [vmem:[%s4885 + $0x340] sm:$0xff]
    %v4991 = vld [vmem:[%s4885 + $0x348] sm:$0xff]
    %v4992 = vld [vmem:[%s4885 + $0x350] sm:$0xff]
    %v4993 = vld [vmem:[%s4885 + $0x358] sm:$0xff]
    %v4994 = vld [vmem:[%s4885 + $0x360] sm:$0xff]
    %v4995 = vld [vmem:[%s4885 + $0x368] sm:$0xff]
    %v4996 = vld [vmem:[%s4885 + $0x370] sm:$0xff]
    %v4997 = vld [vmem:[%s4885 + $0x378] sm:$0xff]
    %v4998 = vld [vmem:[%s4885 + $0x380] sm:$0xff]
    %v4999 = vld [vmem:[%s4885 + $0x388] sm:$0xff]
    %v5000 = vld [vmem:[%s4885 + $0x390] sm:$0xff]
    %v5001 = vld [vmem:[%s4885 + $0x398] sm:$0xff]
    %v5002 = vld [vmem:[%s4885 + $0x3a0] sm:$0xff]
    %v5003 = vld [vmem:[%s4885 + $0x3a8] sm:$0xff]
    %v5004 = vld [vmem:[%s4885 + $0x3b0] sm:$0xff]
    %v5005 = vld [vmem:[%s4885 + $0x3b8] sm:$0xff]
    %v5006 = vld [vmem:[%s4885 + $0x3c0] sm:$0xff]
    %v5007 = vld [vmem:[%s4885 + $0x3c8] sm:$0xff]
    %v5008 = vld [vmem:[%s4885 + $0x3d0] sm:$0xff]
    %v5009 = vld [vmem:[%s4885 + $0x3d8] sm:$0xff]
    %v5010 = vld [vmem:[%s4885 + $0x3e0] sm:$0xff]
    %v5011 = vld [vmem:[%s4885 + $0x3e8] sm:$0xff]
    %v5012 = vld [vmem:[%s4885 + $0x3f0] sm:$0xff]
    %v5013 = vld [vmem:[%s4885 + $0x3f8] sm:$0xff]
    %v5014 = vld [vmem:[%s4885 + $0x400] sm:$0xff]
    %v5015 = vld [vmem:[%s4885 + $0x408] sm:$0xff]
    %v5016 = vld [vmem:[%s4885 + $0x410] sm:$0xff]
    %v5017 = vld [vmem:[%s4885 + $0x418] sm:$0xff]
    %v5018 = vld [vmem:[%s4885 + $0x420] sm:$0xff]
    %v5019 = vld [vmem:[%s4885 + $0x428] sm:$0xff]
    %v5020 = vld [vmem:[%s4885 + $0x430] sm:$0xff]
    %v5021 = vld [vmem:[%s4885 + $0x438] sm:$0xff]
    %v5022 = vld [vmem:[%s4885 + $0x440] sm:$0xff]
    %v5023 = vld [vmem:[%s4885 + $0x448] sm:$0xff]
    %v5024 = vld [vmem:[%s4885 + $0x450] sm:$0xff]
    %v5025 = vld [vmem:[%s4885 + $0x458] sm:$0xff]
    %v5026 = vld [vmem:[%s4885 + $0x460] sm:$0xff]
    %v5027 = vld [vmem:[%s4885 + $0x468] sm:$0xff]
    %v5028 = vld [vmem:[%s4885 + $0x470] sm:$0xff]
    %v5029 = vld [vmem:[%s4885 + $0x478] sm:$0xff]
    %v5030 = vld [vmem:[%s4885 + $0x480] sm:$0xff]
    %v5031 = vld [vmem:[%s4885 + $0x488] sm:$0xff]
    %v5032 = vld [vmem:[%s4885 + $0x490] sm:$0xff]
    %v5033 = vld [vmem:[%s4885 + $0x498] sm:$0xff]
    %v5034 = vld [vmem:[%s4885 + $0x4a0] sm:$0xff]
    %v5035 = vld [vmem:[%s4885 + $0x4a8] sm:$0xff]
    %v5036 = vld [vmem:[%s4885 + $0x4b0] sm:$0xff]
    %v5037 = vld [vmem:[%s4885 + $0x4b8] sm:$0xff]
    %v5038 = vld [vmem:[%s4885 + $0x4c0] sm:$0xff]
    %v5039 = vld [vmem:[%s4885 + $0x4c8] sm:$0xff]
    %v5040 = vld [vmem:[%s4885 + $0x4d0] sm:$0xff]
    %v5041 = vld [vmem:[%s4885 + $0x4d8] sm:$0xff]
    %v5042 = vld [vmem:[%s4885 + $0x4e0] sm:$0xff]
    %v5043 = vld [vmem:[%s4885 + $0x4e8] sm:$0xff]
    %v5044 = vld [vmem:[%s4885 + $0x4f0] sm:$0xff]
    %v5045 = vld [vmem:[%s4885 + $0x4f8] sm:$0xff]
    %v5046 = vld [vmem:[%s4885 + $0x500] sm:$0xff]
    %v5047 = vld [vmem:[%s4885 + $0x508] sm:$0xff]
    %v5048 = vld [vmem:[%s4885 + $0x510] sm:$0xff]
    %v5049 = vld [vmem:[%s4885 + $0x518] sm:$0xff]
    %v5050 = vld [vmem:[%s4885 + $0x520] sm:$0xff]
    %v5051 = vld [vmem:[%s4885 + $0x528] sm:$0xff]
    %v5052 = vld [vmem:[%s4885 + $0x530] sm:$0xff]
    %v5053 = vld [vmem:[%s4885 + $0x538] sm:$0xff]
    %v5054 = vld [vmem:[%s4885 + $0x540] sm:$0xff]
    %v5055 = vld [vmem:[%s4885 + $0x548] sm:$0xff]
    %v5056 = vld [vmem:[%s4885 + $0x550] sm:$0xff]
    %v5057 = vld [vmem:[%s4885 + $0x558] sm:$0xff]
    %v5058 = vld [vmem:[%s4885 + $0x560] sm:$0xff]
    %v5059 = vld [vmem:[%s4885 + $0x568] sm:$0xff]
    %v5060 = vld [vmem:[%s4885 + $0x570] sm:$0xff]
    %v5061 = vld [vmem:[%s4885 + $0x578] sm:$0xff]
    %v5062 = vld [vmem:[%s4885 + $0x580] sm:$0xff]
    %v5063 = vld [vmem:[%s4885 + $0x588] sm:$0xff]
    %v5064 = vld [vmem:[%s4885 + $0x590] sm:$0xff]
    %v5065 = vld [vmem:[%s4885 + $0x598] sm:$0xff]
    %v5066 = vld [vmem:[%s4885 + $0x5a0] sm:$0xff]
    %v5067 = vld [vmem:[%s4885 + $0x5a8] sm:$0xff]
    %v5068 = vld [vmem:[%s4885 + $0x5b0] sm:$0xff]
    %v5069 = vld [vmem:[%s4885 + $0x5b8] sm:$0xff]
    %v5070 = vld [vmem:[%s4885 + $0x5c0] sm:$0xff]
    %v5071 = vld [vmem:[%s4885 + $0x5c8] sm:$0xff]
    %v5072 = vld [vmem:[%s4885 + $0x5d0] sm:$0xff]
    %v5073 = vld [vmem:[%s4885 + $0x5d8] sm:$0xff]
    %v5074 = vld [vmem:[%s4885 + $0x5e0] sm:$0xff]
    %v5075 = vld [vmem:[%s4885 + $0x5e8] sm:$0xff]
    %v5076 = vld [vmem:[%s4885 + $0x5f0] sm:$0xff]
    %v5077 = vld [vmem:[%s4885 + $0x5f8] sm:$0xff]
    %5078 = vmatprep.subr.mxu0 %v4887
    %5079 = vmatpush1.msra.mxu0 %v4886
    %5080 = vmatprep.subr.mxu0 %v4891
    %5081 = vmatpush1.msra.mxu0 %v4890
    %5082 = vmatprep.subr.mxu0 %v4895
    %5083 = vmatpush1.msra.mxu0 %v4894
    %5084 = vmatprep.subr.mxu0 %v4899
    %5085 = vmatpush1.msra.mxu0 %v4898
    %5086 = vmatprep.subr.mxu0 %v4903
    %5087 = vmatpush1.msra.mxu0 %v4902
    %5088 = vmatprep.subr.mxu0 %v4907
    %5089 = vmatpush1.msra.mxu0 %v4906
    %5090 = vmatprep.subr.mxu0 %v4911
    %5091 = vmatpush1.msra.mxu0 %v4910
    %5092 = vmatprep.subr.mxu0 %v4915
    %5093 = vmatpush1.msra.mxu0 %v4914
    %5094 = vmatprep.subr.mxu0 %v4919
    %5095 = vmatpush1.msra.mxu0 %v4918
    %5096 = vmatprep.subr.mxu0 %v4923
    %5097 = vmatpush1.msra.mxu0 %v4922
    %5098 = vmatprep.subr.mxu0 %v4927
    %5099 = vmatpush1.msra.mxu0 %v4926
    %5100 = vmatprep.subr.mxu0 %v4931
    %5101 = vmatpush1.msra.mxu0 %v4930
    %5102 = vmatprep.subr.mxu0 %v4935
    %5103 = vmatpush1.msra.mxu0 %v4934
    %5104 = vmatprep.subr.mxu0 %v4939
    %5105 = vmatpush1.msra.mxu0 %v4938
    %5106 = vmatprep.subr.mxu0 %v4943
    %5107 = vmatpush1.msra.mxu0 %v4942
    %5108 = vmatprep.subr.mxu0 %v4947
    %5109 = vmatpush1.msra.mxu0 %v4946
    %5110 = vmatprep.subr.mxu0 %v4951
    %5111 = vmatpush1.msra.mxu0 %v4950
    %5112 = vmatprep.subr.mxu0 %v4955
    %5113 = vmatpush1.msra.mxu0 %v4954
    %5114 = vmatprep.subr.mxu0 %v4959
    %5115 = vmatpush1.msra.mxu0 %v4958
    %5116 = vmatprep.subr.mxu0 %v4963
    %5117 = vmatpush1.msra.mxu0 %v4962
    %5118 = vmatprep.subr.mxu0 %v4967
    %5119 = vmatpush1.msra.mxu0 %v4966
    %5120 = vmatprep.subr.mxu0 %v4971
    %5121 = vmatpush1.msra.mxu0 %v4970
    %5122 = vmatprep.subr.mxu0 %v4975
    %5123 = vmatpush1.msra.mxu0 %v4974
    %5124 = vmatprep.subr.mxu0 %v4979
    %5125 = vmatpush1.msra.mxu0 %v4978
    %5126 = vmatprep.subr.mxu0 %v4983
    %5127 = vmatpush1.msra.mxu0 %v4982
    %5128 = vmatprep.subr.mxu0 %v4987
    %5129 = vmatpush1.msra.mxu0 %v4986
    %5130 = vmatprep.subr.mxu0 %v4991
    %5131 = vmatpush1.msra.mxu0 %v4990
    %5132 = vmatprep.subr.mxu0 %v4995
    %5133 = vmatpush1.msra.mxu0 %v4994
    %5134 = vmatprep.subr.mxu0 %v4999
    %5135 = vmatpush1.msra.mxu0 %v4998
    %5136 = vmatprep.subr.mxu0 %v5003
    %5137 = vmatpush1.msra.mxu0 %v5002
    %5138 = vmatprep.subr.mxu0 %v5007
    %5139 = vmatpush1.msra.mxu0 %v5006
    %5140 = vmatprep.subr.mxu0 %v5011
    %5141 = vmatpush1.msra.mxu0 %v5010
    %5142 = vmatprep.mubr.f32.mxu0 %v4866
    %5143 = vmatmul.mubr.f32.gmra.mrb[0].mxu0 %v4863
    %v5144 = vpop.f32.mrb[0].mxu0
    %v5145 = vadd.f32 0.0, %v5144
    %v5146 = vpop.f32.mrb[0].mxu0
    %v5147 = vadd.f32 0.0, %v5146
    %5148 = vmatprep.mubr.f32.mxu0 %v4875
    %5149 = vmatmul.mubr.f32.gmra.mrb[0].mxu0 %v4872
    %v5150 = vpop.f32.mrb[0].mxu0
    %v5151 = vadd.f32 0.0, %v5150
    %v5152 = vpop.f32.mrb[0].mxu0
    %v5153 = vadd.f32 0.0, %v5152
    %5154 = vdwg.mxu0
    %5155 = vmatprep.subr.mxu0 %v5015
    %5156 = vmatpush1.msra.mxu0 %v5014
    %5157 = vmatprep.subr.mxu0 %v5019
    %5158 = vmatpush1.msra.mxu0 %v5018
    %5159 = vmatprep.subr.mxu0 %v5023
    %5160 = vmatpush1.msra.mxu0 %v5022
    %5161 = vmatprep.subr.mxu0 %v5027
    %5162 = vmatpush1.msra.mxu0 %v5026
    %5163 = vmatprep.subr.mxu0 %v5031
    %5164 = vmatpush1.msra.mxu0 %v5030
    %5165 = vmatprep.subr.mxu0 %v5035
    %5166 = vmatpush1.msra.mxu0 %v5034
    %5167 = vmatprep.subr.mxu0 %v5039
    %5168 = vmatpush1.msra.mxu0 %v5038
    %5169 = vmatprep.subr.mxu0 %v5043
    %5170 = vmatpush1.msra.mxu0 %v5042
    %5171 = vmatprep.subr.mxu0 %v5047
    %5172 = vmatpush1.msra.mxu0 %v5046
    %5173 = vmatprep.subr.mxu0 %v5051
    %5174 = vmatpush1.msra.mxu0 %v5050
    %5175 = vmatprep.subr.mxu0 %v5055
    %5176 = vmatpush1.msra.mxu0 %v5054
    %5177 = vmatprep.subr.mxu0 %v5059
    %5178 = vmatpush1.msra.mxu0 %v5058
    %5179 = vmatprep.subr.mxu0 %v5063
    %5180 = vmatpush1.msra.mxu0 %v5062
    %5181 = vmatprep.subr.mxu0 %v5067
    %5182 = vmatpush1.msra.mxu0 %v5066
    %5183 = vmatprep.subr.mxu0 %v5071
    %5184 = vmatpush1.msra.mxu0 %v5070
    %5185 = vmatprep.subr.mxu0 %v5075
    %5186 = vmatpush1.msra.mxu0 %v5074
    %5187 = vmatprep.subr.mxu0 0.0
    %5188 = vmatpush1.msra.mxu0 0.0
    %5189 = vmatprep.subr.mxu0 0.0
    %5190 = vmatpush1.msra.mxu0 0.0
    %5191 = vmatprep.subr.mxu0 0.0
    %5192 = vmatpush1.msra.mxu0 0.0
    %5193 = vmatprep.subr.mxu0 0.0
    %5194 = vmatpush1.msra.mxu0 0.0
    %5195 = vmatprep.subr.mxu0 0.0
    %5196 = vmatpush1.msra.mxu0 0.0
    %5197 = vmatprep.subr.mxu0 0.0
    %5198 = vmatpush1.msra.mxu0 0.0
    %5199 = vmatprep.subr.mxu0 0.0
    %5200 = vmatpush1.msra.mxu0 0.0
    %5201 = vmatprep.subr.mxu0 0.0
    %5202 = vmatpush1.msra.mxu0 0.0
    %5203 = vmatprep.subr.mxu0 0.0
    %5204 = vmatpush1.msra.mxu0 0.0
    %5205 = vmatprep.subr.mxu0 0.0
    %5206 = vmatpush1.msra.mxu0 0.0
    %5207 = vmatprep.subr.mxu0 0.0
    %5208 = vmatpush1.msra.mxu0 0.0
    %5209 = vmatprep.subr.mxu0 0.0
    %5210 = vmatpush1.msra.mxu0 0.0
    %5211 = vmatprep.subr.mxu0 0.0
    %5212 = vmatpush1.msra.mxu0 0.0
    %5213 = vmatprep.subr.mxu0 0.0
    %5214 = vmatpush1.msra.mxu0 0.0
    %5215 = vmatprep.subr.mxu0 0.0
    %5216 = vmatpush1.msra.mxu0 0.0
    %5217 = vmatprep.subr.mxu0 0.0
    %5218 = vmatpush1.msra.mxu0 0.0
    %5219 = vmatprep.mubr.f32.mxu0 0.0
    %5220 = vmatmul.mubr.f32.gmra.mrb[0].mxu0 %v4869
    %v5221 = vpop.f32.mrb[0].mxu0
    %v5222 = vadd.f32 %v5145, %v5221
    %v5223 = vpop.f32.mrb[0].mxu0
    %v5224 = vadd.f32 %v5147, %v5223
    %5225 = vmatprep.mubr.f32.mxu0 0.0
    %5226 = vmatmul.mubr.f32.gmra.mrb[0].mxu0 %v4878
    %v5227 = vpop.f32.mrb[0].mxu0
    %v5228 = vadd.f32 %v5151, %v5227
    %v5229 = vpop.f32.mrb[0].mxu0
    %v5230 = vadd.f32 %v5153, %v5229
    %5231 = vdwg.mxu0
    %5232 = vmatprep.subr.mxu0 %v4889
    %5233 = vmatpush1.msra.mxu0 %v4888
    %5234 = vmatprep.subr.mxu0 %v4893
    %5235 = vmatpush1.msra.mxu0 %v4892
    %5236 = vmatprep.subr.mxu0 %v4897
    %5237 = vmatpush1.msra.mxu0 %v4896
    %5238 = vmatprep.subr.mxu0 %v4901
    %5239 = vmatpush1.msra.mxu0 %v4900
    %5240 = vmatprep.subr.mxu0 %v4905
    %5241 = vmatpush1.msra.mxu0 %v4904
    %5242 = vmatprep.subr.mxu0 %v4909
    %5243 = vmatpush1.msra.mxu0 %v4908
    %5244 = vmatprep.subr.mxu0 %v4913
    %5245 = vmatpush1.msra.mxu0 %v4912
    %5246 = vmatprep.subr.mxu0 %v4917
    %5247 = vmatpush1.msra.mxu0 %v4916
    %5248 = vmatprep.subr.mxu0 %v4921
    %5249 = vmatpush1.msra.mxu0 %v4920
    %5250 = vmatprep.subr.mxu0 %v4925
    %5251 = vmatpush1.msra.mxu0 %v4924
    %5252 = vmatprep.subr.mxu0 %v4929
    %5253 = vmatpush1.msra.mxu0 %v4928
    %5254 = vmatprep.subr.mxu0 %v4933
    %5255 = vmatpush1.msra.mxu0 %v4932
    %5256 = vmatprep.subr.mxu0 %v4937
    %5257 = vmatpush1.msra.mxu0 %v4936
    %5258 = vmatprep.subr.mxu0 %v4941
    %5259 = vmatpush1.msra.mxu0 %v4940
    %5260 = vmatprep.subr.mxu0 %v4945
    %5261 = vmatpush1.msra.mxu0 %v4944
    %5262 = vmatprep.subr.mxu0 %v4949
    %5263 = vmatpush1.msra.mxu0 %v4948
    %5264 = vmatprep.subr.mxu0 %v4953
    %5265 = vmatpush1.msra.mxu0 %v4952
    %5266 = vmatprep.subr.mxu0 %v4957
    %5267 = vmatpush1.msra.mxu0 %v4956
    %5268 = vmatprep.subr.mxu0 %v4961
    %5269 = vmatpush1.msra.mxu0 %v4960
    %5270 = vmatprep.subr.mxu0 %v4965
    %5271 = vmatpush1.msra.mxu0 %v4964
    %5272 = vmatprep.subr.mxu0 %v4969
    %5273 = vmatpush1.msra.mxu0 %v4968
    %5274 = vmatprep.subr.mxu0 %v4973
    %5275 = vmatpush1.msra.mxu0 %v4972
    %5276 = vmatprep.subr.mxu0 %v4977
    %5277 = vmatpush1.msra.mxu0 %v4976
    %5278 = vmatprep.subr.mxu0 %v4981
    %5279 = vmatpush1.msra.mxu0 %v4980
    %5280 = vmatprep.subr.mxu0 %v4985
    %5281 = vmatpush1.msra.mxu0 %v4984
    %5282 = vmatprep.subr.mxu0 %v4989
    %5283 = vmatpush1.msra.mxu0 %v4988
    %5284 = vmatprep.subr.mxu0 %v4993
    %5285 = vmatpush1.msra.mxu0 %v4992
    %5286 = vmatprep.subr.mxu0 %v4997
    %5287 = vmatpush1.msra.mxu0 %v4996
    %5288 = vmatprep.subr.mxu0 %v5001
    %5289 = vmatpush1.msra.mxu0 %v5000
    %5290 = vmatprep.subr.mxu0 %v5005
    %5291 = vmatpush1.msra.mxu0 %v5004
    %5292 = vmatprep.subr.mxu0 %v5009
    %5293 = vmatpush1.msra.mxu0 %v5008
    %5294 = vmatprep.subr.mxu0 %v5013
    %5295 = vmatpush1.msra.mxu0 %v5012
    %5296 = vmatprep.mubr.f32.mxu0 %v4866
    %5297 = vmatmul.mubr.f32.gmra.mrb[0].mxu0 %v4863
    %v5298 = vpop.f32.mrb[0].mxu0
    %v5299 = vadd.f32 0.0, %v5298
    %v5300 = vpop.f32.mrb[0].mxu0
    %v5301 = vadd.f32 0.0, %v5300
    %5302 = vmatprep.mubr.f32.mxu0 %v4875
    %5303 = vmatmul.mubr.f32.gmra.mrb[0].mxu0 %v4872
    %v5304 = vpop.f32.mrb[0].mxu0
    %v5305 = vadd.f32 0.0, %v5304
    %v5306 = vpop.f32.mrb[0].mxu0
    %v5307 = vadd.f32 0.0, %v5306
    %5308 = vdwg.mxu0
    %5309 = vmatprep.subr.mxu0 %v5017
    %5310 = vmatpush1.msra.mxu0 %v5016
    %5311 = vmatprep.subr.mxu0 %v5021
    %5312 = vmatpush1.msra.mxu0 %v5020
    %5313 = vmatprep.subr.mxu0 %v5025
    %5314 = vmatpush1.msra.mxu0 %v5024
    %5315 = vmatprep.subr.mxu0 %v5029
    %5316 = vmatpush1.msra.mxu0 %v5028
    %5317 = vmatprep.subr.mxu0 %v5033
    %5318 = vmatpush1.msra.mxu0 %v5032
    %5319 = vmatprep.subr.mxu0 %v5037
    %5320 = vmatpush1.msra.mxu0 %v5036
    %5321 = vmatprep.subr.mxu0 %v5041
    %5322 = vmatpush1.msra.mxu0 %v5040
    %5323 = vmatprep.subr.mxu0 %v5045
    %5324 = vmatpush1.msra.mxu0 %v5044
    %5325 = vmatprep.subr.mxu0 %v5049
    %5326 = vmatpush1.msra.mxu0 %v5048
    %5327 = vmatprep.subr.mxu0 %v5053
    %5328 = vmatpush1.msra.mxu0 %v5052
    %5329 = vmatprep.subr.mxu0 %v5057
    %5330 = vmatpush1.msra.mxu0 %v5056
    %5331 = vmatprep.subr.mxu0 %v5061
    %5332 = vmatpush1.msra.mxu0 %v5060
    %5333 = vmatprep.subr.mxu0 %v5065
    %5334 = vmatpush1.msra.mxu0 %v5064
    %5335 = vmatprep.subr.mxu0 %v5069
    %5336 = vmatpush1.msra.mxu0 %v5068
    %5337 = vmatprep.subr.mxu0 %v5073
    %5338 = vmatpush1.msra.mxu0 %v5072
    %5339 = vmatprep.subr.mxu0 %v5077
    %5340 = vmatpush1.msra.mxu0 %v5076
    %5341 = vmatprep.subr.mxu0 0.0
    %5342 = vmatpush1.msra.mxu0 0.0
    %5343 = vmatprep.subr.mxu0 0.0
    %5344 = vmatpush1.msra.mxu0 0.0
    %5345 = vmatprep.subr.mxu0 0.0
    %5346 = vmatpush1.msra.mxu0 0.0
    %5347 = vmatprep.subr.mxu0 0.0
    %5348 = vmatpush1.msra.mxu0 0.0
    %5349 = vmatprep.subr.mxu0 0.0
    %5350 = vmatpush1.msra.mxu0 0.0
    %5351 = vmatprep.subr.mxu0 0.0
    %5352 = vmatpush1.msra.mxu0 0.0
    %5353 = vmatprep.subr.mxu0 0.0
    %5354 = vmatpush1.msra.mxu0 0.0
    %5355 = vmatprep.subr.mxu0 0.0
    %5356 = vmatpush1.msra.mxu0 0.0
    %5357 = vmatprep.subr.mxu0 0.0
    %5358 = vmatpush1.msra.mxu0 0.0
    %5359 = vmatprep.subr.mxu0 0.0
    %5360 = vmatpush1.msra.mxu0 0.0
    %5361 = vmatprep.subr.mxu0 0.0
    %5362 = vmatpush1.msra.mxu0 0.0
    %5363 = vmatprep.subr.mxu0 0.0
    %5364 = vmatpush1.msra.mxu0 0.0
    %5365 = vmatprep.subr.mxu0 0.0
    %5366 = vmatpush1.msra.mxu0 0.0
    %5367 = vmatprep.subr.mxu0 0.0
    %5368 = vmatpush1.msra.mxu0 0.0
    %5369 = vmatprep.subr.mxu0 0.0
    %5370 = vmatpush1.msra.mxu0 0.0
    %5371 = vmatprep.subr.mxu0 0.0
    %5372 = vmatpush1.msra.mxu0 0.0
    %5373 = vmatprep.mubr.f32.mxu0 0.0
    %5374 = vmatmul.mubr.f32.gmra.mrb[0].mxu0 %v4869
    %v5375 = vpop.f32.mrb[0].mxu0
    %v5376 = vadd.f32 %v5299, %v5375
    %v5377 = vpop.f32.mrb[0].mxu0
    %v5378 = vadd.f32 %v5301, %v5377
    %5379 = vmatprep.mubr.f32.mxu0 0.0
    %5380 = vmatmul.mubr.f32.gmra.mrb[0].mxu0 %v4878
    %v5381 = vpop.f32.mrb[0].mxu0
    %v5382 = vadd.f32 %v5305, %v5381
    %v5383 = vpop.f32.mrb[0].mxu0
    %v5384 = vadd.f32 %v5307, %v5383
    %5385 = vdwg.mxu0
    %v5386 = vadd.f32 %v4829, %v5222
    %v5387 = vadd.f32 %v4830, %v5224
    %v5388 = vadd.f32 %v4831, %v5376
    %v5389 = vadd.f32 %v4832, %v5378
    %v5390 = vadd.f32 %v4833, %v5228
    %v5391 = vadd.f32 %v4834, %v5230
    %v5392 = vadd.f32 %v4835, %v5382
    %v5393 = vadd.f32 %v4836, %v5384
    %v5394 = vld [vmem:[%s5] sm:$0xf]
    %v5396 = vlaneseq
    %v5397 = vshrl.u32 %v5396, 7
    %v5398 = vsub.s32 0, %v5397
    %v5399 = vrot.slane %v5394, %v5398
    %v5400 = vlaneseq
    %v5401 = vshrl.u32 %v5400, 7
    %v5402 = vsub.s32 1, %v5401
    %v5403 = vrot.slane %v5394, %v5402
    %v5404 = vlaneseq
    %v5405 = vshrl.u32 %v5404, 7
    %v5406 = vsub.s32 2, %v5405
    %v5407 = vrot.slane %v5394, %v5406
    %v5408 = vlaneseq
    %v5409 = vshrl.u32 %v5408, 7
    %v5410 = vsub.s32 3, %v5409
    %v5411 = vrot.slane %v5394, %v5410
    %v5416 = vmul.f32 %v5386, %v5399
    %v5417 = vmul.f32 %v5387, %v5403
    %v5418 = vmul.f32 %v5388, %v5407
    %v5419 = vmul.f32 %v5389, %v5411
    %v5420 = vmul.f32 %v5390, %v5399
    %v5421 = vmul.f32 %v5391, %v5403
    %v5422 = vmul.f32 %v5392, %v5407
    %v5423 = vmul.f32 %v5393, %v5411
    %v5424 = vld [vmem:[%s6] sm:$0xf]
    %v5426 = vlaneseq
    %v5427 = vshrl.u32 %v5426, 7
    %v5428 = vsub.s32 0, %v5427
    %v5429 = vrot.slane %v5424, %v5428
    %v5430 = vlaneseq
    %v5431 = vshrl.u32 %v5430, 7
    %v5432 = vsub.s32 1, %v5431
    %v5433 = vrot.slane %v5424, %v5432
    %v5434 = vlaneseq
    %v5435 = vshrl.u32 %v5434, 7
    %v5436 = vsub.s32 2, %v5435
    %v5437 = vrot.slane %v5424, %v5436
    %v5438 = vlaneseq
    %v5439 = vshrl.u32 %v5438, 7
    %v5440 = vsub.s32 3, %v5439
    %v5441 = vrot.slane %v5424, %v5440
    %v5446 = vadd.f32 %v5416, %v5429
    %v5447 = vadd.f32 %v5417, %v5433
    %v5448 = vadd.f32 %v5418, %v5437
    %v5449 = vadd.f32 %v5419, %v5441
    %v5450 = vadd.f32 %v5420, %v5429
    %v5451 = vadd.f32 %v5421, %v5433
    %v5452 = vadd.f32 %v5422, %v5437
    %v5453 = vadd.f32 %v5423, %v5441
    %v5454 = vmax.f32 %v5446, 0.0
    %v5455 = vmax.f32 %v5447, 0.0
    %v5456 = vmax.f32 %v5448, 0.0
    %v5457 = vmax.f32 %v5449, 0.0
    %v5458 = vmax.f32 %v5450, 0.0
    %v5459 = vmax.f32 %v5451, 0.0
    %v5460 = vmax.f32 %v5452, 0.0
    %v5461 = vmax.f32 %v5453, 0.0
    %v5462 = vmax.f32 %v5454, %v5456
    %v5463 = vmax.f32 %v5455, %v5457
    %v5464 = vmax.f32 %v5458, %v5460
    %v5465 = vmax.f32 %v5459, %v5461
    %v5470 = vrot.slane %v5462, 1
    %v5471 = vrot.slane %v5463, 1
    %v5472 = vrot.slane %v5464, 1
    %v5473 = vrot.slane %v5465, 1
    %v5478 = vmax.f32 %v5462, %v5470
    %v5479 = vmax.f32 %v5463, %v5471
    %v5480 = vmax.f32 %v5464, %v5472
    %v5481 = vmax.f32 %v5465, %v5473
    %v5486 = vcombine.low %v5478, %v5479
    %v5488 = vunpack.c.l.s4 1966171168
    %v5489 = vunpack.c.0.s8 %v5488
    %v5490 = vlaneseq
    %v5491 = vshrl.u32 %v5490, 7
    %v5492 = vsub.s32 %v5489, %v5491
    %v5493 = vrot.slane %v5486, %v5492
    %v5495 = vunpack.c.l.s4 1966171168
    %v5496 = vunpack.c.0.s8 %v5495
    %v5497 = vlaneseq
    %v5498 = vshrl.u32 %v5497, 7
    %v5499 = vsub.s32 %v5496, %v5498
    %v5500 = vrot.slane %v5493, %v5499
    %v5501 = vcombine.low %v5480, %v5481
    %v5503 = vunpack.c.l.s4 1966171168
    %v5504 = vunpack.c.0.s8 %v5503
    %v5505 = vlaneseq
    %v5506 = vshrl.u32 %v5505, 7
    %v5507 = vsub.s32 %v5504, %v5506
    %v5508 = vrot.slane %v5501, %v5507
    %v5510 = vunpack.c.l.s4 1966171168
    %v5511 = vunpack.c.0.s8 %v5510
    %v5512 = vlaneseq
    %v5513 = vshrl.u32 %v5512, 7
    %v5514 = vsub.s32 %v5511, %v5513
    %v5515 = vrot.slane %v5508, %v5514
    %vm5518 = vcmp.lt.s32.totalorder %v2260, 256
    %vm5519 = vmand %vm2261, %vm5518
    %5520 = vst.msk [vmem:[#allocation3] ss:$4 sm:$0x3] %vm5519, %v5500
    %s5521 = scalar_lea.vmem [#allocation3], 8
    %5522 = vst.msk [vmem:[%s5521] ss:$4 sm:$0x3] %vm5519, %v5515
    %v5523 = vcombine.high %v5500, %v5500
    %v5524 = vcombine.high %v5515, %v5515
    %s5527 = scalar_lea.vmem [#allocation3], 1
    %5528 = vst.msk [vmem:[%s5527] ss:$4 sm:$0x3] %vm5519, %v5523
    %s5529 = scalar_lea.vmem [#allocation3], 9
    %5530 = vst.msk [vmem:[%s5529] ss:$4 sm:$0x3] %vm5519, %v5524
    %v5531 = vcombine.high %v5478, %v5479
    %v5533 = vunpack.c.l.s4 1966171168
    %v5534 = vunpack.c.0.s8 %v5533
    %v5535 = vlaneseq
    %v5536 = vshrl.u32 %v5535, 7
    %v5537 = vsub.s32 %v5534, %v5536
    %v5538 = vrot.slane %v5531, %v5537
    %v5540 = vunpack.c.l.s4 1966171168
    %v5541 = vunpack.c.0.s8 %v5540
    %v5542 = vlaneseq
    %v5543 = vshrl.u32 %v5542, 7
    %v5544 = vsub.s32 %v5541, %v5543
    %v5545 = vrot.slane %v5538, %v5544
    %v5546 = vcombine.high %v5480, %v5481
    %v5548 = vunpack.c.l.s4 1966171168
    %v5549 = vunpack.c.0.s8 %v5548
    %v5550 = vlaneseq
    %v5551 = vshrl.u32 %v5550, 7
    %v5552 = vsub.s32 %v5549, %v5551
    %v5553 = vrot.slane %v5546, %v5552
    %v5555 = vunpack.c.l.s4 1966171168
    %v5556 = vunpack.c.0.s8 %v5555
    %v5557 = vlaneseq
    %v5558 = vshrl.u32 %v5557, 7
    %v5559 = vsub.s32 %v5556, %v5558
    %v5560 = vrot.slane %v5553, %v5559
    %s5563 = scalar_lea.vmem [#allocation3], 2
    %5564 = vst.msk [vmem:[%s5563] ss:$4 sm:$0x3] %vm5519, %v5545
    %s5565 = scalar_lea.vmem [#allocation3], 10
    %5566 = vst.msk [vmem:[%s5565] ss:$4 sm:$0x3] %vm5519, %v5560
    %v5567 = vcombine.high %v5545, %v5545
    %v5568 = vcombine.high %v5560, %v5560
    %s5571 = scalar_lea.vmem [#allocation3], 3
    %5572 = vst.msk [vmem:[%s5571] ss:$4 sm:$0x3] %vm5519, %v5567
    %s5573 = scalar_lea.vmem [#allocation3], 11
    %5574 = vst.msk [vmem:[%s5573] ss:$4 sm:$0x3] %vm5519, %v5568
    %v5575 = vld [vmem:[#allocation3] ss:$4 sm:$0x3]
    %v5576 = vld [vmem:[%s5521] ss:$4 sm:$0x3]
    %v5577 = vld [vmem:[%s5527] ss:$4 sm:$0x3]
    %v5578 = vld [vmem:[%s5529] ss:$4 sm:$0x3]
    %v5579 = vld [vmem:[%s5563] ss:$4 sm:$0x3]
    %v5580 = vld [vmem:[%s5565] ss:$4 sm:$0x3]
    %v5581 = vld [vmem:[%s5571] ss:$4 sm:$0x3]
    %v5582 = vld [vmem:[%s5573] ss:$4 sm:$0x3]
    %v5585 = vcombine.low %v5575, %v5576
    %v5587 = vunpack.c.l.s4 1966171168
    %v5588 = vunpack.c.0.s8 %v5587
    %v5589 = vlaneseq
    %v5590 = vshrl.u32 %v5589, 7
    %v5591 = vsub.s32 %v5588, %v5590
    %v5592 = vrot.slane %v5585, %v5591
    %v5593 = vcombine.high %v5592, %v5592
    %v5595 = vunpack.c.l.s4 1966171168
    %v5596 = vunpack.c.0.s8 %v5595
    %v5597 = vlaneseq
    %v5598 = vshrl.u32 %v5597, 7
    %v5599 = vsub.s32 %v5596, %v5598
    %v5600 = vrot.slane %v5592, %v5599
    %v5602 = vunpack.c.l.s4 1966171168
    %v5603 = vunpack.c.0.s8 %v5602
    %v5604 = vlaneseq
    %v5605 = vshrl.u32 %v5604, 7
    %v5606 = vsub.s32 %v5603, %v5605
    %v5607 = vrot.slane %v5593, %v5606
    %v5612 = vcombine.low %v5577, %v5578
    %v5614 = vunpack.c.l.s4 1966171168
    %v5615 = vunpack.c.0.s8 %v5614
    %v5616 = vlaneseq
    %v5617 = vshrl.u32 %v5616, 7
    %v5618 = vsub.s32 %v5615, %v5617
    %v5619 = vrot.slane %v5612, %v5618
    %v5620 = vcombine.high %v5619, %v5619
    %v5622 = vunpack.c.l.s4 1966171168
    %v5623 = vunpack.c.0.s8 %v5622
    %v5624 = vlaneseq
    %v5625 = vshrl.u32 %v5624, 7
    %v5626 = vsub.s32 %v5623, %v5625
    %v5627 = vrot.slane %v5619, %v5626
    %v5629 = vunpack.c.l.s4 1966171168
    %v5630 = vunpack.c.0.s8 %v5629
    %v5631 = vlaneseq
    %v5632 = vshrl.u32 %v5631, 7
    %v5633 = vsub.s32 %v5630, %v5632
    %v5634 = vrot.slane %v5620, %v5633
    %v5639 = vcombine.low %v5579, %v5580
    %v5641 = vunpack.c.l.s4 1966171168
    %v5642 = vunpack.c.0.s8 %v5641
    %v5643 = vlaneseq
    %v5644 = vshrl.u32 %v5643, 7
    %v5645 = vsub.s32 %v5642, %v5644
    %v5646 = vrot.slane %v5639, %v5645
    %v5647 = vcombine.high %v5646, %v5646
    %v5649 = vunpack.c.l.s4 1966171168
    %v5650 = vunpack.c.0.s8 %v5649
    %v5651 = vlaneseq
    %v5652 = vshrl.u32 %v5651, 7
    %v5653 = vsub.s32 %v5650, %v5652
    %v5654 = vrot.slane %v5646, %v5653
    %v5656 = vunpack.c.l.s4 1966171168
    %v5657 = vunpack.c.0.s8 %v5656
    %v5658 = vlaneseq
    %v5659 = vshrl.u32 %v5658, 7
    %v5660 = vsub.s32 %v5657, %v5659
    %v5661 = vrot.slane %v5647, %v5660
    %v5666 = vcombine.low %v5581, %v5582
    %v5668 = vunpack.c.l.s4 1966171168
    %v5669 = vunpack.c.0.s8 %v5668
    %v5670 = vlaneseq
    %v5671 = vshrl.u32 %v5670, 7
    %v5672 = vsub.s32 %v5669, %v5671
    %v5673 = vrot.slane %v5666, %v5672
    %v5674 = vcombine.high %v5673, %v5673
    %v5676 = vunpack.c.l.s4 1966171168
    %v5677 = vunpack.c.0.s8 %v5676
    %v5678 = vlaneseq
    %v5679 = vshrl.u32 %v5678, 7
    %v5680 = vsub.s32 %v5677, %v5679
    %v5681 = vrot.slane %v5673, %v5680
    %v5683 = vunpack.c.l.s4 1966171168
    %v5684 = vunpack.c.0.s8 %v5683
    %v5685 = vlaneseq
    %v5686 = vshrl.u32 %v5685, 7
    %v5687 = vsub.s32 %v5684, %v5686
    %v5688 = vrot.slane %v5674, %v5687
    %v5691 = vld [vmem:[%s7] sm:$0xff]
    %v5692 = vld [vmem:[%s7 + $0x8] sm:$0xff]
    %v5693 = vld [vmem:[%s7 + $0x10] sm:$0xff]
    %v5694 = vld [vmem:[%s7 + $0x18] sm:$0xff]
    %v5695 = vld [vmem:[%s7 + $0x20] sm:$0xff]
    %v5696 = vld [vmem:[%s7 + $0x28] sm:$0xff]
    %v5697 = vld [vmem:[%s7 + $0x30] sm:$0xff]
    %v5698 = vld [vmem:[%s7 + $0x38] sm:$0xff]
    %v5699 = vld [vmem:[%s7 + $0x40] sm:$0xff]
    %v5700 = vld [vmem:[%s7 + $0x48] sm:$0xff]
    %v5701 = vld [vmem:[%s7 + $0x50] sm:$0xff]
    %v5702 = vld [vmem:[%s7 + $0x58] sm:$0xff]
    %v5703 = vld [vmem:[%s7 + $0x60] sm:$0xff]
    %v5704 = vld [vmem:[%s7 + $0x68] sm:$0xff]
    %v5705 = vld [vmem:[%s7 + $0x70] sm:$0xff]
    %v5706 = vld [vmem:[%s7 + $0x78] sm:$0xff]
    %v5707 = vld [vmem:[%s7 + $0x80] sm:$0xff]
    %v5708 = vld [vmem:[%s7 + $0x88] sm:$0xff]
    %v5709 = vld [vmem:[%s7 + $0x90] sm:$0xff]
    %v5710 = vld [vmem:[%s7 + $0x98] sm:$0xff]
    %v5711 = vld [vmem:[%s7 + $0xa0] sm:$0xff]
    %v5712 = vld [vmem:[%s7 + $0xa8] sm:$0xff]
    %v5713 = vld [vmem:[%s7 + $0xb0] sm:$0xff]
    %v5714 = vld [vmem:[%s7 + $0xb8] sm:$0xff]
    %v5715 = vld [vmem:[%s7 + $0xc0] sm:$0xff]
    %v5716 = vld [vmem:[%s7 + $0xc8] sm:$0xff]
    %v5717 = vld [vmem:[%s7 + $0xd0] sm:$0xff]
    %v5718 = vld [vmem:[%s7 + $0xd8] sm:$0xff]
    %v5719 = vld [vmem:[%s7 + $0xe0] sm:$0xff]
    %v5720 = vld [vmem:[%s7 + $0xe8] sm:$0xff]
    %v5721 = vld [vmem:[%s7 + $0xf0] sm:$0xff]
    %v5722 = vld [vmem:[%s7 + $0xf8] sm:$0xff]
    %v5723 = vld [vmem:[%s7 + $0x100] sm:$0xff]
    %v5724 = vld [vmem:[%s7 + $0x108] sm:$0xff]
    %v5725 = vld [vmem:[%s7 + $0x110] sm:$0xff]
    %v5726 = vld [vmem:[%s7 + $0x118] sm:$0xff]
    %v5727 = vld [vmem:[%s7 + $0x120] sm:$0xff]
    %v5728 = vld [vmem:[%s7 + $0x128] sm:$0xff]
    %v5729 = vld [vmem:[%s7 + $0x130] sm:$0xff]
    %v5730 = vld [vmem:[%s7 + $0x138] sm:$0xff]
    %v5731 = vld [vmem:[%s7 + $0x140] sm:$0xff]
    %v5732 = vld [vmem:[%s7 + $0x148] sm:$0xff]
    %v5733 = vld [vmem:[%s7 + $0x150] sm:$0xff]
    %v5734 = vld [vmem:[%s7 + $0x158] sm:$0xff]
    %v5735 = vld [vmem:[%s7 + $0x160] sm:$0xff]
    %v5736 = vld [vmem:[%s7 + $0x168] sm:$0xff]
    %v5737 = vld [vmem:[%s7 + $0x170] sm:$0xff]
    %v5738 = vld [vmem:[%s7 + $0x178] sm:$0xff]
    %v5739 = vld [vmem:[%s7 + $0x180] sm:$0xff]
    %v5740 = vld [vmem:[%s7 + $0x188] sm:$0xff]
    %v5741 = vld [vmem:[%s7 + $0x190] sm:$0xff]
    %v5742 = vld [vmem:[%s7 + $0x198] sm:$0xff]
    %v5743 = vld [vmem:[%s7 + $0x1a0] sm:$0xff]
    %v5744 = vld [vmem:[%s7 + $0x1a8] sm:$0xff]
    %v5745 = vld [vmem:[%s7 + $0x1b0] sm:$0xff]
    %v5746 = vld [vmem:[%s7 + $0x1b8] sm:$0xff]
    %v5747 = vld [vmem:[%s7 + $0x1c0] sm:$0xff]
    %v5748 = vld [vmem:[%s7 + $0x1c8] sm:$0xff]
    %v5749 = vld [vmem:[%s7 + $0x1d0] sm:$0xff]
    %v5750 = vld [vmem:[%s7 + $0x1d8] sm:$0xff]
    %v5751 = vld [vmem:[%s7 + $0x1e0] sm:$0xff]
    %v5752 = vld [vmem:[%s7 + $0x1e8] sm:$0xff]
    %v5753 = vld [vmem:[%s7 + $0x1f0] sm:$0xff]
    %v5754 = vld [vmem:[%s7 + $0x1f8] sm:$0xff]
    %v5755 = vld [vmem:[%s7 + $0x200] sm:$0xff]
    %v5756 = vld [vmem:[%s7 + $0x208] sm:$0xff]
    %v5757 = vld [vmem:[%s7 + $0x210] sm:$0xff]
    %v5758 = vld [vmem:[%s7 + $0x218] sm:$0xff]
    %v5759 = vld [vmem:[%s7 + $0x220] sm:$0xff]
    %v5760 = vld [vmem:[%s7 + $0x228] sm:$0xff]
    %v5761 = vld [vmem:[%s7 + $0x230] sm:$0xff]
    %v5762 = vld [vmem:[%s7 + $0x238] sm:$0xff]
    %v5763 = vld [vmem:[%s7 + $0x240] sm:$0xff]
    %v5764 = vld [vmem:[%s7 + $0x248] sm:$0xff]
    %v5765 = vld [vmem:[%s7 + $0x250] sm:$0xff]
    %v5766 = vld [vmem:[%s7 + $0x258] sm:$0xff]
    %v5767 = vld [vmem:[%s7 + $0x260] sm:$0xff]
    %v5768 = vld [vmem:[%s7 + $0x268] sm:$0xff]
    %v5769 = vld [vmem:[%s7 + $0x270] sm:$0xff]
    %v5770 = vld [vmem:[%s7 + $0x278] sm:$0xff]
    %v5771 = vld [vmem:[%s7 + $0x280] sm:$0xff]
    %v5772 = vld [vmem:[%s7 + $0x288] sm:$0xff]
    %v5773 = vld [vmem:[%s7 + $0x290] sm:$0xff]
    %v5774 = vld [vmem:[%s7 + $0x298] sm:$0xff]
    %v5775 = vld [vmem:[%s7 + $0x2a0] sm:$0xff]
    %v5776 = vld [vmem:[%s7 + $0x2a8] sm:$0xff]
    %v5777 = vld [vmem:[%s7 + $0x2b0] sm:$0xff]
    %v5778 = vld [vmem:[%s7 + $0x2b8] sm:$0xff]
    %v5779 = vld [vmem:[%s7 + $0x2c0] sm:$0xff]
    %v5780 = vld [vmem:[%s7 + $0x2c8] sm:$0xff]
    %v5781 = vld [vmem:[%s7 + $0x2d0] sm:$0xff]
    %v5782 = vld [vmem:[%s7 + $0x2d8] sm:$0xff]
    %v5783 = vld [vmem:[%s7 + $0x2e0] sm:$0xff]
    %v5784 = vld [vmem:[%s7 + $0x2e8] sm:$0xff]
    %v5785 = vld [vmem:[%s7 + $0x2f0] sm:$0xff]
    %v5786 = vld [vmem:[%s7 + $0x2f8] sm:$0xff]
    %v5787 = vld [vmem:[%s7 + $0x300] sm:$0xff]
    %v5788 = vld [vmem:[%s7 + $0x308] sm:$0xff]
    %v5789 = vld [vmem:[%s7 + $0x310] sm:$0xff]
    %v5790 = vld [vmem:[%s7 + $0x318] sm:$0xff]
    %v5791 = vld [vmem:[%s7 + $0x320] sm:$0xff]
    %v5792 = vld [vmem:[%s7 + $0x328] sm:$0xff]
    %v5793 = vld [vmem:[%s7 + $0x330] sm:$0xff]
    %v5794 = vld [vmem:[%s7 + $0x338] sm:$0xff]
    %v5795 = vld [vmem:[%s7 + $0x340] sm:$0xff]
    %v5796 = vld [vmem:[%s7 + $0x348] sm:$0xff]
    %v5797 = vld [vmem:[%s7 + $0x350] sm:$0xff]
    %v5798 = vld [vmem:[%s7 + $0x358] sm:$0xff]
    %v5799 = vld [vmem:[%s7 + $0x360] sm:$0xff]
    %v5800 = vld [vmem:[%s7 + $0x368] sm:$0xff]
    %v5801 = vld [vmem:[%s7 + $0x370] sm:$0xff]
    %v5802 = vld [vmem:[%s7 + $0x378] sm:$0xff]
    %v5803 = vld [vmem:[%s7 + $0x380] sm:$0xff]
    %v5804 = vld [vmem:[%s7 + $0x388] sm:$0xff]
    %v5805 = vld [vmem:[%s7 + $0x390] sm:$0xff]
    %v5806 = vld [vmem:[%s7 + $0x398] sm:$0xff]
    %v5807 = vld [vmem:[%s7 + $0x3a0] sm:$0xff]
    %v5808 = vld [vmem:[%s7 + $0x3a8] sm:$0xff]
    %v5809 = vld [vmem:[%s7 + $0x3b0] sm:$0xff]
    %v5810 = vld [vmem:[%s7 + $0x3b8] sm:$0xff]
    %v5811 = vld [vmem:[%s7 + $0x3c0] sm:$0xff]
    %v5812 = vld [vmem:[%s7 + $0x3c8] sm:$0xff]
    %v5813 = vld [vmem:[%s7 + $0x3d0] sm:$0xff]
    %v5814 = vld [vmem:[%s7 + $0x3d8] sm:$0xff]
    %v5815 = vld [vmem:[%s7 + $0x3e0] sm:$0xff]
    %v5816 = vld [vmem:[%s7 + $0x3e8] sm:$0xff]
    %v5817 = vld [vmem:[%s7 + $0x3f0] sm:$0xff]
    %v5818 = vld [vmem:[%s7 + $0x3f8] sm:$0xff]
    %v5819 = vld [vmem:[%s7 + $0x400] sm:$0xff]
    %v5820 = vld [vmem:[%s7 + $0x408] sm:$0xff]
    %v5821 = vld [vmem:[%s7 + $0x410] sm:$0xff]
    %v5822 = vld [vmem:[%s7 + $0x418] sm:$0xff]
    %v5823 = vld [vmem:[%s7 + $0x420] sm:$0xff]
    %v5824 = vld [vmem:[%s7 + $0x428] sm:$0xff]
    %v5825 = vld [vmem:[%s7 + $0x430] sm:$0xff]
    %v5826 = vld [vmem:[%s7 + $0x438] sm:$0xff]
    %v5827 = vld [vmem:[%s7 + $0x440] sm:$0xff]
    %v5828 = vld [vmem:[%s7 + $0x448] sm:$0xff]
    %v5829 = vld [vmem:[%s7 + $0x450] sm:$0xff]
    %v5830 = vld [vmem:[%s7 + $0x458] sm:$0xff]
    %v5831 = vld [vmem:[%s7 + $0x460] sm:$0xff]
    %v5832 = vld [vmem:[%s7 + $0x468] sm:$0xff]
    %v5833 = vld [vmem:[%s7 + $0x470] sm:$0xff]
    %v5834 = vld [vmem:[%s7 + $0x478] sm:$0xff]
    %v5835 = vld [vmem:[%s7 + $0x480] sm:$0xff]
    %v5836 = vld [vmem:[%s7 + $0x488] sm:$0xff]
    %v5837 = vld [vmem:[%s7 + $0x490] sm:$0xff]
    %v5838 = vld [vmem:[%s7 + $0x498] sm:$0xff]
    %v5839 = vld [vmem:[%s7 + $0x4a0] sm:$0xff]
    %v5840 = vld [vmem:[%s7 + $0x4a8] sm:$0xff]
    %v5841 = vld [vmem:[%s7 + $0x4b0] sm:$0xff]
    %v5842 = vld [vmem:[%s7 + $0x4b8] sm:$0xff]
    %v5843 = vld [vmem:[%s7 + $0x4c0] sm:$0xff]
    %v5844 = vld [vmem:[%s7 + $0x4c8] sm:$0xff]
    %v5845 = vld [vmem:[%s7 + $0x4d0] sm:$0xff]
    %v5846 = vld [vmem:[%s7 + $0x4d8] sm:$0xff]
    %v5847 = vld [vmem:[%s7 + $0x4e0] sm:$0xff]
    %v5848 = vld [vmem:[%s7 + $0x4e8] sm:$0xff]
    %v5849 = vld [vmem:[%s7 + $0x4f0] sm:$0xff]
    %v5850 = vld [vmem:[%s7 + $0x4f8] sm:$0xff]
    %v5851 = vld [vmem:[%s7 + $0x500] sm:$0xff]
    %v5852 = vld [vmem:[%s7 + $0x508] sm:$0xff]
    %v5853 = vld [vmem:[%s7 + $0x510] sm:$0xff]
    %v5854 = vld [vmem:[%s7 + $0x518] sm:$0xff]
    %v5855 = vld [vmem:[%s7 + $0x520] sm:$0xff]
    %v5856 = vld [vmem:[%s7 + $0x528] sm:$0xff]
    %v5857 = vld [vmem:[%s7 + $0x530] sm:$0xff]
    %v5858 = vld [vmem:[%s7 + $0x538] sm:$0xff]
    %v5859 = vld [vmem:[%s7 + $0x540] sm:$0xff]
    %v5860 = vld [vmem:[%s7 + $0x548] sm:$0xff]
    %v5861 = vld [vmem:[%s7 + $0x550] sm:$0xff]
    %v5862 = vld [vmem:[%s7 + $0x558] sm:$0xff]
    %v5863 = vld [vmem:[%s7 + $0x560] sm:$0xff]
    %v5864 = vld [vmem:[%s7 + $0x568] sm:$0xff]
    %v5865 = vld [vmem:[%s7 + $0x570] sm:$0xff]
    %v5866 = vld [vmem:[%s7 + $0x578] sm:$0xff]
    %v5867 = vld [vmem:[%s7 + $0x580] sm:$0xff]
    %v5868 = vld [vmem:[%s7 + $0x588] sm:$0xff]
    %v5869 = vld [vmem:[%s7 + $0x590] sm:$0xff]
    %v5870 = vld [vmem:[%s7 + $0x598] sm:$0xff]
    %v5871 = vld [vmem:[%s7 + $0x5a0] sm:$0xff]
    %v5872 = vld [vmem:[%s7 + $0x5a8] sm:$0xff]
    %v5873 = vld [vmem:[%s7 + $0x5b0] sm:$0xff]
    %v5874 = vld [vmem:[%s7 + $0x5b8] sm:$0xff]
    %v5875 = vld [vmem:[%s7 + $0x5c0] sm:$0xff]
    %v5876 = vld [vmem:[%s7 + $0x5c8] sm:$0xff]
    %v5877 = vld [vmem:[%s7 + $0x5d0] sm:$0xff]
    %v5878 = vld [vmem:[%s7 + $0x5d8] sm:$0xff]
    %v5879 = vld [vmem:[%s7 + $0x5e0] sm:$0xff]
    %v5880 = vld [vmem:[%s7 + $0x5e8] sm:$0xff]
    %v5881 = vld [vmem:[%s7 + $0x5f0] sm:$0xff]
    %v5882 = vld [vmem:[%s7 + $0x5f8] sm:$0xff]
    %v5883 = vld [vmem:[%s7 + $0x600] sm:$0xff]
    %v5884 = vld [vmem:[%s7 + $0x608] sm:$0xff]
    %v5885 = vld [vmem:[%s7 + $0x610] sm:$0xff]
    %v5886 = vld [vmem:[%s7 + $0x618] sm:$0xff]
    %v5887 = vld [vmem:[%s7 + $0x620] sm:$0xff]
    %v5888 = vld [vmem:[%s7 + $0x628] sm:$0xff]
    %v5889 = vld [vmem:[%s7 + $0x630] sm:$0xff]
    %v5890 = vld [vmem:[%s7 + $0x638] sm:$0xff]
    %v5891 = vld [vmem:[%s7 + $0x640] sm:$0xff]
    %v5892 = vld [vmem:[%s7 + $0x648] sm:$0xff]
    %v5893 = vld [vmem:[%s7 + $0x650] sm:$0xff]
    %v5894 = vld [vmem:[%s7 + $0x658] sm:$0xff]
    %v5895 = vld [vmem:[%s7 + $0x660] sm:$0xff]
    %v5896 = vld [vmem:[%s7 + $0x668] sm:$0xff]
    %v5897 = vld [vmem:[%s7 + $0x670] sm:$0xff]
    %v5898 = vld [vmem:[%s7 + $0x678] sm:$0xff]
    %v5899 = vld [vmem:[%s7 + $0x680] sm:$0xff]
    %v5900 = vld [vmem:[%s7 + $0x688] sm:$0xff]
    %v5901 = vld [vmem:[%s7 + $0x690] sm:$0xff]
    %v5902 = vld [vmem:[%s7 + $0x698] sm:$0xff]
    %v5903 = vld [vmem:[%s7 + $0x6a0] sm:$0xff]
    %v5904 = vld [vmem:[%s7 + $0x6a8] sm:$0xff]
    %v5905 = vld [vmem:[%s7 + $0x6b0] sm:$0xff]
    %v5906 = vld [vmem:[%s7 + $0x6b8] sm:$0xff]
    %v5907 = vld [vmem:[%s7 + $0x6c0] sm:$0xff]
    %v5908 = vld [vmem:[%s7 + $0x6c8] sm:$0xff]
    %v5909 = vld [vmem:[%s7 + $0x6d0] sm:$0xff]
    %v5910 = vld [vmem:[%s7 + $0x6d8] sm:$0xff]
    %v5911 = vld [vmem:[%s7 + $0x6e0] sm:$0xff]
    %v5912 = vld [vmem:[%s7 + $0x6e8] sm:$0xff]
    %v5913 = vld [vmem:[%s7 + $0x6f0] sm:$0xff]
    %v5914 = vld [vmem:[%s7 + $0x6f8] sm:$0xff]
    %v5915 = vld [vmem:[%s7 + $0x700] sm:$0xff]
    %v5916 = vld [vmem:[%s7 + $0x708] sm:$0xff]
    %v5917 = vld [vmem:[%s7 + $0x710] sm:$0xff]
    %v5918 = vld [vmem:[%s7 + $0x718] sm:$0xff]
    %v5919 = vld [vmem:[%s7 + $0x720] sm:$0xff]
    %v5920 = vld [vmem:[%s7 + $0x728] sm:$0xff]
    %v5921 = vld [vmem:[%s7 + $0x730] sm:$0xff]
    %v5922 = vld [vmem:[%s7 + $0x738] sm:$0xff]
    %v5923 = vld [vmem:[%s7 + $0x740] sm:$0xff]
    %v5924 = vld [vmem:[%s7 + $0x748] sm:$0xff]
    %v5925 = vld [vmem:[%s7 + $0x750] sm:$0xff]
    %v5926 = vld [vmem:[%s7 + $0x758] sm:$0xff]
    %v5927 = vld [vmem:[%s7 + $0x760] sm:$0xff]
    %v5928 = vld [vmem:[%s7 + $0x768] sm:$0xff]
    %v5929 = vld [vmem:[%s7 + $0x770] sm:$0xff]
    %v5930 = vld [vmem:[%s7 + $0x778] sm:$0xff]
    %v5931 = vld [vmem:[%s7 + $0x780] sm:$0xff]
    %v5932 = vld [vmem:[%s7 + $0x788] sm:$0xff]
    %v5933 = vld [vmem:[%s7 + $0x790] sm:$0xff]
    %v5934 = vld [vmem:[%s7 + $0x798] sm:$0xff]
    %v5935 = vld [vmem:[%s7 + $0x7a0] sm:$0xff]
    %v5936 = vld [vmem:[%s7 + $0x7a8] sm:$0xff]
    %v5937 = vld [vmem:[%s7 + $0x7b0] sm:$0xff]
    %v5938 = vld [vmem:[%s7 + $0x7b8] sm:$0xff]
    %v5939 = vld [vmem:[%s7 + $0x7c0] sm:$0xff]
    %v5940 = vld [vmem:[%s7 + $0x7c8] sm:$0xff]
    %v5941 = vld [vmem:[%s7 + $0x7d0] sm:$0xff]
    %v5942 = vld [vmem:[%s7 + $0x7d8] sm:$0xff]
    %v5943 = vld [vmem:[%s7 + $0x7e0] sm:$0xff]
    %v5944 = vld [vmem:[%s7 + $0x7e8] sm:$0xff]
    %v5945 = vld [vmem:[%s7 + $0x7f0] sm:$0xff]
    %v5946 = vld [vmem:[%s7 + $0x7f8] sm:$0xff]
    %v5947 = vld [vmem:[%s7 + $0x800] sm:$0xff]
    %v5948 = vld [vmem:[%s7 + $0x808] sm:$0xff]
    %v5949 = vld [vmem:[%s7 + $0x810] sm:$0xff]
    %v5950 = vld [vmem:[%s7 + $0x818] sm:$0xff]
    %v5951 = vld [vmem:[%s7 + $0x820] sm:$0xff]
    %v5952 = vld [vmem:[%s7 + $0x828] sm:$0xff]
    %v5953 = vld [vmem:[%s7 + $0x830] sm:$0xff]
    %v5954 = vld [vmem:[%s7 + $0x838] sm:$0xff]
    %v5955 = vld [vmem:[%s7 + $0x840] sm:$0xff]
    %v5956 = vld [vmem:[%s7 + $0x848] sm:$0xff]
    %v5957 = vld [vmem:[%s7 + $0x850] sm:$0xff]
    %v5958 = vld [vmem:[%s7 + $0x858] sm:$0xff]
    %v5959 = vld [vmem:[%s7 + $0x860] sm:$0xff]
    %v5960 = vld [vmem:[%s7 + $0x868] sm:$0xff]
    %v5961 = vld [vmem:[%s7 + $0x870] sm:$0xff]
    %v5962 = vld [vmem:[%s7 + $0x878] sm:$0xff]
    %v5963 = vld [vmem:[%s7 + $0x880] sm:$0xff]
    %v5964 = vld [vmem:[%s7 + $0x888] sm:$0xff]
    %v5965 = vld [vmem:[%s7 + $0x890] sm:$0xff]
    %v5966 = vld [vmem:[%s7 + $0x898] sm:$0xff]
    %v5967 = vld [vmem:[%s7 + $0x8a0] sm:$0xff]
    %v5968 = vld [vmem:[%s7 + $0x8a8] sm:$0xff]
    %v5969 = vld [vmem:[%s7 + $0x8b0] sm:$0xff]
    %v5970 = vld [vmem:[%s7 + $0x8b8] sm:$0xff]
    %v5971 = vld [vmem:[%s7 + $0x8c0] sm:$0xff]
    %v5972 = vld [vmem:[%s7 + $0x8c8] sm:$0xff]
    %v5973 = vld [vmem:[%s7 + $0x8d0] sm:$0xff]
    %v5974 = vld [vmem:[%s7 + $0x8d8] sm:$0xff]
    %v5975 = vld [vmem:[%s7 + $0x8e0] sm:$0xff]
    %v5976 = vld [vmem:[%s7 + $0x8e8] sm:$0xff]
    %v5977 = vld [vmem:[%s7 + $0x8f0] sm:$0xff]
    %v5978 = vld [vmem:[%s7 + $0x8f8] sm:$0xff]
    %v5979 = vld [vmem:[%s7 + $0x900] sm:$0xff]
    %v5980 = vld [vmem:[%s7 + $0x908] sm:$0xff]
    %v5981 = vld [vmem:[%s7 + $0x910] sm:$0xff]
    %v5982 = vld [vmem:[%s7 + $0x918] sm:$0xff]
    %v5983 = vld [vmem:[%s7 + $0x920] sm:$0xff]
    %v5984 = vld [vmem:[%s7 + $0x928] sm:$0xff]
    %v5985 = vld [vmem:[%s7 + $0x930] sm:$0xff]
    %v5986 = vld [vmem:[%s7 + $0x938] sm:$0xff]
    %v5987 = vld [vmem:[%s7 + $0x940] sm:$0xff]
    %v5988 = vld [vmem:[%s7 + $0x948] sm:$0xff]
    %v5989 = vld [vmem:[%s7 + $0x950] sm:$0xff]
    %v5990 = vld [vmem:[%s7 + $0x958] sm:$0xff]
    %v5991 = vld [vmem:[%s7 + $0x960] sm:$0xff]
    %v5992 = vld [vmem:[%s7 + $0x968] sm:$0xff]
    %v5993 = vld [vmem:[%s7 + $0x970] sm:$0xff]
    %v5994 = vld [vmem:[%s7 + $0x978] sm:$0xff]
    %v5995 = vld [vmem:[%s7 + $0x980] sm:$0xff]
    %v5996 = vld [vmem:[%s7 + $0x988] sm:$0xff]
    %v5997 = vld [vmem:[%s7 + $0x990] sm:$0xff]
    %v5998 = vld [vmem:[%s7 + $0x998] sm:$0xff]
    %v5999 = vld [vmem:[%s7 + $0x9a0] sm:$0xff]
    %v6000 = vld [vmem:[%s7 + $0x9a8] sm:$0xff]
    %v6001 = vld [vmem:[%s7 + $0x9b0] sm:$0xff]
    %v6002 = vld [vmem:[%s7 + $0x9b8] sm:$0xff]
    %v6003 = vld [vmem:[%s7 + $0x9c0] sm:$0xff]
    %v6004 = vld [vmem:[%s7 + $0x9c8] sm:$0xff]
    %v6005 = vld [vmem:[%s7 + $0x9d0] sm:$0xff]
    %v6006 = vld [vmem:[%s7 + $0x9d8] sm:$0xff]
    %v6007 = vld [vmem:[%s7 + $0x9e0] sm:$0xff]
    %v6008 = vld [vmem:[%s7 + $0x9e8] sm:$0xff]
    %v6009 = vld [vmem:[%s7 + $0x9f0] sm:$0xff]
    %v6010 = vld [vmem:[%s7 + $0x9f8] sm:$0xff]
    %v6011 = vld [vmem:[%s7 + $0xa00] sm:$0xff]
    %v6012 = vld [vmem:[%s7 + $0xa08] sm:$0xff]
    %v6013 = vld [vmem:[%s7 + $0xa10] sm:$0xff]
    %v6014 = vld [vmem:[%s7 + $0xa18] sm:$0xff]
    %v6015 = vld [vmem:[%s7 + $0xa20] sm:$0xff]
    %v6016 = vld [vmem:[%s7 + $0xa28] sm:$0xff]
    %v6017 = vld [vmem:[%s7 + $0xa30] sm:$0xff]
    %v6018 = vld [vmem:[%s7 + $0xa38] sm:$0xff]
    %v6019 = vld [vmem:[%s7 + $0xa40] sm:$0xff]
    %v6020 = vld [vmem:[%s7 + $0xa48] sm:$0xff]
    %v6021 = vld [vmem:[%s7 + $0xa50] sm:$0xff]
    %v6022 = vld [vmem:[%s7 + $0xa58] sm:$0xff]
    %v6023 = vld [vmem:[%s7 + $0xa60] sm:$0xff]
    %v6024 = vld [vmem:[%s7 + $0xa68] sm:$0xff]
    %v6025 = vld [vmem:[%s7 + $0xa70] sm:$0xff]
    %v6026 = vld [vmem:[%s7 + $0xa78] sm:$0xff]
    %v6027 = vld [vmem:[%s7 + $0xa80] sm:$0xff]
    %v6028 = vld [vmem:[%s7 + $0xa88] sm:$0xff]
    %v6029 = vld [vmem:[%s7 + $0xa90] sm:$0xff]
    %v6030 = vld [vmem:[%s7 + $0xa98] sm:$0xff]
    %v6031 = vld [vmem:[%s7 + $0xaa0] sm:$0xff]
    %v6032 = vld [vmem:[%s7 + $0xaa8] sm:$0xff]
    %v6033 = vld [vmem:[%s7 + $0xab0] sm:$0xff]
    %v6034 = vld [vmem:[%s7 + $0xab8] sm:$0xff]
    %v6035 = vld [vmem:[%s7 + $0xac0] sm:$0xff]
    %v6036 = vld [vmem:[%s7 + $0xac8] sm:$0xff]
    %v6037 = vld [vmem:[%s7 + $0xad0] sm:$0xff]
    %v6038 = vld [vmem:[%s7 + $0xad8] sm:$0xff]
    %v6039 = vld [vmem:[%s7 + $0xae0] sm:$0xff]
    %v6040 = vld [vmem:[%s7 + $0xae8] sm:$0xff]
    %v6041 = vld [vmem:[%s7 + $0xaf0] sm:$0xff]
    %v6042 = vld [vmem:[%s7 + $0xaf8] sm:$0xff]
    %v6043 = vld [vmem:[%s7 + $0xb00] sm:$0xff]
    %v6044 = vld [vmem:[%s7 + $0xb08] sm:$0xff]
    %v6045 = vld [vmem:[%s7 + $0xb10] sm:$0xff]
    %v6046 = vld [vmem:[%s7 + $0xb18] sm:$0xff]
    %v6047 = vld [vmem:[%s7 + $0xb20] sm:$0xff]
    %v6048 = vld [vmem:[%s7 + $0xb28] sm:$0xff]
    %v6049 = vld [vmem:[%s7 + $0xb30] sm:$0xff]
    %v6050 = vld [vmem:[%s7 + $0xb38] sm:$0xff]
    %v6051 = vld [vmem:[%s7 + $0xb40] sm:$0xff]
    %v6052 = vld [vmem:[%s7 + $0xb48] sm:$0xff]
    %v6053 = vld [vmem:[%s7 + $0xb50] sm:$0xff]
    %v6054 = vld [vmem:[%s7 + $0xb58] sm:$0xff]
    %v6055 = vld [vmem:[%s7 + $0xb60] sm:$0xff]
    %v6056 = vld [vmem:[%s7 + $0xb68] sm:$0xff]
    %v6057 = vld [vmem:[%s7 + $0xb70] sm:$0xff]
    %v6058 = vld [vmem:[%s7 + $0xb78] sm:$0xff]
    %v6059 = vld [vmem:[%s7 + $0xb80] sm:$0xff]
    %v6060 = vld [vmem:[%s7 + $0xb88] sm:$0xff]
    %v6061 = vld [vmem:[%s7 + $0xb90] sm:$0xff]
    %v6062 = vld [vmem:[%s7 + $0xb98] sm:$0xff]
    %v6063 = vld [vmem:[%s7 + $0xba0] sm:$0xff]
    %v6064 = vld [vmem:[%s7 + $0xba8] sm:$0xff]
    %v6065 = vld [vmem:[%s7 + $0xbb0] sm:$0xff]
    %v6066 = vld [vmem:[%s7 + $0xbb8] sm:$0xff]
    %v6067 = vld [vmem:[%s7 + $0xbc0] sm:$0xff]
    %v6068 = vld [vmem:[%s7 + $0xbc8] sm:$0xff]
    %v6069 = vld [vmem:[%s7 + $0xbd0] sm:$0xff]
    %v6070 = vld [vmem:[%s7 + $0xbd8] sm:$0xff]
    %v6071 = vld [vmem:[%s7 + $0xbe0] sm:$0xff]
    %v6072 = vld [vmem:[%s7 + $0xbe8] sm:$0xff]
    %v6073 = vld [vmem:[%s7 + $0xbf0] sm:$0xff]
    %v6074 = vld [vmem:[%s7 + $0xbf8] sm:$0xff]
    %v6075 = vld [vmem:[%s7 + $0xc00] sm:$0xff]
    %v6076 = vld [vmem:[%s7 + $0xc08] sm:$0xff]
    %v6077 = vld [vmem:[%s7 + $0xc10] sm:$0xff]
    %v6078 = vld [vmem:[%s7 + $0xc18] sm:$0xff]
    %v6079 = vld [vmem:[%s7 + $0xc20] sm:$0xff]
    %v6080 = vld [vmem:[%s7 + $0xc28] sm:$0xff]
    %v6081 = vld [vmem:[%s7 + $0xc30] sm:$0xff]
    %v6082 = vld [vmem:[%s7 + $0xc38] sm:$0xff]
    %v6083 = vld [vmem:[%s7 + $0xc40] sm:$0xff]
    %v6084 = vld [vmem:[%s7 + $0xc48] sm:$0xff]
    %v6085 = vld [vmem:[%s7 + $0xc50] sm:$0xff]
    %v6086 = vld [vmem:[%s7 + $0xc58] sm:$0xff]
    %v6087 = vld [vmem:[%s7 + $0xc60] sm:$0xff]
    %v6088 = vld [vmem:[%s7 + $0xc68] sm:$0xff]
    %v6089 = vld [vmem:[%s7 + $0xc70] sm:$0xff]
    %v6090 = vld [vmem:[%s7 + $0xc78] sm:$0xff]
    %v6091 = vld [vmem:[%s7 + $0xc80] sm:$0xff]
    %v6092 = vld [vmem:[%s7 + $0xc88] sm:$0xff]
    %v6093 = vld [vmem:[%s7 + $0xc90] sm:$0xff]
    %v6094 = vld [vmem:[%s7 + $0xc98] sm:$0xff]
    %v6095 = vld [vmem:[%s7 + $0xca0] sm:$0xff]
    %v6096 = vld [vmem:[%s7 + $0xca8] sm:$0xff]
    %v6097 = vld [vmem:[%s7 + $0xcb0] sm:$0xff]
    %v6098 = vld [vmem:[%s7 + $0xcb8] sm:$0xff]
    %v6099 = vld [vmem:[%s7 + $0xcc0] sm:$0xff]
    %v6100 = vld [vmem:[%s7 + $0xcc8] sm:$0xff]
    %v6101 = vld [vmem:[%s7 + $0xcd0] sm:$0xff]
    %v6102 = vld [vmem:[%s7 + $0xcd8] sm:$0xff]
    %v6103 = vld [vmem:[%s7 + $0xce0] sm:$0xff]
    %v6104 = vld [vmem:[%s7 + $0xce8] sm:$0xff]
    %v6105 = vld [vmem:[%s7 + $0xcf0] sm:$0xff]
    %v6106 = vld [vmem:[%s7 + $0xcf8] sm:$0xff]
    %v6107 = vld [vmem:[%s7 + $0xd00] sm:$0xff]
    %v6108 = vld [vmem:[%s7 + $0xd08] sm:$0xff]
    %v6109 = vld [vmem:[%s7 + $0xd10] sm:$0xff]
    %v6110 = vld [vmem:[%s7 + $0xd18] sm:$0xff]
    %v6111 = vld [vmem:[%s7 + $0xd20] sm:$0xff]
    %v6112 = vld [vmem:[%s7 + $0xd28] sm:$0xff]
    %v6113 = vld [vmem:[%s7 + $0xd30] sm:$0xff]
    %v6114 = vld [vmem:[%s7 + $0xd38] sm:$0xff]
    %v6115 = vld [vmem:[%s7 + $0xd40] sm:$0xff]
    %v6116 = vld [vmem:[%s7 + $0xd48] sm:$0xff]
    %v6117 = vld [vmem:[%s7 + $0xd50] sm:$0xff]
    %v6118 = vld [vmem:[%s7 + $0xd58] sm:$0xff]
    %v6119 = vld [vmem:[%s7 + $0xd60] sm:$0xff]
    %v6120 = vld [vmem:[%s7 + $0xd68] sm:$0xff]
    %v6121 = vld [vmem:[%s7 + $0xd70] sm:$0xff]
    %v6122 = vld [vmem:[%s7 + $0xd78] sm:$0xff]
    %v6123 = vld [vmem:[%s7 + $0xd80] sm:$0xff]
    %v6124 = vld [vmem:[%s7 + $0xd88] sm:$0xff]
    %v6125 = vld [vmem:[%s7 + $0xd90] sm:$0xff]
    %v6126 = vld [vmem:[%s7 + $0xd98] sm:$0xff]
    %v6127 = vld [vmem:[%s7 + $0xda0] sm:$0xff]
    %v6128 = vld [vmem:[%s7 + $0xda8] sm:$0xff]
    %v6129 = vld [vmem:[%s7 + $0xdb0] sm:$0xff]
    %v6130 = vld [vmem:[%s7 + $0xdb8] sm:$0xff]
    %v6131 = vld [vmem:[%s7 + $0xdc0] sm:$0xff]
    %v6132 = vld [vmem:[%s7 + $0xdc8] sm:$0xff]
    %v6133 = vld [vmem:[%s7 + $0xdd0] sm:$0xff]
    %v6134 = vld [vmem:[%s7 + $0xdd8] sm:$0xff]
    %v6135 = vld [vmem:[%s7 + $0xde0] sm:$0xff]
    %v6136 = vld [vmem:[%s7 + $0xde8] sm:$0xff]
    %v6137 = vld [vmem:[%s7 + $0xdf0] sm:$0xff]
    %v6138 = vld [vmem:[%s7 + $0xdf8] sm:$0xff]
    %v6139 = vld [vmem:[%s7 + $0xe00] sm:$0xff]
    %v6140 = vld [vmem:[%s7 + $0xe08] sm:$0xff]
    %v6141 = vld [vmem:[%s7 + $0xe10] sm:$0xff]
    %v6142 = vld [vmem:[%s7 + $0xe18] sm:$0xff]
    %v6143 = vld [vmem:[%s7 + $0xe20] sm:$0xff]
    %v6144 = vld [vmem:[%s7 + $0xe28] sm:$0xff]
    %v6145 = vld [vmem:[%s7 + $0xe30] sm:$0xff]
    %v6146 = vld [vmem:[%s7 + $0xe38] sm:$0xff]
    %v6147 = vld [vmem:[%s7 + $0xe40] sm:$0xff]
    %v6148 = vld [vmem:[%s7 + $0xe48] sm:$0xff]
    %v6149 = vld [vmem:[%s7 + $0xe50] sm:$0xff]
    %v6150 = vld [vmem:[%s7 + $0xe58] sm:$0xff]
    %v6151 = vld [vmem:[%s7 + $0xe60] sm:$0xff]
    %v6152 = vld [vmem:[%s7 + $0xe68] sm:$0xff]
    %v6153 = vld [vmem:[%s7 + $0xe70] sm:$0xff]
    %v6154 = vld [vmem:[%s7 + $0xe78] sm:$0xff]
    %v6155 = vld [vmem:[%s7 + $0xe80] sm:$0xff]
    %v6156 = vld [vmem:[%s7 + $0xe88] sm:$0xff]
    %v6157 = vld [vmem:[%s7 + $0xe90] sm:$0xff]
    %v6158 = vld [vmem:[%s7 + $0xe98] sm:$0xff]
    %v6159 = vld [vmem:[%s7 + $0xea0] sm:$0xff]
    %v6160 = vld [vmem:[%s7 + $0xea8] sm:$0xff]
    %v6161 = vld [vmem:[%s7 + $0xeb0] sm:$0xff]
    %v6162 = vld [vmem:[%s7 + $0xeb8] sm:$0xff]
    %v6163 = vld [vmem:[%s7 + $0xec0] sm:$0xff]
    %v6164 = vld [vmem:[%s7 + $0xec8] sm:$0xff]
    %v6165 = vld [vmem:[%s7 + $0xed0] sm:$0xff]
    %v6166 = vld [vmem:[%s7 + $0xed8] sm:$0xff]
    %v6167 = vld [vmem:[%s7 + $0xee0] sm:$0xff]
    %v6168 = vld [vmem:[%s7 + $0xee8] sm:$0xff]
    %v6169 = vld [vmem:[%s7 + $0xef0] sm:$0xff]
    %v6170 = vld [vmem:[%s7 + $0xef8] sm:$0xff]
    %v6171 = vld [vmem:[%s7 + $0xf00] sm:$0xff]
    %v6172 = vld [vmem:[%s7 + $0xf08] sm:$0xff]
    %v6173 = vld [vmem:[%s7 + $0xf10] sm:$0xff]
    %v6174 = vld [vmem:[%s7 + $0xf18] sm:$0xff]
    %v6175 = vld [vmem:[%s7 + $0xf20] sm:$0xff]
    %v6176 = vld [vmem:[%s7 + $0xf28] sm:$0xff]
    %v6177 = vld [vmem:[%s7 + $0xf30] sm:$0xff]
    %v6178 = vld [vmem:[%s7 + $0xf38] sm:$0xff]
    %v6179 = vld [vmem:[%s7 + $0xf40] sm:$0xff]
    %v6180 = vld [vmem:[%s7 + $0xf48] sm:$0xff]
    %v6181 = vld [vmem:[%s7 + $0xf50] sm:$0xff]
    %v6182 = vld [vmem:[%s7 + $0xf58] sm:$0xff]
    %v6183 = vld [vmem:[%s7 + $0xf60] sm:$0xff]
    %v6184 = vld [vmem:[%s7 + $0xf68] sm:$0xff]
    %v6185 = vld [vmem:[%s7 + $0xf70] sm:$0xff]
    %v6186 = vld [vmem:[%s7 + $0xf78] sm:$0xff]
    %v6187 = vld [vmem:[%s7 + $0xf80] sm:$0xff]
    %v6188 = vld [vmem:[%s7 + $0xf88] sm:$0xff]
    %v6189 = vld [vmem:[%s7 + $0xf90] sm:$0xff]
    %v6190 = vld [vmem:[%s7 + $0xf98] sm:$0xff]
    %v6191 = vld [vmem:[%s7 + $0xfa0] sm:$0xff]
    %v6192 = vld [vmem:[%s7 + $0xfa8] sm:$0xff]
    %v6193 = vld [vmem:[%s7 + $0xfb0] sm:$0xff]
    %v6194 = vld [vmem:[%s7 + $0xfb8] sm:$0xff]
    %v6195 = vld [vmem:[%s7 + $0xfc0] sm:$0xff]
    %v6196 = vld [vmem:[%s7 + $0xfc8] sm:$0xff]
    %v6197 = vld [vmem:[%s7 + $0xfd0] sm:$0xff]
    %v6198 = vld [vmem:[%s7 + $0xfd8] sm:$0xff]
    %v6199 = vld [vmem:[%s7 + $0xfe0] sm:$0xff]
    %v6200 = vld [vmem:[%s7 + $0xfe8] sm:$0xff]
    %v6201 = vld [vmem:[%s7 + $0xff0] sm:$0xff]
    %v6202 = vld [vmem:[%s7 + $0xff8] sm:$0xff]
    %v6203 = vld [vmem:[%s7 + $0x1000] sm:$0xff]
    %v6204 = vld [vmem:[%s7 + $0x1008] sm:$0xff]
    %v6205 = vld [vmem:[%s7 + $0x1010] sm:$0xff]
    %v6206 = vld [vmem:[%s7 + $0x1018] sm:$0xff]
    %v6207 = vld [vmem:[%s7 + $0x1020] sm:$0xff]
    %v6208 = vld [vmem:[%s7 + $0x1028] sm:$0xff]
    %v6209 = vld [vmem:[%s7 + $0x1030] sm:$0xff]
    %v6210 = vld [vmem:[%s7 + $0x1038] sm:$0xff]
    %v6211 = vld [vmem:[%s7 + $0x1040] sm:$0xff]
    %v6212 = vld [vmem:[%s7 + $0x1048] sm:$0xff]
    %v6213 = vld [vmem:[%s7 + $0x1050] sm:$0xff]
    %v6214 = vld [vmem:[%s7 + $0x1058] sm:$0xff]
    %v6215 = vld [vmem:[%s7 + $0x1060] sm:$0xff]
    %v6216 = vld [vmem:[%s7 + $0x1068] sm:$0xff]
    %v6217 = vld [vmem:[%s7 + $0x1070] sm:$0xff]
    %v6218 = vld [vmem:[%s7 + $0x1078] sm:$0xff]
    %v6219 = vld [vmem:[%s7 + $0x1080] sm:$0xff]
    %v6220 = vld [vmem:[%s7 + $0x1088] sm:$0xff]
    %v6221 = vld [vmem:[%s7 + $0x1090] sm:$0xff]
    %v6222 = vld [vmem:[%s7 + $0x1098] sm:$0xff]
    %v6223 = vld [vmem:[%s7 + $0x10a0] sm:$0xff]
    %v6224 = vld [vmem:[%s7 + $0x10a8] sm:$0xff]
    %v6225 = vld [vmem:[%s7 + $0x10b0] sm:$0xff]
    %v6226 = vld [vmem:[%s7 + $0x10b8] sm:$0xff]
    %v6227 = vld [vmem:[%s7 + $0x10c0] sm:$0xff]
    %v6228 = vld [vmem:[%s7 + $0x10c8] sm:$0xff]
    %v6229 = vld [vmem:[%s7 + $0x10d0] sm:$0xff]
    %v6230 = vld [vmem:[%s7 + $0x10d8] sm:$0xff]
    %v6231 = vld [vmem:[%s7 + $0x10e0] sm:$0xff]
    %v6232 = vld [vmem:[%s7 + $0x10e8] sm:$0xff]
    %v6233 = vld [vmem:[%s7 + $0x10f0] sm:$0xff]
    %v6234 = vld [vmem:[%s7 + $0x10f8] sm:$0xff]
    %v6235 = vld [vmem:[%s7 + $0x1100] sm:$0xff]
    %v6236 = vld [vmem:[%s7 + $0x1108] sm:$0xff]
    %v6237 = vld [vmem:[%s7 + $0x1110] sm:$0xff]
    %v6238 = vld [vmem:[%s7 + $0x1118] sm:$0xff]
    %v6239 = vld [vmem:[%s7 + $0x1120] sm:$0xff]
    %v6240 = vld [vmem:[%s7 + $0x1128] sm:$0xff]
    %v6241 = vld [vmem:[%s7 + $0x1130] sm:$0xff]
    %v6242 = vld [vmem:[%s7 + $0x1138] sm:$0xff]
    %v6243 = vld [vmem:[%s7 + $0x1140] sm:$0xff]
    %v6244 = vld [vmem:[%s7 + $0x1148] sm:$0xff]
    %v6245 = vld [vmem:[%s7 + $0x1150] sm:$0xff]
    %v6246 = vld [vmem:[%s7 + $0x1158] sm:$0xff]
    %v6247 = vld [vmem:[%s7 + $0x1160] sm:$0xff]
    %v6248 = vld [vmem:[%s7 + $0x1168] sm:$0xff]
    %v6249 = vld [vmem:[%s7 + $0x1170] sm:$0xff]
    %v6250 = vld [vmem:[%s7 + $0x1178] sm:$0xff]
    %v6251 = vld [vmem:[%s7 + $0x1180] sm:$0xff]
    %v6252 = vld [vmem:[%s7 + $0x1188] sm:$0xff]
    %v6253 = vld [vmem:[%s7 + $0x1190] sm:$0xff]
    %v6254 = vld [vmem:[%s7 + $0x1198] sm:$0xff]
    %v6255 = vld [vmem:[%s7 + $0x11a0] sm:$0xff]
    %v6256 = vld [vmem:[%s7 + $0x11a8] sm:$0xff]
    %v6257 = vld [vmem:[%s7 + $0x11b0] sm:$0xff]
    %v6258 = vld [vmem:[%s7 + $0x11b8] sm:$0xff]
    %v6259 = vld [vmem:[%s7 + $0x11c0] sm:$0xff]
    %v6260 = vld [vmem:[%s7 + $0x11c8] sm:$0xff]
    %v6261 = vld [vmem:[%s7 + $0x11d0] sm:$0xff]
    %v6262 = vld [vmem:[%s7 + $0x11d8] sm:$0xff]
    %v6263 = vld [vmem:[%s7 + $0x11e0] sm:$0xff]
    %v6264 = vld [vmem:[%s7 + $0x11e8] sm:$0xff]
    %v6265 = vld [vmem:[%s7 + $0x11f0] sm:$0xff]
    %v6266 = vld [vmem:[%s7 + $0x11f8] sm:$0xff]
    %v6267 = vld [vmem:[%s7 + $0x1200] sm:$0xff]
    %v6268 = vld [vmem:[%s7 + $0x1208] sm:$0xff]
    %v6269 = vld [vmem:[%s7 + $0x1210] sm:$0xff]
    %v6270 = vld [vmem:[%s7 + $0x1218] sm:$0xff]
    %v6271 = vld [vmem:[%s7 + $0x1220] sm:$0xff]
    %v6272 = vld [vmem:[%s7 + $0x1228] sm:$0xff]
    %v6273 = vld [vmem:[%s7 + $0x1230] sm:$0xff]
    %v6274 = vld [vmem:[%s7 + $0x1238] sm:$0xff]
    %v6275 = vld [vmem:[%s7 + $0x1240] sm:$0xff]
    %v6276 = vld [vmem:[%s7 + $0x1248] sm:$0xff]
    %v6277 = vld [vmem:[%s7 + $0x1250] sm:$0xff]
    %v6278 = vld [vmem:[%s7 + $0x1258] sm:$0xff]
    %v6279 = vld [vmem:[%s7 + $0x1260] sm:$0xff]
    %v6280 = vld [vmem:[%s7 + $0x1268] sm:$0xff]
    %v6281 = vld [vmem:[%s7 + $0x1270] sm:$0xff]
    %v6282 = vld [vmem:[%s7 + $0x1278] sm:$0xff]
    %v6283 = vld [vmem:[%s7 + $0x1280] sm:$0xff]
    %v6284 = vld [vmem:[%s7 + $0x1288] sm:$0xff]
    %v6285 = vld [vmem:[%s7 + $0x1290] sm:$0xff]
    %v6286 = vld [vmem:[%s7 + $0x1298] sm:$0xff]
    %v6287 = vld [vmem:[%s7 + $0x12a0] sm:$0xff]
    %v6288 = vld [vmem:[%s7 + $0x12a8] sm:$0xff]
    %v6289 = vld [vmem:[%s7 + $0x12b0] sm:$0xff]
    %v6290 = vld [vmem:[%s7 + $0x12b8] sm:$0xff]
    %v6291 = vld [vmem:[%s7 + $0x12c0] sm:$0xff]
    %v6292 = vld [vmem:[%s7 + $0x12c8] sm:$0xff]
    %v6293 = vld [vmem:[%s7 + $0x12d0] sm:$0xff]
    %v6294 = vld [vmem:[%s7 + $0x12d8] sm:$0xff]
    %v6295 = vld [vmem:[%s7 + $0x12e0] sm:$0xff]
    %v6296 = vld [vmem:[%s7 + $0x12e8] sm:$0xff]
    %v6297 = vld [vmem:[%s7 + $0x12f0] sm:$0xff]
    %v6298 = vld [vmem:[%s7 + $0x12f8] sm:$0xff]
    %v6299 = vld [vmem:[%s7 + $0x1300] sm:$0xff]
    %v6300 = vld [vmem:[%s7 + $0x1308] sm:$0xff]
    %v6301 = vld [vmem:[%s7 + $0x1310] sm:$0xff]
    %v6302 = vld [vmem:[%s7 + $0x1318] sm:$0xff]
    %v6303 = vld [vmem:[%s7 + $0x1320] sm:$0xff]
    %v6304 = vld [vmem:[%s7 + $0x1328] sm:$0xff]
    %v6305 = vld [vmem:[%s7 + $0x1330] sm:$0xff]
    %v6306 = vld [vmem:[%s7 + $0x1338] sm:$0xff]
    %v6307 = vld [vmem:[%s7 + $0x1340] sm:$0xff]
    %v6308 = vld [vmem:[%s7 + $0x1348] sm:$0xff]
    %v6309 = vld [vmem:[%s7 + $0x1350] sm:$0xff]
    %v6310 = vld [vmem:[%s7 + $0x1358] sm:$0xff]
    %v6311 = vld [vmem:[%s7 + $0x1360] sm:$0xff]
    %v6312 = vld [vmem:[%s7 + $0x1368] sm:$0xff]
    %v6313 = vld [vmem:[%s7 + $0x1370] sm:$0xff]
    %v6314 = vld [vmem:[%s7 + $0x1378] sm:$0xff]
    %v6315 = vld [vmem:[%s7 + $0x1380] sm:$0xff]
    %v6316 = vld [vmem:[%s7 + $0x1388] sm:$0xff]
    %v6317 = vld [vmem:[%s7 + $0x1390] sm:$0xff]
    %v6318 = vld [vmem:[%s7 + $0x1398] sm:$0xff]
    %v6319 = vld [vmem:[%s7 + $0x13a0] sm:$0xff]
    %v6320 = vld [vmem:[%s7 + $0x13a8] sm:$0xff]
    %v6321 = vld [vmem:[%s7 + $0x13b0] sm:$0xff]
    %v6322 = vld [vmem:[%s7 + $0x13b8] sm:$0xff]
    %v6323 = vld [vmem:[%s7 + $0x13c0] sm:$0xff]
    %v6324 = vld [vmem:[%s7 + $0x13c8] sm:$0xff]
    %v6325 = vld [vmem:[%s7 + $0x13d0] sm:$0xff]
    %v6326 = vld [vmem:[%s7 + $0x13d8] sm:$0xff]
    %v6327 = vld [vmem:[%s7 + $0x13e0] sm:$0xff]
    %v6328 = vld [vmem:[%s7 + $0x13e8] sm:$0xff]
    %v6329 = vld [vmem:[%s7 + $0x13f0] sm:$0xff]
    %v6330 = vld [vmem:[%s7 + $0x13f8] sm:$0xff]
    %v6331 = vld [vmem:[%s7 + $0x1400] sm:$0xff]
    %v6332 = vld [vmem:[%s7 + $0x1408] sm:$0xff]
    %v6333 = vld [vmem:[%s7 + $0x1410] sm:$0xff]
    %v6334 = vld [vmem:[%s7 + $0x1418] sm:$0xff]
    %v6335 = vld [vmem:[%s7 + $0x1420] sm:$0xff]
    %v6336 = vld [vmem:[%s7 + $0x1428] sm:$0xff]
    %v6337 = vld [vmem:[%s7 + $0x1430] sm:$0xff]
    %v6338 = vld [vmem:[%s7 + $0x1438] sm:$0xff]
    %v6339 = vld [vmem:[%s7 + $0x1440] sm:$0xff]
    %v6340 = vld [vmem:[%s7 + $0x1448] sm:$0xff]
    %v6341 = vld [vmem:[%s7 + $0x1450] sm:$0xff]
    %v6342 = vld [vmem:[%s7 + $0x1458] sm:$0xff]
    %v6343 = vld [vmem:[%s7 + $0x1460] sm:$0xff]
    %v6344 = vld [vmem:[%s7 + $0x1468] sm:$0xff]
    %v6345 = vld [vmem:[%s7 + $0x1470] sm:$0xff]
    %v6346 = vld [vmem:[%s7 + $0x1478] sm:$0xff]
    %v6347 = vld [vmem:[%s7 + $0x1480] sm:$0xff]
    %v6348 = vld [vmem:[%s7 + $0x1488] sm:$0xff]
    %v6349 = vld [vmem:[%s7 + $0x1490] sm:$0xff]
    %v6350 = vld [vmem:[%s7 + $0x1498] sm:$0xff]
    %v6351 = vld [vmem:[%s7 + $0x14a0] sm:$0xff]
    %v6352 = vld [vmem:[%s7 + $0x14a8] sm:$0xff]
    %v6353 = vld [vmem:[%s7 + $0x14b0] sm:$0xff]
    %v6354 = vld [vmem:[%s7 + $0x14b8] sm:$0xff]
    %v6355 = vld [vmem:[%s7 + $0x14c0] sm:$0xff]
    %v6356 = vld [vmem:[%s7 + $0x14c8] sm:$0xff]
    %v6357 = vld [vmem:[%s7 + $0x14d0] sm:$0xff]
    %v6358 = vld [vmem:[%s7 + $0x14d8] sm:$0xff]
    %v6359 = vld [vmem:[%s7 + $0x14e0] sm:$0xff]
    %v6360 = vld [vmem:[%s7 + $0x14e8] sm:$0xff]
    %v6361 = vld [vmem:[%s7 + $0x14f0] sm:$0xff]
    %v6362 = vld [vmem:[%s7 + $0x14f8] sm:$0xff]
    %v6363 = vld [vmem:[%s7 + $0x1500] sm:$0xff]
    %v6364 = vld [vmem:[%s7 + $0x1508] sm:$0xff]
    %v6365 = vld [vmem:[%s7 + $0x1510] sm:$0xff]
    %v6366 = vld [vmem:[%s7 + $0x1518] sm:$0xff]
    %v6367 = vld [vmem:[%s7 + $0x1520] sm:$0xff]
    %v6368 = vld [vmem:[%s7 + $0x1528] sm:$0xff]
    %v6369 = vld [vmem:[%s7 + $0x1530] sm:$0xff]
    %v6370 = vld [vmem:[%s7 + $0x1538] sm:$0xff]
    %v6371 = vld [vmem:[%s7 + $0x1540] sm:$0xff]
    %v6372 = vld [vmem:[%s7 + $0x1548] sm:$0xff]
    %v6373 = vld [vmem:[%s7 + $0x1550] sm:$0xff]
    %v6374 = vld [vmem:[%s7 + $0x1558] sm:$0xff]
    %v6375 = vld [vmem:[%s7 + $0x1560] sm:$0xff]
    %v6376 = vld [vmem:[%s7 + $0x1568] sm:$0xff]
    %v6377 = vld [vmem:[%s7 + $0x1570] sm:$0xff]
    %v6378 = vld [vmem:[%s7 + $0x1578] sm:$0xff]
    %v6379 = vld [vmem:[%s7 + $0x1580] sm:$0xff]
    %v6380 = vld [vmem:[%s7 + $0x1588] sm:$0xff]
    %v6381 = vld [vmem:[%s7 + $0x1590] sm:$0xff]
    %v6382 = vld [vmem:[%s7 + $0x1598] sm:$0xff]
    %v6383 = vld [vmem:[%s7 + $0x15a0] sm:$0xff]
    %v6384 = vld [vmem:[%s7 + $0x15a8] sm:$0xff]
    %v6385 = vld [vmem:[%s7 + $0x15b0] sm:$0xff]
    %v6386 = vld [vmem:[%s7 + $0x15b8] sm:$0xff]
    %v6387 = vld [vmem:[%s7 + $0x15c0] sm:$0xff]
    %v6388 = vld [vmem:[%s7 + $0x15c8] sm:$0xff]
    %v6389 = vld [vmem:[%s7 + $0x15d0] sm:$0xff]
    %v6390 = vld [vmem:[%s7 + $0x15d8] sm:$0xff]
    %v6391 = vld [vmem:[%s7 + $0x15e0] sm:$0xff]
    %v6392 = vld [vmem:[%s7 + $0x15e8] sm:$0xff]
    %v6393 = vld [vmem:[%s7 + $0x15f0] sm:$0xff]
    %v6394 = vld [vmem:[%s7 + $0x15f8] sm:$0xff]
    %v6395 = vld [vmem:[%s7 + $0x1600] sm:$0xff]
    %v6396 = vld [vmem:[%s7 + $0x1608] sm:$0xff]
    %v6397 = vld [vmem:[%s7 + $0x1610] sm:$0xff]
    %v6398 = vld [vmem:[%s7 + $0x1618] sm:$0xff]
    %v6399 = vld [vmem:[%s7 + $0x1620] sm:$0xff]
    %v6400 = vld [vmem:[%s7 + $0x1628] sm:$0xff]
    %v6401 = vld [vmem:[%s7 + $0x1630] sm:$0xff]
    %v6402 = vld [vmem:[%s7 + $0x1638] sm:$0xff]
    %v6403 = vld [vmem:[%s7 + $0x1640] sm:$0xff]
    %v6404 = vld [vmem:[%s7 + $0x1648] sm:$0xff]
    %v6405 = vld [vmem:[%s7 + $0x1650] sm:$0xff]
    %v6406 = vld [vmem:[%s7 + $0x1658] sm:$0xff]
    %v6407 = vld [vmem:[%s7 + $0x1660] sm:$0xff]
    %v6408 = vld [vmem:[%s7 + $0x1668] sm:$0xff]
    %v6409 = vld [vmem:[%s7 + $0x1670] sm:$0xff]
    %v6410 = vld [vmem:[%s7 + $0x1678] sm:$0xff]
    %v6411 = vld [vmem:[%s7 + $0x1680] sm:$0xff]
    %v6412 = vld [vmem:[%s7 + $0x1688] sm:$0xff]
    %v6413 = vld [vmem:[%s7 + $0x1690] sm:$0xff]
    %v6414 = vld [vmem:[%s7 + $0x1698] sm:$0xff]
    %v6415 = vld [vmem:[%s7 + $0x16a0] sm:$0xff]
    %v6416 = vld [vmem:[%s7 + $0x16a8] sm:$0xff]
    %v6417 = vld [vmem:[%s7 + $0x16b0] sm:$0xff]
    %v6418 = vld [vmem:[%s7 + $0x16b8] sm:$0xff]
    %v6419 = vld [vmem:[%s7 + $0x16c0] sm:$0xff]
    %v6420 = vld [vmem:[%s7 + $0x16c8] sm:$0xff]
    %v6421 = vld [vmem:[%s7 + $0x16d0] sm:$0xff]
    %v6422 = vld [vmem:[%s7 + $0x16d8] sm:$0xff]
    %v6423 = vld [vmem:[%s7 + $0x16e0] sm:$0xff]
    %v6424 = vld [vmem:[%s7 + $0x16e8] sm:$0xff]
    %v6425 = vld [vmem:[%s7 + $0x16f0] sm:$0xff]
    %v6426 = vld [vmem:[%s7 + $0x16f8] sm:$0xff]
    %v6427 = vld [vmem:[%s7 + $0x1700] sm:$0xff]
    %v6428 = vld [vmem:[%s7 + $0x1708] sm:$0xff]
    %v6429 = vld [vmem:[%s7 + $0x1710] sm:$0xff]
    %v6430 = vld [vmem:[%s7 + $0x1718] sm:$0xff]
    %v6431 = vld [vmem:[%s7 + $0x1720] sm:$0xff]
    %v6432 = vld [vmem:[%s7 + $0x1728] sm:$0xff]
    %v6433 = vld [vmem:[%s7 + $0x1730] sm:$0xff]
    %v6434 = vld [vmem:[%s7 + $0x1738] sm:$0xff]
    %v6435 = vld [vmem:[%s7 + $0x1740] sm:$0xff]
    %v6436 = vld [vmem:[%s7 + $0x1748] sm:$0xff]
    %v6437 = vld [vmem:[%s7 + $0x1750] sm:$0xff]
    %v6438 = vld [vmem:[%s7 + $0x1758] sm:$0xff]
    %v6439 = vld [vmem:[%s7 + $0x1760] sm:$0xff]
    %v6440 = vld [vmem:[%s7 + $0x1768] sm:$0xff]
    %v6441 = vld [vmem:[%s7 + $0x1770] sm:$0xff]
    %v6442 = vld [vmem:[%s7 + $0x1778] sm:$0xff]
    %v6443 = vld [vmem:[%s7 + $0x1780] sm:$0xff]
    %v6444 = vld [vmem:[%s7 + $0x1788] sm:$0xff]
    %v6445 = vld [vmem:[%s7 + $0x1790] sm:$0xff]
    %v6446 = vld [vmem:[%s7 + $0x1798] sm:$0xff]
    %v6447 = vld [vmem:[%s7 + $0x17a0] sm:$0xff]
    %v6448 = vld [vmem:[%s7 + $0x17a8] sm:$0xff]
    %v6449 = vld [vmem:[%s7 + $0x17b0] sm:$0xff]
    %v6450 = vld [vmem:[%s7 + $0x17b8] sm:$0xff]
    %v6451 = vld [vmem:[%s7 + $0x17c0] sm:$0xff]
    %v6452 = vld [vmem:[%s7 + $0x17c8] sm:$0xff]
    %v6453 = vld [vmem:[%s7 + $0x17d0] sm:$0xff]
    %v6454 = vld [vmem:[%s7 + $0x17d8] sm:$0xff]
    %v6455 = vld [vmem:[%s7 + $0x17e0] sm:$0xff]
    %v6456 = vld [vmem:[%s7 + $0x17e8] sm:$0xff]
    %v6457 = vld [vmem:[%s7 + $0x17f0] sm:$0xff]
    %v6458 = vld [vmem:[%s7 + $0x17f8] sm:$0xff]
    %v6459 = vld [vmem:[%s7 + $0x1800] sm:$0xff]
    %v6460 = vld [vmem:[%s7 + $0x1808] sm:$0xff]
    %v6461 = vld [vmem:[%s7 + $0x1810] sm:$0xff]
    %v6462 = vld [vmem:[%s7 + $0x1818] sm:$0xff]
    %v6463 = vld [vmem:[%s7 + $0x1820] sm:$0xff]
    %v6464 = vld [vmem:[%s7 + $0x1828] sm:$0xff]
    %v6465 = vld [vmem:[%s7 + $0x1830] sm:$0xff]
    %v6466 = vld [vmem:[%s7 + $0x1838] sm:$0xff]
    %v6467 = vld [vmem:[%s7 + $0x1840] sm:$0xff]
    %v6468 = vld [vmem:[%s7 + $0x1848] sm:$0xff]
    %v6469 = vld [vmem:[%s7 + $0x1850] sm:$0xff]
    %v6470 = vld [vmem:[%s7 + $0x1858] sm:$0xff]
    %v6471 = vld [vmem:[%s7 + $0x1860] sm:$0xff]
    %v6472 = vld [vmem:[%s7 + $0x1868] sm:$0xff]
    %v6473 = vld [vmem:[%s7 + $0x1870] sm:$0xff]
    %v6474 = vld [vmem:[%s7 + $0x1878] sm:$0xff]
    %v6475 = vld [vmem:[%s7 + $0x1880] sm:$0xff]
    %v6476 = vld [vmem:[%s7 + $0x1888] sm:$0xff]
    %v6477 = vld [vmem:[%s7 + $0x1890] sm:$0xff]
    %v6478 = vld [vmem:[%s7 + $0x1898] sm:$0xff]
    %v6479 = vld [vmem:[%s7 + $0x18a0] sm:$0xff]
    %v6480 = vld [vmem:[%s7 + $0x18a8] sm:$0xff]
    %v6481 = vld [vmem:[%s7 + $0x18b0] sm:$0xff]
    %v6482 = vld [vmem:[%s7 + $0x18b8] sm:$0xff]
    %v6483 = vld [vmem:[%s7 + $0x18c0] sm:$0xff]
    %v6484 = vld [vmem:[%s7 + $0x18c8] sm:$0xff]
    %v6485 = vld [vmem:[%s7 + $0x18d0] sm:$0xff]
    %v6486 = vld [vmem:[%s7 + $0x18d8] sm:$0xff]
    %v6487 = vld [vmem:[%s7 + $0x18e0] sm:$0xff]
    %v6488 = vld [vmem:[%s7 + $0x18e8] sm:$0xff]
    %v6489 = vld [vmem:[%s7 + $0x18f0] sm:$0xff]
    %v6490 = vld [vmem:[%s7 + $0x18f8] sm:$0xff]
    %v6491 = vld [vmem:[%s7 + $0x1900] sm:$0xff]
    %v6492 = vld [vmem:[%s7 + $0x1908] sm:$0xff]
    %v6493 = vld [vmem:[%s7 + $0x1910] sm:$0xff]
    %v6494 = vld [vmem:[%s7 + $0x1918] sm:$0xff]
    %v6495 = vld [vmem:[%s7 + $0x1920] sm:$0xff]
    %v6496 = vld [vmem:[%s7 + $0x1928] sm:$0xff]
    %v6497 = vld [vmem:[%s7 + $0x1930] sm:$0xff]
    %v6498 = vld [vmem:[%s7 + $0x1938] sm:$0xff]
    %v6499 = vld [vmem:[%s7 + $0x1940] sm:$0xff]
    %v6500 = vld [vmem:[%s7 + $0x1948] sm:$0xff]
    %v6501 = vld [vmem:[%s7 + $0x1950] sm:$0xff]
    %v6502 = vld [vmem:[%s7 + $0x1958] sm:$0xff]
    %v6503 = vld [vmem:[%s7 + $0x1960] sm:$0xff]
    %v6504 = vld [vmem:[%s7 + $0x1968] sm:$0xff]
    %v6505 = vld [vmem:[%s7 + $0x1970] sm:$0xff]
    %v6506 = vld [vmem:[%s7 + $0x1978] sm:$0xff]
    %v6507 = vld [vmem:[%s7 + $0x1980] sm:$0xff]
    %v6508 = vld [vmem:[%s7 + $0x1988] sm:$0xff]
    %v6509 = vld [vmem:[%s7 + $0x1990] sm:$0xff]
    %v6510 = vld [vmem:[%s7 + $0x1998] sm:$0xff]
    %v6511 = vld [vmem:[%s7 + $0x19a0] sm:$0xff]
    %v6512 = vld [vmem:[%s7 + $0x19a8] sm:$0xff]
    %v6513 = vld [vmem:[%s7 + $0x19b0] sm:$0xff]
    %v6514 = vld [vmem:[%s7 + $0x19b8] sm:$0xff]
    %v6515 = vld [vmem:[%s7 + $0x19c0] sm:$0xff]
    %v6516 = vld [vmem:[%s7 + $0x19c8] sm:$0xff]
    %v6517 = vld [vmem:[%s7 + $0x19d0] sm:$0xff]
    %v6518 = vld [vmem:[%s7 + $0x19d8] sm:$0xff]
    %v6519 = vld [vmem:[%s7 + $0x19e0] sm:$0xff]
    %v6520 = vld [vmem:[%s7 + $0x19e8] sm:$0xff]
    %v6521 = vld [vmem:[%s7 + $0x19f0] sm:$0xff]
    %v6522 = vld [vmem:[%s7 + $0x19f8] sm:$0xff]
    %v6523 = vld [vmem:[%s7 + $0x1a00] sm:$0xff]
    %v6524 = vld [vmem:[%s7 + $0x1a08] sm:$0xff]
    %v6525 = vld [vmem:[%s7 + $0x1a10] sm:$0xff]
    %v6526 = vld [vmem:[%s7 + $0x1a18] sm:$0xff]
    %v6527 = vld [vmem:[%s7 + $0x1a20] sm:$0xff]
    %v6528 = vld [vmem:[%s7 + $0x1a28] sm:$0xff]
    %v6529 = vld [vmem:[%s7 + $0x1a30] sm:$0xff]
    %v6530 = vld [vmem:[%s7 + $0x1a38] sm:$0xff]
    %v6531 = vld [vmem:[%s7 + $0x1a40] sm:$0xff]
    %v6532 = vld [vmem:[%s7 + $0x1a48] sm:$0xff]
    %v6533 = vld [vmem:[%s7 + $0x1a50] sm:$0xff]
    %v6534 = vld [vmem:[%s7 + $0x1a58] sm:$0xff]
    %v6535 = vld [vmem:[%s7 + $0x1a60] sm:$0xff]
    %v6536 = vld [vmem:[%s7 + $0x1a68] sm:$0xff]
    %v6537 = vld [vmem:[%s7 + $0x1a70] sm:$0xff]
    %v6538 = vld [vmem:[%s7 + $0x1a78] sm:$0xff]
    %v6539 = vld [vmem:[%s7 + $0x1a80] sm:$0xff]
    %v6540 = vld [vmem:[%s7 + $0x1a88] sm:$0xff]
    %v6541 = vld [vmem:[%s7 + $0x1a90] sm:$0xff]
    %v6542 = vld [vmem:[%s7 + $0x1a98] sm:$0xff]
    %v6543 = vld [vmem:[%s7 + $0x1aa0] sm:$0xff]
    %v6544 = vld [vmem:[%s7 + $0x1aa8] sm:$0xff]
    %v6545 = vld [vmem:[%s7 + $0x1ab0] sm:$0xff]
    %v6546 = vld [vmem:[%s7 + $0x1ab8] sm:$0xff]
    %v6547 = vld [vmem:[%s7 + $0x1ac0] sm:$0xff]
    %v6548 = vld [vmem:[%s7 + $0x1ac8] sm:$0xff]
    %v6549 = vld [vmem:[%s7 + $0x1ad0] sm:$0xff]
    %v6550 = vld [vmem:[%s7 + $0x1ad8] sm:$0xff]
    %v6551 = vld [vmem:[%s7 + $0x1ae0] sm:$0xff]
    %v6552 = vld [vmem:[%s7 + $0x1ae8] sm:$0xff]
    %v6553 = vld [vmem:[%s7 + $0x1af0] sm:$0xff]
    %v6554 = vld [vmem:[%s7 + $0x1af8] sm:$0xff]
    %v6555 = vld [vmem:[%s7 + $0x1b00] sm:$0xff]
    %v6556 = vld [vmem:[%s7 + $0x1b08] sm:$0xff]
    %v6557 = vld [vmem:[%s7 + $0x1b10] sm:$0xff]
    %v6558 = vld [vmem:[%s7 + $0x1b18] sm:$0xff]
    %v6559 = vld [vmem:[%s7 + $0x1b20] sm:$0xff]
    %v6560 = vld [vmem:[%s7 + $0x1b28] sm:$0xff]
    %v6561 = vld [vmem:[%s7 + $0x1b30] sm:$0xff]
    %v6562 = vld [vmem:[%s7 + $0x1b38] sm:$0xff]
    %v6563 = vld [vmem:[%s7 + $0x1b40] sm:$0xff]
    %v6564 = vld [vmem:[%s7 + $0x1b48] sm:$0xff]
    %v6565 = vld [vmem:[%s7 + $0x1b50] sm:$0xff]
    %v6566 = vld [vmem:[%s7 + $0x1b58] sm:$0xff]
    %v6567 = vld [vmem:[%s7 + $0x1b60] sm:$0xff]
    %v6568 = vld [vmem:[%s7 + $0x1b68] sm:$0xff]
    %v6569 = vld [vmem:[%s7 + $0x1b70] sm:$0xff]
    %v6570 = vld [vmem:[%s7 + $0x1b78] sm:$0xff]
    %v6571 = vld [vmem:[%s7 + $0x1b80] sm:$0xff]
    %v6572 = vld [vmem:[%s7 + $0x1b88] sm:$0xff]
    %v6573 = vld [vmem:[%s7 + $0x1b90] sm:$0xff]
    %v6574 = vld [vmem:[%s7 + $0x1b98] sm:$0xff]
    %v6575 = vld [vmem:[%s7 + $0x1ba0] sm:$0xff]
    %v6576 = vld [vmem:[%s7 + $0x1ba8] sm:$0xff]
    %v6577 = vld [vmem:[%s7 + $0x1bb0] sm:$0xff]
    %v6578 = vld [vmem:[%s7 + $0x1bb8] sm:$0xff]
    %v6579 = vld [vmem:[%s7 + $0x1bc0] sm:$0xff]
    %v6580 = vld [vmem:[%s7 + $0x1bc8] sm:$0xff]
    %v6581 = vld [vmem:[%s7 + $0x1bd0] sm:$0xff]
    %v6582 = vld [vmem:[%s7 + $0x1bd8] sm:$0xff]
    %v6583 = vld [vmem:[%s7 + $0x1be0] sm:$0xff]
    %v6584 = vld [vmem:[%s7 + $0x1be8] sm:$0xff]
    %v6585 = vld [vmem:[%s7 + $0x1bf0] sm:$0xff]
    %v6586 = vld [vmem:[%s7 + $0x1bf8] sm:$0xff]
    %v6587 = vld [vmem:[%s7 + $0x1c00] sm:$0xff]
    %v6588 = vld [vmem:[%s7 + $0x1c08] sm:$0xff]
    %v6589 = vld [vmem:[%s7 + $0x1c10] sm:$0xff]
    %v6590 = vld [vmem:[%s7 + $0x1c18] sm:$0xff]
    %v6591 = vld [vmem:[%s7 + $0x1c20] sm:$0xff]
    %v6592 = vld [vmem:[%s7 + $0x1c28] sm:$0xff]
    %v6593 = vld [vmem:[%s7 + $0x1c30] sm:$0xff]
    %v6594 = vld [vmem:[%s7 + $0x1c38] sm:$0xff]
    %v6595 = vld [vmem:[%s7 + $0x1c40] sm:$0xff]
    %v6596 = vld [vmem:[%s7 + $0x1c48] sm:$0xff]
    %v6597 = vld [vmem:[%s7 + $0x1c50] sm:$0xff]
    %v6598 = vld [vmem:[%s7 + $0x1c58] sm:$0xff]
    %v6599 = vld [vmem:[%s7 + $0x1c60] sm:$0xff]
    %v6600 = vld [vmem:[%s7 + $0x1c68] sm:$0xff]
    %v6601 = vld [vmem:[%s7 + $0x1c70] sm:$0xff]
    %v6602 = vld [vmem:[%s7 + $0x1c78] sm:$0xff]
    %v6603 = vld [vmem:[%s7 + $0x1c80] sm:$0xff]
    %v6604 = vld [vmem:[%s7 + $0x1c88] sm:$0xff]
    %v6605 = vld [vmem:[%s7 + $0x1c90] sm:$0xff]
    %v6606 = vld [vmem:[%s7 + $0x1c98] sm:$0xff]
    %v6607 = vld [vmem:[%s7 + $0x1ca0] sm:$0xff]
    %v6608 = vld [vmem:[%s7 + $0x1ca8] sm:$0xff]
    %v6609 = vld [vmem:[%s7 + $0x1cb0] sm:$0xff]
    %v6610 = vld [vmem:[%s7 + $0x1cb8] sm:$0xff]
    %v6611 = vld [vmem:[%s7 + $0x1cc0] sm:$0xff]
    %v6612 = vld [vmem:[%s7 + $0x1cc8] sm:$0xff]
    %v6613 = vld [vmem:[%s7 + $0x1cd0] sm:$0xff]
    %v6614 = vld [vmem:[%s7 + $0x1cd8] sm:$0xff]
    %v6615 = vld [vmem:[%s7 + $0x1ce0] sm:$0xff]
    %v6616 = vld [vmem:[%s7 + $0x1ce8] sm:$0xff]
    %v6617 = vld [vmem:[%s7 + $0x1cf0] sm:$0xff]
    %v6618 = vld [vmem:[%s7 + $0x1cf8] sm:$0xff]
    %v6619 = vld [vmem:[%s7 + $0x1d00] sm:$0xff]
    %v6620 = vld [vmem:[%s7 + $0x1d08] sm:$0xff]
    %v6621 = vld [vmem:[%s7 + $0x1d10] sm:$0xff]
    %v6622 = vld [vmem:[%s7 + $0x1d18] sm:$0xff]
    %v6623 = vld [vmem:[%s7 + $0x1d20] sm:$0xff]
    %v6624 = vld [vmem:[%s7 + $0x1d28] sm:$0xff]
    %v6625 = vld [vmem:[%s7 + $0x1d30] sm:$0xff]
    %v6626 = vld [vmem:[%s7 + $0x1d38] sm:$0xff]
    %v6627 = vld [vmem:[%s7 + $0x1d40] sm:$0xff]
    %v6628 = vld [vmem:[%s7 + $0x1d48] sm:$0xff]
    %v6629 = vld [vmem:[%s7 + $0x1d50] sm:$0xff]
    %v6630 = vld [vmem:[%s7 + $0x1d58] sm:$0xff]
    %v6631 = vld [vmem:[%s7 + $0x1d60] sm:$0xff]
    %v6632 = vld [vmem:[%s7 + $0x1d68] sm:$0xff]
    %v6633 = vld [vmem:[%s7 + $0x1d70] sm:$0xff]
    %v6634 = vld [vmem:[%s7 + $0x1d78] sm:$0xff]
    %v6635 = vld [vmem:[%s7 + $0x1d80] sm:$0xff]
    %v6636 = vld [vmem:[%s7 + $0x1d88] sm:$0xff]
    %v6637 = vld [vmem:[%s7 + $0x1d90] sm:$0xff]
    %v6638 = vld [vmem:[%s7 + $0x1d98] sm:$0xff]
    %v6639 = vld [vmem:[%s7 + $0x1da0] sm:$0xff]
    %v6640 = vld [vmem:[%s7 + $0x1da8] sm:$0xff]
    %v6641 = vld [vmem:[%s7 + $0x1db0] sm:$0xff]
    %v6642 = vld [vmem:[%s7 + $0x1db8] sm:$0xff]
    %v6643 = vld [vmem:[%s7 + $0x1dc0] sm:$0xff]
    %v6644 = vld [vmem:[%s7 + $0x1dc8] sm:$0xff]
    %v6645 = vld [vmem:[%s7 + $0x1dd0] sm:$0xff]
    %v6646 = vld [vmem:[%s7 + $0x1dd8] sm:$0xff]
    %v6647 = vld [vmem:[%s7 + $0x1de0] sm:$0xff]
    %v6648 = vld [vmem:[%s7 + $0x1de8] sm:$0xff]
    %v6649 = vld [vmem:[%s7 + $0x1df0] sm:$0xff]
    %v6650 = vld [vmem:[%s7 + $0x1df8] sm:$0xff]
    %v6651 = vld [vmem:[%s7 + $0x1e00] sm:$0xff]
    %v6652 = vld [vmem:[%s7 + $0x1e08] sm:$0xff]
    %v6653 = vld [vmem:[%s7 + $0x1e10] sm:$0xff]
    %v6654 = vld [vmem:[%s7 + $0x1e18] sm:$0xff]
    %v6655 = vld [vmem:[%s7 + $0x1e20] sm:$0xff]
    %v6656 = vld [vmem:[%s7 + $0x1e28] sm:$0xff]
    %v6657 = vld [vmem:[%s7 + $0x1e30] sm:$0xff]
    %v6658 = vld [vmem:[%s7 + $0x1e38] sm:$0xff]
    %v6659 = vld [vmem:[%s7 + $0x1e40] sm:$0xff]
    %v6660 = vld [vmem:[%s7 + $0x1e48] sm:$0xff]
    %v6661 = vld [vmem:[%s7 + $0x1e50] sm:$0xff]
    %v6662 = vld [vmem:[%s7 + $0x1e58] sm:$0xff]
    %v6663 = vld [vmem:[%s7 + $0x1e60] sm:$0xff]
    %v6664 = vld [vmem:[%s7 + $0x1e68] sm:$0xff]
    %v6665 = vld [vmem:[%s7 + $0x1e70] sm:$0xff]
    %v6666 = vld [vmem:[%s7 + $0x1e78] sm:$0xff]
    %v6667 = vld [vmem:[%s7 + $0x1e80] sm:$0xff]
    %v6668 = vld [vmem:[%s7 + $0x1e88] sm:$0xff]
    %v6669 = vld [vmem:[%s7 + $0x1e90] sm:$0xff]
    %v6670 = vld [vmem:[%s7 + $0x1e98] sm:$0xff]
    %v6671 = vld [vmem:[%s7 + $0x1ea0] sm:$0xff]
    %v6672 = vld [vmem:[%s7 + $0x1ea8] sm:$0xff]
    %v6673 = vld [vmem:[%s7 + $0x1eb0] sm:$0xff]
    %v6674 = vld [vmem:[%s7 + $0x1eb8] sm:$0xff]
    %v6675 = vld [vmem:[%s7 + $0x1ec0] sm:$0xff]
    %v6676 = vld [vmem:[%s7 + $0x1ec8] sm:$0xff]
    %v6677 = vld [vmem:[%s7 + $0x1ed0] sm:$0xff]
    %v6678 = vld [vmem:[%s7 + $0x1ed8] sm:$0xff]
    %v6679 = vld [vmem:[%s7 + $0x1ee0] sm:$0xff]
    %v6680 = vld [vmem:[%s7 + $0x1ee8] sm:$0xff]
    %v6681 = vld [vmem:[%s7 + $0x1ef0] sm:$0xff]
    %v6682 = vld [vmem:[%s7 + $0x1ef8] sm:$0xff]
    %v6683 = vld [vmem:[%s7 + $0x1f00] sm:$0xff]
    %v6684 = vld [vmem:[%s7 + $0x1f08] sm:$0xff]
    %v6685 = vld [vmem:[%s7 + $0x1f10] sm:$0xff]
    %v6686 = vld [vmem:[%s7 + $0x1f18] sm:$0xff]
    %v6687 = vld [vmem:[%s7 + $0x1f20] sm:$0xff]
    %v6688 = vld [vmem:[%s7 + $0x1f28] sm:$0xff]
    %v6689 = vld [vmem:[%s7 + $0x1f30] sm:$0xff]
    %v6690 = vld [vmem:[%s7 + $0x1f38] sm:$0xff]
    %v6691 = vld [vmem:[%s7 + $0x1f40] sm:$0xff]
    %v6692 = vld [vmem:[%s7 + $0x1f48] sm:$0xff]
    %v6693 = vld [vmem:[%s7 + $0x1f50] sm:$0xff]
    %v6694 = vld [vmem:[%s7 + $0x1f58] sm:$0xff]
    %v6695 = vld [vmem:[%s7 + $0x1f60] sm:$0xff]
    %v6696 = vld [vmem:[%s7 + $0x1f68] sm:$0xff]
    %v6697 = vld [vmem:[%s7 + $0x1f70] sm:$0xff]
    %v6698 = vld [vmem:[%s7 + $0x1f78] sm:$0xff]
    %v6699 = vld [vmem:[%s7 + $0x1f80] sm:$0xff]
    %v6700 = vld [vmem:[%s7 + $0x1f88] sm:$0xff]
    %v6701 = vld [vmem:[%s7 + $0x1f90] sm:$0xff]
    %v6702 = vld [vmem:[%s7 + $0x1f98] sm:$0xff]
    %v6703 = vld [vmem:[%s7 + $0x1fa0] sm:$0xff]
    %v6704 = vld [vmem:[%s7 + $0x1fa8] sm:$0xff]
    %v6705 = vld [vmem:[%s7 + $0x1fb0] sm:$0xff]
    %v6706 = vld [vmem:[%s7 + $0x1fb8] sm:$0xff]
    %v6707 = vld [vmem:[%s7 + $0x1fc0] sm:$0xff]
    %v6708 = vld [vmem:[%s7 + $0x1fc8] sm:$0xff]
    %v6709 = vld [vmem:[%s7 + $0x1fd0] sm:$0xff]
    %v6710 = vld [vmem:[%s7 + $0x1fd8] sm:$0xff]
    %v6711 = vld [vmem:[%s7 + $0x1fe0] sm:$0xff]
    %v6712 = vld [vmem:[%s7 + $0x1fe8] sm:$0xff]
    %v6713 = vld [vmem:[%s7 + $0x1ff0] sm:$0xff]
    %v6714 = vld [vmem:[%s7 + $0x1ff8] sm:$0xff]
    %v6715 = vld [vmem:[%s8] sm:$0xff]
    %v6717 = vlaneseq
    %v6718 = vshrl.u32 %v6717, 7
    %v6719 = vsub.s32 0, %v6718
    %v6720 = vrot.slane %v6715, %v6719
    %v6721 = vlaneseq
    %v6722 = vshrl.u32 %v6721, 7
    %v6723 = vsub.s32 1, %v6722
    %v6724 = vrot.slane %v6715, %v6723
    %v6725 = vlaneseq
    %v6726 = vshrl.u32 %v6725, 7
    %v6727 = vsub.s32 2, %v6726
    %v6728 = vrot.slane %v6715, %v6727
    %v6729 = vlaneseq
    %v6730 = vshrl.u32 %v6729, 7
    %v6731 = vsub.s32 3, %v6730
    %v6732 = vrot.slane %v6715, %v6731
    %v6733 = vlaneseq
    %v6734 = vshrl.u32 %v6733, 7
    %v6735 = vsub.s32 4, %v6734
    %v6736 = vrot.slane %v6715, %v6735
    %v6737 = vlaneseq
    %v6738 = vshrl.u32 %v6737, 7
    %v6739 = vsub.s32 5, %v6738
    %v6740 = vrot.slane %v6715, %v6739
    %v6741 = vlaneseq
    %v6742 = vshrl.u32 %v6741, 7
    %v6743 = vsub.s32 6, %v6742
    %v6744 = vrot.slane %v6715, %v6743
    %v6745 = vlaneseq
    %v6746 = vshrl.u32 %v6745, 7
    %v6747 = vsub.s32 7, %v6746
    %v6748 = vrot.slane %v6715, %v6747
    %6757 = vmatprep.subr.mxu0 %v5692
    %6758 = vmatpush1.msra.mxu0 %v5691
    %6759 = vmatprep.subr.mxu0 %v5700
    %6760 = vmatpush1.msra.mxu0 %v5699
    %6761 = vmatprep.subr.mxu0 %v5708
    %6762 = vmatpush1.msra.mxu0 %v5707
    %6763 = vmatprep.subr.mxu0 %v5716
    %6764 = vmatpush1.msra.mxu0 %v5715
    %6765 = vmatprep.subr.mxu0 %v5724
    %6766 = vmatpush1.msra.mxu0 %v5723
    %6767 = vmatprep.subr.mxu0 %v5732
    %6768 = vmatpush1.msra.mxu0 %v5731
    %6769 = vmatprep.subr.mxu0 %v5740
    %6770 = vmatpush1.msra.mxu0 %v5739
    %6771 = vmatprep.subr.mxu0 %v5748
    %6772 = vmatpush1.msra.mxu0 %v5747
    %6773 = vmatprep.subr.mxu0 %v5756
    %6774 = vmatpush1.msra.mxu0 %v5755
    %6775 = vmatprep.subr.mxu0 %v5764
    %6776 = vmatpush1.msra.mxu0 %v5763
    %6777 = vmatprep.subr.mxu0 %v5772
    %6778 = vmatpush1.msra.mxu0 %v5771
    %6779 = vmatprep.subr.mxu0 %v5780
    %6780 = vmatpush1.msra.mxu0 %v5779
    %6781 = vmatprep.subr.mxu0 %v5788
    %6782 = vmatpush1.msra.mxu0 %v5787
    %6783 = vmatprep.subr.mxu0 %v5796
    %6784 = vmatpush1.msra.mxu0 %v5795
    %6785 = vmatprep.subr.mxu0 %v5804
    %6786 = vmatpush1.msra.mxu0 %v5803
    %6787 = vmatprep.subr.mxu0 %v5812
    %6788 = vmatpush1.msra.mxu0 %v5811
    %6789 = vmatprep.subr.mxu0 %v5820
    %6790 = vmatpush1.msra.mxu0 %v5819
    %6791 = vmatprep.subr.mxu0 %v5828
    %6792 = vmatpush1.msra.mxu0 %v5827
    %6793 = vmatprep.subr.mxu0 %v5836
    %6794 = vmatpush1.msra.mxu0 %v5835
    %6795 = vmatprep.subr.mxu0 %v5844
    %6796 = vmatpush1.msra.mxu0 %v5843
    %6797 = vmatprep.subr.mxu0 %v5852
    %6798 = vmatpush1.msra.mxu0 %v5851
    %6799 = vmatprep.subr.mxu0 %v5860
    %6800 = vmatpush1.msra.mxu0 %v5859
    %6801 = vmatprep.subr.mxu0 %v5868
    %6802 = vmatpush1.msra.mxu0 %v5867
    %6803 = vmatprep.subr.mxu0 %v5876
    %6804 = vmatpush1.msra.mxu0 %v5875
    %6805 = vmatprep.subr.mxu0 %v5884
    %6806 = vmatpush1.msra.mxu0 %v5883
    %6807 = vmatprep.subr.mxu0 %v5892
    %6808 = vmatpush1.msra.mxu0 %v5891
    %6809 = vmatprep.subr.mxu0 %v5900
    %6810 = vmatpush1.msra.mxu0 %v5899
    %6811 = vmatprep.subr.mxu0 %v5908
    %6812 = vmatpush1.msra.mxu0 %v5907
    %6813 = vmatprep.subr.mxu0 %v5916
    %6814 = vmatpush1.msra.mxu0 %v5915
    %6815 = vmatprep.subr.mxu0 %v5924
    %6816 = vmatpush1.msra.mxu0 %v5923
    %6817 = vmatprep.subr.mxu0 %v5932
    %6818 = vmatpush1.msra.mxu0 %v5931
    %6819 = vmatprep.subr.mxu0 %v5940
    %6820 = vmatpush1.msra.mxu0 %v5939
    %6821 = vmatprep.mubr.f32.mxu0 %v5607
    %6822 = vmatmul.mubr.f32.gmra.mrb[0].mxu0 %v5600
    %v6823 = vpop.f32.mrb[0].mxu0
    %v6824 = vadd.f32 %v6720, %v6823
    %v6825 = vpop.f32.mrb[0].mxu0
    %v6826 = vadd.f32 %v6724, %v6825
    %6827 = vdwg.mxu0
    %6828 = vmatprep.subr.mxu0 %v5948
    %6829 = vmatpush1.msra.mxu0 %v5947
    %6830 = vmatprep.subr.mxu0 %v5956
    %6831 = vmatpush1.msra.mxu0 %v5955
    %6832 = vmatprep.subr.mxu0 %v5964
    %6833 = vmatpush1.msra.mxu0 %v5963
    %6834 = vmatprep.subr.mxu0 %v5972
    %6835 = vmatpush1.msra.mxu0 %v5971
    %6836 = vmatprep.subr.mxu0 %v5980
    %6837 = vmatpush1.msra.mxu0 %v5979
    %6838 = vmatprep.subr.mxu0 %v5988
    %6839 = vmatpush1.msra.mxu0 %v5987
    %6840 = vmatprep.subr.mxu0 %v5996
    %6841 = vmatpush1.msra.mxu0 %v5995
    %6842 = vmatprep.subr.mxu0 %v6004
    %6843 = vmatpush1.msra.mxu0 %v6003
    %6844 = vmatprep.subr.mxu0 %v6012
    %6845 = vmatpush1.msra.mxu0 %v6011
    %6846 = vmatprep.subr.mxu0 %v6020
    %6847 = vmatpush1.msra.mxu0 %v6019
    %6848 = vmatprep.subr.mxu0 %v6028
    %6849 = vmatpush1.msra.mxu0 %v6027
    %6850 = vmatprep.subr.mxu0 %v6036
    %6851 = vmatpush1.msra.mxu0 %v6035
    %6852 = vmatprep.subr.mxu0 %v6044
    %6853 = vmatpush1.msra.mxu0 %v6043
    %6854 = vmatprep.subr.mxu0 %v6052
    %6855 = vmatpush1.msra.mxu0 %v6051
    %6856 = vmatprep.subr.mxu0 %v6060
    %6857 = vmatpush1.msra.mxu0 %v6059
    %6858 = vmatprep.subr.mxu0 %v6068
    %6859 = vmatpush1.msra.mxu0 %v6067
    %6860 = vmatprep.subr.mxu0 %v6076
    %6861 = vmatpush1.msra.mxu0 %v6075
    %6862 = vmatprep.subr.mxu0 %v6084
    %6863 = vmatpush1.msra.mxu0 %v6083
    %6864 = vmatprep.subr.mxu0 %v6092
    %6865 = vmatpush1.msra.mxu0 %v6091
    %6866 = vmatprep.subr.mxu0 %v6100
    %6867 = vmatpush1.msra.mxu0 %v6099
    %6868 = vmatprep.subr.mxu0 %v6108
    %6869 = vmatpush1.msra.mxu0 %v6107
    %6870 = vmatprep.subr.mxu0 %v6116
    %6871 = vmatpush1.msra.mxu0 %v6115
    %6872 = vmatprep.subr.mxu0 %v6124
    %6873 = vmatpush1.msra.mxu0 %v6123
    %6874 = vmatprep.subr.mxu0 %v6132
    %6875 = vmatpush1.msra.mxu0 %v6131
    %6876 = vmatprep.subr.mxu0 %v6140
    %6877 = vmatpush1.msra.mxu0 %v6139
    %6878 = vmatprep.subr.mxu0 %v6148
    %6879 = vmatpush1.msra.mxu0 %v6147
    %6880 = vmatprep.subr.mxu0 %v6156
    %6881 = vmatpush1.msra.mxu0 %v6155
    %6882 = vmatprep.subr.mxu0 %v6164
    %6883 = vmatpush1.msra.mxu0 %v6163
    %6884 = vmatprep.subr.mxu0 %v6172
    %6885 = vmatpush1.msra.mxu0 %v6171
    %6886 = vmatprep.subr.mxu0 %v6180
    %6887 = vmatpush1.msra.mxu0 %v6179
    %6888 = vmatprep.subr.mxu0 %v6188
    %6889 = vmatpush1.msra.mxu0 %v6187
    %6890 = vmatprep.subr.mxu0 %v6196
    %6891 = vmatpush1.msra.mxu0 %v6195
    %6892 = vmatprep.mubr.f32.mxu0 %v5634
    %6893 = vmatmul.mubr.f32.gmra.mrb[0].mxu0 %v5627
    %v6894 = vpop.f32.mrb[0].mxu0
    %v6895 = vadd.f32 %v6824, %v6894
    %v6896 = vpop.f32.mrb[0].mxu0
    %v6897 = vadd.f32 %v6826, %v6896
    %6898 = vdwg.mxu0
    %6899 = vmatprep.subr.mxu0 %v6204
    %6900 = vmatpush1.msra.mxu0 %v6203
    %6901 = vmatprep.subr.mxu0 %v6212
    %6902 = vmatpush1.msra.mxu0 %v6211
    %6903 = vmatprep.subr.mxu0 %v6220
    %6904 = vmatpush1.msra.mxu0 %v6219
    %6905 = vmatprep.subr.mxu0 %v6228
    %6906 = vmatpush1.msra.mxu0 %v6227
    %6907 = vmatprep.subr.mxu0 %v6236
    %6908 = vmatpush1.msra.mxu0 %v6235
    %6909 = vmatprep.subr.mxu0 %v6244
    %6910 = vmatpush1.msra.mxu0 %v6243
    %6911 = vmatprep.subr.mxu0 %v6252
    %6912 = vmatpush1.msra.mxu0 %v6251
    %6913 = vmatprep.subr.mxu0 %v6260
    %6914 = vmatpush1.msra.mxu0 %v6259
    %6915 = vmatprep.subr.mxu0 %v6268
    %6916 = vmatpush1.msra.mxu0 %v6267
    %6917 = vmatprep.subr.mxu0 %v6276
    %6918 = vmatpush1.msra.mxu0 %v6275
    %6919 = vmatprep.subr.mxu0 %v6284
    %6920 = vmatpush1.msra.mxu0 %v6283
    %6921 = vmatprep.subr.mxu0 %v6292
    %6922 = vmatpush1.msra.mxu0 %v6291
    %6923 = vmatprep.subr.mxu0 %v6300
    %6924 = vmatpush1.msra.mxu0 %v6299
    %6925 = vmatprep.subr.mxu0 %v6308
    %6926 = vmatpush1.msra.mxu0 %v6307
    %6927 = vmatprep.subr.mxu0 %v6316
    %6928 = vmatpush1.msra.mxu0 %v6315
    %6929 = vmatprep.subr.mxu0 %v6324
    %6930 = vmatpush1.msra.mxu0 %v6323
    %6931 = vmatprep.subr.mxu0 %v6332
    %6932 = vmatpush1.msra.mxu0 %v6331
    %6933 = vmatprep.subr.mxu0 %v6340
    %6934 = vmatpush1.msra.mxu0 %v6339
    %6935 = vmatprep.subr.mxu0 %v6348
    %6936 = vmatpush1.msra.mxu0 %v6347
    %6937 = vmatprep.subr.mxu0 %v6356
    %6938 = vmatpush1.msra.mxu0 %v6355
    %6939 = vmatprep.subr.mxu0 %v6364
    %6940 = vmatpush1.msra.mxu0 %v6363
    %6941 = vmatprep.subr.mxu0 %v6372
    %6942 = vmatpush1.msra.mxu0 %v6371
    %6943 = vmatprep.subr.mxu0 %v6380
    %6944 = vmatpush1.msra.mxu0 %v6379
    %6945 = vmatprep.subr.mxu0 %v6388
    %6946 = vmatpush1.msra.mxu0 %v6387
    %6947 = vmatprep.subr.mxu0 %v6396
    %6948 = vmatpush1.msra.mxu0 %v6395
    %6949 = vmatprep.subr.mxu0 %v6404
    %6950 = vmatpush1.msra.mxu0 %v6403
    %6951 = vmatprep.subr.mxu0 %v6412
    %6952 = vmatpush1.msra.mxu0 %v6411
    %6953 = vmatprep.subr.mxu0 %v6420
    %6954 = vmatpush1.msra.mxu0 %v6419
    %6955 = vmatprep.subr.mxu0 %v6428
    %6956 = vmatpush1.msra.mxu0 %v6427
    %6957 = vmatprep.subr.mxu0 %v6436
    %6958 = vmatpush1.msra.mxu0 %v6435
    %6959 = vmatprep.subr.mxu0 %v6444
    %6960 = vmatpush1.msra.mxu0 %v6443
    %6961 = vmatprep.subr.mxu0 %v6452
    %6962 = vmatpush1.msra.mxu0 %v6451
    %6963 = vmatprep.mubr.f32.mxu0 %v5661
    %6964 = vmatmul.mubr.f32.gmra.mrb[0].mxu0 %v5654
    %v6965 = vpop.f32.mrb[0].mxu0
    %v6966 = vadd.f32 %v6895, %v6965
    %v6967 = vpop.f32.mrb[0].mxu0
    %v6968 = vadd.f32 %v6897, %v6967
    %6969 = vdwg.mxu0
    %6970 = vmatprep.subr.mxu0 %v6460
    %6971 = vmatpush1.msra.mxu0 %v6459
    %6972 = vmatprep.subr.mxu0 %v6468
    %6973 = vmatpush1.msra.mxu0 %v6467
    %6974 = vmatprep.subr.mxu0 %v6476
    %6975 = vmatpush1.msra.mxu0 %v6475
    %6976 = vmatprep.subr.mxu0 %v6484
    %6977 = vmatpush1.msra.mxu0 %v6483
    %6978 = vmatprep.subr.mxu0 %v6492
    %6979 = vmatpush1.msra.mxu0 %v6491
    %6980 = vmatprep.subr.mxu0 %v6500
    %6981 = vmatpush1.msra.mxu0 %v6499
    %6982 = vmatprep.subr.mxu0 %v6508
    %6983 = vmatpush1.msra.mxu0 %v6507
    %6984 = vmatprep.subr.mxu0 %v6516
    %6985 = vmatpush1.msra.mxu0 %v6515
    %6986 = vmatprep.subr.mxu0 %v6524
    %6987 = vmatpush1.msra.mxu0 %v6523
    %6988 = vmatprep.subr.mxu0 %v6532
    %6989 = vmatpush1.msra.mxu0 %v6531
    %6990 = vmatprep.subr.mxu0 %v6540
    %6991 = vmatpush1.msra.mxu0 %v6539
    %6992 = vmatprep.subr.mxu0 %v6548
    %6993 = vmatpush1.msra.mxu0 %v6547
    %6994 = vmatprep.subr.mxu0 %v6556
    %6995 = vmatpush1.msra.mxu0 %v6555
    %6996 = vmatprep.subr.mxu0 %v6564
    %6997 = vmatpush1.msra.mxu0 %v6563
    %6998 = vmatprep.subr.mxu0 %v6572
    %6999 = vmatpush1.msra.mxu0 %v6571
    %7000 = vmatprep.subr.mxu0 %v6580
    %7001 = vmatpush1.msra.mxu0 %v6579
    %7002 = vmatprep.subr.mxu0 %v6588
    %7003 = vmatpush1.msra.mxu0 %v6587
    %7004 = vmatprep.subr.mxu0 %v6596
    %7005 = vmatpush1.msra.mxu0 %v6595
    %7006 = vmatprep.subr.mxu0 %v6604
    %7007 = vmatpush1.msra.mxu0 %v6603
    %7008 = vmatprep.subr.mxu0 %v6612
    %7009 = vmatpush1.msra.mxu0 %v6611
    %7010 = vmatprep.subr.mxu0 %v6620
    %7011 = vmatpush1.msra.mxu0 %v6619
    %7012 = vmatprep.subr.mxu0 %v6628
    %7013 = vmatpush1.msra.mxu0 %v6627
    %7014 = vmatprep.subr.mxu0 %v6636
    %7015 = vmatpush1.msra.mxu0 %v6635
    %7016 = vmatprep.subr.mxu0 %v6644
    %7017 = vmatpush1.msra.mxu0 %v6643
    %7018 = vmatprep.subr.mxu0 %v6652
    %7019 = vmatpush1.msra.mxu0 %v6651
    %7020 = vmatprep.subr.mxu0 %v6660
    %7021 = vmatpush1.msra.mxu0 %v6659
    %7022 = vmatprep.subr.mxu0 %v6668
    %7023 = vmatpush1.msra.mxu0 %v6667
    %7024 = vmatprep.subr.mxu0 %v6676
    %7025 = vmatpush1.msra.mxu0 %v6675
    %7026 = vmatprep.subr.mxu0 %v6684
    %7027 = vmatpush1.msra.mxu0 %v6683
    %7028 = vmatprep.subr.mxu0 %v6692
    %7029 = vmatpush1.msra.mxu0 %v6691
    %7030 = vmatprep.subr.mxu0 %v6700
    %7031 = vmatpush1.msra.mxu0 %v6699
    %7032 = vmatprep.subr.mxu0 %v6708
    %7033 = vmatpush1.msra.mxu0 %v6707
    %7034 = vmatprep.mubr.f32.mxu0 %v5688
    %7035 = vmatmul.mubr.f32.gmra.mrb[0].mxu0 %v5681
    %v7036 = vpop.f32.mrb[0].mxu0
    %v7037 = vadd.f32 %v6966, %v7036
    %v7038 = vpop.f32.mrb[0].mxu0
    %v7039 = vadd.f32 %v6968, %v7038
    %7040 = vdwg.mxu0
    %7041 = vmatprep.subr.mxu0 %v5694
    %7042 = vmatpush1.msra.mxu0 %v5693
    %7043 = vmatprep.subr.mxu0 %v5702
    %7044 = vmatpush1.msra.mxu0 %v5701
    %7045 = vmatprep.subr.mxu0 %v5710
    %7046 = vmatpush1.msra.mxu0 %v5709
    %7047 = vmatprep.subr.mxu0 %v5718
    %7048 = vmatpush1.msra.mxu0 %v5717
    %7049 = vmatprep.subr.mxu0 %v5726
    %7050 = vmatpush1.msra.mxu0 %v5725
    %7051 = vmatprep.subr.mxu0 %v5734
    %7052 = vmatpush1.msra.mxu0 %v5733
    %7053 = vmatprep.subr.mxu0 %v5742
    %7054 = vmatpush1.msra.mxu0 %v5741
    %7055 = vmatprep.subr.mxu0 %v5750
    %7056 = vmatpush1.msra.mxu0 %v5749
    %7057 = vmatprep.subr.mxu0 %v5758
    %7058 = vmatpush1.msra.mxu0 %v5757
    %7059 = vmatprep.subr.mxu0 %v5766
    %7060 = vmatpush1.msra.mxu0 %v5765
    %7061 = vmatprep.subr.mxu0 %v5774
    %7062 = vmatpush1.msra.mxu0 %v5773
    %7063 = vmatprep.subr.mxu0 %v5782
    %7064 = vmatpush1.msra.mxu0 %v5781
    %7065 = vmatprep.subr.mxu0 %v5790
    %7066 = vmatpush1.msra.mxu0 %v5789
    %7067 = vmatprep.subr.mxu0 %v5798
    %7068 = vmatpush1.msra.mxu0 %v5797
    %7069 = vmatprep.subr.mxu0 %v5806
    %7070 = vmatpush1.msra.mxu0 %v5805
    %7071 = vmatprep.subr.mxu0 %v5814
    %7072 = vmatpush1.msra.mxu0 %v5813
    %7073 = vmatprep.subr.mxu0 %v5822
    %7074 = vmatpush1.msra.mxu0 %v5821
    %7075 = vmatprep.subr.mxu0 %v5830
    %7076 = vmatpush1.msra.mxu0 %v5829
    %7077 = vmatprep.subr.mxu0 %v5838
    %7078 = vmatpush1.msra.mxu0 %v5837
    %7079 = vmatprep.subr.mxu0 %v5846
    %7080 = vmatpush1.msra.mxu0 %v5845
    %7081 = vmatprep.subr.mxu0 %v5854
    %7082 = vmatpush1.msra.mxu0 %v5853
    %7083 = vmatprep.subr.mxu0 %v5862
    %7084 = vmatpush1.msra.mxu0 %v5861
    %7085 = vmatprep.subr.mxu0 %v5870
    %7086 = vmatpush1.msra.mxu0 %v5869
    %7087 = vmatprep.subr.mxu0 %v5878
    %7088 = vmatpush1.msra.mxu0 %v5877
    %7089 = vmatprep.subr.mxu0 %v5886
    %7090 = vmatpush1.msra.mxu0 %v5885
    %7091 = vmatprep.subr.mxu0 %v5894
    %7092 = vmatpush1.msra.mxu0 %v5893
    %7093 = vmatprep.subr.mxu0 %v5902
    %7094 = vmatpush1.msra.mxu0 %v5901
    %7095 = vmatprep.subr.mxu0 %v5910
    %7096 = vmatpush1.msra.mxu0 %v5909
    %7097 = vmatprep.subr.mxu0 %v5918
    %7098 = vmatpush1.msra.mxu0 %v5917
    %7099 = vmatprep.subr.mxu0 %v5926
    %7100 = vmatpush1.msra.mxu0 %v5925
    %7101 = vmatprep.subr.mxu0 %v5934
    %7102 = vmatpush1.msra.mxu0 %v5933
    %7103 = vmatprep.subr.mxu0 %v5942
    %7104 = vmatpush1.msra.mxu0 %v5941
    %7105 = vmatprep.mubr.f32.mxu0 %v5607
    %7106 = vmatmul.mubr.f32.gmra.mrb[0].mxu0 %v5600
    %v7107 = vpop.f32.mrb[0].mxu0
    %v7108 = vadd.f32 %v6728, %v7107
    %v7109 = vpop.f32.mrb[0].mxu0
    %v7110 = vadd.f32 %v6732, %v7109
    %7111 = vdwg.mxu0
    %7112 = vmatprep.subr.mxu0 %v5950
    %7113 = vmatpush1.msra.mxu0 %v5949
    %7114 = vmatprep.subr.mxu0 %v5958
    %7115 = vmatpush1.msra.mxu0 %v5957
    %7116 = vmatprep.subr.mxu0 %v5966
    %7117 = vmatpush1.msra.mxu0 %v5965
    %7118 = vmatprep.subr.mxu0 %v5974
    %7119 = vmatpush1.msra.mxu0 %v5973
    %7120 = vmatprep.subr.mxu0 %v5982
    %7121 = vmatpush1.msra.mxu0 %v5981
    %7122 = vmatprep.subr.mxu0 %v5990
    %7123 = vmatpush1.msra.mxu0 %v5989
    %7124 = vmatprep.subr.mxu0 %v5998
    %7125 = vmatpush1.msra.mxu0 %v5997
    %7126 = vmatprep.subr.mxu0 %v6006
    %7127 = vmatpush1.msra.mxu0 %v6005
    %7128 = vmatprep.subr.mxu0 %v6014
    %7129 = vmatpush1.msra.mxu0 %v6013
    %7130 = vmatprep.subr.mxu0 %v6022
    %7131 = vmatpush1.msra.mxu0 %v6021
    %7132 = vmatprep.subr.mxu0 %v6030
    %7133 = vmatpush1.msra.mxu0 %v6029
    %7134 = vmatprep.subr.mxu0 %v6038
    %7135 = vmatpush1.msra.mxu0 %v6037
    %7136 = vmatprep.subr.mxu0 %v6046
    %7137 = vmatpush1.msra.mxu0 %v6045
    %7138 = vmatprep.subr.mxu0 %v6054
    %7139 = vmatpush1.msra.mxu0 %v6053
    %7140 = vmatprep.subr.mxu0 %v6062
    %7141 = vmatpush1.msra.mxu0 %v6061
    %7142 = vmatprep.subr.mxu0 %v6070
    %7143 = vmatpush1.msra.mxu0 %v6069
    %7144 = vmatprep.subr.mxu0 %v6078
    %7145 = vmatpush1.msra.mxu0 %v6077
    %7146 = vmatprep.subr.mxu0 %v6086
    %7147 = vmatpush1.msra.mxu0 %v6085
    %7148 = vmatprep.subr.mxu0 %v6094
    %7149 = vmatpush1.msra.mxu0 %v6093
    %7150 = vmatprep.subr.mxu0 %v6102
    %7151 = vmatpush1.msra.mxu0 %v6101
    %7152 = vmatprep.subr.mxu0 %v6110
    %7153 = vmatpush1.msra.mxu0 %v6109
    %7154 = vmatprep.subr.mxu0 %v6118
    %7155 = vmatpush1.msra.mxu0 %v6117
    %7156 = vmatprep.subr.mxu0 %v6126
    %7157 = vmatpush1.msra.mxu0 %v6125
    %7158 = vmatprep.subr.mxu0 %v6134
    %7159 = vmatpush1.msra.mxu0 %v6133
    %7160 = vmatprep.subr.mxu0 %v6142
    %7161 = vmatpush1.msra.mxu0 %v6141
    %7162 = vmatprep.subr.mxu0 %v6150
    %7163 = vmatpush1.msra.mxu0 %v6149
    %7164 = vmatprep.subr.mxu0 %v6158
    %7165 = vmatpush1.msra.mxu0 %v6157
    %7166 = vmatprep.subr.mxu0 %v6166
    %7167 = vmatpush1.msra.mxu0 %v6165
    %7168 = vmatprep.subr.mxu0 %v6174
    %7169 = vmatpush1.msra.mxu0 %v6173
    %7170 = vmatprep.subr.mxu0 %v6182
    %7171 = vmatpush1.msra.mxu0 %v6181
    %7172 = vmatprep.subr.mxu0 %v6190
    %7173 = vmatpush1.msra.mxu0 %v6189
    %7174 = vmatprep.subr.mxu0 %v6198
    %7175 = vmatpush1.msra.mxu0 %v6197
    %7176 = vmatprep.mubr.f32.mxu0 %v5634
    %7177 = vmatmul.mubr.f32.gmra.mrb[0].mxu0 %v5627
    %v7178 = vpop.f32.mrb[0].mxu0
    %v7179 = vadd.f32 %v7108, %v7178
    %v7180 = vpop.f32.mrb[0].mxu0
    %v7181 = vadd.f32 %v7110, %v7180
    %7182 = vdwg.mxu0
    %7183 = vmatprep.subr.mxu0 %v6206
    %7184 = vmatpush1.msra.mxu0 %v6205
    %7185 = vmatprep.subr.mxu0 %v6214
    %7186 = vmatpush1.msra.mxu0 %v6213
    %7187 = vmatprep.subr.mxu0 %v6222
    %7188 = vmatpush1.msra.mxu0 %v6221
    %7189 = vmatprep.subr.mxu0 %v6230
    %7190 = vmatpush1.msra.mxu0 %v6229
    %7191 = vmatprep.subr.mxu0 %v6238
    %7192 = vmatpush1.msra.mxu0 %v6237
    %7193 = vmatprep.subr.mxu0 %v6246
    %7194 = vmatpush1.msra.mxu0 %v6245
    %7195 = vmatprep.subr.mxu0 %v6254
    %7196 = vmatpush1.msra.mxu0 %v6253
    %7197 = vmatprep.subr.mxu0 %v6262
    %7198 = vmatpush1.msra.mxu0 %v6261
    %7199 = vmatprep.subr.mxu0 %v6270
    %7200 = vmatpush1.msra.mxu0 %v6269
    %7201 = vmatprep.subr.mxu0 %v6278
    %7202 = vmatpush1.msra.mxu0 %v6277
    %7203 = vmatprep.subr.mxu0 %v6286
    %7204 = vmatpush1.msra.mxu0 %v6285
    %7205 = vmatprep.subr.mxu0 %v6294
    %7206 = vmatpush1.msra.mxu0 %v6293
    %7207 = vmatprep.subr.mxu0 %v6302
    %7208 = vmatpush1.msra.mxu0 %v6301
    %7209 = vmatprep.subr.mxu0 %v6310
    %7210 = vmatpush1.msra.mxu0 %v6309
    %7211 = vmatprep.subr.mxu0 %v6318
    %7212 = vmatpush1.msra.mxu0 %v6317
    %7213 = vmatprep.subr.mxu0 %v6326
    %7214 = vmatpush1.msra.mxu0 %v6325
    %7215 = vmatprep.subr.mxu0 %v6334
    %7216 = vmatpush1.msra.mxu0 %v6333
    %7217 = vmatprep.subr.mxu0 %v6342
    %7218 = vmatpush1.msra.mxu0 %v6341
    %7219 = vmatprep.subr.mxu0 %v6350
    %7220 = vmatpush1.msra.mxu0 %v6349
    %7221 = vmatprep.subr.mxu0 %v6358
    %7222 = vmatpush1.msra.mxu0 %v6357
    %7223 = vmatprep.subr.mxu0 %v6366
    %7224 = vmatpush1.msra.mxu0 %v6365
    %7225 = vmatprep.subr.mxu0 %v6374
    %7226 = vmatpush1.msra.mxu0 %v6373
    %7227 = vmatprep.subr.mxu0 %v6382
    %7228 = vmatpush1.msra.mxu0 %v6381
    %7229 = vmatprep.subr.mxu0 %v6390
    %7230 = vmatpush1.msra.mxu0 %v6389
    %7231 = vmatprep.subr.mxu0 %v6398
    %7232 = vmatpush1.msra.mxu0 %v6397
    %7233 = vmatprep.subr.mxu0 %v6406
    %7234 = vmatpush1.msra.mxu0 %v6405
    %7235 = vmatprep.subr.mxu0 %v6414
    %7236 = vmatpush1.msra.mxu0 %v6413
    %7237 = vmatprep.subr.mxu0 %v6422
    %7238 = vmatpush1.msra.mxu0 %v6421
    %7239 = vmatprep.subr.mxu0 %v6430
    %7240 = vmatpush1.msra.mxu0 %v6429
    %7241 = vmatprep.subr.mxu0 %v6438
    %7242 = vmatpush1.msra.mxu0 %v6437
    %7243 = vmatprep.subr.mxu0 %v6446
    %7244 = vmatpush1.msra.mxu0 %v6445
    %7245 = vmatprep.subr.mxu0 %v6454
    %7246 = vmatpush1.msra.mxu0 %v6453
    %7247 = vmatprep.mubr.f32.mxu0 %v5661
    %7248 = vmatmul.mubr.f32.gmra.mrb[0].mxu0 %v5654
    %v7249 = vpop.f32.mrb[0].mxu0
    %v7250 = vadd.f32 %v7179, %v7249
    %v7251 = vpop.f32.mrb[0].mxu0
    %v7252 = vadd.f32 %v7181, %v7251
    %7253 = vdwg.mxu0
    %7254 = vmatprep.subr.mxu0 %v6462
    %7255 = vmatpush1.msra.mxu0 %v6461
    %7256 = vmatprep.subr.mxu0 %v6470
    %7257 = vmatpush1.msra.mxu0 %v6469
    %7258 = vmatprep.subr.mxu0 %v6478
    %7259 = vmatpush1.msra.mxu0 %v6477
    %7260 = vmatprep.subr.mxu0 %v6486
    %7261 = vmatpush1.msra.mxu0 %v6485
    %7262 = vmatprep.subr.mxu0 %v6494
    %7263 = vmatpush1.msra.mxu0 %v6493
    %7264 = vmatprep.subr.mxu0 %v6502
    %7265 = vmatpush1.msra.mxu0 %v6501
    %7266 = vmatprep.subr.mxu0 %v6510
    %7267 = vmatpush1.msra.mxu0 %v6509
    %7268 = vmatprep.subr.mxu0 %v6518
    %7269 = vmatpush1.msra.mxu0 %v6517
    %7270 = vmatprep.subr.mxu0 %v6526
    %7271 = vmatpush1.msra.mxu0 %v6525
    %7272 = vmatprep.subr.mxu0 %v6534
    %7273 = vmatpush1.msra.mxu0 %v6533
    %7274 = vmatprep.subr.mxu0 %v6542
    %7275 = vmatpush1.msra.mxu0 %v6541
    %7276 = vmatprep.subr.mxu0 %v6550
    %7277 = vmatpush1.msra.mxu0 %v6549
    %7278 = vmatprep.subr.mxu0 %v6558
    %7279 = vmatpush1.msra.mxu0 %v6557
    %7280 = vmatprep.subr.mxu0 %v6566
    %7281 = vmatpush1.msra.mxu0 %v6565
    %7282 = vmatprep.subr.mxu0 %v6574
    %7283 = vmatpush1.msra.mxu0 %v6573
    %7284 = vmatprep.subr.mxu0 %v6582
    %7285 = vmatpush1.msra.mxu0 %v6581
    %7286 = vmatprep.subr.mxu0 %v6590
    %7287 = vmatpush1.msra.mxu0 %v6589
    %7288 = vmatprep.subr.mxu0 %v6598
    %7289 = vmatpush1.msra.mxu0 %v6597
    %7290 = vmatprep.subr.mxu0 %v6606
    %7291 = vmatpush1.msra.mxu0 %v6605
    %7292 = vmatprep.subr.mxu0 %v6614
    %7293 = vmatpush1.msra.mxu0 %v6613
    %7294 = vmatprep.subr.mxu0 %v6622
    %7295 = vmatpush1.msra.mxu0 %v6621
    %7296 = vmatprep.subr.mxu0 %v6630
    %7297 = vmatpush1.msra.mxu0 %v6629
    %7298 = vmatprep.subr.mxu0 %v6638
    %7299 = vmatpush1.msra.mxu0 %v6637
    %7300 = vmatprep.subr.mxu0 %v6646
    %7301 = vmatpush1.msra.mxu0 %v6645
    %7302 = vmatprep.subr.mxu0 %v6654
    %7303 = vmatpush1.msra.mxu0 %v6653
    %7304 = vmatprep.subr.mxu0 %v6662
    %7305 = vmatpush1.msra.mxu0 %v6661
    %7306 = vmatprep.subr.mxu0 %v6670
    %7307 = vmatpush1.msra.mxu0 %v6669
    %7308 = vmatprep.subr.mxu0 %v6678
    %7309 = vmatpush1.msra.mxu0 %v6677
    %7310 = vmatprep.subr.mxu0 %v6686
    %7311 = vmatpush1.msra.mxu0 %v6685
    %7312 = vmatprep.subr.mxu0 %v6694
    %7313 = vmatpush1.msra.mxu0 %v6693
    %7314 = vmatprep.subr.mxu0 %v6702
    %7315 = vmatpush1.msra.mxu0 %v6701
    %7316 = vmatprep.subr.mxu0 %v6710
    %7317 = vmatpush1.msra.mxu0 %v6709
    %7318 = vmatprep.mubr.f32.mxu0 %v5688
    %7319 = vmatmul.mubr.f32.gmra.mrb[0].mxu0 %v5681
    %v7320 = vpop.f32.mrb[0].mxu0
    %v7321 = vadd.f32 %v7250, %v7320
    %v7322 = vpop.f32.mrb[0].mxu0
    %v7323 = vadd.f32 %v7252, %v7322
    %7324 = vdwg.mxu0
    %7325 = vmatprep.subr.mxu0 %v5696
    %7326 = vmatpush1.msra.mxu0 %v5695
    %7327 = vmatprep.subr.mxu0 %v5704
    %7328 = vmatpush1.msra.mxu0 %v5703
    %7329 = vmatprep.subr.mxu0 %v5712
    %7330 = vmatpush1.msra.mxu0 %v5711
    %7331 = vmatprep.subr.mxu0 %v5720
    %7332 = vmatpush1.msra.mxu0 %v5719
    %7333 = vmatprep.subr.mxu0 %v5728
    %7334 = vmatpush1.msra.mxu0 %v5727
    %7335 = vmatprep.subr.mxu0 %v5736
    %7336 = vmatpush1.msra.mxu0 %v5735
    %7337 = vmatprep.subr.mxu0 %v5744
    %7338 = vmatpush1.msra.mxu0 %v5743
    %7339 = vmatprep.subr.mxu0 %v5752
    %7340 = vmatpush1.msra.mxu0 %v5751
    %7341 = vmatprep.subr.mxu0 %v5760
    %7342 = vmatpush1.msra.mxu0 %v5759
    %7343 = vmatprep.subr.mxu0 %v5768
    %7344 = vmatpush1.msra.mxu0 %v5767
    %7345 = vmatprep.subr.mxu0 %v5776
    %7346 = vmatpush1.msra.mxu0 %v5775
    %7347 = vmatprep.subr.mxu0 %v5784
    %7348 = vmatpush1.msra.mxu0 %v5783
    %7349 = vmatprep.subr.mxu0 %v5792
    %7350 = vmatpush1.msra.mxu0 %v5791
    %7351 = vmatprep.subr.mxu0 %v5800
    %7352 = vmatpush1.msra.mxu0 %v5799
    %7353 = vmatprep.subr.mxu0 %v5808
    %7354 = vmatpush1.msra.mxu0 %v5807
    %7355 = vmatprep.subr.mxu0 %v5816
    %7356 = vmatpush1.msra.mxu0 %v5815
    %7357 = vmatprep.subr.mxu0 %v5824
    %7358 = vmatpush1.msra.mxu0 %v5823
    %7359 = vmatprep.subr.mxu0 %v5832
    %7360 = vmatpush1.msra.mxu0 %v5831
    %7361 = vmatprep.subr.mxu0 %v5840
    %7362 = vmatpush1.msra.mxu0 %v5839
    %7363 = vmatprep.subr.mxu0 %v5848
    %7364 = vmatpush1.msra.mxu0 %v5847
    %7365 = vmatprep.subr.mxu0 %v5856
    %7366 = vmatpush1.msra.mxu0 %v5855
    %7367 = vmatprep.subr.mxu0 %v5864
    %7368 = vmatpush1.msra.mxu0 %v5863
    %7369 = vmatprep.subr.mxu0 %v5872
    %7370 = vmatpush1.msra.mxu0 %v5871
    %7371 = vmatprep.subr.mxu0 %v5880
    %7372 = vmatpush1.msra.mxu0 %v5879
    %7373 = vmatprep.subr.mxu0 %v5888
    %7374 = vmatpush1.msra.mxu0 %v5887
    %7375 = vmatprep.subr.mxu0 %v5896
    %7376 = vmatpush1.msra.mxu0 %v5895
    %7377 = vmatprep.subr.mxu0 %v5904
    %7378 = vmatpush1.msra.mxu0 %v5903
    %7379 = vmatprep.subr.mxu0 %v5912
    %7380 = vmatpush1.msra.mxu0 %v5911
    %7381 = vmatprep.subr.mxu0 %v5920
    %7382 = vmatpush1.msra.mxu0 %v5919
    %7383 = vmatprep.subr.mxu0 %v5928
    %7384 = vmatpush1.msra.mxu0 %v5927
    %7385 = vmatprep.subr.mxu0 %v5936
    %7386 = vmatpush1.msra.mxu0 %v5935
    %7387 = vmatprep.subr.mxu0 %v5944
    %7388 = vmatpush1.msra.mxu0 %v5943
    %7389 = vmatprep.mubr.f32.mxu0 %v5607
    %7390 = vmatmul.mubr.f32.gmra.mrb[0].mxu0 %v5600
    %v7391 = vpop.f32.mrb[0].mxu0
    %v7392 = vadd.f32 %v6736, %v7391
    %v7393 = vpop.f32.mrb[0].mxu0
    %v7394 = vadd.f32 %v6740, %v7393
    %7395 = vdwg.mxu0
    %7396 = vmatprep.subr.mxu0 %v5952
    %7397 = vmatpush1.msra.mxu0 %v5951
    %7398 = vmatprep.subr.mxu0 %v5960
    %7399 = vmatpush1.msra.mxu0 %v5959
    %7400 = vmatprep.subr.mxu0 %v5968
    %7401 = vmatpush1.msra.mxu0 %v5967
    %7402 = vmatprep.subr.mxu0 %v5976
    %7403 = vmatpush1.msra.mxu0 %v5975
    %7404 = vmatprep.subr.mxu0 %v5984
    %7405 = vmatpush1.msra.mxu0 %v5983
    %7406 = vmatprep.subr.mxu0 %v5992
    %7407 = vmatpush1.msra.mxu0 %v5991
    %7408 = vmatprep.subr.mxu0 %v6000
    %7409 = vmatpush1.msra.mxu0 %v5999
    %7410 = vmatprep.subr.mxu0 %v6008
    %7411 = vmatpush1.msra.mxu0 %v6007
    %7412 = vmatprep.subr.mxu0 %v6016
    %7413 = vmatpush1.msra.mxu0 %v6015
    %7414 = vmatprep.subr.mxu0 %v6024
    %7415 = vmatpush1.msra.mxu0 %v6023
    %7416 = vmatprep.subr.mxu0 %v6032
    %7417 = vmatpush1.msra.mxu0 %v6031
    %7418 = vmatprep.subr.mxu0 %v6040
    %7419 = vmatpush1.msra.mxu0 %v6039
    %7420 = vmatprep.subr.mxu0 %v6048
    %7421 = vmatpush1.msra.mxu0 %v6047
    %7422 = vmatprep.subr.mxu0 %v6056
    %7423 = vmatpush1.msra.mxu0 %v6055
    %7424 = vmatprep.subr.mxu0 %v6064
    %7425 = vmatpush1.msra.mxu0 %v6063
    %7426 = vmatprep.subr.mxu0 %v6072
    %7427 = vmatpush1.msra.mxu0 %v6071
    %7428 = vmatprep.subr.mxu0 %v6080
    %7429 = vmatpush1.msra.mxu0 %v6079
    %7430 = vmatprep.subr.mxu0 %v6088
    %7431 = vmatpush1.msra.mxu0 %v6087
    %7432 = vmatprep.subr.mxu0 %v6096
    %7433 = vmatpush1.msra.mxu0 %v6095
    %7434 = vmatprep.subr.mxu0 %v6104
    %7435 = vmatpush1.msra.mxu0 %v6103
    %7436 = vmatprep.subr.mxu0 %v6112
    %7437 = vmatpush1.msra.mxu0 %v6111
    %7438 = vmatprep.subr.mxu0 %v6120
    %7439 = vmatpush1.msra.mxu0 %v6119
    %7440 = vmatprep.subr.mxu0 %v6128
    %7441 = vmatpush1.msra.mxu0 %v6127
    %7442 = vmatprep.subr.mxu0 %v6136
    %7443 = vmatpush1.msra.mxu0 %v6135
    %7444 = vmatprep.subr.mxu0 %v6144
    %7445 = vmatpush1.msra.mxu0 %v6143
    %7446 = vmatprep.subr.mxu0 %v6152
    %7447 = vmatpush1.msra.mxu0 %v6151
    %7448 = vmatprep.subr.mxu0 %v6160
    %7449 = vmatpush1.msra.mxu0 %v6159
    %7450 = vmatprep.subr.mxu0 %v6168
    %7451 = vmatpush1.msra.mxu0 %v6167
    %7452 = vmatprep.subr.mxu0 %v6176
    %7453 = vmatpush1.msra.mxu0 %v6175
    %7454 = vmatprep.subr.mxu0 %v6184
    %7455 = vmatpush1.msra.mxu0 %v6183
    %7456 = vmatprep.subr.mxu0 %v6192
    %7457 = vmatpush1.msra.mxu0 %v6191
    %7458 = vmatprep.subr.mxu0 %v6200
    %7459 = vmatpush1.msra.mxu0 %v6199
    %7460 = vmatprep.mubr.f32.mxu0 %v5634
    %7461 = vmatmul.mubr.f32.gmra.mrb[0].mxu0 %v5627
    %v7462 = vpop.f32.mrb[0].mxu0
    %v7463 = vadd.f32 %v7392, %v7462
    %v7464 = vpop.f32.mrb[0].mxu0
    %v7465 = vadd.f32 %v7394, %v7464
    %7466 = vdwg.mxu0
    %7467 = vmatprep.subr.mxu0 %v6208
    %7468 = vmatpush1.msra.mxu0 %v6207
    %7469 = vmatprep.subr.mxu0 %v6216
    %7470 = vmatpush1.msra.mxu0 %v6215
    %7471 = vmatprep.subr.mxu0 %v6224
    %7472 = vmatpush1.msra.mxu0 %v6223
    %7473 = vmatprep.subr.mxu0 %v6232
    %7474 = vmatpush1.msra.mxu0 %v6231
    %7475 = vmatprep.subr.mxu0 %v6240
    %7476 = vmatpush1.msra.mxu0 %v6239
    %7477 = vmatprep.subr.mxu0 %v6248
    %7478 = vmatpush1.msra.mxu0 %v6247
    %7479 = vmatprep.subr.mxu0 %v6256
    %7480 = vmatpush1.msra.mxu0 %v6255
    %7481 = vmatprep.subr.mxu0 %v6264
    %7482 = vmatpush1.msra.mxu0 %v6263
    %7483 = vmatprep.subr.mxu0 %v6272
    %7484 = vmatpush1.msra.mxu0 %v6271
    %7485 = vmatprep.subr.mxu0 %v6280
    %7486 = vmatpush1.msra.mxu0 %v6279
    %7487 = vmatprep.subr.mxu0 %v6288
    %7488 = vmatpush1.msra.mxu0 %v6287
    %7489 = vmatprep.subr.mxu0 %v6296
    %7490 = vmatpush1.msra.mxu0 %v6295
    %7491 = vmatprep.subr.mxu0 %v6304
    %7492 = vmatpush1.msra.mxu0 %v6303
    %7493 = vmatprep.subr.mxu0 %v6312
    %7494 = vmatpush1.msra.mxu0 %v6311
    %7495 = vmatprep.subr.mxu0 %v6320
    %7496 = vmatpush1.msra.mxu0 %v6319
    %7497 = vmatprep.subr.mxu0 %v6328
    %7498 = vmatpush1.msra.mxu0 %v6327
    %7499 = vmatprep.subr.mxu0 %v6336
    %7500 = vmatpush1.msra.mxu0 %v6335
    %7501 = vmatprep.subr.mxu0 %v6344
    %7502 = vmatpush1.msra.mxu0 %v6343
    %7503 = vmatprep.subr.mxu0 %v6352
    %7504 = vmatpush1.msra.mxu0 %v6351
    %7505 = vmatprep.subr.mxu0 %v6360
    %7506 = vmatpush1.msra.mxu0 %v6359
    %7507 = vmatprep.subr.mxu0 %v6368
    %7508 = vmatpush1.msra.mxu0 %v6367
    %7509 = vmatprep.subr.mxu0 %v6376
    %7510 = vmatpush1.msra.mxu0 %v6375
    %7511 = vmatprep.subr.mxu0 %v6384
    %7512 = vmatpush1.msra.mxu0 %v6383
    %7513 = vmatprep.subr.mxu0 %v6392
    %7514 = vmatpush1.msra.mxu0 %v6391
    %7515 = vmatprep.subr.mxu0 %v6400
    %7516 = vmatpush1.msra.mxu0 %v6399
    %7517 = vmatprep.subr.mxu0 %v6408
    %7518 = vmatpush1.msra.mxu0 %v6407
    %7519 = vmatprep.subr.mxu0 %v6416
    %7520 = vmatpush1.msra.mxu0 %v6415
    %7521 = vmatprep.subr.mxu0 %v6424
    %7522 = vmatpush1.msra.mxu0 %v6423
    %7523 = vmatprep.subr.mxu0 %v6432
    %7524 = vmatpush1.msra.mxu0 %v6431
    %7525 = vmatprep.subr.mxu0 %v6440
    %7526 = vmatpush1.msra.mxu0 %v6439
    %7527 = vmatprep.subr.mxu0 %v6448
    %7528 = vmatpush1.msra.mxu0 %v6447
    %7529 = vmatprep.subr.mxu0 %v6456
    %7530 = vmatpush1.msra.mxu0 %v6455
    %7531 = vmatprep.mubr.f32.mxu0 %v5661
    %7532 = vmatmul.mubr.f32.gmra.mrb[0].mxu0 %v5654
    %v7533 = vpop.f32.mrb[0].mxu0
    %v7534 = vadd.f32 %v7463, %v7533
    %v7535 = vpop.f32.mrb[0].mxu0
    %v7536 = vadd.f32 %v7465, %v7535
    %7537 = vdwg.mxu0
    %7538 = vmatprep.subr.mxu0 %v6464
    %7539 = vmatpush1.msra.mxu0 %v6463
    %7540 = vmatprep.subr.mxu0 %v6472
    %7541 = vmatpush1.msra.mxu0 %v6471
    %7542 = vmatprep.subr.mxu0 %v6480
    %7543 = vmatpush1.msra.mxu0 %v6479
    %7544 = vmatprep.subr.mxu0 %v6488
    %7545 = vmatpush1.msra.mxu0 %v6487
    %7546 = vmatprep.subr.mxu0 %v6496
    %7547 = vmatpush1.msra.mxu0 %v6495
    %7548 = vmatprep.subr.mxu0 %v6504
    %7549 = vmatpush1.msra.mxu0 %v6503
    %7550 = vmatprep.subr.mxu0 %v6512
    %7551 = vmatpush1.msra.mxu0 %v6511
    %7552 = vmatprep.subr.mxu0 %v6520
    %7553 = vmatpush1.msra.mxu0 %v6519
    %7554 = vmatprep.subr.mxu0 %v6528
    %7555 = vmatpush1.msra.mxu0 %v6527
    %7556 = vmatprep.subr.mxu0 %v6536
    %7557 = vmatpush1.msra.mxu0 %v6535
    %7558 = vmatprep.subr.mxu0 %v6544
    %7559 = vmatpush1.msra.mxu0 %v6543
    %7560 = vmatprep.subr.mxu0 %v6552
    %7561 = vmatpush1.msra.mxu0 %v6551
    %7562 = vmatprep.subr.mxu0 %v6560
    %7563 = vmatpush1.msra.mxu0 %v6559
    %7564 = vmatprep.subr.mxu0 %v6568
    %7565 = vmatpush1.msra.mxu0 %v6567
    %7566 = vmatprep.subr.mxu0 %v6576
    %7567 = vmatpush1.msra.mxu0 %v6575
    %7568 = vmatprep.subr.mxu0 %v6584
    %7569 = vmatpush1.msra.mxu0 %v6583
    %7570 = vmatprep.subr.mxu0 %v6592
    %7571 = vmatpush1.msra.mxu0 %v6591
    %7572 = vmatprep.subr.mxu0 %v6600
    %7573 = vmatpush1.msra.mxu0 %v6599
    %7574 = vmatprep.subr.mxu0 %v6608
    %7575 = vmatpush1.msra.mxu0 %v6607
    %7576 = vmatprep.subr.mxu0 %v6616
    %7577 = vmatpush1.msra.mxu0 %v6615
    %7578 = vmatprep.subr.mxu0 %v6624
    %7579 = vmatpush1.msra.mxu0 %v6623
    %7580 = vmatprep.subr.mxu0 %v6632
    %7581 = vmatpush1.msra.mxu0 %v6631
    %7582 = vmatprep.subr.mxu0 %v6640
    %7583 = vmatpush1.msra.mxu0 %v6639
    %7584 = vmatprep.subr.mxu0 %v6648
    %7585 = vmatpush1.msra.mxu0 %v6647
    %7586 = vmatprep.subr.mxu0 %v6656
    %7587 = vmatpush1.msra.mxu0 %v6655
    %7588 = vmatprep.subr.mxu0 %v6664
    %7589 = vmatpush1.msra.mxu0 %v6663
    %7590 = vmatprep.subr.mxu0 %v6672
    %7591 = vmatpush1.msra.mxu0 %v6671
    %7592 = vmatprep.subr.mxu0 %v6680
    %7593 = vmatpush1.msra.mxu0 %v6679
    %7594 = vmatprep.subr.mxu0 %v6688
    %7595 = vmatpush1.msra.mxu0 %v6687
    %7596 = vmatprep.subr.mxu0 %v6696
    %7597 = vmatpush1.msra.mxu0 %v6695
    %7598 = vmatprep.subr.mxu0 %v6704
    %7599 = vmatpush1.msra.mxu0 %v6703
    %7600 = vmatprep.subr.mxu0 %v6712
    %7601 = vmatpush1.msra.mxu0 %v6711
    %7602 = vmatprep.mubr.f32.mxu0 %v5688
    %7603 = vmatmul.mubr.f32.gmra.mrb[0].mxu0 %v5681
    %v7604 = vpop.f32.mrb[0].mxu0
    %v7605 = vadd.f32 %v7534, %v7604
    %v7606 = vpop.f32.mrb[0].mxu0
    %v7607 = vadd.f32 %v7536, %v7606
    %7608 = vdwg.mxu0
    %7609 = vmatprep.subr.mxu0 %v5698
    %7610 = vmatpush1.msra.mxu0 %v5697
    %7611 = vmatprep.subr.mxu0 %v5706
    %7612 = vmatpush1.msra.mxu0 %v5705
    %7613 = vmatprep.subr.mxu0 %v5714
    %7614 = vmatpush1.msra.mxu0 %v5713
    %7615 = vmatprep.subr.mxu0 %v5722
    %7616 = vmatpush1.msra.mxu0 %v5721
    %7617 = vmatprep.subr.mxu0 %v5730
    %7618 = vmatpush1.msra.mxu0 %v5729
    %7619 = vmatprep.subr.mxu0 %v5738
    %7620 = vmatpush1.msra.mxu0 %v5737
    %7621 = vmatprep.subr.mxu0 %v5746
    %7622 = vmatpush1.msra.mxu0 %v5745
    %7623 = vmatprep.subr.mxu0 %v5754
    %7624 = vmatpush1.msra.mxu0 %v5753
    %7625 = vmatprep.subr.mxu0 %v5762
    %7626 = vmatpush1.msra.mxu0 %v5761
    %7627 = vmatprep.subr.mxu0 %v5770
    %7628 = vmatpush1.msra.mxu0 %v5769
    %7629 = vmatprep.subr.mxu0 %v5778
    %7630 = vmatpush1.msra.mxu0 %v5777
    %7631 = vmatprep.subr.mxu0 %v5786
    %7632 = vmatpush1.msra.mxu0 %v5785
    %7633 = vmatprep.subr.mxu0 %v5794
    %7634 = vmatpush1.msra.mxu0 %v5793
    %7635 = vmatprep.subr.mxu0 %v5802
    %7636 = vmatpush1.msra.mxu0 %v5801
    %7637 = vmatprep.subr.mxu0 %v5810
    %7638 = vmatpush1.msra.mxu0 %v5809
    %7639 = vmatprep.subr.mxu0 %v5818
    %7640 = vmatpush1.msra.mxu0 %v5817
    %7641 = vmatprep.subr.mxu0 %v5826
    %7642 = vmatpush1.msra.mxu0 %v5825
    %7643 = vmatprep.subr.mxu0 %v5834
    %7644 = vmatpush1.msra.mxu0 %v5833
    %7645 = vmatprep.subr.mxu0 %v5842
    %7646 = vmatpush1.msra.mxu0 %v5841
    %7647 = vmatprep.subr.mxu0 %v5850
    %7648 = vmatpush1.msra.mxu0 %v5849
    %7649 = vmatprep.subr.mxu0 %v5858
    %7650 = vmatpush1.msra.mxu0 %v5857
    %7651 = vmatprep.subr.mxu0 %v5866
    %7652 = vmatpush1.msra.mxu0 %v5865
    %7653 = vmatprep.subr.mxu0 %v5874
    %7654 = vmatpush1.msra.mxu0 %v5873
    %7655 = vmatprep.subr.mxu0 %v5882
    %7656 = vmatpush1.msra.mxu0 %v5881
    %7657 = vmatprep.subr.mxu0 %v5890
    %7658 = vmatpush1.msra.mxu0 %v5889
    %7659 = vmatprep.subr.mxu0 %v5898
    %7660 = vmatpush1.msra.mxu0 %v5897
    %7661 = vmatprep.subr.mxu0 %v5906
    %7662 = vmatpush1.msra.mxu0 %v5905
    %7663 = vmatprep.subr.mxu0 %v5914
    %7664 = vmatpush1.msra.mxu0 %v5913
    %7665 = vmatprep.subr.mxu0 %v5922
    %7666 = vmatpush1.msra.mxu0 %v5921
    %7667 = vmatprep.subr.mxu0 %v5930
    %7668 = vmatpush1.msra.mxu0 %v5929
    %7669 = vmatprep.subr.mxu0 %v5938
    %7670 = vmatpush1.msra.mxu0 %v5937
    %7671 = vmatprep.subr.mxu0 %v5946
    %7672 = vmatpush1.msra.mxu0 %v5945
    %7673 = vmatprep.mubr.f32.mxu0 %v5607
    %7674 = vmatmul.mubr.f32.gmra.mrb[0].mxu0 %v5600
    %v7675 = vpop.f32.mrb[0].mxu0
    %v7676 = vadd.f32 %v6744, %v7675
    %v7677 = vpop.f32.mrb[0].mxu0
    %v7678 = vadd.f32 %v6748, %v7677
    %7679 = vdwg.mxu0
    %7680 = vmatprep.subr.mxu0 %v5954
    %7681 = vmatpush1.msra.mxu0 %v5953
    %7682 = vmatprep.subr.mxu0 %v5962
    %7683 = vmatpush1.msra.mxu0 %v5961
    %7684 = vmatprep.subr.mxu0 %v5970
    %7685 = vmatpush1.msra.mxu0 %v5969
    %7686 = vmatprep.subr.mxu0 %v5978
    %7687 = vmatpush1.msra.mxu0 %v5977
    %7688 = vmatprep.subr.mxu0 %v5986
    %7689 = vmatpush1.msra.mxu0 %v5985
    %7690 = vmatprep.subr.mxu0 %v5994
    %7691 = vmatpush1.msra.mxu0 %v5993
    %7692 = vmatprep.subr.mxu0 %v6002
    %7693 = vmatpush1.msra.mxu0 %v6001
    %7694 = vmatprep.subr.mxu0 %v6010
    %7695 = vmatpush1.msra.mxu0 %v6009
    %7696 = vmatprep.subr.mxu0 %v6018
    %7697 = vmatpush1.msra.mxu0 %v6017
    %7698 = vmatprep.subr.mxu0 %v6026
    %7699 = vmatpush1.msra.mxu0 %v6025
    %7700 = vmatprep.subr.mxu0 %v6034
    %7701 = vmatpush1.msra.mxu0 %v6033
    %7702 = vmatprep.subr.mxu0 %v6042
    %7703 = vmatpush1.msra.mxu0 %v6041
    %7704 = vmatprep.subr.mxu0 %v6050
    %7705 = vmatpush1.msra.mxu0 %v6049
    %7706 = vmatprep.subr.mxu0 %v6058
    %7707 = vmatpush1.msra.mxu0 %v6057
    %7708 = vmatprep.subr.mxu0 %v6066
    %7709 = vmatpush1.msra.mxu0 %v6065
    %7710 = vmatprep.subr.mxu0 %v6074
    %7711 = vmatpush1.msra.mxu0 %v6073
    %7712 = vmatprep.subr.mxu0 %v6082
    %7713 = vmatpush1.msra.mxu0 %v6081
    %7714 = vmatprep.subr.mxu0 %v6090
    %7715 = vmatpush1.msra.mxu0 %v6089
    %7716 = vmatprep.subr.mxu0 %v6098
    %7717 = vmatpush1.msra.mxu0 %v6097
    %7718 = vmatprep.subr.mxu0 %v6106
    %7719 = vmatpush1.msra.mxu0 %v6105
    %7720 = vmatprep.subr.mxu0 %v6114
    %7721 = vmatpush1.msra.mxu0 %v6113
    %7722 = vmatprep.subr.mxu0 %v6122
    %7723 = vmatpush1.msra.mxu0 %v6121
    %7724 = vmatprep.subr.mxu0 %v6130
    %7725 = vmatpush1.msra.mxu0 %v6129
    %7726 = vmatprep.subr.mxu0 %v6138
    %7727 = vmatpush1.msra.mxu0 %v6137
    %7728 = vmatprep.subr.mxu0 %v6146
    %7729 = vmatpush1.msra.mxu0 %v6145
    %7730 = vmatprep.subr.mxu0 %v6154
    %7731 = vmatpush1.msra.mxu0 %v6153
    %7732 = vmatprep.subr.mxu0 %v6162
    %7733 = vmatpush1.msra.mxu0 %v6161
    %7734 = vmatprep.subr.mxu0 %v6170
    %7735 = vmatpush1.msra.mxu0 %v6169
    %7736 = vmatprep.subr.mxu0 %v6178
    %7737 = vmatpush1.msra.mxu0 %v6177
    %7738 = vmatprep.subr.mxu0 %v6186
    %7739 = vmatpush1.msra.mxu0 %v6185
    %7740 = vmatprep.subr.mxu0 %v6194
    %7741 = vmatpush1.msra.mxu0 %v6193
    %7742 = vmatprep.subr.mxu0 %v6202
    %7743 = vmatpush1.msra.mxu0 %v6201
    %7744 = vmatprep.mubr.f32.mxu0 %v5634
    %7745 = vmatmul.mubr.f32.gmra.mrb[0].mxu0 %v5627
    %v7746 = vpop.f32.mrb[0].mxu0
    %v7747 = vadd.f32 %v7676, %v7746
    %v7748 = vpop.f32.mrb[0].mxu0
    %v7749 = vadd.f32 %v7678, %v7748
    %7750 = vdwg.mxu0
    %7751 = vmatprep.subr.mxu0 %v6210
    %7752 = vmatpush1.msra.mxu0 %v6209
    %7753 = vmatprep.subr.mxu0 %v6218
    %7754 = vmatpush1.msra.mxu0 %v6217
    %7755 = vmatprep.subr.mxu0 %v6226
    %7756 = vmatpush1.msra.mxu0 %v6225
    %7757 = vmatprep.subr.mxu0 %v6234
    %7758 = vmatpush1.msra.mxu0 %v6233
    %7759 = vmatprep.subr.mxu0 %v6242
    %7760 = vmatpush1.msra.mxu0 %v6241
    %7761 = vmatprep.subr.mxu0 %v6250
    %7762 = vmatpush1.msra.mxu0 %v6249
    %7763 = vmatprep.subr.mxu0 %v6258
    %7764 = vmatpush1.msra.mxu0 %v6257
    %7765 = vmatprep.subr.mxu0 %v6266
    %7766 = vmatpush1.msra.mxu0 %v6265
    %7767 = vmatprep.subr.mxu0 %v6274
    %7768 = vmatpush1.msra.mxu0 %v6273
    %7769 = vmatprep.subr.mxu0 %v6282
    %7770 = vmatpush1.msra.mxu0 %v6281
    %7771 = vmatprep.subr.mxu0 %v6290
    %7772 = vmatpush1.msra.mxu0 %v6289
    %7773 = vmatprep.subr.mxu0 %v6298
    %7774 = vmatpush1.msra.mxu0 %v6297
    %7775 = vmatprep.subr.mxu0 %v6306
    %7776 = vmatpush1.msra.mxu0 %v6305
    %7777 = vmatprep.subr.mxu0 %v6314
    %7778 = vmatpush1.msra.mxu0 %v6313
    %7779 = vmatprep.subr.mxu0 %v6322
    %7780 = vmatpush1.msra.mxu0 %v6321
    %7781 = vmatprep.subr.mxu0 %v6330
    %7782 = vmatpush1.msra.mxu0 %v6329
    %7783 = vmatprep.subr.mxu0 %v6338
    %7784 = vmatpush1.msra.mxu0 %v6337
    %7785 = vmatprep.subr.mxu0 %v6346
    %7786 = vmatpush1.msra.mxu0 %v6345
    %7787 = vmatprep.subr.mxu0 %v6354
    %7788 = vmatpush1.msra.mxu0 %v6353
    %7789 = vmatprep.subr.mxu0 %v6362
    %7790 = vmatpush1.msra.mxu0 %v6361
    %7791 = vmatprep.subr.mxu0 %v6370
    %7792 = vmatpush1.msra.mxu0 %v6369
    %7793 = vmatprep.subr.mxu0 %v6378
    %7794 = vmatpush1.msra.mxu0 %v6377
    %7795 = vmatprep.subr.mxu0 %v6386
    %7796 = vmatpush1.msra.mxu0 %v6385
    %7797 = vmatprep.subr.mxu0 %v6394
    %7798 = vmatpush1.msra.mxu0 %v6393
    %7799 = vmatprep.subr.mxu0 %v6402
    %7800 = vmatpush1.msra.mxu0 %v6401
    %7801 = vmatprep.subr.mxu0 %v6410
    %7802 = vmatpush1.msra.mxu0 %v6409
    %7803 = vmatprep.subr.mxu0 %v6418
    %7804 = vmatpush1.msra.mxu0 %v6417
    %7805 = vmatprep.subr.mxu0 %v6426
    %7806 = vmatpush1.msra.mxu0 %v6425
    %7807 = vmatprep.subr.mxu0 %v6434
    %7808 = vmatpush1.msra.mxu0 %v6433
    %7809 = vmatprep.subr.mxu0 %v6442
    %7810 = vmatpush1.msra.mxu0 %v6441
    %7811 = vmatprep.subr.mxu0 %v6450
    %7812 = vmatpush1.msra.mxu0 %v6449
    %7813 = vmatprep.subr.mxu0 %v6458
    %7814 = vmatpush1.msra.mxu0 %v6457
    %7815 = vmatprep.mubr.f32.mxu0 %v5661
    %7816 = vmatmul.mubr.f32.gmra.mrb[0].mxu0 %v5654
    %v7817 = vpop.f32.mrb[0].mxu0
    %v7818 = vadd.f32 %v7747, %v7817
    %v7819 = vpop.f32.mrb[0].mxu0
    %v7820 = vadd.f32 %v7749, %v7819
    %7821 = vdwg.mxu0
    %7822 = vmatprep.subr.mxu0 %v6466
    %7823 = vmatpush1.msra.mxu0 %v6465
    %7824 = vmatprep.subr.mxu0 %v6474
    %7825 = vmatpush1.msra.mxu0 %v6473
    %7826 = vmatprep.subr.mxu0 %v6482
    %7827 = vmatpush1.msra.mxu0 %v6481
    %7828 = vmatprep.subr.mxu0 %v6490
    %7829 = vmatpush1.msra.mxu0 %v6489
    %7830 = vmatprep.subr.mxu0 %v6498
    %7831 = vmatpush1.msra.mxu0 %v6497
    %7832 = vmatprep.subr.mxu0 %v6506
    %7833 = vmatpush1.msra.mxu0 %v6505
    %7834 = vmatprep.subr.mxu0 %v6514
    %7835 = vmatpush1.msra.mxu0 %v6513
    %7836 = vmatprep.subr.mxu0 %v6522
    %7837 = vmatpush1.msra.mxu0 %v6521
    %7838 = vmatprep.subr.mxu0 %v6530
    %7839 = vmatpush1.msra.mxu0 %v6529
    %7840 = vmatprep.subr.mxu0 %v6538
    %7841 = vmatpush1.msra.mxu0 %v6537
    %7842 = vmatprep.subr.mxu0 %v6546
    %7843 = vmatpush1.msra.mxu0 %v6545
    %7844 = vmatprep.subr.mxu0 %v6554
    %7845 = vmatpush1.msra.mxu0 %v6553
    %7846 = vmatprep.subr.mxu0 %v6562
    %7847 = vmatpush1.msra.mxu0 %v6561
    %7848 = vmatprep.subr.mxu0 %v6570
    %7849 = vmatpush1.msra.mxu0 %v6569
    %7850 = vmatprep.subr.mxu0 %v6578
    %7851 = vmatpush1.msra.mxu0 %v6577
    %7852 = vmatprep.subr.mxu0 %v6586
    %7853 = vmatpush1.msra.mxu0 %v6585
    %7854 = vmatprep.subr.mxu0 %v6594
    %7855 = vmatpush1.msra.mxu0 %v6593
    %7856 = vmatprep.subr.mxu0 %v6602
    %7857 = vmatpush1.msra.mxu0 %v6601
    %7858 = vmatprep.subr.mxu0 %v6610
    %7859 = vmatpush1.msra.mxu0 %v6609
    %7860 = vmatprep.subr.mxu0 %v6618
    %7861 = vmatpush1.msra.mxu0 %v6617
    %7862 = vmatprep.subr.mxu0 %v6626
    %7863 = vmatpush1.msra.mxu0 %v6625
    %7864 = vmatprep.subr.mxu0 %v6634
    %7865 = vmatpush1.msra.mxu0 %v6633
    %7866 = vmatprep.subr.mxu0 %v6642
    %7867 = vmatpush1.msra.mxu0 %v6641
    %7868 = vmatprep.subr.mxu0 %v6650
    %7869 = vmatpush1.msra.mxu0 %v6649
    %7870 = vmatprep.subr.mxu0 %v6658
    %7871 = vmatpush1.msra.mxu0 %v6657
    %7872 = vmatprep.subr.mxu0 %v6666
    %7873 = vmatpush1.msra.mxu0 %v6665
    %7874 = vmatprep.subr.mxu0 %v6674
    %7875 = vmatpush1.msra.mxu0 %v6673
    %7876 = vmatprep.subr.mxu0 %v6682
    %7877 = vmatpush1.msra.mxu0 %v6681
    %7878 = vmatprep.subr.mxu0 %v6690
    %7879 = vmatpush1.msra.mxu0 %v6689
    %7880 = vmatprep.subr.mxu0 %v6698
    %7881 = vmatpush1.msra.mxu0 %v6697
    %7882 = vmatprep.subr.mxu0 %v6706
    %7883 = vmatpush1.msra.mxu0 %v6705
    %7884 = vmatprep.subr.mxu0 %v6714
    %7885 = vmatpush1.msra.mxu0 %v6713
    %7886 = vmatprep.mubr.f32.mxu0 %v5688
    %7887 = vmatmul.mubr.f32.gmra.mrb[0].mxu0 %v5681
    %v7888 = vpop.f32.mrb[0].mxu0
    %v7889 = vadd.f32 %v7818, %v7888
    %v7890 = vpop.f32.mrb[0].mxu0
    %v7891 = vadd.f32 %v7820, %v7890
    %7892 = vdwg.mxu0
    %v7901 = vcombine.low %v7037, %v7039
    %v7902 = vcombine.low %v7321, %v7323
    %v7904 = vunpack.c.l.s4 1983009808
    %v7905 = vunpack.c.0.s8 %v7904
    %v7906 = vlaneseq
    %v7907 = vshrl.u32 %v7906, 7
    %v7908 = vsub.s32 %v7905, %v7907
    %v7909 = vrot.slane %v7901, %v7908
    %v7911 = vunpack.c.l.s4 1983009808
    %v7912 = vunpack.c.0.s8 %v7911
    %v7913 = vlaneseq
    %v7914 = vshrl.u32 %v7913, 7
    %v7915 = vsub.s32 %v7912, %v7914
    %v7916 = vrot.slane %v7902, %v7915
    %v7917 = vcombine.low %v7909, %v7916
    %v7918 = vcombine.low %v7605, %v7607
    %v7919 = vcombine.low %v7889, %v7891
    %v7921 = vunpack.c.l.s4 1983009808
    %v7922 = vunpack.c.0.s8 %v7921
    %v7923 = vlaneseq
    %v7924 = vshrl.u32 %v7923, 7
    %v7925 = vsub.s32 %v7922, %v7924
    %v7926 = vrot.slane %v7918, %v7925
    %v7928 = vunpack.c.l.s4 1983009808
    %v7929 = vunpack.c.0.s8 %v7928
    %v7930 = vlaneseq
    %v7931 = vshrl.u32 %v7930, 7
    %v7932 = vsub.s32 %v7929, %v7931
    %v7933 = vrot.slane %v7919, %v7932
    %v7934 = vcombine.low %v7926, %v7933
    %7937 = vst [vmem:[#allocation4] sm:$0xff] %v7917
    %7938 = vst [vmem:[#allocation4 + $0x8] sm:$0xff] %v7934
    // Predicated region
    $region38: #{csfe_forward.1} parent=1 // pred_check
      _
    $region39: #{csfe_forward.1} parent=1 // pred_check_branch
      %7940 = sbr.rel (0) target = $region41
    $region40: #{csfe_forward.1} parent=1 // pred_region
      %s7942 = ssub.s32 256, 256
      %7943 = vsyncadd [#allocation5], %s7942
      %s7945 = sshll.u32 [#allocation4], 4
      %s7946 = int_to_ptr.vmem [resolvable:$true] %s7945
      %7948 = dma.vmem_to_hbm [thread:$0]  %s7946, 256, %s9, [#allocation5]
    $region41: #{csfe_forward.1} parent=1 // pred_fallthru
      _
    // Predicated region
    $region42: #{csfe_forward.1} parent=1 // pred_check
      _
    $region43: #{csfe_forward.1} parent=1 // pred_check_branch
      %7950 = sbr.rel (0) target = $region45
    $region44: #{csfe_forward.1} parent=1 // pred_region
      %7951 = dma.done [#allocation5], 256
    $region45: #{csfe_forward.1} parent=1 // pred_fallthru
      _
    %7952 = vsyncpa [#allocation5], 1

</llo_original>
